<compile_context>
chip_gen: v7x
topology: tpu7x:2x2x1
jax: 0.10.0
libtpu: 0.0.40
codegen_flags: <defaults>
</compile_context>

<pallas_src>
import jax
import jax.numpy as jnp
from jax.experimental import pallas as pl
from jax.experimental.pallas import tpu as pltpu  # noqa: F401  (TPU backend import)

LEAK = 0.2
BN_EPS = 1e-5


def _leaky(z):
    return jnp.where(z > 0, z, LEAK * z)


# ----------------------------- Pallas kernels -------------------------------

def conv1_pool_kernel(p_ref, w_ref, b_ref, o_ref):
    """Conv1 (BN folded) + LeakyReLU + 2x2 maxpool, via 4 output-parity matmuls.

    p_ref: (4, B*14*14, 49)   parity im2col patches of the padded input
    w_ref: (49, 64)           folded conv1 weight (tap-major, channel on lanes)
    b_ref: (1, 64)            folded conv1/BN1 bias
    o_ref: (B*14*14, 64)      pooled activations, rows ordered (b, py, px)
    """
    w = w_ref[...]
    b = b_ref[...]
    m = _leaky(jnp.dot(p_ref[0], w, preferred_element_type=jnp.float32) + b)
    for p in range(1, 4):
        m = jnp.maximum(
            m, _leaky(jnp.dot(p_ref[p], w, preferred_element_type=jnp.float32) + b)
        )
    o_ref[...] = m


def conv2_kernel(p_ref, w_ref, b_ref, o_ref):
    """Conv2 (BN folded) + LeakyReLU as one im2col matmul.

    p_ref: (B*10*10, 1600)  im2col patches of the pooled conv1 features
    w_ref: (1600, 128)      folded conv2 weight
    b_ref: (1, 128)         folded conv2/BN2 bias
    o_ref: (B*10*10, 128)
    """
    z = jnp.dot(p_ref[...], w_ref[...], preferred_element_type=jnp.float32) + b_ref[...]
    o_ref[...] = _leaky(z)


def fc_kernel(x_ref, w_ref, b_ref, o_ref):
    """fc_layer: (B, 12800) @ (12800, NC) + bias."""
    o_ref[...] = (
        jnp.dot(x_ref[...], w_ref[...], preferred_element_type=jnp.float32) + b_ref[...]
    )


# ------------------------------ Forward wrapper -----------------------------

def mcnn2_forward(x, params):
    """x: (B, 1, 32, 32) float32 -> (feature (B, 12800), out (B, num_classes))."""
    B, _, H, W = x.shape
    C1 = params["w1"].shape[1]          # 64
    C2 = params["w2"].shape[1]          # 128
    NC = params["wfc"].shape[1]         # num_classes

    # ---- conv1 layout plumbing (zero FLOPs): pad + parity im2col ----
    xpad = jnp.pad(x[:, 0], ((0, 0), (1, 1), (1, 1)))        # (B, 34, 34)
    H1 = H + 2 - 7 + 1                                        # 28
    Hp = H1 // 2                                              # 14 (after 2x2 pool)
    planes = []
    for oy in range(2):
        for ox in range(2):
            taps = []
            for dy in range(7):
                for dx in range(7):
                    s0, s1 = oy + dy, ox + dx
                    taps.append(xpad[:, s0:s0 + 2 * Hp - 1:2, s1:s1 + 2 * Hp - 1:2])
            planes.append(jnp.stack(taps, axis=-1).reshape(B * Hp * Hp, 49))
    p1 = jnp.stack(planes, axis=0)                            # (4, B*196, 49)

    pooled = pl.pallas_call(
        conv1_pool_kernel,
        out_shape=jax.ShapeDtypeStruct((B * Hp * Hp, C1), jnp.float32),
        cost_estimate=pl.CostEstimate(
            flops=2 * 4 * B * Hp * Hp * 49 * C1,
            transcendentals=0,
            bytes_accessed=4 * (p1.size + 49 * C1 + C1 + B * Hp * Hp * C1),
        ),
    )(p1, params["w1"], params["b1"])                         # (B*196, 64)

    # ---- conv2 layout plumbing: im2col of the pooled feature ----
    pooled4 = pooled.reshape(B, Hp, Hp, C1)                   # (B, 14, 14, 64)
    H2 = Hp - 5 + 1                                           # 10
    taps2 = [pooled4[:, dy:dy + H2, dx:dx + H2, :]
             for dy in range(5) for dx in range(5)]
    p2 = jnp.stack(taps2, axis=3).reshape(B * H2 * H2, 25 * C1)   # (200, 1600)

    h2 = pl.pallas_call(
        conv2_kernel,
        out_shape=jax.ShapeDtypeStruct((B * H2 * H2, C2), jnp.float32),
        cost_estimate=pl.CostEstimate(
            flops=2 * B * H2 * H2 * (25 * C1) * C2,
            transcendentals=0,
            bytes_accessed=4 * (p2.size + 25 * C1 * C2 + C2 + B * H2 * H2 * C2),
        ),
    )(p2, params["w2"], params["b2"])                         # (200, 128)

    # ---- PyTorch-style flatten of the NCHW feature (layout only) ----
    feature = (
        h2.reshape(B, H2 * H2, C2).transpose(0, 2, 1).reshape(B, C2 * H2 * H2)
    )                                                         # (B, 12800), index c*100+y*10+x

    out = pl.pallas_call(
        fc_kernel,
        out_shape=jax.ShapeDtypeStruct((B, NC), jnp.float32),
        cost_estimate=pl.CostEstimate(
            flops=2 * B * feature.shape[1] * NC,
            transcendentals=0,
            bytes_accessed=4 * (feature.size + feature.shape[1] * NC + NC + B * NC),
        ),
    )(feature, params["wfc"], params["bfc"])                  # (B, NC)

    return feature, out


# ------------------------------ Parameters -----------------------------------

def make_params(key, *, num_classes=10):
    """Random torch-style parameters; BN (eval mode) folded into conv weights."""
    ks = jax.random.split(key, 16)

    # Conv2d(1, 64, 7) + BatchNorm2d(64)
    w1 = 0.05 * jax.random.normal(ks[0], (64, 1, 7, 7), jnp.float32)
    c1b = 0.05 * jax.random.normal(ks[1], (64,), jnp.float32)
    g1 = 1.0 + 0.1 * jax.random.normal(ks[2], (64,), jnp.float32)
    be1 = 0.1 * jax.random.normal(ks[3], (64,), jnp.float32)
    m1 = 0.1 * jax.random.normal(ks[4], (64,), jnp.float32)
    v1 = jnp.abs(1.0 + 0.1 * jax.random.normal(ks[5], (64,), jnp.float32))
    s1 = g1 / jnp.sqrt(v1 + BN_EPS)
    w1_col = jnp.transpose(w1[:, 0], (1, 2, 0)).reshape(49, 64) * s1[None, :]
    b1_col = (s1 * (c1b - m1) + be1).reshape(1, 64)

    # Conv2d(64, 128, 5) + BatchNorm2d(128)
    w2 = 0.02 * jax.random.normal(ks[6], (128, 64, 5, 5), jnp.float32)
    c2b = 0.02 * jax.random.normal(ks[7], (128,), jnp.float32)
    g2 = 1.0 + 0.1 * jax.random.normal(ks[8], (128,), jnp.float32)
    be2 = 0.1 * jax.random.normal(ks[9], (128,), jnp.float32)
    m2 = 0.1 * jax.random.normal(ks[10], (128,), jnp.float32)
    v2 = jnp.abs(1.0 + 0.1 * jax.random.normal(ks[11], (128,), jnp.float32))
    s2 = g2 / jnp.sqrt(v2 + BN_EPS)
    w2_col = jnp.transpose(w2, (2, 3, 1, 0)).reshape(25 * 64, 128) * s2[None, :]
    b2_col = (s2 * (c2b - m2) + be2).reshape(1, 128)

    # Linear(12800, num_classes)
    wfc = 0.01 * jax.random.normal(ks[12], (num_classes, 12800), jnp.float32)
    bfc = 0.01 * jax.random.normal(ks[13], (num_classes,), jnp.float32)

    params = dict(w1=w1_col, b1=b1_col, w2=w2_col, b2=b2_col,
                  wfc=wfc.T, bfc=bfc.reshape(1, num_classes))
    raw = dict(w1=w1, b1=c1b, bn1=(g1, be1, m1, v1),
               w2=w2, b2=c2b, bn2=(g2, be2, m2, v2),
               wfc=wfc, bfc=bfc)
    return params, raw


def mcnn2_reference(x, raw):
    """Pure-JAX reference of the PyTorch forward (eval-mode BN)."""
    def bn(z, p):
        g, be, m, v = p
        return (z - m[None, :, None, None]) / jnp.sqrt(v + BN_EPS)[None, :, None, None] \
            * g[None, :, None, None] + be[None, :, None, None]

    z = jax.lax.conv_general_dilated(
        x, raw["w1"], window_strides=(1, 1), padding=((1, 1), (1, 1)),
        dimension_numbers=("NCHW", "OIHW", "NCHW"),
        precision=jax.lax.Precision.HIGHEST) + raw["b1"][None, :, None, None]
    z = _leaky(bn(z, raw["bn1"]))
    z = jax.lax.reduce_window(z, -jnp.inf, jax.lax.max,
                              (1, 1, 2, 2), (1, 1, 2, 2), "VALID")
    z = jax.lax.conv_general_dilated(
        z, raw["w2"], window_strides=(1, 1), padding="VALID",
        dimension_numbers=("NCHW", "OIHW", "NCHW"),
        precision=jax.lax.Precision.HIGHEST) + raw["b2"][None, :, None, None]
    z = _leaky(bn(z, raw["bn2"]))
    feature = z.reshape(z.shape[0], -1)
    out = feature @ raw["wfc"].T + raw["bfc"][None, :]
    return feature, out


if __name__ == "__main__":
    B, num_classes = 2, 10
    key = jax.random.PRNGKey(0)
    kx, kp = jax.random.split(key)

    # MCNN2's feat_dim=12800 with Conv(7,pad=1)->Pool(2)->Conv(5) implies 32x32 input.
    x = jax.random.normal(kx, (B, 1, 32, 32), jnp.float32)
    params, raw = make_params(kp, num_classes=num_classes)

    feature, out = jax.block_until_ready(jax.jit(mcnn2_forward)(x, params))

    assert feature.shape == (B, 12800) and feature.dtype == jnp.float32
    assert out.shape == (B, num_classes) and out.dtype == jnp.float32

    ref_feat, ref_out = mcnn2_reference(x, raw)
    assert bool(jnp.allclose(feature, ref_feat, rtol=3e-2, atol=3e-2))
    assert bool(jnp.allclose(out, ref_out, rtol=3e-2, atol=3e-2))

    print("KERNEL_OK")
</pallas_src>

<mosaic_0001>
module attributes {stable_mosaic.version = 11 : i64} {
  func.func @conv1_pool_kernel(%arg0: memref<4x392x49xf32, #tpu.memory_space<vmem>>, %arg1: memref<49x64xf32, #tpu.memory_space<vmem>>, %arg2: memref<1x64xf32, #tpu.memory_space<vmem>>, %arg3: memref<392x64xf32, #tpu.memory_space<vmem>>) attributes {dimension_semantics = [], scalar_prefetch = 0 : i64, scratch_operands = 0 : i64, tpu.core_type = #tpu.core_type<tc>} {
    %c0 = arith.constant 0 : index
    %c0_0 = arith.constant 0 : index
    %0 = vector.load %arg1[%c0, %c0_0] : memref<49x64xf32, #tpu.memory_space<vmem>>, vector<49x64xf32>
    %c0_1 = arith.constant 0 : index
    %c0_2 = arith.constant 0 : index
    %1 = vector.load %arg2[%c0_1, %c0_2] : memref<1x64xf32, #tpu.memory_space<vmem>>, vector<1x64xf32>
    %c0_3 = arith.constant 0 : index
    %c0_4 = arith.constant 0 : index
    %c0_5 = arith.constant 0 : index
    %2 = vector.load %arg0[%c0_3, %c0_4, %c0_5] : memref<4x392x49xf32, #tpu.memory_space<vmem>>, vector<1x392x49xf32>
    %3 = vector.shape_cast %2 : vector<1x392x49xf32> to vector<392x49xf32>
    %cst = arith.constant dense<0.000000e+00> : vector<392x64xf32>
    %4 = tpu.matmul %3, %0, %cst {dimension_numbers = #tpu.dot_dimension_numbers<[1], [0], [0], [1], [0, 0, 1, 1], [], []>} : vector<392x49xf32>, vector<49x64xf32>, vector<392x64xf32> -> vector<392x64xf32>
    %5 = vector.broadcast %1 : vector<1x64xf32> to vector<392x64xf32>
    %6 = arith.addf %4, %5 : vector<392x64xf32>
    %cst_6 = arith.constant 0.000000e+00 : f32
    %7 = vector.broadcast %cst_6 : f32 to vector<392x64xf32>
    %8 = arith.cmpf ogt, %6, %7 : vector<392x64xf32>
    %cst_7 = arith.constant 2.000000e-01 : f32
    %9 = vector.broadcast %cst_7 : f32 to vector<392x64xf32>
    %10 = arith.mulf %9, %6 : vector<392x64xf32>
    %11 = arith.select %8, %6, %10 : vector<392x64xi1>, vector<392x64xf32>
    %c1 = arith.constant 1 : index
    %c0_8 = arith.constant 0 : index
    %c0_9 = arith.constant 0 : index
    %12 = vector.load %arg0[%c1, %c0_8, %c0_9] : memref<4x392x49xf32, #tpu.memory_space<vmem>>, vector<1x392x49xf32>
    %13 = vector.shape_cast %12 : vector<1x392x49xf32> to vector<392x49xf32>
    %cst_10 = arith.constant dense<0.000000e+00> : vector<392x64xf32>
    %14 = tpu.matmul %13, %0, %cst_10 {dimension_numbers = #tpu.dot_dimension_numbers<[1], [0], [0], [1], [0, 0, 1, 1], [], []>} : vector<392x49xf32>, vector<49x64xf32>, vector<392x64xf32> -> vector<392x64xf32>
    %15 = vector.broadcast %1 : vector<1x64xf32> to vector<392x64xf32>
    %16 = arith.addf %14, %15 : vector<392x64xf32>
    %cst_11 = arith.constant 0.000000e+00 : f32
    %17 = vector.broadcast %cst_11 : f32 to vector<392x64xf32>
    %18 = arith.cmpf ogt, %16, %17 : vector<392x64xf32>
    %cst_12 = arith.constant 2.000000e-01 : f32
    %19 = vector.broadcast %cst_12 : f32 to vector<392x64xf32>
    %20 = arith.mulf %19, %16 : vector<392x64xf32>
    %21 = arith.select %18, %16, %20 : vector<392x64xi1>, vector<392x64xf32>
    %22 = arith.maximumf %11, %21 : vector<392x64xf32>
    %c2 = arith.constant 2 : index
    %c0_13 = arith.constant 0 : index
    %c0_14 = arith.constant 0 : index
    %23 = vector.load %arg0[%c2, %c0_13, %c0_14] : memref<4x392x49xf32, #tpu.memory_space<vmem>>, vector<1x392x49xf32>
    %24 = vector.shape_cast %23 : vector<1x392x49xf32> to vector<392x49xf32>
    %cst_15 = arith.constant dense<0.000000e+00> : vector<392x64xf32>
    %25 = tpu.matmul %24, %0, %cst_15 {dimension_numbers = #tpu.dot_dimension_numbers<[1], [0], [0], [1], [0, 0, 1, 1], [], []>} : vector<392x49xf32>, vector<49x64xf32>, vector<392x64xf32> -> vector<392x64xf32>
    %26 = vector.broadcast %1 : vector<1x64xf32> to vector<392x64xf32>
    %27 = arith.addf %25, %26 : vector<392x64xf32>
    %cst_16 = arith.constant 0.000000e+00 : f32
    %28 = vector.broadcast %cst_16 : f32 to vector<392x64xf32>
    %29 = arith.cmpf ogt, %27, %28 : vector<392x64xf32>
    %cst_17 = arith.constant 2.000000e-01 : f32
    %30 = vector.broadcast %cst_17 : f32 to vector<392x64xf32>
    %31 = arith.mulf %30, %27 : vector<392x64xf32>
    %32 = arith.select %29, %27, %31 : vector<392x64xi1>, vector<392x64xf32>
    %33 = arith.maximumf %22, %32 : vector<392x64xf32>
    %c3 = arith.constant 3 : index
    %c0_18 = arith.constant 0 : index
    %c0_19 = arith.constant 0 : index
    %34 = vector.load %arg0[%c3, %c0_18, %c0_19] : memref<4x392x49xf32, #tpu.memory_space<vmem>>, vector<1x392x49xf32>
    %35 = vector.shape_cast %34 : vector<1x392x49xf32> to vector<392x49xf32>
    %cst_20 = arith.constant dense<0.000000e+00> : vector<392x64xf32>
    %36 = tpu.matmul %35, %0, %cst_20 {dimension_numbers = #tpu.dot_dimension_numbers<[1], [0], [0], [1], [0, 0, 1, 1], [], []>} : vector<392x49xf32>, vector<49x64xf32>, vector<392x64xf32> -> vector<392x64xf32>
    %37 = vector.broadcast %1 : vector<1x64xf32> to vector<392x64xf32>
    %38 = arith.addf %36, %37 : vector<392x64xf32>
    %cst_21 = arith.constant 0.000000e+00 : f32
    %39 = vector.broadcast %cst_21 : f32 to vector<392x64xf32>
    %40 = arith.cmpf ogt, %38, %39 : vector<392x64xf32>
    %cst_22 = arith.constant 2.000000e-01 : f32
    %41 = vector.broadcast %cst_22 : f32 to vector<392x64xf32>
    %42 = arith.mulf %41, %38 : vector<392x64xf32>
    %43 = arith.select %40, %38, %42 : vector<392x64xi1>, vector<392x64xf32>
    %44 = arith.maximumf %33, %43 : vector<392x64xf32>
    %c0_23 = arith.constant 0 : index
    %c0_24 = arith.constant 0 : index
    %45 = vector.load %arg3[%c0_23, %c0_24] : memref<392x64xf32, #tpu.memory_space<vmem>>, vector<392x64xf32>
    tpu.vector_store %arg3[%c0_23, %c0_24], %44 {strides = array<i32>} : memref<392x64xf32, #tpu.memory_space<vmem>>, vector<392x64xf32>,
    return
  }
}

module attributes {stable_mosaic.version = 11 : i64} {
  func.func @conv2_kernel(%arg0: memref<200x1600xf32, #tpu.memory_space<vmem>>, %arg1: memref<1600x128xf32, #tpu.memory_space<vmem>>, %arg2: memref<1x128xf32, #tpu.memory_space<vmem>>, %arg3: memref<200x128xf32, #tpu.memory_space<vmem>>) attributes {dimension_semantics = [], scalar_prefetch = 0 : i64, scratch_operands = 0 : i64, tpu.core_type = #tpu.core_type<tc>} {
    %c0 = arith.constant 0 : index
    %c0_0 = arith.constant 0 : index
    %0 = vector.load %arg0[%c0, %c0_0] : memref<200x1600xf32, #tpu.memory_space<vmem>>, vector<200x1600xf32>
    %c0_1 = arith.constant 0 : index
    %c0_2 = arith.constant 0 : index
    %1 = vector.load %arg1[%c0_1, %c0_2] : memref<1600x128xf32, #tpu.memory_space<vmem>>, vector<1600x128xf32>
    %cst = arith.constant dense<0.000000e+00> : vector<200x128xf32>
    %2 = tpu.matmul %0, %1, %cst {dimension_numbers = #tpu.dot_dimension_numbers<[1], [0], [0], [1], [0, 0, 1, 1], [], []>} : vector<200x1600xf32>, vector<1600x128xf32>, vector<200x128xf32> -> vector<200x128xf32>
    %c0_3 = arith.constant 0 : index
    %c0_4 = arith.constant 0 : index
    %3 = vector.load %arg2[%c0_3, %c0_4] : memref<1x128xf32, #tpu.memory_space<vmem>>, vector<1x128xf32>
    %4 = vector.broadcast %3 : vector<1x128xf32> to vector<200x128xf32>
    %5 = arith.addf %2, %4 : vector<200x128xf32>
    %cst_5 = arith.constant 0.000000e+00 : f32
    %6 = vector.broadcast %cst_5 : f32 to vector<200x128xf32>
    %7 = arith.cmpf ogt, %5, %6 : vector<200x128xf32>
    %cst_6 = arith.constant 2.000000e-01 : f32
    %8 = vector.broadcast %cst_6 : f32 to vector<200x128xf32>
    %9 = arith.mulf %8, %5 : vector<200x128xf32>
    %10 = arith.select %7, %5, %9 : vector<200x128xi1>, vector<200x128xf32>
    %c0_7 = arith.constant 0 : index
    %c0_8 = arith.constant 0 : index
    %11 = vector.load %arg3[%c0_7, %c0_8] : memref<200x128xf32, #tpu.memory_space<vmem>>, vector<200x128xf32>
    tpu.vector_store %arg3[%c0_7, %c0_8], %10 {strides = array<i32>} : memref<200x128xf32, #tpu.memory_space<vmem>>, vector<200x128xf32>,
    return
  }
}

module attributes {stable_mosaic.version = 11 : i64} {
  func.func @fc_kernel(%arg0: memref<2x12800xf32, #tpu.memory_space<vmem>>, %arg1: memref<12800x10xf32, #tpu.memory_space<vmem>>, %arg2: memref<1x10xf32, #tpu.memory_space<vmem>>, %arg3: memref<2x10xf32, #tpu.memory_space<vmem>>) attributes {dimension_semantics = [], scalar_prefetch = 0 : i64, scratch_operands = 0 : i64, tpu.core_type = #tpu.core_type<tc>} {
    %c0 = arith.constant 0 : index
    %c0_0 = arith.constant 0 : index
    %0 = vector.load %arg0[%c0, %c0_0] : memref<2x12800xf32, #tpu.memory_space<vmem>>, vector<2x12800xf32>
    %c0_1 = arith.constant 0 : index
    %c0_2 = arith.constant 0 : index
    %1 = vector.load %arg1[%c0_1, %c0_2] : memref<12800x10xf32, #tpu.memory_space<vmem>>, vector<12800x10xf32>
    %cst = arith.constant dense<0.000000e+00> : vector<2x10xf32>
    %2 = tpu.matmul %0, %1, %cst {dimension_numbers = #tpu.dot_dimension_numbers<[1], [0], [0], [1], [0, 0, 1, 1], [], []>} : vector<2x12800xf32>, vector<12800x10xf32>, vector<2x10xf32> -> vector<2x10xf32>
    %c0_3 = arith.constant 0 : index
    %c0_4 = arith.constant 0 : index
    %3 = vector.load %arg2[%c0_3, %c0_4] : memref<1x10xf32, #tpu.memory_space<vmem>>, vector<1x10xf32>
    %4 = vector.broadcast %3 : vector<1x10xf32> to vector<2x10xf32>
    %5 = arith.addf %2, %4 : vector<2x10xf32>
    %c0_5 = arith.constant 0 : index
    %c0_6 = arith.constant 0 : index
    %6 = vector.load %arg3[%c0_5, %c0_6] : memref<2x10xf32, #tpu.memory_space<vmem>>, vector<2x10xf32>
    tpu.vector_store %arg3[%c0_5, %c0_6], %5 {strides = array<i32>} : memref<2x10xf32, #tpu.memory_space<vmem>>, vector<2x10xf32>,
    return
  }
}

</mosaic_0001>

<llo_original>
// kernel: mcnn2_forward.3
$region0: #{mcnn2_forward.3}
  #allocation0 [shape = 'u32[]', space=smem, size = 0x4, offset = 0x4, fixed_abs, tag = 'smem constant byte address 0x4 - core index']
  #allocation1 [shape = 'u32[144,128]{1,0:T(1,128)}', space=vmem, size = 0x12000, scoped, tag = 'internal scratch']
  %s0 = inlined_call_operand.vmem [shape: f32[4,392,49], index: 0, kind: input, shape index: {}]
  %s1 = inlined_call_operand.vmem [shape: f32[49,64], index: 1, kind: input, shape index: {}]
  %s2 = inlined_call_operand.vmem [shape: f32[1,64], index: 2, kind: input, shape index: {}]
  %s3 = inlined_call_operand.vmem [shape: f32[392,64], index: 3, kind: output, shape index: {}]
  %s4 = sld [smem:[#allocation0]]
  $region22: #{mcnn2_forward.3} parent=0
    _
  %s6 = ssub.s32 1, %s4
  %s7 = scalar_select 0, %s6, %s4
  // Predicated region
  $region2: #{mcnn2_forward.3} parent=0 // pred_check
    _
  $region3: #{mcnn2_forward.3} parent=0 // pred_check_branch
    %9 = sbr.rel (0) target = $region5
  $region4: #{mcnn2_forward.3} parent=0 // pred_region
    _
  $region5: #{mcnn2_forward.3} parent=0 // pred_fallthru
    _
  // Predicated region
  $region6: #{mcnn2_forward.3} parent=0 // pred_check
    _
  $region7: #{mcnn2_forward.3} parent=0 // pred_check_branch
    %11 = sbr.rel (0) target = $region9
  $region8: #{mcnn2_forward.3} parent=0 // pred_region
    _
  $region9: #{mcnn2_forward.3} parent=0 // pred_fallthru
    _
  // Predicated region
  $region10: #{mcnn2_forward.3} parent=0 // pred_check
    _
  $region11: #{mcnn2_forward.3} parent=0 // pred_check_branch
    %13 = sbr.rel (0) target = $region13
  $region12: #{mcnn2_forward.3} parent=0 // pred_region
    _
  $region13: #{mcnn2_forward.3} parent=0 // pred_fallthru
    _
  %v14 = vld [vmem:[%s1] sm:$0xff]
  %v15 = vld [vmem:[%s1 + $0x8] sm:$0xff]
  %v16 = vld [vmem:[%s1 + $0x10] sm:$0xff]
  %v17 = vld [vmem:[%s1 + $0x18] sm:$0xff]
  %v18 = vld [vmem:[%s1 + $0x20] sm:$0xff]
  %v19 = vld [vmem:[%s1 + $0x28] sm:$0xff]
  %v20 = vld [vmem:[%s1 + $0x30] sm:$0x1]
  %v21 = vld [vmem:[%s2] sm:$0x1]
  %v22 = vld [vmem:[%s0] sm:$0xff]
  %v23 = vld [vmem:[%s0 + $0x8] sm:$0xff]
  %v24 = vld [vmem:[%s0 + $0x10] sm:$0xff]
  %v25 = vld [vmem:[%s0 + $0x18] sm:$0xff]
  %v26 = vld [vmem:[%s0 + $0x20] sm:$0xff]
  %v27 = vld [vmem:[%s0 + $0x28] sm:$0xff]
  %v28 = vld [vmem:[%s0 + $0x30] sm:$0xff]
  %v29 = vld [vmem:[%s0 + $0x38] sm:$0xff]
  %v30 = vld [vmem:[%s0 + $0x40] sm:$0xff]
  %v31 = vld [vmem:[%s0 + $0x48] sm:$0xff]
  %v32 = vld [vmem:[%s0 + $0x50] sm:$0xff]
  %v33 = vld [vmem:[%s0 + $0x58] sm:$0xff]
  %v34 = vld [vmem:[%s0 + $0x60] sm:$0xff]
  %v35 = vld [vmem:[%s0 + $0x68] sm:$0xff]
  %v36 = vld [vmem:[%s0 + $0x70] sm:$0xff]
  %v37 = vld [vmem:[%s0 + $0x78] sm:$0xff]
  %v38 = vld [vmem:[%s0 + $0x80] sm:$0xff]
  %v39 = vld [vmem:[%s0 + $0x88] sm:$0xff]
  %v40 = vld [vmem:[%s0 + $0x90] sm:$0xff]
  %v41 = vld [vmem:[%s0 + $0x98] sm:$0xff]
  %v42 = vld [vmem:[%s0 + $0xa0] sm:$0xff]
  %v43 = vld [vmem:[%s0 + $0xa8] sm:$0xff]
  %v44 = vld [vmem:[%s0 + $0xb0] sm:$0xff]
  %v45 = vld [vmem:[%s0 + $0xb8] sm:$0xff]
  %v46 = vld [vmem:[%s0 + $0xc0] sm:$0xff]
  %v47 = vld [vmem:[%s0 + $0xc8] sm:$0xff]
  %v48 = vld [vmem:[%s0 + $0xd0] sm:$0xff]
  %v49 = vld [vmem:[%s0 + $0xd8] sm:$0xff]
  %v50 = vld [vmem:[%s0 + $0xe0] sm:$0xff]
  %v51 = vld [vmem:[%s0 + $0xe8] sm:$0xff]
  %v52 = vld [vmem:[%s0 + $0xf0] sm:$0xff]
  %v53 = vld [vmem:[%s0 + $0xf8] sm:$0xff]
  %v54 = vld [vmem:[%s0 + $0x100] sm:$0xff]
  %v55 = vld [vmem:[%s0 + $0x108] sm:$0xff]
  %v56 = vld [vmem:[%s0 + $0x110] sm:$0xff]
  %v57 = vld [vmem:[%s0 + $0x118] sm:$0xff]
  %v58 = vld [vmem:[%s0 + $0x120] sm:$0xff]
  %v59 = vld [vmem:[%s0 + $0x128] sm:$0xff]
  %v60 = vld [vmem:[%s0 + $0x130] sm:$0xff]
  %v61 = vld [vmem:[%s0 + $0x138] sm:$0xff]
  %v62 = vld [vmem:[%s0 + $0x140] sm:$0xff]
  %v63 = vld [vmem:[%s0 + $0x148] sm:$0xff]
  %v64 = vld [vmem:[%s0 + $0x150] sm:$0xff]
  %v65 = vld [vmem:[%s0 + $0x158] sm:$0xff]
  %v66 = vld [vmem:[%s0 + $0x160] sm:$0xff]
  %v67 = vld [vmem:[%s0 + $0x168] sm:$0xff]
  %v68 = vld [vmem:[%s0 + $0x170] sm:$0xff]
  %v69 = vld [vmem:[%s0 + $0x178] sm:$0xff]
  %v70 = vld [vmem:[%s0 + $0x180] sm:$0xff]
  %v72 = vlaneseq
  %v73 = vshrl.u32 %v72, 7
  %v74 = vsub.s32 0, %v73
  %v75 = vrot.slane %v21, %v74
  %vm77 = vcmask 400384
  %v79 = vsel %vm77, %v22, 0
  %v82 = vsel %vm77, %v23, 0
  %v85 = vsel %vm77, %v24, 0
  %v88 = vsel %vm77, %v25, 0
  %v91 = vsel %vm77, %v26, 0
  %v94 = vsel %vm77, %v27, 0
  %v97 = vsel %vm77, %v28, 0
  %v100 = vsel %vm77, %v29, 0
  %v103 = vsel %vm77, %v30, 0
  %v106 = vsel %vm77, %v31, 0
  %v109 = vsel %vm77, %v32, 0
  %v112 = vsel %vm77, %v33, 0
  %v115 = vsel %vm77, %v34, 0
  %v118 = vsel %vm77, %v35, 0
  %v121 = vsel %vm77, %v36, 0
  %v124 = vsel %vm77, %v37, 0
  %v127 = vsel %vm77, %v38, 0
  %v130 = vsel %vm77, %v39, 0
  %v133 = vsel %vm77, %v40, 0
  %v136 = vsel %vm77, %v41, 0
  %v139 = vsel %vm77, %v42, 0
  %v142 = vsel %vm77, %v43, 0
  %v145 = vsel %vm77, %v44, 0
  %v148 = vsel %vm77, %v45, 0
  %v151 = vsel %vm77, %v46, 0
  %v154 = vsel %vm77, %v47, 0
  %v157 = vsel %vm77, %v48, 0
  %v160 = vsel %vm77, %v49, 0
  %v163 = vsel %vm77, %v50, 0
  %v166 = vsel %vm77, %v51, 0
  %v169 = vsel %vm77, %v52, 0
  %v172 = vsel %vm77, %v53, 0
  %v175 = vsel %vm77, %v54, 0
  %v178 = vsel %vm77, %v55, 0
  %v181 = vsel %vm77, %v56, 0
  %v184 = vsel %vm77, %v57, 0
  %v187 = vsel %vm77, %v58, 0
  %v190 = vsel %vm77, %v59, 0
  %v193 = vsel %vm77, %v60, 0
  %v196 = vsel %vm77, %v61, 0
  %v199 = vsel %vm77, %v62, 0
  %v202 = vsel %vm77, %v63, 0
  %v205 = vsel %vm77, %v64, 0
  %v208 = vsel %vm77, %v65, 0
  %v211 = vsel %vm77, %v66, 0
  %v214 = vsel %vm77, %v67, 0
  %v217 = vsel %vm77, %v68, 0
  %v220 = vsel %vm77, %v69, 0
  %v223 = vsel %vm77, %v70, 0
  %vm225 = vcmask 1040384
  %v227 = vsel %vm225, %v20, 0
  %229 = vmatprep.subr.mxu0 0.0
  %230 = vmatpush1.msra.mxu0 %v14
  %231 = vmatprep.subr.mxu0 0.0
  %232 = vmatpush1.msra.mxu0 %v15
  %233 = vmatprep.subr.mxu0 0.0
  %234 = vmatpush1.msra.mxu0 %v16
  %235 = vmatprep.subr.mxu0 0.0
  %236 = vmatpush1.msra.mxu0 %v17
  %237 = vmatprep.subr.mxu0 0.0
  %238 = vmatpush1.msra.mxu0 %v18
  %239 = vmatprep.subr.mxu0 0.0
  %240 = vmatpush1.msra.mxu0 %v19
  %241 = vmatprep.subr.mxu0 0.0
  %242 = vmatpush1.msra.mxu0 %v227
  %243 = vmatprep.subr.mxu0 0.0
  %244 = vmatpush1.msra.mxu0 0.0
  %245 = vmatprep.subr.mxu0 0.0
  %246 = vmatpush1.msra.mxu0 0.0
  %247 = vmatprep.subr.mxu0 0.0
  %248 = vmatpush1.msra.mxu0 0.0
  %249 = vmatprep.subr.mxu0 0.0
  %250 = vmatpush1.msra.mxu0 0.0
  %251 = vmatprep.subr.mxu0 0.0
  %252 = vmatpush1.msra.mxu0 0.0
  %253 = vmatprep.subr.mxu0 0.0
  %254 = vmatpush1.msra.mxu0 0.0
  %255 = vmatprep.subr.mxu0 0.0
  %256 = vmatpush1.msra.mxu0 0.0
  %257 = vmatprep.subr.mxu0 0.0
  %258 = vmatpush1.msra.mxu0 0.0
  %259 = vmatprep.subr.mxu0 0.0
  %260 = vmatpush1.msra.mxu0 0.0
  %261 = vmatprep.subr.mxu0 0.0
  %262 = vmatpush1.msra.mxu0 0.0
  %263 = vmatprep.subr.mxu0 0.0
  %264 = vmatpush1.msra.mxu0 0.0
  %265 = vmatprep.subr.mxu0 0.0
  %266 = vmatpush1.msra.mxu0 0.0
  %267 = vmatprep.subr.mxu0 0.0
  %268 = vmatpush1.msra.mxu0 0.0
  %269 = vmatprep.subr.mxu0 0.0
  %270 = vmatpush1.msra.mxu0 0.0
  %271 = vmatprep.subr.mxu0 0.0
  %272 = vmatpush1.msra.mxu0 0.0
  %273 = vmatprep.subr.mxu0 0.0
  %274 = vmatpush1.msra.mxu0 0.0
  %275 = vmatprep.subr.mxu0 0.0
  %276 = vmatpush1.msra.mxu0 0.0
  %277 = vmatprep.subr.mxu0 0.0
  %278 = vmatpush1.msra.mxu0 0.0
  %279 = vmatprep.subr.mxu0 0.0
  %280 = vmatpush1.msra.mxu0 0.0
  %281 = vmatprep.subr.mxu0 0.0
  %282 = vmatpush1.msra.mxu0 0.0
  %283 = vmatprep.subr.mxu0 0.0
  %284 = vmatpush1.msra.mxu0 0.0
  %285 = vmatprep.subr.mxu0 0.0
  %286 = vmatpush1.msra.mxu0 0.0
  %287 = vmatprep.subr.mxu0 0.0
  %288 = vmatpush1.msra.mxu0 0.0
  %289 = vmatprep.subr.mxu0 0.0
  %290 = vmatpush1.msra.mxu0 0.0
  %291 = vmatprep.subr.mxu0 0.0
  %292 = vmatpush1.msra.mxu0 0.0
  %293 = vmatprep.mubr.f32.mxu0 0.0
  %294 = vmatmul.mubr.f32.gmra.mrb[0].mxu0 %v79
  %v295 = vpop.f32.mrb[0].mxu0
  %v296 = vadd.f32 %v75, %v295
  %v297 = vpop.f32.mrb[0].mxu0
  %298 = vmatprep.mubr.f32.mxu0 0.0
  %299 = vmatmul.mubr.f32.gmra.mrb[0].mxu0 %v82
  %v300 = vpop.f32.mrb[0].mxu0
  %v301 = vadd.f32 %v75, %v300
  %v302 = vpop.f32.mrb[0].mxu0
  %303 = vmatprep.mubr.f32.mxu0 0.0
  %304 = vmatmul.mubr.f32.gmra.mrb[0].mxu0 %v85
  %v305 = vpop.f32.mrb[0].mxu0
  %v306 = vadd.f32 %v75, %v305
  %v307 = vpop.f32.mrb[0].mxu0
  %308 = vmatprep.mubr.f32.mxu0 0.0
  %309 = vmatmul.mubr.f32.gmra.mrb[0].mxu0 %v88
  %v310 = vpop.f32.mrb[0].mxu0
  %v311 = vadd.f32 %v75, %v310
  %v312 = vpop.f32.mrb[0].mxu0
  %313 = vmatprep.mubr.f32.mxu0 0.0
  %314 = vmatmul.mubr.f32.gmra.mrb[0].mxu0 %v91
  %v315 = vpop.f32.mrb[0].mxu0
  %v316 = vadd.f32 %v75, %v315
  %v317 = vpop.f32.mrb[0].mxu0
  %318 = vmatprep.mubr.f32.mxu0 0.0
  %319 = vmatmul.mubr.f32.gmra.mrb[0].mxu0 %v94
  %v320 = vpop.f32.mrb[0].mxu0
  %v321 = vadd.f32 %v75, %v320
  %v322 = vpop.f32.mrb[0].mxu0
  %323 = vmatprep.mubr.f32.mxu0 0.0
  %324 = vmatmul.mubr.f32.gmra.mrb[0].mxu0 %v97
  %v325 = vpop.f32.mrb[0].mxu0
  %v326 = vadd.f32 %v75, %v325
  %v327 = vpop.f32.mrb[0].mxu0
  %328 = vmatprep.mubr.f32.mxu0 0.0
  %329 = vmatmul.mubr.f32.gmra.mrb[0].mxu0 %v100
  %v330 = vpop.f32.mrb[0].mxu0
  %v331 = vadd.f32 %v75, %v330
  %v332 = vpop.f32.mrb[0].mxu0
  %333 = vmatprep.mubr.f32.mxu0 0.0
  %334 = vmatmul.mubr.f32.gmra.mrb[0].mxu0 %v103
  %v335 = vpop.f32.mrb[0].mxu0
  %v336 = vadd.f32 %v75, %v335
  %v337 = vpop.f32.mrb[0].mxu0
  %338 = vmatprep.mubr.f32.mxu0 0.0
  %339 = vmatmul.mubr.f32.gmra.mrb[0].mxu0 %v106
  %v340 = vpop.f32.mrb[0].mxu0
  %v341 = vadd.f32 %v75, %v340
  %v342 = vpop.f32.mrb[0].mxu0
  %343 = vmatprep.mubr.f32.mxu0 0.0
  %344 = vmatmul.mubr.f32.gmra.mrb[0].mxu0 %v109
  %v345 = vpop.f32.mrb[0].mxu0
  %v346 = vadd.f32 %v75, %v345
  %v347 = vpop.f32.mrb[0].mxu0
  %348 = vmatprep.mubr.f32.mxu0 0.0
  %349 = vmatmul.mubr.f32.gmra.mrb[0].mxu0 %v112
  %v350 = vpop.f32.mrb[0].mxu0
  %v351 = vadd.f32 %v75, %v350
  %v352 = vpop.f32.mrb[0].mxu0
  %353 = vmatprep.mubr.f32.mxu0 0.0
  %354 = vmatmul.mubr.f32.gmra.mrb[0].mxu0 %v115
  %v355 = vpop.f32.mrb[0].mxu0
  %v356 = vadd.f32 %v75, %v355
  %v357 = vpop.f32.mrb[0].mxu0
  %358 = vmatprep.mubr.f32.mxu0 0.0
  %359 = vmatmul.mubr.f32.gmra.mrb[0].mxu0 %v118
  %v360 = vpop.f32.mrb[0].mxu0
  %v361 = vadd.f32 %v75, %v360
  %v362 = vpop.f32.mrb[0].mxu0
  %363 = vmatprep.mubr.f32.mxu0 0.0
  %364 = vmatmul.mubr.f32.gmra.mrb[0].mxu0 %v121
  %v365 = vpop.f32.mrb[0].mxu0
  %v366 = vadd.f32 %v75, %v365
  %v367 = vpop.f32.mrb[0].mxu0
  %368 = vmatprep.mubr.f32.mxu0 0.0
  %369 = vmatmul.mubr.f32.gmra.mrb[0].mxu0 %v124
  %v370 = vpop.f32.mrb[0].mxu0
  %v371 = vadd.f32 %v75, %v370
  %v372 = vpop.f32.mrb[0].mxu0
  %373 = vmatprep.mubr.f32.mxu0 0.0
  %374 = vmatmul.mubr.f32.gmra.mrb[0].mxu0 %v127
  %v375 = vpop.f32.mrb[0].mxu0
  %v376 = vadd.f32 %v75, %v375
  %v377 = vpop.f32.mrb[0].mxu0
  %378 = vmatprep.mubr.f32.mxu0 0.0
  %379 = vmatmul.mubr.f32.gmra.mrb[0].mxu0 %v130
  %v380 = vpop.f32.mrb[0].mxu0
  %v381 = vadd.f32 %v75, %v380
  %v382 = vpop.f32.mrb[0].mxu0
  %383 = vmatprep.mubr.f32.mxu0 0.0
  %384 = vmatmul.mubr.f32.gmra.mrb[0].mxu0 %v133
  %v385 = vpop.f32.mrb[0].mxu0
  %v386 = vadd.f32 %v75, %v385
  %v387 = vpop.f32.mrb[0].mxu0
  %388 = vmatprep.mubr.f32.mxu0 0.0
  %389 = vmatmul.mubr.f32.gmra.mrb[0].mxu0 %v136
  %v390 = vpop.f32.mrb[0].mxu0
  %v391 = vadd.f32 %v75, %v390
  %v392 = vpop.f32.mrb[0].mxu0
  %393 = vmatprep.mubr.f32.mxu0 0.0
  %394 = vmatmul.mubr.f32.gmra.mrb[0].mxu0 %v139
  %v395 = vpop.f32.mrb[0].mxu0
  %v396 = vadd.f32 %v75, %v395
  %v397 = vpop.f32.mrb[0].mxu0
  %398 = vmatprep.mubr.f32.mxu0 0.0
  %399 = vmatmul.mubr.f32.gmra.mrb[0].mxu0 %v142
  %v400 = vpop.f32.mrb[0].mxu0
  %v401 = vadd.f32 %v75, %v400
  %v402 = vpop.f32.mrb[0].mxu0
  %403 = vmatprep.mubr.f32.mxu0 0.0
  %404 = vmatmul.mubr.f32.gmra.mrb[0].mxu0 %v145
  %v405 = vpop.f32.mrb[0].mxu0
  %v406 = vadd.f32 %v75, %v405
  %v407 = vpop.f32.mrb[0].mxu0
  %408 = vmatprep.mubr.f32.mxu0 0.0
  %409 = vmatmul.mubr.f32.gmra.mrb[0].mxu0 %v148
  %v410 = vpop.f32.mrb[0].mxu0
  %v411 = vadd.f32 %v75, %v410
  %v412 = vpop.f32.mrb[0].mxu0
  %413 = vmatprep.mubr.f32.mxu0 0.0
  %414 = vmatmul.mubr.f32.gmra.mrb[0].mxu0 %v151
  %v415 = vpop.f32.mrb[0].mxu0
  %v416 = vadd.f32 %v75, %v415
  %v417 = vpop.f32.mrb[0].mxu0
  %418 = vmatprep.mubr.f32.mxu0 0.0
  %419 = vmatmul.mubr.f32.gmra.mrb[0].mxu0 %v154
  %v420 = vpop.f32.mrb[0].mxu0
  %v421 = vadd.f32 %v75, %v420
  %v422 = vpop.f32.mrb[0].mxu0
  %423 = vmatprep.mubr.f32.mxu0 0.0
  %424 = vmatmul.mubr.f32.gmra.mrb[0].mxu0 %v157
  %v425 = vpop.f32.mrb[0].mxu0
  %v426 = vadd.f32 %v75, %v425
  %v427 = vpop.f32.mrb[0].mxu0
  %428 = vmatprep.mubr.f32.mxu0 0.0
  %429 = vmatmul.mubr.f32.gmra.mrb[0].mxu0 %v160
  %v430 = vpop.f32.mrb[0].mxu0
  %v431 = vadd.f32 %v75, %v430
  %v432 = vpop.f32.mrb[0].mxu0
  %433 = vmatprep.mubr.f32.mxu0 0.0
  %434 = vmatmul.mubr.f32.gmra.mrb[0].mxu0 %v163
  %v435 = vpop.f32.mrb[0].mxu0
  %v436 = vadd.f32 %v75, %v435
  %v437 = vpop.f32.mrb[0].mxu0
  %438 = vmatprep.mubr.f32.mxu0 0.0
  %439 = vmatmul.mubr.f32.gmra.mrb[0].mxu0 %v166
  %v440 = vpop.f32.mrb[0].mxu0
  %v441 = vadd.f32 %v75, %v440
  %v442 = vpop.f32.mrb[0].mxu0
  %443 = vmatprep.mubr.f32.mxu0 0.0
  %444 = vmatmul.mubr.f32.gmra.mrb[0].mxu0 %v169
  %v445 = vpop.f32.mrb[0].mxu0
  %v446 = vadd.f32 %v75, %v445
  %v447 = vpop.f32.mrb[0].mxu0
  %448 = vmatprep.mubr.f32.mxu0 0.0
  %449 = vmatmul.mubr.f32.gmra.mrb[0].mxu0 %v172
  %v450 = vpop.f32.mrb[0].mxu0
  %v451 = vadd.f32 %v75, %v450
  %v452 = vpop.f32.mrb[0].mxu0
  %453 = vmatprep.mubr.f32.mxu0 0.0
  %454 = vmatmul.mubr.f32.gmra.mrb[0].mxu0 %v175
  %v455 = vpop.f32.mrb[0].mxu0
  %v456 = vadd.f32 %v75, %v455
  %v457 = vpop.f32.mrb[0].mxu0
  %458 = vmatprep.mubr.f32.mxu0 0.0
  %459 = vmatmul.mubr.f32.gmra.mrb[0].mxu0 %v178
  %v460 = vpop.f32.mrb[0].mxu0
  %v461 = vadd.f32 %v75, %v460
  %v462 = vpop.f32.mrb[0].mxu0
  %463 = vmatprep.mubr.f32.mxu0 0.0
  %464 = vmatmul.mubr.f32.gmra.mrb[0].mxu0 %v181
  %v465 = vpop.f32.mrb[0].mxu0
  %v466 = vadd.f32 %v75, %v465
  %v467 = vpop.f32.mrb[0].mxu0
  %468 = vmatprep.mubr.f32.mxu0 0.0
  %469 = vmatmul.mubr.f32.gmra.mrb[0].mxu0 %v184
  %v470 = vpop.f32.mrb[0].mxu0
  %v471 = vadd.f32 %v75, %v470
  %v472 = vpop.f32.mrb[0].mxu0
  %473 = vmatprep.mubr.f32.mxu0 0.0
  %474 = vmatmul.mubr.f32.gmra.mrb[0].mxu0 %v187
  %v475 = vpop.f32.mrb[0].mxu0
  %v476 = vadd.f32 %v75, %v475
  %v477 = vpop.f32.mrb[0].mxu0
  %478 = vmatprep.mubr.f32.mxu0 0.0
  %479 = vmatmul.mubr.f32.gmra.mrb[0].mxu0 %v190
  %v480 = vpop.f32.mrb[0].mxu0
  %v481 = vadd.f32 %v75, %v480
  %v482 = vpop.f32.mrb[0].mxu0
  %483 = vmatprep.mubr.f32.mxu0 0.0
  %484 = vmatmul.mubr.f32.gmra.mrb[0].mxu0 %v193
  %v485 = vpop.f32.mrb[0].mxu0
  %v486 = vadd.f32 %v75, %v485
  %v487 = vpop.f32.mrb[0].mxu0
  %488 = vmatprep.mubr.f32.mxu0 0.0
  %489 = vmatmul.mubr.f32.gmra.mrb[0].mxu0 %v196
  %v490 = vpop.f32.mrb[0].mxu0
  %v491 = vadd.f32 %v75, %v490
  %v492 = vpop.f32.mrb[0].mxu0
  %493 = vmatprep.mubr.f32.mxu0 0.0
  %494 = vmatmul.mubr.f32.gmra.mrb[0].mxu0 %v199
  %v495 = vpop.f32.mrb[0].mxu0
  %v496 = vadd.f32 %v75, %v495
  %v497 = vpop.f32.mrb[0].mxu0
  %498 = vmatprep.mubr.f32.mxu0 0.0
  %499 = vmatmul.mubr.f32.gmra.mrb[0].mxu0 %v202
  %v500 = vpop.f32.mrb[0].mxu0
  %v501 = vadd.f32 %v75, %v500
  %v502 = vpop.f32.mrb[0].mxu0
  %503 = vmatprep.mubr.f32.mxu0 0.0
  %504 = vmatmul.mubr.f32.gmra.mrb[0].mxu0 %v205
  %v505 = vpop.f32.mrb[0].mxu0
  %v506 = vadd.f32 %v75, %v505
  %v507 = vpop.f32.mrb[0].mxu0
  %508 = vmatprep.mubr.f32.mxu0 0.0
  %509 = vmatmul.mubr.f32.gmra.mrb[0].mxu0 %v208
  %v510 = vpop.f32.mrb[0].mxu0
  %v511 = vadd.f32 %v75, %v510
  %v512 = vpop.f32.mrb[0].mxu0
  %513 = vmatprep.mubr.f32.mxu0 0.0
  %514 = vmatmul.mubr.f32.gmra.mrb[0].mxu0 %v211
  %v515 = vpop.f32.mrb[0].mxu0
  %v516 = vadd.f32 %v75, %v515
  %v517 = vpop.f32.mrb[0].mxu0
  %518 = vmatprep.mubr.f32.mxu0 0.0
  %519 = vmatmul.mubr.f32.gmra.mrb[0].mxu0 %v214
  %v520 = vpop.f32.mrb[0].mxu0
  %v521 = vadd.f32 %v75, %v520
  %v522 = vpop.f32.mrb[0].mxu0
  %523 = vmatprep.mubr.f32.mxu0 0.0
  %524 = vmatmul.mubr.f32.gmra.mrb[0].mxu0 %v217
  %v525 = vpop.f32.mrb[0].mxu0
  %v526 = vadd.f32 %v75, %v525
  %v527 = vpop.f32.mrb[0].mxu0
  %528 = vmatprep.mubr.f32.mxu0 0.0
  %529 = vmatmul.mubr.f32.gmra.mrb[0].mxu0 %v220
  %v530 = vpop.f32.mrb[0].mxu0
  %v531 = vadd.f32 %v75, %v530
  %v532 = vpop.f32.mrb[0].mxu0
  %533 = vmatprep.mubr.f32.mxu0 0.0
  %534 = vmatmul.mubr.f32.gmra.mrb[0].mxu0 %v223
  %v535 = vpop.f32.mrb[0].mxu0
  %v536 = vadd.f32 %v75, %v535
  %v537 = vpop.f32.mrb[0].mxu0
  %538 = vdwg.mxu0
  %vm539 = vcmp.gt.f32.partialorder %v296, 0.0
  %vm540 = vcmp.gt.f32.partialorder %v301, 0.0
  %vm541 = vcmp.gt.f32.partialorder %v306, 0.0
  %vm542 = vcmp.gt.f32.partialorder %v311, 0.0
  %vm543 = vcmp.gt.f32.partialorder %v316, 0.0
  %vm544 = vcmp.gt.f32.partialorder %v321, 0.0
  %vm545 = vcmp.gt.f32.partialorder %v326, 0.0
  %vm546 = vcmp.gt.f32.partialorder %v331, 0.0
  %vm547 = vcmp.gt.f32.partialorder %v336, 0.0
  %vm548 = vcmp.gt.f32.partialorder %v341, 0.0
  %vm549 = vcmp.gt.f32.partialorder %v346, 0.0
  %vm550 = vcmp.gt.f32.partialorder %v351, 0.0
  %vm551 = vcmp.gt.f32.partialorder %v356, 0.0
  %vm552 = vcmp.gt.f32.partialorder %v361, 0.0
  %vm553 = vcmp.gt.f32.partialorder %v366, 0.0
  %vm554 = vcmp.gt.f32.partialorder %v371, 0.0
  %vm555 = vcmp.gt.f32.partialorder %v376, 0.0
  %vm556 = vcmp.gt.f32.partialorder %v381, 0.0
  %vm557 = vcmp.gt.f32.partialorder %v386, 0.0
  %vm558 = vcmp.gt.f32.partialorder %v391, 0.0
  %vm559 = vcmp.gt.f32.partialorder %v396, 0.0
  %vm560 = vcmp.gt.f32.partialorder %v401, 0.0
  %vm561 = vcmp.gt.f32.partialorder %v406, 0.0
  %vm562 = vcmp.gt.f32.partialorder %v411, 0.0
  %vm563 = vcmp.gt.f32.partialorder %v416, 0.0
  %vm564 = vcmp.gt.f32.partialorder %v421, 0.0
  %vm565 = vcmp.gt.f32.partialorder %v426, 0.0
  %vm566 = vcmp.gt.f32.partialorder %v431, 0.0
  %vm567 = vcmp.gt.f32.partialorder %v436, 0.0
  %vm568 = vcmp.gt.f32.partialorder %v441, 0.0
  %vm569 = vcmp.gt.f32.partialorder %v446, 0.0
  %vm570 = vcmp.gt.f32.partialorder %v451, 0.0
  %vm571 = vcmp.gt.f32.partialorder %v456, 0.0
  %vm572 = vcmp.gt.f32.partialorder %v461, 0.0
  %vm573 = vcmp.gt.f32.partialorder %v466, 0.0
  %vm574 = vcmp.gt.f32.partialorder %v471, 0.0
  %vm575 = vcmp.gt.f32.partialorder %v476, 0.0
  %vm576 = vcmp.gt.f32.partialorder %v481, 0.0
  %vm577 = vcmp.gt.f32.partialorder %v486, 0.0
  %vm578 = vcmp.gt.f32.partialorder %v491, 0.0
  %vm579 = vcmp.gt.f32.partialorder %v496, 0.0
  %vm580 = vcmp.gt.f32.partialorder %v501, 0.0
  %vm581 = vcmp.gt.f32.partialorder %v506, 0.0
  %vm582 = vcmp.gt.f32.partialorder %v511, 0.0
  %vm583 = vcmp.gt.f32.partialorder %v516, 0.0
  %vm584 = vcmp.gt.f32.partialorder %v521, 0.0
  %vm585 = vcmp.gt.f32.partialorder %v526, 0.0
  %vm586 = vcmp.gt.f32.partialorder %v531, 0.0
  %vm587 = vcmp.gt.f32.partialorder %v536, 0.0
  %v588 = vmul.f32 %v296, 0.2
  %v589 = vmul.f32 %v301, 0.2
  %v590 = vmul.f32 %v306, 0.2
  %v591 = vmul.f32 %v311, 0.2
  %v592 = vmul.f32 %v316, 0.2
  %v593 = vmul.f32 %v321, 0.2
  %v594 = vmul.f32 %v326, 0.2
  %v595 = vmul.f32 %v331, 0.2
  %v596 = vmul.f32 %v336, 0.2
  %v597 = vmul.f32 %v341, 0.2
  %v598 = vmul.f32 %v346, 0.2
  %v599 = vmul.f32 %v351, 0.2
  %v600 = vmul.f32 %v356, 0.2
  %v601 = vmul.f32 %v361, 0.2
  %v602 = vmul.f32 %v366, 0.2
  %v603 = vmul.f32 %v371, 0.2
  %v604 = vmul.f32 %v376, 0.2
  %v605 = vmul.f32 %v381, 0.2
  %v606 = vmul.f32 %v386, 0.2
  %v607 = vmul.f32 %v391, 0.2
  %v608 = vmul.f32 %v396, 0.2
  %v609 = vmul.f32 %v401, 0.2
  %v610 = vmul.f32 %v406, 0.2
  %v611 = vmul.f32 %v411, 0.2
  %v612 = vmul.f32 %v416, 0.2
  %v613 = vmul.f32 %v421, 0.2
  %v614 = vmul.f32 %v426, 0.2
  %v615 = vmul.f32 %v431, 0.2
  %v616 = vmul.f32 %v436, 0.2
  %v617 = vmul.f32 %v441, 0.2
  %v618 = vmul.f32 %v446, 0.2
  %v619 = vmul.f32 %v451, 0.2
  %v620 = vmul.f32 %v456, 0.2
  %v621 = vmul.f32 %v461, 0.2
  %v622 = vmul.f32 %v466, 0.2
  %v623 = vmul.f32 %v471, 0.2
  %v624 = vmul.f32 %v476, 0.2
  %v625 = vmul.f32 %v481, 0.2
  %v626 = vmul.f32 %v486, 0.2
  %v627 = vmul.f32 %v491, 0.2
  %v628 = vmul.f32 %v496, 0.2
  %v629 = vmul.f32 %v501, 0.2
  %v630 = vmul.f32 %v506, 0.2
  %v631 = vmul.f32 %v511, 0.2
  %v632 = vmul.f32 %v516, 0.2
  %v633 = vmul.f32 %v521, 0.2
  %v634 = vmul.f32 %v526, 0.2
  %v635 = vmul.f32 %v531, 0.2
  %v636 = vmul.f32 %v536, 0.2
  %v637 = vsel %vm539, %v296, %v588
  %v638 = vsel %vm540, %v301, %v589
  %v639 = vsel %vm541, %v306, %v590
  %v640 = vsel %vm542, %v311, %v591
  %v641 = vsel %vm543, %v316, %v592
  %v642 = vsel %vm544, %v321, %v593
  %v643 = vsel %vm545, %v326, %v594
  %v644 = vsel %vm546, %v331, %v595
  %v645 = vsel %vm547, %v336, %v596
  %v646 = vsel %vm548, %v341, %v597
  %v647 = vsel %vm549, %v346, %v598
  %v648 = vsel %vm550, %v351, %v599
  %v649 = vsel %vm551, %v356, %v600
  %v650 = vsel %vm552, %v361, %v601
  %v651 = vsel %vm553, %v366, %v602
  %v652 = vsel %vm554, %v371, %v603
  %v653 = vsel %vm555, %v376, %v604
  %v654 = vsel %vm556, %v381, %v605
  %v655 = vsel %vm557, %v386, %v606
  %v656 = vsel %vm558, %v391, %v607
  %v657 = vsel %vm559, %v396, %v608
  %v658 = vsel %vm560, %v401, %v609
  %v659 = vsel %vm561, %v406, %v610
  %v660 = vsel %vm562, %v411, %v611
  %v661 = vsel %vm563, %v416, %v612
  %v662 = vsel %vm564, %v421, %v613
  %v663 = vsel %vm565, %v426, %v614
  %v664 = vsel %vm566, %v431, %v615
  %v665 = vsel %vm567, %v436, %v616
  %v666 = vsel %vm568, %v441, %v617
  %v667 = vsel %vm569, %v446, %v618
  %v668 = vsel %vm570, %v451, %v619
  %v669 = vsel %vm571, %v456, %v620
  %v670 = vsel %vm572, %v461, %v621
  %v671 = vsel %vm573, %v466, %v622
  %v672 = vsel %vm574, %v471, %v623
  %v673 = vsel %vm575, %v476, %v624
  %v674 = vsel %vm576, %v481, %v625
  %v675 = vsel %vm577, %v486, %v626
  %v676 = vsel %vm578, %v491, %v627
  %v677 = vsel %vm579, %v496, %v628
  %v678 = vsel %vm580, %v501, %v629
  %v679 = vsel %vm581, %v506, %v630
  %v680 = vsel %vm582, %v511, %v631
  %v681 = vsel %vm583, %v516, %v632
  %v682 = vsel %vm584, %v521, %v633
  %v683 = vsel %vm585, %v526, %v634
  %v684 = vsel %vm586, %v531, %v635
  %v685 = vsel %vm587, %v536, %v636
  %s686 = scalar_lea.vmem %s0, 392
  %v687 = vld [vmem:[%s686] sm:$0xff]
  %v688 = vld [vmem:[%s686 + $0x8] sm:$0xff]
  %v689 = vld [vmem:[%s686 + $0x10] sm:$0xff]
  %v690 = vld [vmem:[%s686 + $0x18] sm:$0xff]
  %v691 = vld [vmem:[%s686 + $0x20] sm:$0xff]
  %v692 = vld [vmem:[%s686 + $0x28] sm:$0xff]
  %v693 = vld [vmem:[%s686 + $0x30] sm:$0xff]
  %v694 = vld [vmem:[%s686 + $0x38] sm:$0xff]
  %v695 = vld [vmem:[%s686 + $0x40] sm:$0xff]
  %v696 = vld [vmem:[%s686 + $0x48] sm:$0xff]
  %v697 = vld [vmem:[%s686 + $0x50] sm:$0xff]
  %v698 = vld [vmem:[%s686 + $0x58] sm:$0xff]
  %v699 = vld [vmem:[%s686 + $0x60] sm:$0xff]
  %v700 = vld [vmem:[%s686 + $0x68] sm:$0xff]
  %v701 = vld [vmem:[%s686 + $0x70] sm:$0xff]
  %v702 = vld [vmem:[%s686 + $0x78] sm:$0xff]
  %v703 = vld [vmem:[%s686 + $0x80] sm:$0xff]
  %v704 = vld [vmem:[%s686 + $0x88] sm:$0xff]
  %v705 = vld [vmem:[%s686 + $0x90] sm:$0xff]
  %v706 = vld [vmem:[%s686 + $0x98] sm:$0xff]
  %v707 = vld [vmem:[%s686 + $0xa0] sm:$0xff]
  %v708 = vld [vmem:[%s686 + $0xa8] sm:$0xff]
  %v709 = vld [vmem:[%s686 + $0xb0] sm:$0xff]
  %v710 = vld [vmem:[%s686 + $0xb8] sm:$0xff]
  %v711 = vld [vmem:[%s686 + $0xc0] sm:$0xff]
  %v712 = vld [vmem:[%s686 + $0xc8] sm:$0xff]
  %v713 = vld [vmem:[%s686 + $0xd0] sm:$0xff]
  %v714 = vld [vmem:[%s686 + $0xd8] sm:$0xff]
  %v715 = vld [vmem:[%s686 + $0xe0] sm:$0xff]
  %v716 = vld [vmem:[%s686 + $0xe8] sm:$0xff]
  %v717 = vld [vmem:[%s686 + $0xf0] sm:$0xff]
  %v718 = vld [vmem:[%s686 + $0xf8] sm:$0xff]
  %v719 = vld [vmem:[%s686 + $0x100] sm:$0xff]
  %v720 = vld [vmem:[%s686 + $0x108] sm:$0xff]
  %v721 = vld [vmem:[%s686 + $0x110] sm:$0xff]
  %v722 = vld [vmem:[%s686 + $0x118] sm:$0xff]
  %v723 = vld [vmem:[%s686 + $0x120] sm:$0xff]
  %v724 = vld [vmem:[%s686 + $0x128] sm:$0xff]
  %v725 = vld [vmem:[%s686 + $0x130] sm:$0xff]
  %v726 = vld [vmem:[%s686 + $0x138] sm:$0xff]
  %v727 = vld [vmem:[%s686 + $0x140] sm:$0xff]
  %v728 = vld [vmem:[%s686 + $0x148] sm:$0xff]
  %v729 = vld [vmem:[%s686 + $0x150] sm:$0xff]
  %v730 = vld [vmem:[%s686 + $0x158] sm:$0xff]
  %v731 = vld [vmem:[%s686 + $0x160] sm:$0xff]
  %v732 = vld [vmem:[%s686 + $0x168] sm:$0xff]
  %v733 = vld [vmem:[%s686 + $0x170] sm:$0xff]
  %v734 = vld [vmem:[%s686 + $0x178] sm:$0xff]
  %v735 = vld [vmem:[%s686 + $0x180] sm:$0xff]
  %v737 = vsel %vm77, %v687, 0
  %v740 = vsel %vm77, %v688, 0
  %v743 = vsel %vm77, %v689, 0
  %v746 = vsel %vm77, %v690, 0
  %v749 = vsel %vm77, %v691, 0
  %v752 = vsel %vm77, %v692, 0
  %v755 = vsel %vm77, %v693, 0
  %v758 = vsel %vm77, %v694, 0
  %v761 = vsel %vm77, %v695, 0
  %v764 = vsel %vm77, %v696, 0
  %v767 = vsel %vm77, %v697, 0
  %v770 = vsel %vm77, %v698, 0
  %v773 = vsel %vm77, %v699, 0
  %v776 = vsel %vm77, %v700, 0
  %v779 = vsel %vm77, %v701, 0
  %v782 = vsel %vm77, %v702, 0
  %v785 = vsel %vm77, %v703, 0
  %v788 = vsel %vm77, %v704, 0
  %v791 = vsel %vm77, %v705, 0
  %v794 = vsel %vm77, %v706, 0
  %v797 = vsel %vm77, %v707, 0
  %v800 = vsel %vm77, %v708, 0
  %v803 = vsel %vm77, %v709, 0
  %v806 = vsel %vm77, %v710, 0
  %v809 = vsel %vm77, %v711, 0
  %v812 = vsel %vm77, %v712, 0
  %v815 = vsel %vm77, %v713, 0
  %v818 = vsel %vm77, %v714, 0
  %v821 = vsel %vm77, %v715, 0
  %v824 = vsel %vm77, %v716, 0
  %v827 = vsel %vm77, %v717, 0
  %v830 = vsel %vm77, %v718, 0
  %v833 = vsel %vm77, %v719, 0
  %v836 = vsel %vm77, %v720, 0
  %v839 = vsel %vm77, %v721, 0
  %v842 = vsel %vm77, %v722, 0
  %v845 = vsel %vm77, %v723, 0
  %v848 = vsel %vm77, %v724, 0
  %v851 = vsel %vm77, %v725, 0
  %v854 = vsel %vm77, %v726, 0
  %v857 = vsel %vm77, %v727, 0
  %v860 = vsel %vm77, %v728, 0
  %v863 = vsel %vm77, %v729, 0
  %v866 = vsel %vm77, %v730, 0
  %v869 = vsel %vm77, %v731, 0
  %v872 = vsel %vm77, %v732, 0
  %v875 = vsel %vm77, %v733, 0
  %v878 = vsel %vm77, %v734, 0
  %v881 = vsel %vm77, %v735, 0
  %883 = vmatprep.subr.mxu0 0.0
  %884 = vmatpush1.msra.mxu0 %v14
  %885 = vmatprep.subr.mxu0 0.0
  %886 = vmatpush1.msra.mxu0 %v15
  %887 = vmatprep.subr.mxu0 0.0
  %888 = vmatpush1.msra.mxu0 %v16
  %889 = vmatprep.subr.mxu0 0.0
  %890 = vmatpush1.msra.mxu0 %v17
  %891 = vmatprep.subr.mxu0 0.0
  %892 = vmatpush1.msra.mxu0 %v18
  %893 = vmatprep.subr.mxu0 0.0
  %894 = vmatpush1.msra.mxu0 %v19
  %895 = vmatprep.subr.mxu0 0.0
  %896 = vmatpush1.msra.mxu0 %v227
  %897 = vmatprep.subr.mxu0 0.0
  %898 = vmatpush1.msra.mxu0 0.0
  %899 = vmatprep.subr.mxu0 0.0
  %900 = vmatpush1.msra.mxu0 0.0
  %901 = vmatprep.subr.mxu0 0.0
  %902 = vmatpush1.msra.mxu0 0.0
  %903 = vmatprep.subr.mxu0 0.0
  %904 = vmatpush1.msra.mxu0 0.0
  %905 = vmatprep.subr.mxu0 0.0
  %906 = vmatpush1.msra.mxu0 0.0
  %907 = vmatprep.subr.mxu0 0.0
  %908 = vmatpush1.msra.mxu0 0.0
  %909 = vmatprep.subr.mxu0 0.0
  %910 = vmatpush1.msra.mxu0 0.0
  %911 = vmatprep.subr.mxu0 0.0
  %912 = vmatpush1.msra.mxu0 0.0
  %913 = vmatprep.subr.mxu0 0.0
  %914 = vmatpush1.msra.mxu0 0.0
  %915 = vmatprep.subr.mxu0 0.0
  %916 = vmatpush1.msra.mxu0 0.0
  %917 = vmatprep.subr.mxu0 0.0
  %918 = vmatpush1.msra.mxu0 0.0
  %919 = vmatprep.subr.mxu0 0.0
  %920 = vmatpush1.msra.mxu0 0.0
  %921 = vmatprep.subr.mxu0 0.0
  %922 = vmatpush1.msra.mxu0 0.0
  %923 = vmatprep.subr.mxu0 0.0
  %924 = vmatpush1.msra.mxu0 0.0
  %925 = vmatprep.subr.mxu0 0.0
  %926 = vmatpush1.msra.mxu0 0.0
  %927 = vmatprep.subr.mxu0 0.0
  %928 = vmatpush1.msra.mxu0 0.0
  %929 = vmatprep.subr.mxu0 0.0
  %930 = vmatpush1.msra.mxu0 0.0
  %931 = vmatprep.subr.mxu0 0.0
  %932 = vmatpush1.msra.mxu0 0.0
  %933 = vmatprep.subr.mxu0 0.0
  %934 = vmatpush1.msra.mxu0 0.0
  %935 = vmatprep.subr.mxu0 0.0
  %936 = vmatpush1.msra.mxu0 0.0
  %937 = vmatprep.subr.mxu0 0.0
  %938 = vmatpush1.msra.mxu0 0.0
  %939 = vmatprep.subr.mxu0 0.0
  %940 = vmatpush1.msra.mxu0 0.0
  %941 = vmatprep.subr.mxu0 0.0
  %942 = vmatpush1.msra.mxu0 0.0
  %943 = vmatprep.subr.mxu0 0.0
  %944 = vmatpush1.msra.mxu0 0.0
  %945 = vmatprep.subr.mxu0 0.0
  %946 = vmatpush1.msra.mxu0 0.0
  %947 = vmatprep.mubr.f32.mxu0 0.0
  %948 = vmatmul.mubr.f32.gmra.mrb[0].mxu0 %v737
  %v949 = vpop.f32.mrb[0].mxu0
  %v950 = vadd.f32 %v75, %v949
  %v951 = vpop.f32.mrb[0].mxu0
  %952 = vmatprep.mubr.f32.mxu0 0.0
  %953 = vmatmul.mubr.f32.gmra.mrb[0].mxu0 %v740
  %v954 = vpop.f32.mrb[0].mxu0
  %v955 = vadd.f32 %v75, %v954
  %v956 = vpop.f32.mrb[0].mxu0
  %957 = vmatprep.mubr.f32.mxu0 0.0
  %958 = vmatmul.mubr.f32.gmra.mrb[0].mxu0 %v743
  %v959 = vpop.f32.mrb[0].mxu0
  %v960 = vadd.f32 %v75, %v959
  %v961 = vpop.f32.mrb[0].mxu0
  %962 = vmatprep.mubr.f32.mxu0 0.0
  %963 = vmatmul.mubr.f32.gmra.mrb[0].mxu0 %v746
  %v964 = vpop.f32.mrb[0].mxu0
  %v965 = vadd.f32 %v75, %v964
  %v966 = vpop.f32.mrb[0].mxu0
  %967 = vmatprep.mubr.f32.mxu0 0.0
  %968 = vmatmul.mubr.f32.gmra.mrb[0].mxu0 %v749
  %v969 = vpop.f32.mrb[0].mxu0
  %v970 = vadd.f32 %v75, %v969
  %v971 = vpop.f32.mrb[0].mxu0
  %972 = vmatprep.mubr.f32.mxu0 0.0
  %973 = vmatmul.mubr.f32.gmra.mrb[0].mxu0 %v752
  %v974 = vpop.f32.mrb[0].mxu0
  %v975 = vadd.f32 %v75, %v974
  %v976 = vpop.f32.mrb[0].mxu0
  %977 = vmatprep.mubr.f32.mxu0 0.0
  %978 = vmatmul.mubr.f32.gmra.mrb[0].mxu0 %v755
  %v979 = vpop.f32.mrb[0].mxu0
  %v980 = vadd.f32 %v75, %v979
  %v981 = vpop.f32.mrb[0].mxu0
  %982 = vmatprep.mubr.f32.mxu0 0.0
  %983 = vmatmul.mubr.f32.gmra.mrb[0].mxu0 %v758
  %v984 = vpop.f32.mrb[0].mxu0
  %v985 = vadd.f32 %v75, %v984
  %v986 = vpop.f32.mrb[0].mxu0
  %987 = vmatprep.mubr.f32.mxu0 0.0
  %988 = vmatmul.mubr.f32.gmra.mrb[0].mxu0 %v761
  %v989 = vpop.f32.mrb[0].mxu0
  %v990 = vadd.f32 %v75, %v989
  %v991 = vpop.f32.mrb[0].mxu0
  %992 = vmatprep.mubr.f32.mxu0 0.0
  %993 = vmatmul.mubr.f32.gmra.mrb[0].mxu0 %v764
  %v994 = vpop.f32.mrb[0].mxu0
  %v995 = vadd.f32 %v75, %v994
  %v996 = vpop.f32.mrb[0].mxu0
  %997 = vmatprep.mubr.f32.mxu0 0.0
  %998 = vmatmul.mubr.f32.gmra.mrb[0].mxu0 %v767
  %v999 = vpop.f32.mrb[0].mxu0
  %v1000 = vadd.f32 %v75, %v999
  %v1001 = vpop.f32.mrb[0].mxu0
  %1002 = vmatprep.mubr.f32.mxu0 0.0
  %1003 = vmatmul.mubr.f32.gmra.mrb[0].mxu0 %v770
  %v1004 = vpop.f32.mrb[0].mxu0
  %v1005 = vadd.f32 %v75, %v1004
  %v1006 = vpop.f32.mrb[0].mxu0
  %1007 = vmatprep.mubr.f32.mxu0 0.0
  %1008 = vmatmul.mubr.f32.gmra.mrb[0].mxu0 %v773
  %v1009 = vpop.f32.mrb[0].mxu0
  %v1010 = vadd.f32 %v75, %v1009
  %v1011 = vpop.f32.mrb[0].mxu0
  %1012 = vmatprep.mubr.f32.mxu0 0.0
  %1013 = vmatmul.mubr.f32.gmra.mrb[0].mxu0 %v776
  %v1014 = vpop.f32.mrb[0].mxu0
  %v1015 = vadd.f32 %v75, %v1014
  %v1016 = vpop.f32.mrb[0].mxu0
  %1017 = vmatprep.mubr.f32.mxu0 0.0
  %1018 = vmatmul.mubr.f32.gmra.mrb[0].mxu0 %v779
  %v1019 = vpop.f32.mrb[0].mxu0
  %v1020 = vadd.f32 %v75, %v1019
  %v1021 = vpop.f32.mrb[0].mxu0
  %1022 = vmatprep.mubr.f32.mxu0 0.0
  %1023 = vmatmul.mubr.f32.gmra.mrb[0].mxu0 %v782
  %v1024 = vpop.f32.mrb[0].mxu0
  %v1025 = vadd.f32 %v75, %v1024
  %v1026 = vpop.f32.mrb[0].mxu0
  %1027 = vmatprep.mubr.f32.mxu0 0.0
  %1028 = vmatmul.mubr.f32.gmra.mrb[0].mxu0 %v785
  %v1029 = vpop.f32.mrb[0].mxu0
  %v1030 = vadd.f32 %v75, %v1029
  %v1031 = vpop.f32.mrb[0].mxu0
  %1032 = vmatprep.mubr.f32.mxu0 0.0
  %1033 = vmatmul.mubr.f32.gmra.mrb[0].mxu0 %v788
  %v1034 = vpop.f32.mrb[0].mxu0
  %v1035 = vadd.f32 %v75, %v1034
  %v1036 = vpop.f32.mrb[0].mxu0
  %1037 = vmatprep.mubr.f32.mxu0 0.0
  %1038 = vmatmul.mubr.f32.gmra.mrb[0].mxu0 %v791
  %v1039 = vpop.f32.mrb[0].mxu0
  %v1040 = vadd.f32 %v75, %v1039
  %v1041 = vpop.f32.mrb[0].mxu0
  %1042 = vmatprep.mubr.f32.mxu0 0.0
  %1043 = vmatmul.mubr.f32.gmra.mrb[0].mxu0 %v794
  %v1044 = vpop.f32.mrb[0].mxu0
  %v1045 = vadd.f32 %v75, %v1044
  %v1046 = vpop.f32.mrb[0].mxu0
  %1047 = vmatprep.mubr.f32.mxu0 0.0
  %1048 = vmatmul.mubr.f32.gmra.mrb[0].mxu0 %v797
  %v1049 = vpop.f32.mrb[0].mxu0
  %v1050 = vadd.f32 %v75, %v1049
  %v1051 = vpop.f32.mrb[0].mxu0
  %1052 = vmatprep.mubr.f32.mxu0 0.0
  %1053 = vmatmul.mubr.f32.gmra.mrb[0].mxu0 %v800
  %v1054 = vpop.f32.mrb[0].mxu0
  %v1055 = vadd.f32 %v75, %v1054
  %v1056 = vpop.f32.mrb[0].mxu0
  %1057 = vmatprep.mubr.f32.mxu0 0.0
  %1058 = vmatmul.mubr.f32.gmra.mrb[0].mxu0 %v803
  %v1059 = vpop.f32.mrb[0].mxu0
  %v1060 = vadd.f32 %v75, %v1059
  %v1061 = vpop.f32.mrb[0].mxu0
  %1062 = vmatprep.mubr.f32.mxu0 0.0
  %1063 = vmatmul.mubr.f32.gmra.mrb[0].mxu0 %v806
  %v1064 = vpop.f32.mrb[0].mxu0
  %v1065 = vadd.f32 %v75, %v1064
  %v1066 = vpop.f32.mrb[0].mxu0
  %1067 = vmatprep.mubr.f32.mxu0 0.0
  %1068 = vmatmul.mubr.f32.gmra.mrb[0].mxu0 %v809
  %v1069 = vpop.f32.mrb[0].mxu0
  %v1070 = vadd.f32 %v75, %v1069
  %v1071 = vpop.f32.mrb[0].mxu0
  %1072 = vmatprep.mubr.f32.mxu0 0.0
  %1073 = vmatmul.mubr.f32.gmra.mrb[0].mxu0 %v812
  %v1074 = vpop.f32.mrb[0].mxu0
  %v1075 = vadd.f32 %v75, %v1074
  %v1076 = vpop.f32.mrb[0].mxu0
  %1077 = vmatprep.mubr.f32.mxu0 0.0
  %1078 = vmatmul.mubr.f32.gmra.mrb[0].mxu0 %v815
  %v1079 = vpop.f32.mrb[0].mxu0
  %v1080 = vadd.f32 %v75, %v1079
  %v1081 = vpop.f32.mrb[0].mxu0
  %1082 = vmatprep.mubr.f32.mxu0 0.0
  %1083 = vmatmul.mubr.f32.gmra.mrb[0].mxu0 %v818
  %v1084 = vpop.f32.mrb[0].mxu0
  %v1085 = vadd.f32 %v75, %v1084
  %v1086 = vpop.f32.mrb[0].mxu0
  %1087 = vmatprep.mubr.f32.mxu0 0.0
  %1088 = vmatmul.mubr.f32.gmra.mrb[0].mxu0 %v821
  %v1089 = vpop.f32.mrb[0].mxu0
  %v1090 = vadd.f32 %v75, %v1089
  %v1091 = vpop.f32.mrb[0].mxu0
  %1092 = vmatprep.mubr.f32.mxu0 0.0
  %1093 = vmatmul.mubr.f32.gmra.mrb[0].mxu0 %v824
  %v1094 = vpop.f32.mrb[0].mxu0
  %v1095 = vadd.f32 %v75, %v1094
  %v1096 = vpop.f32.mrb[0].mxu0
  %1097 = vmatprep.mubr.f32.mxu0 0.0
  %1098 = vmatmul.mubr.f32.gmra.mrb[0].mxu0 %v827
  %v1099 = vpop.f32.mrb[0].mxu0
  %v1100 = vadd.f32 %v75, %v1099
  %v1101 = vpop.f32.mrb[0].mxu0
  %1102 = vmatprep.mubr.f32.mxu0 0.0
  %1103 = vmatmul.mubr.f32.gmra.mrb[0].mxu0 %v830
  %v1104 = vpop.f32.mrb[0].mxu0
  %v1105 = vadd.f32 %v75, %v1104
  %v1106 = vpop.f32.mrb[0].mxu0
  %1107 = vmatprep.mubr.f32.mxu0 0.0
  %1108 = vmatmul.mubr.f32.gmra.mrb[0].mxu0 %v833
  %v1109 = vpop.f32.mrb[0].mxu0
  %v1110 = vadd.f32 %v75, %v1109
  %v1111 = vpop.f32.mrb[0].mxu0
  %1112 = vmatprep.mubr.f32.mxu0 0.0
  %1113 = vmatmul.mubr.f32.gmra.mrb[0].mxu0 %v836
  %v1114 = vpop.f32.mrb[0].mxu0
  %v1115 = vadd.f32 %v75, %v1114
  %v1116 = vpop.f32.mrb[0].mxu0
  %1117 = vmatprep.mubr.f32.mxu0 0.0
  %1118 = vmatmul.mubr.f32.gmra.mrb[0].mxu0 %v839
  %v1119 = vpop.f32.mrb[0].mxu0
  %v1120 = vadd.f32 %v75, %v1119
  %v1121 = vpop.f32.mrb[0].mxu0
  %1122 = vmatprep.mubr.f32.mxu0 0.0
  %1123 = vmatmul.mubr.f32.gmra.mrb[0].mxu0 %v842
  %v1124 = vpop.f32.mrb[0].mxu0
  %v1125 = vadd.f32 %v75, %v1124
  %v1126 = vpop.f32.mrb[0].mxu0
  %1127 = vmatprep.mubr.f32.mxu0 0.0
  %1128 = vmatmul.mubr.f32.gmra.mrb[0].mxu0 %v845
  %v1129 = vpop.f32.mrb[0].mxu0
  %v1130 = vadd.f32 %v75, %v1129
  %v1131 = vpop.f32.mrb[0].mxu0
  %1132 = vmatprep.mubr.f32.mxu0 0.0
  %1133 = vmatmul.mubr.f32.gmra.mrb[0].mxu0 %v848
  %v1134 = vpop.f32.mrb[0].mxu0
  %v1135 = vadd.f32 %v75, %v1134
  %v1136 = vpop.f32.mrb[0].mxu0
  %1137 = vmatprep.mubr.f32.mxu0 0.0
  %1138 = vmatmul.mubr.f32.gmra.mrb[0].mxu0 %v851
  %v1139 = vpop.f32.mrb[0].mxu0
  %v1140 = vadd.f32 %v75, %v1139
  %v1141 = vpop.f32.mrb[0].mxu0
  %1142 = vmatprep.mubr.f32.mxu0 0.0
  %1143 = vmatmul.mubr.f32.gmra.mrb[0].mxu0 %v854
  %v1144 = vpop.f32.mrb[0].mxu0
  %v1145 = vadd.f32 %v75, %v1144
  %v1146 = vpop.f32.mrb[0].mxu0
  %1147 = vmatprep.mubr.f32.mxu0 0.0
  %1148 = vmatmul.mubr.f32.gmra.mrb[0].mxu0 %v857
  %v1149 = vpop.f32.mrb[0].mxu0
  %v1150 = vadd.f32 %v75, %v1149
  %v1151 = vpop.f32.mrb[0].mxu0
  %1152 = vmatprep.mubr.f32.mxu0 0.0
  %1153 = vmatmul.mubr.f32.gmra.mrb[0].mxu0 %v860
  %v1154 = vpop.f32.mrb[0].mxu0
  %v1155 = vadd.f32 %v75, %v1154
  %v1156 = vpop.f32.mrb[0].mxu0
  %1157 = vmatprep.mubr.f32.mxu0 0.0
  %1158 = vmatmul.mubr.f32.gmra.mrb[0].mxu0 %v863
  %v1159 = vpop.f32.mrb[0].mxu0
  %v1160 = vadd.f32 %v75, %v1159
  %v1161 = vpop.f32.mrb[0].mxu0
  %1162 = vmatprep.mubr.f32.mxu0 0.0
  %1163 = vmatmul.mubr.f32.gmra.mrb[0].mxu0 %v866
  %v1164 = vpop.f32.mrb[0].mxu0
  %v1165 = vadd.f32 %v75, %v1164
  %v1166 = vpop.f32.mrb[0].mxu0
  %1167 = vmatprep.mubr.f32.mxu0 0.0
  %1168 = vmatmul.mubr.f32.gmra.mrb[0].mxu0 %v869
  %v1169 = vpop.f32.mrb[0].mxu0
  %v1170 = vadd.f32 %v75, %v1169
  %v1171 = vpop.f32.mrb[0].mxu0
  %1172 = vmatprep.mubr.f32.mxu0 0.0
  %1173 = vmatmul.mubr.f32.gmra.mrb[0].mxu0 %v872
  %v1174 = vpop.f32.mrb[0].mxu0
  %v1175 = vadd.f32 %v75, %v1174
  %v1176 = vpop.f32.mrb[0].mxu0
  %1177 = vmatprep.mubr.f32.mxu0 0.0
  %1178 = vmatmul.mubr.f32.gmra.mrb[0].mxu0 %v875
  %v1179 = vpop.f32.mrb[0].mxu0
  %v1180 = vadd.f32 %v75, %v1179
  %v1181 = vpop.f32.mrb[0].mxu0
  %1182 = vmatprep.mubr.f32.mxu0 0.0
  %1183 = vmatmul.mubr.f32.gmra.mrb[0].mxu0 %v878
  %v1184 = vpop.f32.mrb[0].mxu0
  %v1185 = vadd.f32 %v75, %v1184
  %v1186 = vpop.f32.mrb[0].mxu0
  %1187 = vmatprep.mubr.f32.mxu0 0.0
  %1188 = vmatmul.mubr.f32.gmra.mrb[0].mxu0 %v881
  %v1189 = vpop.f32.mrb[0].mxu0
  %v1190 = vadd.f32 %v75, %v1189
  %v1191 = vpop.f32.mrb[0].mxu0
  %1192 = vdwg.mxu0
  %vm1193 = vcmp.gt.f32.partialorder %v950, 0.0
  %vm1194 = vcmp.gt.f32.partialorder %v955, 0.0
  %vm1195 = vcmp.gt.f32.partialorder %v960, 0.0
  %vm1196 = vcmp.gt.f32.partialorder %v965, 0.0
  %vm1197 = vcmp.gt.f32.partialorder %v970, 0.0
  %vm1198 = vcmp.gt.f32.partialorder %v975, 0.0
  %vm1199 = vcmp.gt.f32.partialorder %v980, 0.0
  %vm1200 = vcmp.gt.f32.partialorder %v985, 0.0
  %vm1201 = vcmp.gt.f32.partialorder %v990, 0.0
  %vm1202 = vcmp.gt.f32.partialorder %v995, 0.0
  %vm1203 = vcmp.gt.f32.partialorder %v1000, 0.0
  %vm1204 = vcmp.gt.f32.partialorder %v1005, 0.0
  %vm1205 = vcmp.gt.f32.partialorder %v1010, 0.0
  %vm1206 = vcmp.gt.f32.partialorder %v1015, 0.0
  %vm1207 = vcmp.gt.f32.partialorder %v1020, 0.0
  %vm1208 = vcmp.gt.f32.partialorder %v1025, 0.0
  %vm1209 = vcmp.gt.f32.partialorder %v1030, 0.0
  %vm1210 = vcmp.gt.f32.partialorder %v1035, 0.0
  %vm1211 = vcmp.gt.f32.partialorder %v1040, 0.0
  %vm1212 = vcmp.gt.f32.partialorder %v1045, 0.0
  %vm1213 = vcmp.gt.f32.partialorder %v1050, 0.0
  %vm1214 = vcmp.gt.f32.partialorder %v1055, 0.0
  %vm1215 = vcmp.gt.f32.partialorder %v1060, 0.0
  %vm1216 = vcmp.gt.f32.partialorder %v1065, 0.0
  %vm1217 = vcmp.gt.f32.partialorder %v1070, 0.0
  %vm1218 = vcmp.gt.f32.partialorder %v1075, 0.0
  %vm1219 = vcmp.gt.f32.partialorder %v1080, 0.0
  %vm1220 = vcmp.gt.f32.partialorder %v1085, 0.0
  %vm1221 = vcmp.gt.f32.partialorder %v1090, 0.0
  %vm1222 = vcmp.gt.f32.partialorder %v1095, 0.0
  %vm1223 = vcmp.gt.f32.partialorder %v1100, 0.0
  %vm1224 = vcmp.gt.f32.partialorder %v1105, 0.0
  %vm1225 = vcmp.gt.f32.partialorder %v1110, 0.0
  %vm1226 = vcmp.gt.f32.partialorder %v1115, 0.0
  %vm1227 = vcmp.gt.f32.partialorder %v1120, 0.0
  %vm1228 = vcmp.gt.f32.partialorder %v1125, 0.0
  %vm1229 = vcmp.gt.f32.partialorder %v1130, 0.0
  %vm1230 = vcmp.gt.f32.partialorder %v1135, 0.0
  %vm1231 = vcmp.gt.f32.partialorder %v1140, 0.0
  %vm1232 = vcmp.gt.f32.partialorder %v1145, 0.0
  %vm1233 = vcmp.gt.f32.partialorder %v1150, 0.0
  %vm1234 = vcmp.gt.f32.partialorder %v1155, 0.0
  %vm1235 = vcmp.gt.f32.partialorder %v1160, 0.0
  %vm1236 = vcmp.gt.f32.partialorder %v1165, 0.0
  %vm1237 = vcmp.gt.f32.partialorder %v1170, 0.0
  %vm1238 = vcmp.gt.f32.partialorder %v1175, 0.0
  %vm1239 = vcmp.gt.f32.partialorder %v1180, 0.0
  %vm1240 = vcmp.gt.f32.partialorder %v1185, 0.0
  %vm1241 = vcmp.gt.f32.partialorder %v1190, 0.0
  %v1242 = vmul.f32 %v950, 0.2
  %v1243 = vmul.f32 %v955, 0.2
  %v1244 = vmul.f32 %v960, 0.2
  %v1245 = vmul.f32 %v965, 0.2
  %v1246 = vmul.f32 %v970, 0.2
  %v1247 = vmul.f32 %v975, 0.2
  %v1248 = vmul.f32 %v980, 0.2
  %v1249 = vmul.f32 %v985, 0.2
  %v1250 = vmul.f32 %v990, 0.2
  %v1251 = vmul.f32 %v995, 0.2
  %v1252 = vmul.f32 %v1000, 0.2
  %v1253 = vmul.f32 %v1005, 0.2
  %v1254 = vmul.f32 %v1010, 0.2
  %v1255 = vmul.f32 %v1015, 0.2
  %v1256 = vmul.f32 %v1020, 0.2
  %v1257 = vmul.f32 %v1025, 0.2
  %v1258 = vmul.f32 %v1030, 0.2
  %v1259 = vmul.f32 %v1035, 0.2
  %v1260 = vmul.f32 %v1040, 0.2
  %v1261 = vmul.f32 %v1045, 0.2
  %v1262 = vmul.f32 %v1050, 0.2
  %v1263 = vmul.f32 %v1055, 0.2
  %v1264 = vmul.f32 %v1060, 0.2
  %v1265 = vmul.f32 %v1065, 0.2
  %v1266 = vmul.f32 %v1070, 0.2
  %v1267 = vmul.f32 %v1075, 0.2
  %v1268 = vmul.f32 %v1080, 0.2
  %v1269 = vmul.f32 %v1085, 0.2
  %v1270 = vmul.f32 %v1090, 0.2
  %v1271 = vmul.f32 %v1095, 0.2
  %v1272 = vmul.f32 %v1100, 0.2
  %v1273 = vmul.f32 %v1105, 0.2
  %v1274 = vmul.f32 %v1110, 0.2
  %v1275 = vmul.f32 %v1115, 0.2
  %v1276 = vmul.f32 %v1120, 0.2
  %v1277 = vmul.f32 %v1125, 0.2
  %v1278 = vmul.f32 %v1130, 0.2
  %v1279 = vmul.f32 %v1135, 0.2
  %v1280 = vmul.f32 %v1140, 0.2
  %v1281 = vmul.f32 %v1145, 0.2
  %v1282 = vmul.f32 %v1150, 0.2
  %v1283 = vmul.f32 %v1155, 0.2
  %v1284 = vmul.f32 %v1160, 0.2
  %v1285 = vmul.f32 %v1165, 0.2
  %v1286 = vmul.f32 %v1170, 0.2
  %v1287 = vmul.f32 %v1175, 0.2
  %v1288 = vmul.f32 %v1180, 0.2
  %v1289 = vmul.f32 %v1185, 0.2
  %v1290 = vmul.f32 %v1190, 0.2
  %v1291 = vsel %vm1193, %v950, %v1242
  %v1292 = vsel %vm1194, %v955, %v1243
  %v1293 = vsel %vm1195, %v960, %v1244
  %v1294 = vsel %vm1196, %v965, %v1245
  %v1295 = vsel %vm1197, %v970, %v1246
  %v1296 = vsel %vm1198, %v975, %v1247
  %v1297 = vsel %vm1199, %v980, %v1248
  %v1298 = vsel %vm1200, %v985, %v1249
  %v1299 = vsel %vm1201, %v990, %v1250
  %v1300 = vsel %vm1202, %v995, %v1251
  %v1301 = vsel %vm1203, %v1000, %v1252
  %v1302 = vsel %vm1204, %v1005, %v1253
  %v1303 = vsel %vm1205, %v1010, %v1254
  %v1304 = vsel %vm1206, %v1015, %v1255
  %v1305 = vsel %vm1207, %v1020, %v1256
  %v1306 = vsel %vm1208, %v1025, %v1257
  %v1307 = vsel %vm1209, %v1030, %v1258
  %v1308 = vsel %vm1210, %v1035, %v1259
  %v1309 = vsel %vm1211, %v1040, %v1260
  %v1310 = vsel %vm1212, %v1045, %v1261
  %v1311 = vsel %vm1213, %v1050, %v1262
  %v1312 = vsel %vm1214, %v1055, %v1263
  %v1313 = vsel %vm1215, %v1060, %v1264
  %v1314 = vsel %vm1216, %v1065, %v1265
  %v1315 = vsel %vm1217, %v1070, %v1266
  %v1316 = vsel %vm1218, %v1075, %v1267
  %v1317 = vsel %vm1219, %v1080, %v1268
  %v1318 = vsel %vm1220, %v1085, %v1269
  %v1319 = vsel %vm1221, %v1090, %v1270
  %v1320 = vsel %vm1222, %v1095, %v1271
  %v1321 = vsel %vm1223, %v1100, %v1272
  %v1322 = vsel %vm1224, %v1105, %v1273
  %v1323 = vsel %vm1225, %v1110, %v1274
  %v1324 = vsel %vm1226, %v1115, %v1275
  %v1325 = vsel %vm1227, %v1120, %v1276
  %v1326 = vsel %vm1228, %v1125, %v1277
  %v1327 = vsel %vm1229, %v1130, %v1278
  %v1328 = vsel %vm1230, %v1135, %v1279
  %v1329 = vsel %vm1231, %v1140, %v1280
  %v1330 = vsel %vm1232, %v1145, %v1281
  %v1331 = vsel %vm1233, %v1150, %v1282
  %v1332 = vsel %vm1234, %v1155, %v1283
  %v1333 = vsel %vm1235, %v1160, %v1284
  %v1334 = vsel %vm1236, %v1165, %v1285
  %v1335 = vsel %vm1237, %v1170, %v1286
  %v1336 = vsel %vm1238, %v1175, %v1287
  %v1337 = vsel %vm1239, %v1180, %v1288
  %v1338 = vsel %vm1240, %v1185, %v1289
  %v1339 = vsel %vm1241, %v1190, %v1290
  %v1340 = vmax.f32 %v637, %v1291
  %v1341 = vmax.f32 %v638, %v1292
  %v1342 = vmax.f32 %v639, %v1293
  %v1343 = vmax.f32 %v640, %v1294
  %v1344 = vmax.f32 %v641, %v1295
  %v1345 = vmax.f32 %v642, %v1296
  %v1346 = vmax.f32 %v643, %v1297
  %v1347 = vmax.f32 %v644, %v1298
  %v1348 = vmax.f32 %v645, %v1299
  %v1349 = vmax.f32 %v646, %v1300
  %v1350 = vmax.f32 %v647, %v1301
  %v1351 = vmax.f32 %v648, %v1302
  %v1352 = vmax.f32 %v649, %v1303
  %v1353 = vmax.f32 %v650, %v1304
  %v1354 = vmax.f32 %v651, %v1305
  %v1355 = vmax.f32 %v652, %v1306
  %v1356 = vmax.f32 %v653, %v1307
  %v1357 = vmax.f32 %v654, %v1308
  %v1358 = vmax.f32 %v655, %v1309
  %v1359 = vmax.f32 %v656, %v1310
  %v1360 = vmax.f32 %v657, %v1311
  %v1361 = vmax.f32 %v658, %v1312
  %v1362 = vmax.f32 %v659, %v1313
  %v1363 = vmax.f32 %v660, %v1314
  %v1364 = vmax.f32 %v661, %v1315
  %v1365 = vmax.f32 %v662, %v1316
  %v1366 = vmax.f32 %v663, %v1317
  %v1367 = vmax.f32 %v664, %v1318
  %v1368 = vmax.f32 %v665, %v1319
  %v1369 = vmax.f32 %v666, %v1320
  %v1370 = vmax.f32 %v667, %v1321
  %v1371 = vmax.f32 %v668, %v1322
  %v1372 = vmax.f32 %v669, %v1323
  %v1373 = vmax.f32 %v670, %v1324
  %v1374 = vmax.f32 %v671, %v1325
  %v1375 = vmax.f32 %v672, %v1326
  %v1376 = vmax.f32 %v673, %v1327
  %v1377 = vmax.f32 %v674, %v1328
  %v1378 = vmax.f32 %v675, %v1329
  %v1379 = vmax.f32 %v676, %v1330
  %v1380 = vmax.f32 %v677, %v1331
  %v1381 = vmax.f32 %v678, %v1332
  %v1382 = vmax.f32 %v679, %v1333
  %v1383 = vmax.f32 %v680, %v1334
  %v1384 = vmax.f32 %v681, %v1335
  %v1385 = vmax.f32 %v682, %v1336
  %v1386 = vmax.f32 %v683, %v1337
  %v1387 = vmax.f32 %v684, %v1338
  %v1388 = vmax.f32 %v685, %v1339
  %s1389 = scalar_lea.vmem %s0, 784
  %v1390 = vld [vmem:[%s1389] sm:$0xff]
  %v1391 = vld [vmem:[%s1389 + $0x8] sm:$0xff]
  %v1392 = vld [vmem:[%s1389 + $0x10] sm:$0xff]
  %v1393 = vld [vmem:[%s1389 + $0x18] sm:$0xff]
  %v1394 = vld [vmem:[%s1389 + $0x20] sm:$0xff]
  %v1395 = vld [vmem:[%s1389 + $0x28] sm:$0xff]
  %v1396 = vld [vmem:[%s1389 + $0x30] sm:$0xff]
  %v1397 = vld [vmem:[%s1389 + $0x38] sm:$0xff]
  %v1398 = vld [vmem:[%s1389 + $0x40] sm:$0xff]
  %v1399 = vld [vmem:[%s1389 + $0x48] sm:$0xff]
  %v1400 = vld [vmem:[%s1389 + $0x50] sm:$0xff]
  %v1401 = vld [vmem:[%s1389 + $0x58] sm:$0xff]
  %v1402 = vld [vmem:[%s1389 + $0x60] sm:$0xff]
  %v1403 = vld [vmem:[%s1389 + $0x68] sm:$0xff]
  %v1404 = vld [vmem:[%s1389 + $0x70] sm:$0xff]
  %v1405 = vld [vmem:[%s1389 + $0x78] sm:$0xff]
  %v1406 = vld [vmem:[%s1389 + $0x80] sm:$0xff]
  %v1407 = vld [vmem:[%s1389 + $0x88] sm:$0xff]
  %v1408 = vld [vmem:[%s1389 + $0x90] sm:$0xff]
  %v1409 = vld [vmem:[%s1389 + $0x98] sm:$0xff]
  %v1410 = vld [vmem:[%s1389 + $0xa0] sm:$0xff]
  %v1411 = vld [vmem:[%s1389 + $0xa8] sm:$0xff]
  %v1412 = vld [vmem:[%s1389 + $0xb0] sm:$0xff]
  %v1413 = vld [vmem:[%s1389 + $0xb8] sm:$0xff]
  %v1414 = vld [vmem:[%s1389 + $0xc0] sm:$0xff]
  %v1415 = vld [vmem:[%s1389 + $0xc8] sm:$0xff]
  %v1416 = vld [vmem:[%s1389 + $0xd0] sm:$0xff]
  %v1417 = vld [vmem:[%s1389 + $0xd8] sm:$0xff]
  %v1418 = vld [vmem:[%s1389 + $0xe0] sm:$0xff]
  %v1419 = vld [vmem:[%s1389 + $0xe8] sm:$0xff]
  %v1420 = vld [vmem:[%s1389 + $0xf0] sm:$0xff]
  %v1421 = vld [vmem:[%s1389 + $0xf8] sm:$0xff]
  %v1422 = vld [vmem:[%s1389 + $0x100] sm:$0xff]
  %v1423 = vld [vmem:[%s1389 + $0x108] sm:$0xff]
  %v1424 = vld [vmem:[%s1389 + $0x110] sm:$0xff]
  %v1425 = vld [vmem:[%s1389 + $0x118] sm:$0xff]
  %v1426 = vld [vmem:[%s1389 + $0x120] sm:$0xff]
  %v1427 = vld [vmem:[%s1389 + $0x128] sm:$0xff]
  %v1428 = vld [vmem:[%s1389 + $0x130] sm:$0xff]
  %v1429 = vld [vmem:[%s1389 + $0x138] sm:$0xff]
  %v1430 = vld [vmem:[%s1389 + $0x140] sm:$0xff]
  %v1431 = vld [vmem:[%s1389 + $0x148] sm:$0xff]
  %v1432 = vld [vmem:[%s1389 + $0x150] sm:$0xff]
  %v1433 = vld [vmem:[%s1389 + $0x158] sm:$0xff]
  %v1434 = vld [vmem:[%s1389 + $0x160] sm:$0xff]
  %v1435 = vld [vmem:[%s1389 + $0x168] sm:$0xff]
  %v1436 = vld [vmem:[%s1389 + $0x170] sm:$0xff]
  %v1437 = vld [vmem:[%s1389 + $0x178] sm:$0xff]
  %v1438 = vld [vmem:[%s1389 + $0x180] sm:$0xff]
  %v1440 = vsel %vm77, %v1390, 0
  %v1443 = vsel %vm77, %v1391, 0
  %v1446 = vsel %vm77, %v1392, 0
  %v1449 = vsel %vm77, %v1393, 0
  %v1452 = vsel %vm77, %v1394, 0
  %v1455 = vsel %vm77, %v1395, 0
  %v1458 = vsel %vm77, %v1396, 0
  %v1461 = vsel %vm77, %v1397, 0
  %v1464 = vsel %vm77, %v1398, 0
  %v1467 = vsel %vm77, %v1399, 0
  %v1470 = vsel %vm77, %v1400, 0
  %v1473 = vsel %vm77, %v1401, 0
  %v1476 = vsel %vm77, %v1402, 0
  %v1479 = vsel %vm77, %v1403, 0
  %v1482 = vsel %vm77, %v1404, 0
  %v1485 = vsel %vm77, %v1405, 0
  %v1488 = vsel %vm77, %v1406, 0
  %v1491 = vsel %vm77, %v1407, 0
  %v1494 = vsel %vm77, %v1408, 0
  %v1497 = vsel %vm77, %v1409, 0
  %v1500 = vsel %vm77, %v1410, 0
  %v1503 = vsel %vm77, %v1411, 0
  %v1506 = vsel %vm77, %v1412, 0
  %v1509 = vsel %vm77, %v1413, 0
  %v1512 = vsel %vm77, %v1414, 0
  %v1515 = vsel %vm77, %v1415, 0
  %v1518 = vsel %vm77, %v1416, 0
  %v1521 = vsel %vm77, %v1417, 0
  %v1524 = vsel %vm77, %v1418, 0
  %v1527 = vsel %vm77, %v1419, 0
  %v1530 = vsel %vm77, %v1420, 0
  %v1533 = vsel %vm77, %v1421, 0
  %v1536 = vsel %vm77, %v1422, 0
  %v1539 = vsel %vm77, %v1423, 0
  %v1542 = vsel %vm77, %v1424, 0
  %v1545 = vsel %vm77, %v1425, 0
  %v1548 = vsel %vm77, %v1426, 0
  %v1551 = vsel %vm77, %v1427, 0
  %v1554 = vsel %vm77, %v1428, 0
  %v1557 = vsel %vm77, %v1429, 0
  %v1560 = vsel %vm77, %v1430, 0
  %v1563 = vsel %vm77, %v1431, 0
  %v1566 = vsel %vm77, %v1432, 0
  %v1569 = vsel %vm77, %v1433, 0
  %v1572 = vsel %vm77, %v1434, 0
  %v1575 = vsel %vm77, %v1435, 0
  %v1578 = vsel %vm77, %v1436, 0
  %v1581 = vsel %vm77, %v1437, 0
  %v1584 = vsel %vm77, %v1438, 0
  %1586 = vmatprep.subr.mxu0 0.0
  %1587 = vmatpush1.msra.mxu0 %v14
  %1588 = vmatprep.subr.mxu0 0.0
  %1589 = vmatpush1.msra.mxu0 %v15
  %1590 = vmatprep.subr.mxu0 0.0
  %1591 = vmatpush1.msra.mxu0 %v16
  %1592 = vmatprep.subr.mxu0 0.0
  %1593 = vmatpush1.msra.mxu0 %v17
  %1594 = vmatprep.subr.mxu0 0.0
  %1595 = vmatpush1.msra.mxu0 %v18
  %1596 = vmatprep.subr.mxu0 0.0
  %1597 = vmatpush1.msra.mxu0 %v19
  %1598 = vmatprep.subr.mxu0 0.0
  %1599 = vmatpush1.msra.mxu0 %v227
  %1600 = vmatprep.subr.mxu0 0.0
  %1601 = vmatpush1.msra.mxu0 0.0
  %1602 = vmatprep.subr.mxu0 0.0
  %1603 = vmatpush1.msra.mxu0 0.0
  %1604 = vmatprep.subr.mxu0 0.0
  %1605 = vmatpush1.msra.mxu0 0.0
  %1606 = vmatprep.subr.mxu0 0.0
  %1607 = vmatpush1.msra.mxu0 0.0
  %1608 = vmatprep.subr.mxu0 0.0
  %1609 = vmatpush1.msra.mxu0 0.0
  %1610 = vmatprep.subr.mxu0 0.0
  %1611 = vmatpush1.msra.mxu0 0.0
  %1612 = vmatprep.subr.mxu0 0.0
  %1613 = vmatpush1.msra.mxu0 0.0
  %1614 = vmatprep.subr.mxu0 0.0
  %1615 = vmatpush1.msra.mxu0 0.0
  %1616 = vmatprep.subr.mxu0 0.0
  %1617 = vmatpush1.msra.mxu0 0.0
  %1618 = vmatprep.subr.mxu0 0.0
  %1619 = vmatpush1.msra.mxu0 0.0
  %1620 = vmatprep.subr.mxu0 0.0
  %1621 = vmatpush1.msra.mxu0 0.0
  %1622 = vmatprep.subr.mxu0 0.0
  %1623 = vmatpush1.msra.mxu0 0.0
  %1624 = vmatprep.subr.mxu0 0.0
  %1625 = vmatpush1.msra.mxu0 0.0
  %1626 = vmatprep.subr.mxu0 0.0
  %1627 = vmatpush1.msra.mxu0 0.0
  %1628 = vmatprep.subr.mxu0 0.0
  %1629 = vmatpush1.msra.mxu0 0.0
  %1630 = vmatprep.subr.mxu0 0.0
  %1631 = vmatpush1.msra.mxu0 0.0
  %1632 = vmatprep.subr.mxu0 0.0
  %1633 = vmatpush1.msra.mxu0 0.0
  %1634 = vmatprep.subr.mxu0 0.0
  %1635 = vmatpush1.msra.mxu0 0.0
  %1636 = vmatprep.subr.mxu0 0.0
  %1637 = vmatpush1.msra.mxu0 0.0
  %1638 = vmatprep.subr.mxu0 0.0
  %1639 = vmatpush1.msra.mxu0 0.0
  %1640 = vmatprep.subr.mxu0 0.0
  %1641 = vmatpush1.msra.mxu0 0.0
  %1642 = vmatprep.subr.mxu0 0.0
  %1643 = vmatpush1.msra.mxu0 0.0
  %1644 = vmatprep.subr.mxu0 0.0
  %1645 = vmatpush1.msra.mxu0 0.0
  %1646 = vmatprep.subr.mxu0 0.0
  %1647 = vmatpush1.msra.mxu0 0.0
  %1648 = vmatprep.subr.mxu0 0.0
  %1649 = vmatpush1.msra.mxu0 0.0
  %1650 = vmatprep.mubr.f32.mxu0 0.0
  %1651 = vmatmul.mubr.f32.gmra.mrb[0].mxu0 %v1440
  %v1652 = vpop.f32.mrb[0].mxu0
  %v1653 = vadd.f32 %v75, %v1652
  %v1654 = vpop.f32.mrb[0].mxu0
  %1655 = vmatprep.mubr.f32.mxu0 0.0
  %1656 = vmatmul.mubr.f32.gmra.mrb[0].mxu0 %v1443
  %v1657 = vpop.f32.mrb[0].mxu0
  %v1658 = vadd.f32 %v75, %v1657
  %v1659 = vpop.f32.mrb[0].mxu0
  %1660 = vmatprep.mubr.f32.mxu0 0.0
  %1661 = vmatmul.mubr.f32.gmra.mrb[0].mxu0 %v1446
  %v1662 = vpop.f32.mrb[0].mxu0
  %v1663 = vadd.f32 %v75, %v1662
  %v1664 = vpop.f32.mrb[0].mxu0
  %1665 = vmatprep.mubr.f32.mxu0 0.0
  %1666 = vmatmul.mubr.f32.gmra.mrb[0].mxu0 %v1449
  %v1667 = vpop.f32.mrb[0].mxu0
  %v1668 = vadd.f32 %v75, %v1667
  %v1669 = vpop.f32.mrb[0].mxu0
  %1670 = vmatprep.mubr.f32.mxu0 0.0
  %1671 = vmatmul.mubr.f32.gmra.mrb[0].mxu0 %v1452
  %v1672 = vpop.f32.mrb[0].mxu0
  %v1673 = vadd.f32 %v75, %v1672
  %v1674 = vpop.f32.mrb[0].mxu0
  %1675 = vmatprep.mubr.f32.mxu0 0.0
  %1676 = vmatmul.mubr.f32.gmra.mrb[0].mxu0 %v1455
  %v1677 = vpop.f32.mrb[0].mxu0
  %v1678 = vadd.f32 %v75, %v1677
  %v1679 = vpop.f32.mrb[0].mxu0
  %1680 = vmatprep.mubr.f32.mxu0 0.0
  %1681 = vmatmul.mubr.f32.gmra.mrb[0].mxu0 %v1458
  %v1682 = vpop.f32.mrb[0].mxu0
  %v1683 = vadd.f32 %v75, %v1682
  %v1684 = vpop.f32.mrb[0].mxu0
  %1685 = vmatprep.mubr.f32.mxu0 0.0
  %1686 = vmatmul.mubr.f32.gmra.mrb[0].mxu0 %v1461
  %v1687 = vpop.f32.mrb[0].mxu0
  %v1688 = vadd.f32 %v75, %v1687
  %v1689 = vpop.f32.mrb[0].mxu0
  %1690 = vmatprep.mubr.f32.mxu0 0.0
  %1691 = vmatmul.mubr.f32.gmra.mrb[0].mxu0 %v1464
  %v1692 = vpop.f32.mrb[0].mxu0
  %v1693 = vadd.f32 %v75, %v1692
  %v1694 = vpop.f32.mrb[0].mxu0
  %1695 = vmatprep.mubr.f32.mxu0 0.0
  %1696 = vmatmul.mubr.f32.gmra.mrb[0].mxu0 %v1467
  %v1697 = vpop.f32.mrb[0].mxu0
  %v1698 = vadd.f32 %v75, %v1697
  %v1699 = vpop.f32.mrb[0].mxu0
  %1700 = vmatprep.mubr.f32.mxu0 0.0
  %1701 = vmatmul.mubr.f32.gmra.mrb[0].mxu0 %v1470
  %v1702 = vpop.f32.mrb[0].mxu0
  %v1703 = vadd.f32 %v75, %v1702
  %v1704 = vpop.f32.mrb[0].mxu0
  %1705 = vmatprep.mubr.f32.mxu0 0.0
  %1706 = vmatmul.mubr.f32.gmra.mrb[0].mxu0 %v1473
  %v1707 = vpop.f32.mrb[0].mxu0
  %v1708 = vadd.f32 %v75, %v1707
  %v1709 = vpop.f32.mrb[0].mxu0
  %1710 = vmatprep.mubr.f32.mxu0 0.0
  %1711 = vmatmul.mubr.f32.gmra.mrb[0].mxu0 %v1476
  %v1712 = vpop.f32.mrb[0].mxu0
  %v1713 = vadd.f32 %v75, %v1712
  %v1714 = vpop.f32.mrb[0].mxu0
  %1715 = vmatprep.mubr.f32.mxu0 0.0
  %1716 = vmatmul.mubr.f32.gmra.mrb[0].mxu0 %v1479
  %v1717 = vpop.f32.mrb[0].mxu0
  %v1718 = vadd.f32 %v75, %v1717
  %v1719 = vpop.f32.mrb[0].mxu0
  %1720 = vmatprep.mubr.f32.mxu0 0.0
  %1721 = vmatmul.mubr.f32.gmra.mrb[0].mxu0 %v1482
  %v1722 = vpop.f32.mrb[0].mxu0
  %v1723 = vadd.f32 %v75, %v1722
  %v1724 = vpop.f32.mrb[0].mxu0
  %1725 = vmatprep.mubr.f32.mxu0 0.0
  %1726 = vmatmul.mubr.f32.gmra.mrb[0].mxu0 %v1485
  %v1727 = vpop.f32.mrb[0].mxu0
  %v1728 = vadd.f32 %v75, %v1727
  %v1729 = vpop.f32.mrb[0].mxu0
  %1730 = vmatprep.mubr.f32.mxu0 0.0
  %1731 = vmatmul.mubr.f32.gmra.mrb[0].mxu0 %v1488
  %v1732 = vpop.f32.mrb[0].mxu0
  %v1733 = vadd.f32 %v75, %v1732
  %v1734 = vpop.f32.mrb[0].mxu0
  %1735 = vmatprep.mubr.f32.mxu0 0.0
  %1736 = vmatmul.mubr.f32.gmra.mrb[0].mxu0 %v1491
  %v1737 = vpop.f32.mrb[0].mxu0
  %v1738 = vadd.f32 %v75, %v1737
  %v1739 = vpop.f32.mrb[0].mxu0
  %1740 = vmatprep.mubr.f32.mxu0 0.0
  %1741 = vmatmul.mubr.f32.gmra.mrb[0].mxu0 %v1494
  %v1742 = vpop.f32.mrb[0].mxu0
  %v1743 = vadd.f32 %v75, %v1742
  %v1744 = vpop.f32.mrb[0].mxu0
  %1745 = vmatprep.mubr.f32.mxu0 0.0
  %1746 = vmatmul.mubr.f32.gmra.mrb[0].mxu0 %v1497
  %v1747 = vpop.f32.mrb[0].mxu0
  %v1748 = vadd.f32 %v75, %v1747
  %v1749 = vpop.f32.mrb[0].mxu0
  %1750 = vmatprep.mubr.f32.mxu0 0.0
  %1751 = vmatmul.mubr.f32.gmra.mrb[0].mxu0 %v1500
  %v1752 = vpop.f32.mrb[0].mxu0
  %v1753 = vadd.f32 %v75, %v1752
  %v1754 = vpop.f32.mrb[0].mxu0
  %1755 = vmatprep.mubr.f32.mxu0 0.0
  %1756 = vmatmul.mubr.f32.gmra.mrb[0].mxu0 %v1503
  %v1757 = vpop.f32.mrb[0].mxu0
  %v1758 = vadd.f32 %v75, %v1757
  %v1759 = vpop.f32.mrb[0].mxu0
  %1760 = vmatprep.mubr.f32.mxu0 0.0
  %1761 = vmatmul.mubr.f32.gmra.mrb[0].mxu0 %v1506
  %v1762 = vpop.f32.mrb[0].mxu0
  %v1763 = vadd.f32 %v75, %v1762
  %v1764 = vpop.f32.mrb[0].mxu0
  %1765 = vmatprep.mubr.f32.mxu0 0.0
  %1766 = vmatmul.mubr.f32.gmra.mrb[0].mxu0 %v1509
  %v1767 = vpop.f32.mrb[0].mxu0
  %v1768 = vadd.f32 %v75, %v1767
  %v1769 = vpop.f32.mrb[0].mxu0
  %1770 = vmatprep.mubr.f32.mxu0 0.0
  %1771 = vmatmul.mubr.f32.gmra.mrb[0].mxu0 %v1512
  %v1772 = vpop.f32.mrb[0].mxu0
  %v1773 = vadd.f32 %v75, %v1772
  %v1774 = vpop.f32.mrb[0].mxu0
  %1775 = vmatprep.mubr.f32.mxu0 0.0
  %1776 = vmatmul.mubr.f32.gmra.mrb[0].mxu0 %v1515
  %v1777 = vpop.f32.mrb[0].mxu0
  %v1778 = vadd.f32 %v75, %v1777
  %v1779 = vpop.f32.mrb[0].mxu0
  %1780 = vmatprep.mubr.f32.mxu0 0.0
  %1781 = vmatmul.mubr.f32.gmra.mrb[0].mxu0 %v1518
  %v1782 = vpop.f32.mrb[0].mxu0
  %v1783 = vadd.f32 %v75, %v1782
  %v1784 = vpop.f32.mrb[0].mxu0
  %1785 = vmatprep.mubr.f32.mxu0 0.0
  %1786 = vmatmul.mubr.f32.gmra.mrb[0].mxu0 %v1521
  %v1787 = vpop.f32.mrb[0].mxu0
  %v1788 = vadd.f32 %v75, %v1787
  %v1789 = vpop.f32.mrb[0].mxu0
  %1790 = vmatprep.mubr.f32.mxu0 0.0
  %1791 = vmatmul.mubr.f32.gmra.mrb[0].mxu0 %v1524
  %v1792 = vpop.f32.mrb[0].mxu0
  %v1793 = vadd.f32 %v75, %v1792
  %v1794 = vpop.f32.mrb[0].mxu0
  %1795 = vmatprep.mubr.f32.mxu0 0.0
  %1796 = vmatmul.mubr.f32.gmra.mrb[0].mxu0 %v1527
  %v1797 = vpop.f32.mrb[0].mxu0
  %v1798 = vadd.f32 %v75, %v1797
  %v1799 = vpop.f32.mrb[0].mxu0
  %1800 = vmatprep.mubr.f32.mxu0 0.0
  %1801 = vmatmul.mubr.f32.gmra.mrb[0].mxu0 %v1530
  %v1802 = vpop.f32.mrb[0].mxu0
  %v1803 = vadd.f32 %v75, %v1802
  %v1804 = vpop.f32.mrb[0].mxu0
  %1805 = vmatprep.mubr.f32.mxu0 0.0
  %1806 = vmatmul.mubr.f32.gmra.mrb[0].mxu0 %v1533
  %v1807 = vpop.f32.mrb[0].mxu0
  %v1808 = vadd.f32 %v75, %v1807
  %v1809 = vpop.f32.mrb[0].mxu0
  %1810 = vmatprep.mubr.f32.mxu0 0.0
  %1811 = vmatmul.mubr.f32.gmra.mrb[0].mxu0 %v1536
  %v1812 = vpop.f32.mrb[0].mxu0
  %v1813 = vadd.f32 %v75, %v1812
  %v1814 = vpop.f32.mrb[0].mxu0
  %1815 = vmatprep.mubr.f32.mxu0 0.0
  %1816 = vmatmul.mubr.f32.gmra.mrb[0].mxu0 %v1539
  %v1817 = vpop.f32.mrb[0].mxu0
  %v1818 = vadd.f32 %v75, %v1817
  %v1819 = vpop.f32.mrb[0].mxu0
  %1820 = vmatprep.mubr.f32.mxu0 0.0
  %1821 = vmatmul.mubr.f32.gmra.mrb[0].mxu0 %v1542
  %v1822 = vpop.f32.mrb[0].mxu0
  %v1823 = vadd.f32 %v75, %v1822
  %v1824 = vpop.f32.mrb[0].mxu0
  %1825 = vmatprep.mubr.f32.mxu0 0.0
  %1826 = vmatmul.mubr.f32.gmra.mrb[0].mxu0 %v1545
  %v1827 = vpop.f32.mrb[0].mxu0
  %v1828 = vadd.f32 %v75, %v1827
  %v1829 = vpop.f32.mrb[0].mxu0
  %1830 = vmatprep.mubr.f32.mxu0 0.0
  %1831 = vmatmul.mubr.f32.gmra.mrb[0].mxu0 %v1548
  %v1832 = vpop.f32.mrb[0].mxu0
  %v1833 = vadd.f32 %v75, %v1832
  %v1834 = vpop.f32.mrb[0].mxu0
  %1835 = vmatprep.mubr.f32.mxu0 0.0
  %1836 = vmatmul.mubr.f32.gmra.mrb[0].mxu0 %v1551
  %v1837 = vpop.f32.mrb[0].mxu0
  %v1838 = vadd.f32 %v75, %v1837
  %v1839 = vpop.f32.mrb[0].mxu0
  %1840 = vmatprep.mubr.f32.mxu0 0.0
  %1841 = vmatmul.mubr.f32.gmra.mrb[0].mxu0 %v1554
  %v1842 = vpop.f32.mrb[0].mxu0
  %v1843 = vadd.f32 %v75, %v1842
  %v1844 = vpop.f32.mrb[0].mxu0
  %1845 = vmatprep.mubr.f32.mxu0 0.0
  %1846 = vmatmul.mubr.f32.gmra.mrb[0].mxu0 %v1557
  %v1847 = vpop.f32.mrb[0].mxu0
  %v1848 = vadd.f32 %v75, %v1847
  %v1849 = vpop.f32.mrb[0].mxu0
  %1850 = vmatprep.mubr.f32.mxu0 0.0
  %1851 = vmatmul.mubr.f32.gmra.mrb[0].mxu0 %v1560
  %v1852 = vpop.f32.mrb[0].mxu0
  %v1853 = vadd.f32 %v75, %v1852
  %v1854 = vpop.f32.mrb[0].mxu0
  %1855 = vmatprep.mubr.f32.mxu0 0.0
  %1856 = vmatmul.mubr.f32.gmra.mrb[0].mxu0 %v1563
  %v1857 = vpop.f32.mrb[0].mxu0
  %v1858 = vadd.f32 %v75, %v1857
  %v1859 = vpop.f32.mrb[0].mxu0
  %1860 = vmatprep.mubr.f32.mxu0 0.0
  %1861 = vmatmul.mubr.f32.gmra.mrb[0].mxu0 %v1566
  %v1862 = vpop.f32.mrb[0].mxu0
  %v1863 = vadd.f32 %v75, %v1862
  %v1864 = vpop.f32.mrb[0].mxu0
  %1865 = vmatprep.mubr.f32.mxu0 0.0
  %1866 = vmatmul.mubr.f32.gmra.mrb[0].mxu0 %v1569
  %v1867 = vpop.f32.mrb[0].mxu0
  %v1868 = vadd.f32 %v75, %v1867
  %v1869 = vpop.f32.mrb[0].mxu0
  %1870 = vmatprep.mubr.f32.mxu0 0.0
  %1871 = vmatmul.mubr.f32.gmra.mrb[0].mxu0 %v1572
  %v1872 = vpop.f32.mrb[0].mxu0
  %v1873 = vadd.f32 %v75, %v1872
  %v1874 = vpop.f32.mrb[0].mxu0
  %1875 = vmatprep.mubr.f32.mxu0 0.0
  %1876 = vmatmul.mubr.f32.gmra.mrb[0].mxu0 %v1575
  %v1877 = vpop.f32.mrb[0].mxu0
  %v1878 = vadd.f32 %v75, %v1877
  %v1879 = vpop.f32.mrb[0].mxu0
  %1880 = vmatprep.mubr.f32.mxu0 0.0
  %1881 = vmatmul.mubr.f32.gmra.mrb[0].mxu0 %v1578
  %v1882 = vpop.f32.mrb[0].mxu0
  %v1883 = vadd.f32 %v75, %v1882
  %v1884 = vpop.f32.mrb[0].mxu0
  %1885 = vmatprep.mubr.f32.mxu0 0.0
  %1886 = vmatmul.mubr.f32.gmra.mrb[0].mxu0 %v1581
  %v1887 = vpop.f32.mrb[0].mxu0
  %v1888 = vadd.f32 %v75, %v1887
  %v1889 = vpop.f32.mrb[0].mxu0
  %1890 = vmatprep.mubr.f32.mxu0 0.0
  %1891 = vmatmul.mubr.f32.gmra.mrb[0].mxu0 %v1584
  %v1892 = vpop.f32.mrb[0].mxu0
  %v1893 = vadd.f32 %v75, %v1892
  %v1894 = vpop.f32.mrb[0].mxu0
  %1895 = vdwg.mxu0
  %vm1896 = vcmp.gt.f32.partialorder %v1653, 0.0
  %vm1897 = vcmp.gt.f32.partialorder %v1658, 0.0
  %vm1898 = vcmp.gt.f32.partialorder %v1663, 0.0
  %vm1899 = vcmp.gt.f32.partialorder %v1668, 0.0
  %vm1900 = vcmp.gt.f32.partialorder %v1673, 0.0
  %vm1901 = vcmp.gt.f32.partialorder %v1678, 0.0
  %vm1902 = vcmp.gt.f32.partialorder %v1683, 0.0
  %vm1903 = vcmp.gt.f32.partialorder %v1688, 0.0
  %vm1904 = vcmp.gt.f32.partialorder %v1693, 0.0
  %vm1905 = vcmp.gt.f32.partialorder %v1698, 0.0
  %vm1906 = vcmp.gt.f32.partialorder %v1703, 0.0
  %vm1907 = vcmp.gt.f32.partialorder %v1708, 0.0
  %vm1908 = vcmp.gt.f32.partialorder %v1713, 0.0
  %vm1909 = vcmp.gt.f32.partialorder %v1718, 0.0
  %vm1910 = vcmp.gt.f32.partialorder %v1723, 0.0
  %vm1911 = vcmp.gt.f32.partialorder %v1728, 0.0
  %vm1912 = vcmp.gt.f32.partialorder %v1733, 0.0
  %vm1913 = vcmp.gt.f32.partialorder %v1738, 0.0
  %vm1914 = vcmp.gt.f32.partialorder %v1743, 0.0
  %vm1915 = vcmp.gt.f32.partialorder %v1748, 0.0
  %vm1916 = vcmp.gt.f32.partialorder %v1753, 0.0
  %vm1917 = vcmp.gt.f32.partialorder %v1758, 0.0
  %vm1918 = vcmp.gt.f32.partialorder %v1763, 0.0
  %vm1919 = vcmp.gt.f32.partialorder %v1768, 0.0
  %vm1920 = vcmp.gt.f32.partialorder %v1773, 0.0
  %vm1921 = vcmp.gt.f32.partialorder %v1778, 0.0
  %vm1922 = vcmp.gt.f32.partialorder %v1783, 0.0
  %vm1923 = vcmp.gt.f32.partialorder %v1788, 0.0
  %vm1924 = vcmp.gt.f32.partialorder %v1793, 0.0
  %vm1925 = vcmp.gt.f32.partialorder %v1798, 0.0
  %vm1926 = vcmp.gt.f32.partialorder %v1803, 0.0
  %vm1927 = vcmp.gt.f32.partialorder %v1808, 0.0
  %vm1928 = vcmp.gt.f32.partialorder %v1813, 0.0
  %vm1929 = vcmp.gt.f32.partialorder %v1818, 0.0
  %vm1930 = vcmp.gt.f32.partialorder %v1823, 0.0
  %vm1931 = vcmp.gt.f32.partialorder %v1828, 0.0
  %vm1932 = vcmp.gt.f32.partialorder %v1833, 0.0
  %vm1933 = vcmp.gt.f32.partialorder %v1838, 0.0
  %vm1934 = vcmp.gt.f32.partialorder %v1843, 0.0
  %vm1935 = vcmp.gt.f32.partialorder %v1848, 0.0
  %vm1936 = vcmp.gt.f32.partialorder %v1853, 0.0
  %vm1937 = vcmp.gt.f32.partialorder %v1858, 0.0
  %vm1938 = vcmp.gt.f32.partialorder %v1863, 0.0
  %vm1939 = vcmp.gt.f32.partialorder %v1868, 0.0
  %vm1940 = vcmp.gt.f32.partialorder %v1873, 0.0
  %vm1941 = vcmp.gt.f32.partialorder %v1878, 0.0
  %vm1942 = vcmp.gt.f32.partialorder %v1883, 0.0
  %vm1943 = vcmp.gt.f32.partialorder %v1888, 0.0
  %vm1944 = vcmp.gt.f32.partialorder %v1893, 0.0
  %v1945 = vmul.f32 %v1653, 0.2
  %v1946 = vmul.f32 %v1658, 0.2
  %v1947 = vmul.f32 %v1663, 0.2
  %v1948 = vmul.f32 %v1668, 0.2
  %v1949 = vmul.f32 %v1673, 0.2
  %v1950 = vmul.f32 %v1678, 0.2
  %v1951 = vmul.f32 %v1683, 0.2
  %v1952 = vmul.f32 %v1688, 0.2
  %v1953 = vmul.f32 %v1693, 0.2
  %v1954 = vmul.f32 %v1698, 0.2
  %v1955 = vmul.f32 %v1703, 0.2
  %v1956 = vmul.f32 %v1708, 0.2
  %v1957 = vmul.f32 %v1713, 0.2
  %v1958 = vmul.f32 %v1718, 0.2
  %v1959 = vmul.f32 %v1723, 0.2
  %v1960 = vmul.f32 %v1728, 0.2
  %v1961 = vmul.f32 %v1733, 0.2
  %v1962 = vmul.f32 %v1738, 0.2
  %v1963 = vmul.f32 %v1743, 0.2
  %v1964 = vmul.f32 %v1748, 0.2
  %v1965 = vmul.f32 %v1753, 0.2
  %v1966 = vmul.f32 %v1758, 0.2
  %v1967 = vmul.f32 %v1763, 0.2
  %v1968 = vmul.f32 %v1768, 0.2
  %v1969 = vmul.f32 %v1773, 0.2
  %v1970 = vmul.f32 %v1778, 0.2
  %v1971 = vmul.f32 %v1783, 0.2
  %v1972 = vmul.f32 %v1788, 0.2
  %v1973 = vmul.f32 %v1793, 0.2
  %v1974 = vmul.f32 %v1798, 0.2
  %v1975 = vmul.f32 %v1803, 0.2
  %v1976 = vmul.f32 %v1808, 0.2
  %v1977 = vmul.f32 %v1813, 0.2
  %v1978 = vmul.f32 %v1818, 0.2
  %v1979 = vmul.f32 %v1823, 0.2
  %v1980 = vmul.f32 %v1828, 0.2
  %v1981 = vmul.f32 %v1833, 0.2
  %v1982 = vmul.f32 %v1838, 0.2
  %v1983 = vmul.f32 %v1843, 0.2
  %v1984 = vmul.f32 %v1848, 0.2
  %v1985 = vmul.f32 %v1853, 0.2
  %v1986 = vmul.f32 %v1858, 0.2
  %v1987 = vmul.f32 %v1863, 0.2
  %v1988 = vmul.f32 %v1868, 0.2
  %v1989 = vmul.f32 %v1873, 0.2
  %v1990 = vmul.f32 %v1878, 0.2
  %v1991 = vmul.f32 %v1883, 0.2
  %v1992 = vmul.f32 %v1888, 0.2
  %v1993 = vmul.f32 %v1893, 0.2
  %v1994 = vsel %vm1896, %v1653, %v1945
  %v1995 = vsel %vm1897, %v1658, %v1946
  %v1996 = vsel %vm1898, %v1663, %v1947
  %v1997 = vsel %vm1899, %v1668, %v1948
  %v1998 = vsel %vm1900, %v1673, %v1949
  %v1999 = vsel %vm1901, %v1678, %v1950
  %v2000 = vsel %vm1902, %v1683, %v1951
  %v2001 = vsel %vm1903, %v1688, %v1952
  %v2002 = vsel %vm1904, %v1693, %v1953
  %v2003 = vsel %vm1905, %v1698, %v1954
  %v2004 = vsel %vm1906, %v1703, %v1955
  %v2005 = vsel %vm1907, %v1708, %v1956
  %v2006 = vsel %vm1908, %v1713, %v1957
  %v2007 = vsel %vm1909, %v1718, %v1958
  %v2008 = vsel %vm1910, %v1723, %v1959
  %v2009 = vsel %vm1911, %v1728, %v1960
  %v2010 = vsel %vm1912, %v1733, %v1961
  %v2011 = vsel %vm1913, %v1738, %v1962
  %v2012 = vsel %vm1914, %v1743, %v1963
  %v2013 = vsel %vm1915, %v1748, %v1964
  %v2014 = vsel %vm1916, %v1753, %v1965
  %v2015 = vsel %vm1917, %v1758, %v1966
  %v2016 = vsel %vm1918, %v1763, %v1967
  %v2017 = vsel %vm1919, %v1768, %v1968
  %v2018 = vsel %vm1920, %v1773, %v1969
  %v2019 = vsel %vm1921, %v1778, %v1970
  %v2020 = vsel %vm1922, %v1783, %v1971
  %v2021 = vsel %vm1923, %v1788, %v1972
  %v2022 = vsel %vm1924, %v1793, %v1973
  %v2023 = vsel %vm1925, %v1798, %v1974
  %v2024 = vsel %vm1926, %v1803, %v1975
  %v2025 = vsel %vm1927, %v1808, %v1976
  %v2026 = vsel %vm1928, %v1813, %v1977
  %v2027 = vsel %vm1929, %v1818, %v1978
  %v2028 = vsel %vm1930, %v1823, %v1979
  %v2029 = vsel %vm1931, %v1828, %v1980
  %v2030 = vsel %vm1932, %v1833, %v1981
  %v2031 = vsel %vm1933, %v1838, %v1982
  %v2032 = vsel %vm1934, %v1843, %v1983
  %v2033 = vsel %vm1935, %v1848, %v1984
  %v2034 = vsel %vm1936, %v1853, %v1985
  %v2035 = vsel %vm1937, %v1858, %v1986
  %v2036 = vsel %vm1938, %v1863, %v1987
  %v2037 = vsel %vm1939, %v1868, %v1988
  %v2038 = vsel %vm1940, %v1873, %v1989
  %v2039 = vsel %vm1941, %v1878, %v1990
  %v2040 = vsel %vm1942, %v1883, %v1991
  %v2041 = vsel %vm1943, %v1888, %v1992
  %v2042 = vsel %vm1944, %v1893, %v1993
  %v2043 = vmax.f32 %v1340, %v1994
  %v2044 = vmax.f32 %v1341, %v1995
  %v2045 = vmax.f32 %v1342, %v1996
  %v2046 = vmax.f32 %v1343, %v1997
  %v2047 = vmax.f32 %v1344, %v1998
  %v2048 = vmax.f32 %v1345, %v1999
  %v2049 = vmax.f32 %v1346, %v2000
  %v2050 = vmax.f32 %v1347, %v2001
  %v2051 = vmax.f32 %v1348, %v2002
  %v2052 = vmax.f32 %v1349, %v2003
  %v2053 = vmax.f32 %v1350, %v2004
  %v2054 = vmax.f32 %v1351, %v2005
  %v2055 = vmax.f32 %v1352, %v2006
  %v2056 = vmax.f32 %v1353, %v2007
  %v2057 = vmax.f32 %v1354, %v2008
  %v2058 = vmax.f32 %v1355, %v2009
  %v2059 = vmax.f32 %v1356, %v2010
  %v2060 = vmax.f32 %v1357, %v2011
  %v2061 = vmax.f32 %v1358, %v2012
  %v2062 = vmax.f32 %v1359, %v2013
  %v2063 = vmax.f32 %v1360, %v2014
  %v2064 = vmax.f32 %v1361, %v2015
  %v2065 = vmax.f32 %v1362, %v2016
  %v2066 = vmax.f32 %v1363, %v2017
  %v2067 = vmax.f32 %v1364, %v2018
  %v2068 = vmax.f32 %v1365, %v2019
  %v2069 = vmax.f32 %v1366, %v2020
  %v2070 = vmax.f32 %v1367, %v2021
  %v2071 = vmax.f32 %v1368, %v2022
  %v2072 = vmax.f32 %v1369, %v2023
  %v2073 = vmax.f32 %v1370, %v2024
  %v2074 = vmax.f32 %v1371, %v2025
  %v2075 = vmax.f32 %v1372, %v2026
  %v2076 = vmax.f32 %v1373, %v2027
  %v2077 = vmax.f32 %v1374, %v2028
  %v2078 = vmax.f32 %v1375, %v2029
  %v2079 = vmax.f32 %v1376, %v2030
  %v2080 = vmax.f32 %v1377, %v2031
  %v2081 = vmax.f32 %v1378, %v2032
  %v2082 = vmax.f32 %v1379, %v2033
  %v2083 = vmax.f32 %v1380, %v2034
  %v2084 = vmax.f32 %v1381, %v2035
  %v2085 = vmax.f32 %v1382, %v2036
  %v2086 = vmax.f32 %v1383, %v2037
  %v2087 = vmax.f32 %v1384, %v2038
  %v2088 = vmax.f32 %v1385, %v2039
  %v2089 = vmax.f32 %v1386, %v2040
  %v2090 = vmax.f32 %v1387, %v2041
  %v2091 = vmax.f32 %v1388, %v2042
  %s2092 = scalar_lea.vmem %s0, 1176
  %v2093 = vld [vmem:[%s2092] sm:$0xff]
  %v2094 = vld [vmem:[%s2092 + $0x8] sm:$0xff]
  %v2095 = vld [vmem:[%s2092 + $0x10] sm:$0xff]
  %v2096 = vld [vmem:[%s2092 + $0x18] sm:$0xff]
  %v2097 = vld [vmem:[%s2092 + $0x20] sm:$0xff]
  %v2098 = vld [vmem:[%s2092 + $0x28] sm:$0xff]
  %v2099 = vld [vmem:[%s2092 + $0x30] sm:$0xff]
  %v2100 = vld [vmem:[%s2092 + $0x38] sm:$0xff]
  %v2101 = vld [vmem:[%s2092 + $0x40] sm:$0xff]
  %v2102 = vld [vmem:[%s2092 + $0x48] sm:$0xff]
  %v2103 = vld [vmem:[%s2092 + $0x50] sm:$0xff]
  %v2104 = vld [vmem:[%s2092 + $0x58] sm:$0xff]
  %v2105 = vld [vmem:[%s2092 + $0x60] sm:$0xff]
  %v2106 = vld [vmem:[%s2092 + $0x68] sm:$0xff]
  %v2107 = vld [vmem:[%s2092 + $0x70] sm:$0xff]
  %v2108 = vld [vmem:[%s2092 + $0x78] sm:$0xff]
  %v2109 = vld [vmem:[%s2092 + $0x80] sm:$0xff]
  %v2110 = vld [vmem:[%s2092 + $0x88] sm:$0xff]
  %v2111 = vld [vmem:[%s2092 + $0x90] sm:$0xff]
  %v2112 = vld [vmem:[%s2092 + $0x98] sm:$0xff]
  %v2113 = vld [vmem:[%s2092 + $0xa0] sm:$0xff]
  %v2114 = vld [vmem:[%s2092 + $0xa8] sm:$0xff]
  %v2115 = vld [vmem:[%s2092 + $0xb0] sm:$0xff]
  %v2116 = vld [vmem:[%s2092 + $0xb8] sm:$0xff]
  %v2117 = vld [vmem:[%s2092 + $0xc0] sm:$0xff]
  %v2118 = vld [vmem:[%s2092 + $0xc8] sm:$0xff]
  %v2119 = vld [vmem:[%s2092 + $0xd0] sm:$0xff]
  %v2120 = vld [vmem:[%s2092 + $0xd8] sm:$0xff]
  %v2121 = vld [vmem:[%s2092 + $0xe0] sm:$0xff]
  %v2122 = vld [vmem:[%s2092 + $0xe8] sm:$0xff]
  %v2123 = vld [vmem:[%s2092 + $0xf0] sm:$0xff]
  %v2124 = vld [vmem:[%s2092 + $0xf8] sm:$0xff]
  %v2125 = vld [vmem:[%s2092 + $0x100] sm:$0xff]
  %v2126 = vld [vmem:[%s2092 + $0x108] sm:$0xff]
  %v2127 = vld [vmem:[%s2092 + $0x110] sm:$0xff]
  %v2128 = vld [vmem:[%s2092 + $0x118] sm:$0xff]
  %v2129 = vld [vmem:[%s2092 + $0x120] sm:$0xff]
  %v2130 = vld [vmem:[%s2092 + $0x128] sm:$0xff]
  %v2131 = vld [vmem:[%s2092 + $0x130] sm:$0xff]
  %v2132 = vld [vmem:[%s2092 + $0x138] sm:$0xff]
  %v2133 = vld [vmem:[%s2092 + $0x140] sm:$0xff]
  %v2134 = vld [vmem:[%s2092 + $0x148] sm:$0xff]
  %v2135 = vld [vmem:[%s2092 + $0x150] sm:$0xff]
  %v2136 = vld [vmem:[%s2092 + $0x158] sm:$0xff]
  %v2137 = vld [vmem:[%s2092 + $0x160] sm:$0xff]
  %v2138 = vld [vmem:[%s2092 + $0x168] sm:$0xff]
  %v2139 = vld [vmem:[%s2092 + $0x170] sm:$0xff]
  %v2140 = vld [vmem:[%s2092 + $0x178] sm:$0xff]
  %v2141 = vld [vmem:[%s2092 + $0x180] sm:$0xff]
  %v2143 = vsel %vm77, %v2093, 0
  %v2146 = vsel %vm77, %v2094, 0
  %v2149 = vsel %vm77, %v2095, 0
  %v2152 = vsel %vm77, %v2096, 0
  %v2155 = vsel %vm77, %v2097, 0
  %v2158 = vsel %vm77, %v2098, 0
  %v2161 = vsel %vm77, %v2099, 0
  %v2164 = vsel %vm77, %v2100, 0
  %v2167 = vsel %vm77, %v2101, 0
  %v2170 = vsel %vm77, %v2102, 0
  %v2173 = vsel %vm77, %v2103, 0
  %v2176 = vsel %vm77, %v2104, 0
  %v2179 = vsel %vm77, %v2105, 0
  %v2182 = vsel %vm77, %v2106, 0
  %v2185 = vsel %vm77, %v2107, 0
  %v2188 = vsel %vm77, %v2108, 0
  %v2191 = vsel %vm77, %v2109, 0
  %v2194 = vsel %vm77, %v2110, 0
  %v2197 = vsel %vm77, %v2111, 0
  %v2200 = vsel %vm77, %v2112, 0
  %v2203 = vsel %vm77, %v2113, 0
  %v2206 = vsel %vm77, %v2114, 0
  %v2209 = vsel %vm77, %v2115, 0
  %v2212 = vsel %vm77, %v2116, 0
  %v2215 = vsel %vm77, %v2117, 0
  %v2218 = vsel %vm77, %v2118, 0
  %v2221 = vsel %vm77, %v2119, 0
  %v2224 = vsel %vm77, %v2120, 0
  %v2227 = vsel %vm77, %v2121, 0
  %v2230 = vsel %vm77, %v2122, 0
  %v2233 = vsel %vm77, %v2123, 0
  %v2236 = vsel %vm77, %v2124, 0
  %v2239 = vsel %vm77, %v2125, 0
  %v2242 = vsel %vm77, %v2126, 0
  %v2245 = vsel %vm77, %v2127, 0
  %v2248 = vsel %vm77, %v2128, 0
  %v2251 = vsel %vm77, %v2129, 0
  %v2254 = vsel %vm77, %v2130, 0
  %v2257 = vsel %vm77, %v2131, 0
  %v2260 = vsel %vm77, %v2132, 0
  %v2263 = vsel %vm77, %v2133, 0
  %v2266 = vsel %vm77, %v2134, 0
  %v2269 = vsel %vm77, %v2135, 0
  %v2272 = vsel %vm77, %v2136, 0
  %v2275 = vsel %vm77, %v2137, 0
  %v2278 = vsel %vm77, %v2138, 0
  %v2281 = vsel %vm77, %v2139, 0
  %v2284 = vsel %vm77, %v2140, 0
  %v2287 = vsel %vm77, %v2141, 0
  %2289 = vmatprep.subr.mxu0 0.0
  %2290 = vmatpush1.msra.mxu0 %v14
  %2291 = vmatprep.subr.mxu0 0.0
  %2292 = vmatpush1.msra.mxu0 %v15
  %2293 = vmatprep.subr.mxu0 0.0
  %2294 = vmatpush1.msra.mxu0 %v16
  %2295 = vmatprep.subr.mxu0 0.0
  %2296 = vmatpush1.msra.mxu0 %v17
  %2297 = vmatprep.subr.mxu0 0.0
  %2298 = vmatpush1.msra.mxu0 %v18
  %2299 = vmatprep.subr.mxu0 0.0
  %2300 = vmatpush1.msra.mxu0 %v19
  %2301 = vmatprep.subr.mxu0 0.0
  %2302 = vmatpush1.msra.mxu0 %v227
  %2303 = vmatprep.subr.mxu0 0.0
  %2304 = vmatpush1.msra.mxu0 0.0
  %2305 = vmatprep.subr.mxu0 0.0
  %2306 = vmatpush1.msra.mxu0 0.0
  %2307 = vmatprep.subr.mxu0 0.0
  %2308 = vmatpush1.msra.mxu0 0.0
  %2309 = vmatprep.subr.mxu0 0.0
  %2310 = vmatpush1.msra.mxu0 0.0
  %2311 = vmatprep.subr.mxu0 0.0
  %2312 = vmatpush1.msra.mxu0 0.0
  %2313 = vmatprep.subr.mxu0 0.0
  %2314 = vmatpush1.msra.mxu0 0.0
  %2315 = vmatprep.subr.mxu0 0.0
  %2316 = vmatpush1.msra.mxu0 0.0
  %2317 = vmatprep.subr.mxu0 0.0
  %2318 = vmatpush1.msra.mxu0 0.0
  %2319 = vmatprep.subr.mxu0 0.0
  %2320 = vmatpush1.msra.mxu0 0.0
  %2321 = vmatprep.subr.mxu0 0.0
  %2322 = vmatpush1.msra.mxu0 0.0
  %2323 = vmatprep.subr.mxu0 0.0
  %2324 = vmatpush1.msra.mxu0 0.0
  %2325 = vmatprep.subr.mxu0 0.0
  %2326 = vmatpush1.msra.mxu0 0.0
  %2327 = vmatprep.subr.mxu0 0.0
  %2328 = vmatpush1.msra.mxu0 0.0
  %2329 = vmatprep.subr.mxu0 0.0
  %2330 = vmatpush1.msra.mxu0 0.0
  %2331 = vmatprep.subr.mxu0 0.0
  %2332 = vmatpush1.msra.mxu0 0.0
  %2333 = vmatprep.subr.mxu0 0.0
  %2334 = vmatpush1.msra.mxu0 0.0
  %2335 = vmatprep.subr.mxu0 0.0
  %2336 = vmatpush1.msra.mxu0 0.0
  %2337 = vmatprep.subr.mxu0 0.0
  %2338 = vmatpush1.msra.mxu0 0.0
  %2339 = vmatprep.subr.mxu0 0.0
  %2340 = vmatpush1.msra.mxu0 0.0
  %2341 = vmatprep.subr.mxu0 0.0
  %2342 = vmatpush1.msra.mxu0 0.0
  %2343 = vmatprep.subr.mxu0 0.0
  %2344 = vmatpush1.msra.mxu0 0.0
  %2345 = vmatprep.subr.mxu0 0.0
  %2346 = vmatpush1.msra.mxu0 0.0
  %2347 = vmatprep.subr.mxu0 0.0
  %2348 = vmatpush1.msra.mxu0 0.0
  %2349 = vmatprep.subr.mxu0 0.0
  %2350 = vmatpush1.msra.mxu0 0.0
  %2351 = vmatprep.subr.mxu0 0.0
  %2352 = vmatpush1.msra.mxu0 0.0
  %2353 = vmatprep.mubr.f32.mxu0 0.0
  %2354 = vmatmul.mubr.f32.gmra.mrb[0].mxu0 %v2143
  %v2355 = vpop.f32.mrb[0].mxu0
  %v2356 = vadd.f32 %v75, %v2355
  %v2357 = vpop.f32.mrb[0].mxu0
  %2358 = vmatprep.mubr.f32.mxu0 0.0
  %2359 = vmatmul.mubr.f32.gmra.mrb[0].mxu0 %v2146
  %v2360 = vpop.f32.mrb[0].mxu0
  %v2361 = vadd.f32 %v75, %v2360
  %v2362 = vpop.f32.mrb[0].mxu0
  %2363 = vmatprep.mubr.f32.mxu0 0.0
  %2364 = vmatmul.mubr.f32.gmra.mrb[0].mxu0 %v2149
  %v2365 = vpop.f32.mrb[0].mxu0
  %v2366 = vadd.f32 %v75, %v2365
  %v2367 = vpop.f32.mrb[0].mxu0
  %2368 = vmatprep.mubr.f32.mxu0 0.0
  %2369 = vmatmul.mubr.f32.gmra.mrb[0].mxu0 %v2152
  %v2370 = vpop.f32.mrb[0].mxu0
  %v2371 = vadd.f32 %v75, %v2370
  %v2372 = vpop.f32.mrb[0].mxu0
  %2373 = vmatprep.mubr.f32.mxu0 0.0
  %2374 = vmatmul.mubr.f32.gmra.mrb[0].mxu0 %v2155
  %v2375 = vpop.f32.mrb[0].mxu0
  %v2376 = vadd.f32 %v75, %v2375
  %v2377 = vpop.f32.mrb[0].mxu0
  %2378 = vmatprep.mubr.f32.mxu0 0.0
  %2379 = vmatmul.mubr.f32.gmra.mrb[0].mxu0 %v2158
  %v2380 = vpop.f32.mrb[0].mxu0
  %v2381 = vadd.f32 %v75, %v2380
  %v2382 = vpop.f32.mrb[0].mxu0
  %2383 = vmatprep.mubr.f32.mxu0 0.0
  %2384 = vmatmul.mubr.f32.gmra.mrb[0].mxu0 %v2161
  %v2385 = vpop.f32.mrb[0].mxu0
  %v2386 = vadd.f32 %v75, %v2385
  %v2387 = vpop.f32.mrb[0].mxu0
  %2388 = vmatprep.mubr.f32.mxu0 0.0
  %2389 = vmatmul.mubr.f32.gmra.mrb[0].mxu0 %v2164
  %v2390 = vpop.f32.mrb[0].mxu0
  %v2391 = vadd.f32 %v75, %v2390
  %v2392 = vpop.f32.mrb[0].mxu0
  %2393 = vmatprep.mubr.f32.mxu0 0.0
  %2394 = vmatmul.mubr.f32.gmra.mrb[0].mxu0 %v2167
  %v2395 = vpop.f32.mrb[0].mxu0
  %v2396 = vadd.f32 %v75, %v2395
  %v2397 = vpop.f32.mrb[0].mxu0
  %2398 = vmatprep.mubr.f32.mxu0 0.0
  %2399 = vmatmul.mubr.f32.gmra.mrb[0].mxu0 %v2170
  %v2400 = vpop.f32.mrb[0].mxu0
  %v2401 = vadd.f32 %v75, %v2400
  %v2402 = vpop.f32.mrb[0].mxu0
  %2403 = vmatprep.mubr.f32.mxu0 0.0
  %2404 = vmatmul.mubr.f32.gmra.mrb[0].mxu0 %v2173
  %v2405 = vpop.f32.mrb[0].mxu0
  %v2406 = vadd.f32 %v75, %v2405
  %v2407 = vpop.f32.mrb[0].mxu0
  %2408 = vmatprep.mubr.f32.mxu0 0.0
  %2409 = vmatmul.mubr.f32.gmra.mrb[0].mxu0 %v2176
  %v2410 = vpop.f32.mrb[0].mxu0
  %v2411 = vadd.f32 %v75, %v2410
  %v2412 = vpop.f32.mrb[0].mxu0
  %2413 = vmatprep.mubr.f32.mxu0 0.0
  %2414 = vmatmul.mubr.f32.gmra.mrb[0].mxu0 %v2179
  %v2415 = vpop.f32.mrb[0].mxu0
  %v2416 = vadd.f32 %v75, %v2415
  %v2417 = vpop.f32.mrb[0].mxu0
  %2418 = vmatprep.mubr.f32.mxu0 0.0
  %2419 = vmatmul.mubr.f32.gmra.mrb[0].mxu0 %v2182
  %v2420 = vpop.f32.mrb[0].mxu0
  %v2421 = vadd.f32 %v75, %v2420
  %v2422 = vpop.f32.mrb[0].mxu0
  %2423 = vmatprep.mubr.f32.mxu0 0.0
  %2424 = vmatmul.mubr.f32.gmra.mrb[0].mxu0 %v2185
  %v2425 = vpop.f32.mrb[0].mxu0
  %v2426 = vadd.f32 %v75, %v2425
  %v2427 = vpop.f32.mrb[0].mxu0
  %2428 = vmatprep.mubr.f32.mxu0 0.0
  %2429 = vmatmul.mubr.f32.gmra.mrb[0].mxu0 %v2188
  %v2430 = vpop.f32.mrb[0].mxu0
  %v2431 = vadd.f32 %v75, %v2430
  %v2432 = vpop.f32.mrb[0].mxu0
  %2433 = vmatprep.mubr.f32.mxu0 0.0
  %2434 = vmatmul.mubr.f32.gmra.mrb[0].mxu0 %v2191
  %v2435 = vpop.f32.mrb[0].mxu0
  %v2436 = vadd.f32 %v75, %v2435
  %v2437 = vpop.f32.mrb[0].mxu0
  %2438 = vmatprep.mubr.f32.mxu0 0.0
  %2439 = vmatmul.mubr.f32.gmra.mrb[0].mxu0 %v2194
  %v2440 = vpop.f32.mrb[0].mxu0
  %v2441 = vadd.f32 %v75, %v2440
  %v2442 = vpop.f32.mrb[0].mxu0
  %2443 = vmatprep.mubr.f32.mxu0 0.0
  %2444 = vmatmul.mubr.f32.gmra.mrb[0].mxu0 %v2197
  %v2445 = vpop.f32.mrb[0].mxu0
  %v2446 = vadd.f32 %v75, %v2445
  %v2447 = vpop.f32.mrb[0].mxu0
  %2448 = vmatprep.mubr.f32.mxu0 0.0
  %2449 = vmatmul.mubr.f32.gmra.mrb[0].mxu0 %v2200
  %v2450 = vpop.f32.mrb[0].mxu0
  %v2451 = vadd.f32 %v75, %v2450
  %v2452 = vpop.f32.mrb[0].mxu0
  %2453 = vmatprep.mubr.f32.mxu0 0.0
  %2454 = vmatmul.mubr.f32.gmra.mrb[0].mxu0 %v2203
  %v2455 = vpop.f32.mrb[0].mxu0
  %v2456 = vadd.f32 %v75, %v2455
  %v2457 = vpop.f32.mrb[0].mxu0
  %2458 = vmatprep.mubr.f32.mxu0 0.0
  %2459 = vmatmul.mubr.f32.gmra.mrb[0].mxu0 %v2206
  %v2460 = vpop.f32.mrb[0].mxu0
  %v2461 = vadd.f32 %v75, %v2460
  %v2462 = vpop.f32.mrb[0].mxu0
  %2463 = vmatprep.mubr.f32.mxu0 0.0
  %2464 = vmatmul.mubr.f32.gmra.mrb[0].mxu0 %v2209
  %v2465 = vpop.f32.mrb[0].mxu0
  %v2466 = vadd.f32 %v75, %v2465
  %v2467 = vpop.f32.mrb[0].mxu0
  %2468 = vmatprep.mubr.f32.mxu0 0.0
  %2469 = vmatmul.mubr.f32.gmra.mrb[0].mxu0 %v2212
  %v2470 = vpop.f32.mrb[0].mxu0
  %v2471 = vadd.f32 %v75, %v2470
  %v2472 = vpop.f32.mrb[0].mxu0
  %2473 = vmatprep.mubr.f32.mxu0 0.0
  %2474 = vmatmul.mubr.f32.gmra.mrb[0].mxu0 %v2215
  %v2475 = vpop.f32.mrb[0].mxu0
  %v2476 = vadd.f32 %v75, %v2475
  %v2477 = vpop.f32.mrb[0].mxu0
  %2478 = vmatprep.mubr.f32.mxu0 0.0
  %2479 = vmatmul.mubr.f32.gmra.mrb[0].mxu0 %v2218
  %v2480 = vpop.f32.mrb[0].mxu0
  %v2481 = vadd.f32 %v75, %v2480
  %v2482 = vpop.f32.mrb[0].mxu0
  %2483 = vmatprep.mubr.f32.mxu0 0.0
  %2484 = vmatmul.mubr.f32.gmra.mrb[0].mxu0 %v2221
  %v2485 = vpop.f32.mrb[0].mxu0
  %v2486 = vadd.f32 %v75, %v2485
  %v2487 = vpop.f32.mrb[0].mxu0
  %2488 = vmatprep.mubr.f32.mxu0 0.0
  %2489 = vmatmul.mubr.f32.gmra.mrb[0].mxu0 %v2224
  %v2490 = vpop.f32.mrb[0].mxu0
  %v2491 = vadd.f32 %v75, %v2490
  %v2492 = vpop.f32.mrb[0].mxu0
  %2493 = vmatprep.mubr.f32.mxu0 0.0
  %2494 = vmatmul.mubr.f32.gmra.mrb[0].mxu0 %v2227
  %v2495 = vpop.f32.mrb[0].mxu0
  %v2496 = vadd.f32 %v75, %v2495
  %v2497 = vpop.f32.mrb[0].mxu0
  %2498 = vmatprep.mubr.f32.mxu0 0.0
  %2499 = vmatmul.mubr.f32.gmra.mrb[0].mxu0 %v2230
  %v2500 = vpop.f32.mrb[0].mxu0
  %v2501 = vadd.f32 %v75, %v2500
  %v2502 = vpop.f32.mrb[0].mxu0
  %2503 = vmatprep.mubr.f32.mxu0 0.0
  %2504 = vmatmul.mubr.f32.gmra.mrb[0].mxu0 %v2233
  %v2505 = vpop.f32.mrb[0].mxu0
  %v2506 = vadd.f32 %v75, %v2505
  %v2507 = vpop.f32.mrb[0].mxu0
  %2508 = vmatprep.mubr.f32.mxu0 0.0
  %2509 = vmatmul.mubr.f32.gmra.mrb[0].mxu0 %v2236
  %v2510 = vpop.f32.mrb[0].mxu0
  %v2511 = vadd.f32 %v75, %v2510
  %v2512 = vpop.f32.mrb[0].mxu0
  %2513 = vmatprep.mubr.f32.mxu0 0.0
  %2514 = vmatmul.mubr.f32.gmra.mrb[0].mxu0 %v2239
  %v2515 = vpop.f32.mrb[0].mxu0
  %v2516 = vadd.f32 %v75, %v2515
  %v2517 = vpop.f32.mrb[0].mxu0
  %2518 = vmatprep.mubr.f32.mxu0 0.0
  %2519 = vmatmul.mubr.f32.gmra.mrb[0].mxu0 %v2242
  %v2520 = vpop.f32.mrb[0].mxu0
  %v2521 = vadd.f32 %v75, %v2520
  %v2522 = vpop.f32.mrb[0].mxu0
  %2523 = vmatprep.mubr.f32.mxu0 0.0
  %2524 = vmatmul.mubr.f32.gmra.mrb[0].mxu0 %v2245
  %v2525 = vpop.f32.mrb[0].mxu0
  %v2526 = vadd.f32 %v75, %v2525
  %v2527 = vpop.f32.mrb[0].mxu0
  %2528 = vmatprep.mubr.f32.mxu0 0.0
  %2529 = vmatmul.mubr.f32.gmra.mrb[0].mxu0 %v2248
  %v2530 = vpop.f32.mrb[0].mxu0
  %v2531 = vadd.f32 %v75, %v2530
  %v2532 = vpop.f32.mrb[0].mxu0
  %2533 = vmatprep.mubr.f32.mxu0 0.0
  %2534 = vmatmul.mubr.f32.gmra.mrb[0].mxu0 %v2251
  %v2535 = vpop.f32.mrb[0].mxu0
  %v2536 = vadd.f32 %v75, %v2535
  %v2537 = vpop.f32.mrb[0].mxu0
  %2538 = vmatprep.mubr.f32.mxu0 0.0
  %2539 = vmatmul.mubr.f32.gmra.mrb[0].mxu0 %v2254
  %v2540 = vpop.f32.mrb[0].mxu0
  %v2541 = vadd.f32 %v75, %v2540
  %v2542 = vpop.f32.mrb[0].mxu0
  %2543 = vmatprep.mubr.f32.mxu0 0.0
  %2544 = vmatmul.mubr.f32.gmra.mrb[0].mxu0 %v2257
  %v2545 = vpop.f32.mrb[0].mxu0
  %v2546 = vadd.f32 %v75, %v2545
  %v2547 = vpop.f32.mrb[0].mxu0
  %2548 = vmatprep.mubr.f32.mxu0 0.0
  %2549 = vmatmul.mubr.f32.gmra.mrb[0].mxu0 %v2260
  %v2550 = vpop.f32.mrb[0].mxu0
  %v2551 = vadd.f32 %v75, %v2550
  %v2552 = vpop.f32.mrb[0].mxu0
  %2553 = vmatprep.mubr.f32.mxu0 0.0
  %2554 = vmatmul.mubr.f32.gmra.mrb[0].mxu0 %v2263
  %v2555 = vpop.f32.mrb[0].mxu0
  %v2556 = vadd.f32 %v75, %v2555
  %v2557 = vpop.f32.mrb[0].mxu0
  %2558 = vmatprep.mubr.f32.mxu0 0.0
  %2559 = vmatmul.mubr.f32.gmra.mrb[0].mxu0 %v2266
  %v2560 = vpop.f32.mrb[0].mxu0
  %v2561 = vadd.f32 %v75, %v2560
  %v2562 = vpop.f32.mrb[0].mxu0
  %2563 = vmatprep.mubr.f32.mxu0 0.0
  %2564 = vmatmul.mubr.f32.gmra.mrb[0].mxu0 %v2269
  %v2565 = vpop.f32.mrb[0].mxu0
  %v2566 = vadd.f32 %v75, %v2565
  %v2567 = vpop.f32.mrb[0].mxu0
  %2568 = vmatprep.mubr.f32.mxu0 0.0
  %2569 = vmatmul.mubr.f32.gmra.mrb[0].mxu0 %v2272
  %v2570 = vpop.f32.mrb[0].mxu0
  %v2571 = vadd.f32 %v75, %v2570
  %v2572 = vpop.f32.mrb[0].mxu0
  %2573 = vmatprep.mubr.f32.mxu0 0.0
  %2574 = vmatmul.mubr.f32.gmra.mrb[0].mxu0 %v2275
  %v2575 = vpop.f32.mrb[0].mxu0
  %v2576 = vadd.f32 %v75, %v2575
  %v2577 = vpop.f32.mrb[0].mxu0
  %2578 = vmatprep.mubr.f32.mxu0 0.0
  %2579 = vmatmul.mubr.f32.gmra.mrb[0].mxu0 %v2278
  %v2580 = vpop.f32.mrb[0].mxu0
  %v2581 = vadd.f32 %v75, %v2580
  %v2582 = vpop.f32.mrb[0].mxu0
  %2583 = vmatprep.mubr.f32.mxu0 0.0
  %2584 = vmatmul.mubr.f32.gmra.mrb[0].mxu0 %v2281
  %v2585 = vpop.f32.mrb[0].mxu0
  %v2586 = vadd.f32 %v75, %v2585
  %v2587 = vpop.f32.mrb[0].mxu0
  %2588 = vmatprep.mubr.f32.mxu0 0.0
  %2589 = vmatmul.mubr.f32.gmra.mrb[0].mxu0 %v2284
  %v2590 = vpop.f32.mrb[0].mxu0
  %v2591 = vadd.f32 %v75, %v2590
  %v2592 = vpop.f32.mrb[0].mxu0
  %2593 = vmatprep.mubr.f32.mxu0 0.0
  %2594 = vmatmul.mubr.f32.gmra.mrb[0].mxu0 %v2287
  %v2595 = vpop.f32.mrb[0].mxu0
  %v2596 = vadd.f32 %v75, %v2595
  %v2597 = vpop.f32.mrb[0].mxu0
  %2598 = vdwg.mxu0
  %vm2599 = vcmp.gt.f32.partialorder %v2356, 0.0
  %vm2600 = vcmp.gt.f32.partialorder %v2361, 0.0
  %vm2601 = vcmp.gt.f32.partialorder %v2366, 0.0
  %vm2602 = vcmp.gt.f32.partialorder %v2371, 0.0
  %vm2603 = vcmp.gt.f32.partialorder %v2376, 0.0
  %vm2604 = vcmp.gt.f32.partialorder %v2381, 0.0
  %vm2605 = vcmp.gt.f32.partialorder %v2386, 0.0
  %vm2606 = vcmp.gt.f32.partialorder %v2391, 0.0
  %vm2607 = vcmp.gt.f32.partialorder %v2396, 0.0
  %vm2608 = vcmp.gt.f32.partialorder %v2401, 0.0
  %vm2609 = vcmp.gt.f32.partialorder %v2406, 0.0
  %vm2610 = vcmp.gt.f32.partialorder %v2411, 0.0
  %vm2611 = vcmp.gt.f32.partialorder %v2416, 0.0
  %vm2612 = vcmp.gt.f32.partialorder %v2421, 0.0
  %vm2613 = vcmp.gt.f32.partialorder %v2426, 0.0
  %vm2614 = vcmp.gt.f32.partialorder %v2431, 0.0
  %vm2615 = vcmp.gt.f32.partialorder %v2436, 0.0
  %vm2616 = vcmp.gt.f32.partialorder %v2441, 0.0
  %vm2617 = vcmp.gt.f32.partialorder %v2446, 0.0
  %vm2618 = vcmp.gt.f32.partialorder %v2451, 0.0
  %vm2619 = vcmp.gt.f32.partialorder %v2456, 0.0
  %vm2620 = vcmp.gt.f32.partialorder %v2461, 0.0
  %vm2621 = vcmp.gt.f32.partialorder %v2466, 0.0
  %vm2622 = vcmp.gt.f32.partialorder %v2471, 0.0
  %vm2623 = vcmp.gt.f32.partialorder %v2476, 0.0
  %vm2624 = vcmp.gt.f32.partialorder %v2481, 0.0
  %vm2625 = vcmp.gt.f32.partialorder %v2486, 0.0
  %vm2626 = vcmp.gt.f32.partialorder %v2491, 0.0
  %vm2627 = vcmp.gt.f32.partialorder %v2496, 0.0
  %vm2628 = vcmp.gt.f32.partialorder %v2501, 0.0
  %vm2629 = vcmp.gt.f32.partialorder %v2506, 0.0
  %vm2630 = vcmp.gt.f32.partialorder %v2511, 0.0
  %vm2631 = vcmp.gt.f32.partialorder %v2516, 0.0
  %vm2632 = vcmp.gt.f32.partialorder %v2521, 0.0
  %vm2633 = vcmp.gt.f32.partialorder %v2526, 0.0
  %vm2634 = vcmp.gt.f32.partialorder %v2531, 0.0
  %vm2635 = vcmp.gt.f32.partialorder %v2536, 0.0
  %vm2636 = vcmp.gt.f32.partialorder %v2541, 0.0
  %vm2637 = vcmp.gt.f32.partialorder %v2546, 0.0
  %vm2638 = vcmp.gt.f32.partialorder %v2551, 0.0
  %vm2639 = vcmp.gt.f32.partialorder %v2556, 0.0
  %vm2640 = vcmp.gt.f32.partialorder %v2561, 0.0
  %vm2641 = vcmp.gt.f32.partialorder %v2566, 0.0
  %vm2642 = vcmp.gt.f32.partialorder %v2571, 0.0
  %vm2643 = vcmp.gt.f32.partialorder %v2576, 0.0
  %vm2644 = vcmp.gt.f32.partialorder %v2581, 0.0
  %vm2645 = vcmp.gt.f32.partialorder %v2586, 0.0
  %vm2646 = vcmp.gt.f32.partialorder %v2591, 0.0
  %vm2647 = vcmp.gt.f32.partialorder %v2596, 0.0
  %v2648 = vmul.f32 %v2356, 0.2
  %v2649 = vmul.f32 %v2361, 0.2
  %v2650 = vmul.f32 %v2366, 0.2
  %v2651 = vmul.f32 %v2371, 0.2
  %v2652 = vmul.f32 %v2376, 0.2
  %v2653 = vmul.f32 %v2381, 0.2
  %v2654 = vmul.f32 %v2386, 0.2
  %v2655 = vmul.f32 %v2391, 0.2
  %v2656 = vmul.f32 %v2396, 0.2
  %v2657 = vmul.f32 %v2401, 0.2
  %v2658 = vmul.f32 %v2406, 0.2
  %v2659 = vmul.f32 %v2411, 0.2
  %v2660 = vmul.f32 %v2416, 0.2
  %v2661 = vmul.f32 %v2421, 0.2
  %v2662 = vmul.f32 %v2426, 0.2
  %v2663 = vmul.f32 %v2431, 0.2
  %v2664 = vmul.f32 %v2436, 0.2
  %v2665 = vmul.f32 %v2441, 0.2
  %v2666 = vmul.f32 %v2446, 0.2
  %v2667 = vmul.f32 %v2451, 0.2
  %v2668 = vmul.f32 %v2456, 0.2
  %v2669 = vmul.f32 %v2461, 0.2
  %v2670 = vmul.f32 %v2466, 0.2
  %v2671 = vmul.f32 %v2471, 0.2
  %v2672 = vmul.f32 %v2476, 0.2
  %v2673 = vmul.f32 %v2481, 0.2
  %v2674 = vmul.f32 %v2486, 0.2
  %v2675 = vmul.f32 %v2491, 0.2
  %v2676 = vmul.f32 %v2496, 0.2
  %v2677 = vmul.f32 %v2501, 0.2
  %v2678 = vmul.f32 %v2506, 0.2
  %v2679 = vmul.f32 %v2511, 0.2
  %v2680 = vmul.f32 %v2516, 0.2
  %v2681 = vmul.f32 %v2521, 0.2
  %v2682 = vmul.f32 %v2526, 0.2
  %v2683 = vmul.f32 %v2531, 0.2
  %v2684 = vmul.f32 %v2536, 0.2
  %v2685 = vmul.f32 %v2541, 0.2
  %v2686 = vmul.f32 %v2546, 0.2
  %v2687 = vmul.f32 %v2551, 0.2
  %v2688 = vmul.f32 %v2556, 0.2
  %v2689 = vmul.f32 %v2561, 0.2
  %v2690 = vmul.f32 %v2566, 0.2
  %v2691 = vmul.f32 %v2571, 0.2
  %v2692 = vmul.f32 %v2576, 0.2
  %v2693 = vmul.f32 %v2581, 0.2
  %v2694 = vmul.f32 %v2586, 0.2
  %v2695 = vmul.f32 %v2591, 0.2
  %v2696 = vmul.f32 %v2596, 0.2
  %v2697 = vsel %vm2599, %v2356, %v2648
  %v2698 = vsel %vm2600, %v2361, %v2649
  %v2699 = vsel %vm2601, %v2366, %v2650
  %v2700 = vsel %vm2602, %v2371, %v2651
  %v2701 = vsel %vm2603, %v2376, %v2652
  %v2702 = vsel %vm2604, %v2381, %v2653
  %v2703 = vsel %vm2605, %v2386, %v2654
  %v2704 = vsel %vm2606, %v2391, %v2655
  %v2705 = vsel %vm2607, %v2396, %v2656
  %v2706 = vsel %vm2608, %v2401, %v2657
  %v2707 = vsel %vm2609, %v2406, %v2658
  %v2708 = vsel %vm2610, %v2411, %v2659
  %v2709 = vsel %vm2611, %v2416, %v2660
  %v2710 = vsel %vm2612, %v2421, %v2661
  %v2711 = vsel %vm2613, %v2426, %v2662
  %v2712 = vsel %vm2614, %v2431, %v2663
  %v2713 = vsel %vm2615, %v2436, %v2664
  %v2714 = vsel %vm2616, %v2441, %v2665
  %v2715 = vsel %vm2617, %v2446, %v2666
  %v2716 = vsel %vm2618, %v2451, %v2667
  %v2717 = vsel %vm2619, %v2456, %v2668
  %v2718 = vsel %vm2620, %v2461, %v2669
  %v2719 = vsel %vm2621, %v2466, %v2670
  %v2720 = vsel %vm2622, %v2471, %v2671
  %v2721 = vsel %vm2623, %v2476, %v2672
  %v2722 = vsel %vm2624, %v2481, %v2673
  %v2723 = vsel %vm2625, %v2486, %v2674
  %v2724 = vsel %vm2626, %v2491, %v2675
  %v2725 = vsel %vm2627, %v2496, %v2676
  %v2726 = vsel %vm2628, %v2501, %v2677
  %v2727 = vsel %vm2629, %v2506, %v2678
  %v2728 = vsel %vm2630, %v2511, %v2679
  %v2729 = vsel %vm2631, %v2516, %v2680
  %v2730 = vsel %vm2632, %v2521, %v2681
  %v2731 = vsel %vm2633, %v2526, %v2682
  %v2732 = vsel %vm2634, %v2531, %v2683
  %v2733 = vsel %vm2635, %v2536, %v2684
  %v2734 = vsel %vm2636, %v2541, %v2685
  %v2735 = vsel %vm2637, %v2546, %v2686
  %v2736 = vsel %vm2638, %v2551, %v2687
  %v2737 = vsel %vm2639, %v2556, %v2688
  %v2738 = vsel %vm2640, %v2561, %v2689
  %v2739 = vsel %vm2641, %v2566, %v2690
  %v2740 = vsel %vm2642, %v2571, %v2691
  %v2741 = vsel %vm2643, %v2576, %v2692
  %v2742 = vsel %vm2644, %v2581, %v2693
  %v2743 = vsel %vm2645, %v2586, %v2694
  %v2744 = vsel %vm2646, %v2591, %v2695
  %v2745 = vsel %vm2647, %v2596, %v2696
  %v2746 = vmax.f32 %v2043, %v2697
  %v2747 = vmax.f32 %v2044, %v2698
  %v2748 = vmax.f32 %v2045, %v2699
  %v2749 = vmax.f32 %v2046, %v2700
  %v2750 = vmax.f32 %v2047, %v2701
  %v2751 = vmax.f32 %v2048, %v2702
  %v2752 = vmax.f32 %v2049, %v2703
  %v2753 = vmax.f32 %v2050, %v2704
  %v2754 = vmax.f32 %v2051, %v2705
  %v2755 = vmax.f32 %v2052, %v2706
  %v2756 = vmax.f32 %v2053, %v2707
  %v2757 = vmax.f32 %v2054, %v2708
  %v2758 = vmax.f32 %v2055, %v2709
  %v2759 = vmax.f32 %v2056, %v2710
  %v2760 = vmax.f32 %v2057, %v2711
  %v2761 = vmax.f32 %v2058, %v2712
  %v2762 = vmax.f32 %v2059, %v2713
  %v2763 = vmax.f32 %v2060, %v2714
  %v2764 = vmax.f32 %v2061, %v2715
  %v2765 = vmax.f32 %v2062, %v2716
  %v2766 = vmax.f32 %v2063, %v2717
  %v2767 = vmax.f32 %v2064, %v2718
  %v2768 = vmax.f32 %v2065, %v2719
  %v2769 = vmax.f32 %v2066, %v2720
  %v2770 = vmax.f32 %v2067, %v2721
  %v2771 = vmax.f32 %v2068, %v2722
  %v2772 = vmax.f32 %v2069, %v2723
  %v2773 = vmax.f32 %v2070, %v2724
  %v2774 = vmax.f32 %v2071, %v2725
  %v2775 = vmax.f32 %v2072, %v2726
  %v2776 = vmax.f32 %v2073, %v2727
  %v2777 = vmax.f32 %v2074, %v2728
  %v2778 = vmax.f32 %v2075, %v2729
  %v2779 = vmax.f32 %v2076, %v2730
  %v2780 = vmax.f32 %v2077, %v2731
  %v2781 = vmax.f32 %v2078, %v2732
  %v2782 = vmax.f32 %v2079, %v2733
  %v2783 = vmax.f32 %v2080, %v2734
  %v2784 = vmax.f32 %v2081, %v2735
  %v2785 = vmax.f32 %v2082, %v2736
  %v2786 = vmax.f32 %v2083, %v2737
  %v2787 = vmax.f32 %v2084, %v2738
  %v2788 = vmax.f32 %v2085, %v2739
  %v2789 = vmax.f32 %v2086, %v2740
  %v2790 = vmax.f32 %v2087, %v2741
  %v2791 = vmax.f32 %v2088, %v2742
  %v2792 = vmax.f32 %v2089, %v2743
  %v2793 = vmax.f32 %v2090, %v2744
  %v2794 = vmax.f32 %v2091, %v2745
  %vm2795 = vcmask 523264
  %2796 = vst.msk [vmem:[%s3] sm:$0xff] %vm2795, %v2746
  %2797 = vst.msk [vmem:[%s3 + $0x8] sm:$0xff] %vm2795, %v2747
  %2798 = vst.msk [vmem:[%s3 + $0x10] sm:$0xff] %vm2795, %v2748
  %2799 = vst.msk [vmem:[%s3 + $0x18] sm:$0xff] %vm2795, %v2749
  %2800 = vst.msk [vmem:[%s3 + $0x20] sm:$0xff] %vm2795, %v2750
  %2801 = vst.msk [vmem:[%s3 + $0x28] sm:$0xff] %vm2795, %v2751
  %2802 = vst.msk [vmem:[%s3 + $0x30] sm:$0xff] %vm2795, %v2752
  %2803 = vst.msk [vmem:[%s3 + $0x38] sm:$0xff] %vm2795, %v2753
  %2804 = vst.msk [vmem:[%s3 + $0x40] sm:$0xff] %vm2795, %v2754
  %2805 = vst.msk [vmem:[%s3 + $0x48] sm:$0xff] %vm2795, %v2755
  %2806 = vst.msk [vmem:[%s3 + $0x50] sm:$0xff] %vm2795, %v2756
  %2807 = vst.msk [vmem:[%s3 + $0x58] sm:$0xff] %vm2795, %v2757
  %2808 = vst.msk [vmem:[%s3 + $0x60] sm:$0xff] %vm2795, %v2758
  %2809 = vst.msk [vmem:[%s3 + $0x68] sm:$0xff] %vm2795, %v2759
  %2810 = vst.msk [vmem:[%s3 + $0x70] sm:$0xff] %vm2795, %v2760
  %2811 = vst.msk [vmem:[%s3 + $0x78] sm:$0xff] %vm2795, %v2761
  %2812 = vst.msk [vmem:[%s3 + $0x80] sm:$0xff] %vm2795, %v2762
  %2813 = vst.msk [vmem:[%s3 + $0x88] sm:$0xff] %vm2795, %v2763
  %2814 = vst.msk [vmem:[%s3 + $0x90] sm:$0xff] %vm2795, %v2764
  %2815 = vst.msk [vmem:[%s3 + $0x98] sm:$0xff] %vm2795, %v2765
  %2816 = vst.msk [vmem:[%s3 + $0xa0] sm:$0xff] %vm2795, %v2766
  %2817 = vst.msk [vmem:[%s3 + $0xa8] sm:$0xff] %vm2795, %v2767
  %2818 = vst.msk [vmem:[%s3 + $0xb0] sm:$0xff] %vm2795, %v2768
  %2819 = vst.msk [vmem:[%s3 + $0xb8] sm:$0xff] %vm2795, %v2769
  %2820 = vst.msk [vmem:[%s3 + $0xc0] sm:$0xff] %vm2795, %v2770
  %2821 = vst.msk [vmem:[%s3 + $0xc8] sm:$0xff] %vm2795, %v2771
  %2822 = vst.msk [vmem:[%s3 + $0xd0] sm:$0xff] %vm2795, %v2772
  %2823 = vst.msk [vmem:[%s3 + $0xd8] sm:$0xff] %vm2795, %v2773
  %2824 = vst.msk [vmem:[%s3 + $0xe0] sm:$0xff] %vm2795, %v2774
  %2825 = vst.msk [vmem:[%s3 + $0xe8] sm:$0xff] %vm2795, %v2775
  %2826 = vst.msk [vmem:[%s3 + $0xf0] sm:$0xff] %vm2795, %v2776
  %2827 = vst.msk [vmem:[%s3 + $0xf8] sm:$0xff] %vm2795, %v2777
  %2828 = vst.msk [vmem:[%s3 + $0x100] sm:$0xff] %vm2795, %v2778
  %2829 = vst.msk [vmem:[%s3 + $0x108] sm:$0xff] %vm2795, %v2779
  %2830 = vst.msk [vmem:[%s3 + $0x110] sm:$0xff] %vm2795, %v2780
  %2831 = vst.msk [vmem:[%s3 + $0x118] sm:$0xff] %vm2795, %v2781
  %2832 = vst.msk [vmem:[%s3 + $0x120] sm:$0xff] %vm2795, %v2782
  %2833 = vst.msk [vmem:[%s3 + $0x128] sm:$0xff] %vm2795, %v2783
  %2834 = vst.msk [vmem:[%s3 + $0x130] sm:$0xff] %vm2795, %v2784
  %2835 = vst.msk [vmem:[%s3 + $0x138] sm:$0xff] %vm2795, %v2785
  %2836 = vst.msk [vmem:[%s3 + $0x140] sm:$0xff] %vm2795, %v2786
  %2837 = vst.msk [vmem:[%s3 + $0x148] sm:$0xff] %vm2795, %v2787
  %2838 = vst.msk [vmem:[%s3 + $0x150] sm:$0xff] %vm2795, %v2788
  %2839 = vst.msk [vmem:[%s3 + $0x158] sm:$0xff] %vm2795, %v2789
  %2840 = vst.msk [vmem:[%s3 + $0x160] sm:$0xff] %vm2795, %v2790
  %2841 = vst.msk [vmem:[%s3 + $0x168] sm:$0xff] %vm2795, %v2791
  %2842 = vst.msk [vmem:[%s3 + $0x170] sm:$0xff] %vm2795, %v2792
  %2843 = vst.msk [vmem:[%s3 + $0x178] sm:$0xff] %vm2795, %v2793
  %2844 = vst.msk [vmem:[%s3 + $0x180] sm:$0xff] %vm2795, %v2794
  // Predicated region
  $region14: #{mcnn2_forward.3} parent=0 // pred_check
    _
  $region15: #{mcnn2_forward.3} parent=0 // pred_check_branch
    %2846 = sbr.rel (0) target = $region17
  $region16: #{mcnn2_forward.3} parent=0 // pred_region
    _
  $region17: #{mcnn2_forward.3} parent=0 // pred_fallthru
    _
  // Predicated region
  $region18: #{mcnn2_forward.3} parent=0 // pred_check
    _
  $region19: #{mcnn2_forward.3} parent=0 // pred_check_branch
    %2848 = sbr.rel (0) target = $region21
  $region20: #{mcnn2_forward.3} parent=0 // pred_region
    _
  $region21: #{mcnn2_forward.3} parent=0 // pred_fallthru
    _

// kernel: mcnn2_forward.4
$region0: #{mcnn2_forward.4}
  #allocation0 [shape = 'u32[]', space=smem, size = 0x4, offset = 0x4, fixed_abs, tag = 'smem constant byte address 0x4 - core index']
  #allocation1 [shape = 'u32[144,128]{1,0:T(1,128)}', space=vmem, size = 0x12000, scoped, tag = 'internal scratch']
  %s0 = inlined_call_operand.vmem [shape: f32[200,1600], index: 0, kind: input, shape index: {}]
  %s1 = inlined_call_operand.vmem [shape: f32[1600,128], index: 1, kind: input, shape index: {}]
  %s2 = inlined_call_operand.vmem [shape: f32[1,128], index: 2, kind: input, shape index: {}]
  %s3 = inlined_call_operand.vmem [shape: f32[200,128], index: 3, kind: output, shape index: {}]
  %s4 = sld [smem:[#allocation0]]
  $region22: #{mcnn2_forward.4} parent=0
    _
  %s6 = ssub.s32 1, %s4
  %s7 = scalar_select 0, %s6, %s4
  // Predicated region
  $region2: #{mcnn2_forward.4} parent=0 // pred_check
    _
  $region3: #{mcnn2_forward.4} parent=0 // pred_check_branch
    %9 = sbr.rel (0) target = $region5
  $region4: #{mcnn2_forward.4} parent=0 // pred_region
    _
  $region5: #{mcnn2_forward.4} parent=0 // pred_fallthru
    _
  // Predicated region
  $region6: #{mcnn2_forward.4} parent=0 // pred_check
    _
  $region7: #{mcnn2_forward.4} parent=0 // pred_check_branch
    %11 = sbr.rel (0) target = $region9
  $region8: #{mcnn2_forward.4} parent=0 // pred_region
    _
  $region9: #{mcnn2_forward.4} parent=0 // pred_fallthru
    _
  // Predicated region
  $region10: #{mcnn2_forward.4} parent=0 // pred_check
    _
  $region11: #{mcnn2_forward.4} parent=0 // pred_check_branch
    %13 = sbr.rel (0) target = $region13
  $region12: #{mcnn2_forward.4} parent=0 // pred_region
    _
  $region13: #{mcnn2_forward.4} parent=0 // pred_fallthru
    _
  %v14 = vld [vmem:[%s0] sm:$0xff]
  %v15 = vld [vmem:[%s0 + $0x8] sm:$0xff]
  %v16 = vld [vmem:[%s0 + $0x10] sm:$0xff]
  %v17 = vld [vmem:[%s0 + $0x18] sm:$0xff]
  %v18 = vld [vmem:[%s0 + $0x20] sm:$0xff]
  %v19 = vld [vmem:[%s0 + $0x28] sm:$0xff]
  %v20 = vld [vmem:[%s0 + $0x30] sm:$0xff]
  %v21 = vld [vmem:[%s0 + $0x38] sm:$0xff]
  %v22 = vld [vmem:[%s0 + $0x40] sm:$0xff]
  %v23 = vld [vmem:[%s0 + $0x48] sm:$0xff]
  %v24 = vld [vmem:[%s0 + $0x50] sm:$0xff]
  %v25 = vld [vmem:[%s0 + $0x58] sm:$0xff]
  %v26 = vld [vmem:[%s0 + $0x60] sm:$0xff]
  %v27 = vld [vmem:[%s0 + $0x68] sm:$0xff]
  %v28 = vld [vmem:[%s0 + $0x70] sm:$0xff]
  %v29 = vld [vmem:[%s0 + $0x78] sm:$0xff]
  %v30 = vld [vmem:[%s0 + $0x80] sm:$0xff]
  %v31 = vld [vmem:[%s0 + $0x88] sm:$0xff]
  %v32 = vld [vmem:[%s0 + $0x90] sm:$0xff]
  %v33 = vld [vmem:[%s0 + $0x98] sm:$0xff]
  %v34 = vld [vmem:[%s0 + $0xa0] sm:$0xff]
  %v35 = vld [vmem:[%s0 + $0xa8] sm:$0xff]
  %v36 = vld [vmem:[%s0 + $0xb0] sm:$0xff]
  %v37 = vld [vmem:[%s0 + $0xb8] sm:$0xff]
  %v38 = vld [vmem:[%s0 + $0xc0] sm:$0xff]
  %v39 = vld [vmem:[%s0 + $0xc8] sm:$0xff]
  %v40 = vld [vmem:[%s0 + $0xd0] sm:$0xff]
  %v41 = vld [vmem:[%s0 + $0xd8] sm:$0xff]
  %v42 = vld [vmem:[%s0 + $0xe0] sm:$0xff]
  %v43 = vld [vmem:[%s0 + $0xe8] sm:$0xff]
  %v44 = vld [vmem:[%s0 + $0xf0] sm:$0xff]
  %v45 = vld [vmem:[%s0 + $0xf8] sm:$0xff]
  %v46 = vld [vmem:[%s0 + $0x100] sm:$0xff]
  %v47 = vld [vmem:[%s0 + $0x108] sm:$0xff]
  %v48 = vld [vmem:[%s0 + $0x110] sm:$0xff]
  %v49 = vld [vmem:[%s0 + $0x118] sm:$0xff]
  %v50 = vld [vmem:[%s0 + $0x120] sm:$0xff]
  %v51 = vld [vmem:[%s0 + $0x128] sm:$0xff]
  %v52 = vld [vmem:[%s0 + $0x130] sm:$0xff]
  %v53 = vld [vmem:[%s0 + $0x138] sm:$0xff]
  %v54 = vld [vmem:[%s0 + $0x140] sm:$0xff]
  %v55 = vld [vmem:[%s0 + $0x148] sm:$0xff]
  %v56 = vld [vmem:[%s0 + $0x150] sm:$0xff]
  %v57 = vld [vmem:[%s0 + $0x158] sm:$0xff]
  %v58 = vld [vmem:[%s0 + $0x160] sm:$0xff]
  %v59 = vld [vmem:[%s0 + $0x168] sm:$0xff]
  %v60 = vld [vmem:[%s0 + $0x170] sm:$0xff]
  %v61 = vld [vmem:[%s0 + $0x178] sm:$0xff]
  %v62 = vld [vmem:[%s0 + $0x180] sm:$0xff]
  %v63 = vld [vmem:[%s0 + $0x188] sm:$0xff]
  %v64 = vld [vmem:[%s0 + $0x190] sm:$0xff]
  %v65 = vld [vmem:[%s0 + $0x198] sm:$0xff]
  %v66 = vld [vmem:[%s0 + $0x1a0] sm:$0xff]
  %v67 = vld [vmem:[%s0 + $0x1a8] sm:$0xff]
  %v68 = vld [vmem:[%s0 + $0x1b0] sm:$0xff]
  %v69 = vld [vmem:[%s0 + $0x1b8] sm:$0xff]
  %v70 = vld [vmem:[%s0 + $0x1c0] sm:$0xff]
  %v71 = vld [vmem:[%s0 + $0x1c8] sm:$0xff]
  %v72 = vld [vmem:[%s0 + $0x1d0] sm:$0xff]
  %v73 = vld [vmem:[%s0 + $0x1d8] sm:$0xff]
  %v74 = vld [vmem:[%s0 + $0x1e0] sm:$0xff]
  %v75 = vld [vmem:[%s0 + $0x1e8] sm:$0xff]
  %v76 = vld [vmem:[%s0 + $0x1f0] sm:$0xff]
  %v77 = vld [vmem:[%s0 + $0x1f8] sm:$0xff]
  %v78 = vld [vmem:[%s0 + $0x200] sm:$0xff]
  %v79 = vld [vmem:[%s0 + $0x208] sm:$0xff]
  %v80 = vld [vmem:[%s0 + $0x210] sm:$0xff]
  %v81 = vld [vmem:[%s0 + $0x218] sm:$0xff]
  %v82 = vld [vmem:[%s0 + $0x220] sm:$0xff]
  %v83 = vld [vmem:[%s0 + $0x228] sm:$0xff]
  %v84 = vld [vmem:[%s0 + $0x230] sm:$0xff]
  %v85 = vld [vmem:[%s0 + $0x238] sm:$0xff]
  %v86 = vld [vmem:[%s0 + $0x240] sm:$0xff]
  %v87 = vld [vmem:[%s0 + $0x248] sm:$0xff]
  %v88 = vld [vmem:[%s0 + $0x250] sm:$0xff]
  %v89 = vld [vmem:[%s0 + $0x258] sm:$0xff]
  %v90 = vld [vmem:[%s0 + $0x260] sm:$0xff]
  %v91 = vld [vmem:[%s0 + $0x268] sm:$0xff]
  %v92 = vld [vmem:[%s0 + $0x270] sm:$0xff]
  %v93 = vld [vmem:[%s0 + $0x278] sm:$0xff]
  %v94 = vld [vmem:[%s0 + $0x280] sm:$0xff]
  %v95 = vld [vmem:[%s0 + $0x288] sm:$0xff]
  %v96 = vld [vmem:[%s0 + $0x290] sm:$0xff]
  %v97 = vld [vmem:[%s0 + $0x298] sm:$0xff]
  %v98 = vld [vmem:[%s0 + $0x2a0] sm:$0xff]
  %v99 = vld [vmem:[%s0 + $0x2a8] sm:$0xff]
  %v100 = vld [vmem:[%s0 + $0x2b0] sm:$0xff]
  %v101 = vld [vmem:[%s0 + $0x2b8] sm:$0xff]
  %v102 = vld [vmem:[%s0 + $0x2c0] sm:$0xff]
  %v103 = vld [vmem:[%s0 + $0x2c8] sm:$0xff]
  %v104 = vld [vmem:[%s0 + $0x2d0] sm:$0xff]
  %v105 = vld [vmem:[%s0 + $0x2d8] sm:$0xff]
  %v106 = vld [vmem:[%s0 + $0x2e0] sm:$0xff]
  %v107 = vld [vmem:[%s0 + $0x2e8] sm:$0xff]
  %v108 = vld [vmem:[%s0 + $0x2f0] sm:$0xff]
  %v109 = vld [vmem:[%s0 + $0x2f8] sm:$0xff]
  %v110 = vld [vmem:[%s0 + $0x300] sm:$0xff]
  %v111 = vld [vmem:[%s0 + $0x308] sm:$0xff]
  %v112 = vld [vmem:[%s0 + $0x310] sm:$0xff]
  %v113 = vld [vmem:[%s0 + $0x318] sm:$0xff]
  %v114 = vld [vmem:[%s0 + $0x320] sm:$0xff]
  %v115 = vld [vmem:[%s0 + $0x328] sm:$0xff]
  %v116 = vld [vmem:[%s0 + $0x330] sm:$0xff]
  %v117 = vld [vmem:[%s0 + $0x338] sm:$0xff]
  %v118 = vld [vmem:[%s0 + $0x340] sm:$0xff]
  %v119 = vld [vmem:[%s0 + $0x348] sm:$0xff]
  %v120 = vld [vmem:[%s0 + $0x350] sm:$0xff]
  %v121 = vld [vmem:[%s0 + $0x358] sm:$0xff]
  %v122 = vld [vmem:[%s0 + $0x360] sm:$0xff]
  %v123 = vld [vmem:[%s0 + $0x368] sm:$0xff]
  %v124 = vld [vmem:[%s0 + $0x370] sm:$0xff]
  %v125 = vld [vmem:[%s0 + $0x378] sm:$0xff]
  %v126 = vld [vmem:[%s0 + $0x380] sm:$0xff]
  %v127 = vld [vmem:[%s0 + $0x388] sm:$0xff]
  %v128 = vld [vmem:[%s0 + $0x390] sm:$0xff]
  %v129 = vld [vmem:[%s0 + $0x398] sm:$0xff]
  %v130 = vld [vmem:[%s0 + $0x3a0] sm:$0xff]
  %v131 = vld [vmem:[%s0 + $0x3a8] sm:$0xff]
  %v132 = vld [vmem:[%s0 + $0x3b0] sm:$0xff]
  %v133 = vld [vmem:[%s0 + $0x3b8] sm:$0xff]
  %v134 = vld [vmem:[%s0 + $0x3c0] sm:$0xff]
  %v135 = vld [vmem:[%s0 + $0x3c8] sm:$0xff]
  %v136 = vld [vmem:[%s0 + $0x3d0] sm:$0xff]
  %v137 = vld [vmem:[%s0 + $0x3d8] sm:$0xff]
  %v138 = vld [vmem:[%s0 + $0x3e0] sm:$0xff]
  %v139 = vld [vmem:[%s0 + $0x3e8] sm:$0xff]
  %v140 = vld [vmem:[%s0 + $0x3f0] sm:$0xff]
  %v141 = vld [vmem:[%s0 + $0x3f8] sm:$0xff]
  %v142 = vld [vmem:[%s0 + $0x400] sm:$0xff]
  %v143 = vld [vmem:[%s0 + $0x408] sm:$0xff]
  %v144 = vld [vmem:[%s0 + $0x410] sm:$0xff]
  %v145 = vld [vmem:[%s0 + $0x418] sm:$0xff]
  %v146 = vld [vmem:[%s0 + $0x420] sm:$0xff]
  %v147 = vld [vmem:[%s0 + $0x428] sm:$0xff]
  %v148 = vld [vmem:[%s0 + $0x430] sm:$0xff]
  %v149 = vld [vmem:[%s0 + $0x438] sm:$0xff]
  %v150 = vld [vmem:[%s0 + $0x440] sm:$0xff]
  %v151 = vld [vmem:[%s0 + $0x448] sm:$0xff]
  %v152 = vld [vmem:[%s0 + $0x450] sm:$0xff]
  %v153 = vld [vmem:[%s0 + $0x458] sm:$0xff]
  %v154 = vld [vmem:[%s0 + $0x460] sm:$0xff]
  %v155 = vld [vmem:[%s0 + $0x468] sm:$0xff]
  %v156 = vld [vmem:[%s0 + $0x470] sm:$0xff]
  %v157 = vld [vmem:[%s0 + $0x478] sm:$0xff]
  %v158 = vld [vmem:[%s0 + $0x480] sm:$0xff]
  %v159 = vld [vmem:[%s0 + $0x488] sm:$0xff]
  %v160 = vld [vmem:[%s0 + $0x490] sm:$0xff]
  %v161 = vld [vmem:[%s0 + $0x498] sm:$0xff]
  %v162 = vld [vmem:[%s0 + $0x4a0] sm:$0xff]
  %v163 = vld [vmem:[%s0 + $0x4a8] sm:$0xff]
  %v164 = vld [vmem:[%s0 + $0x4b0] sm:$0xff]
  %v165 = vld [vmem:[%s0 + $0x4b8] sm:$0xff]
  %v166 = vld [vmem:[%s0 + $0x4c0] sm:$0xff]
  %v167 = vld [vmem:[%s0 + $0x4c8] sm:$0xff]
  %v168 = vld [vmem:[%s0 + $0x4d0] sm:$0xff]
  %v169 = vld [vmem:[%s0 + $0x4d8] sm:$0xff]
  %v170 = vld [vmem:[%s0 + $0x4e0] sm:$0xff]
  %v171 = vld [vmem:[%s0 + $0x4e8] sm:$0xff]
  %v172 = vld [vmem:[%s0 + $0x4f0] sm:$0xff]
  %v173 = vld [vmem:[%s0 + $0x4f8] sm:$0xff]
  %v174 = vld [vmem:[%s0 + $0x500] sm:$0xff]
  %v175 = vld [vmem:[%s0 + $0x508] sm:$0xff]
  %v176 = vld [vmem:[%s0 + $0x510] sm:$0xff]
  %v177 = vld [vmem:[%s0 + $0x518] sm:$0xff]
  %v178 = vld [vmem:[%s0 + $0x520] sm:$0xff]
  %v179 = vld [vmem:[%s0 + $0x528] sm:$0xff]
  %v180 = vld [vmem:[%s0 + $0x530] sm:$0xff]
  %v181 = vld [vmem:[%s0 + $0x538] sm:$0xff]
  %v182 = vld [vmem:[%s0 + $0x540] sm:$0xff]
  %v183 = vld [vmem:[%s0 + $0x548] sm:$0xff]
  %v184 = vld [vmem:[%s0 + $0x550] sm:$0xff]
  %v185 = vld [vmem:[%s0 + $0x558] sm:$0xff]
  %v186 = vld [vmem:[%s0 + $0x560] sm:$0xff]
  %v187 = vld [vmem:[%s0 + $0x568] sm:$0xff]
  %v188 = vld [vmem:[%s0 + $0x570] sm:$0xff]
  %v189 = vld [vmem:[%s0 + $0x578] sm:$0xff]
  %v190 = vld [vmem:[%s0 + $0x580] sm:$0xff]
  %v191 = vld [vmem:[%s0 + $0x588] sm:$0xff]
  %v192 = vld [vmem:[%s0 + $0x590] sm:$0xff]
  %v193 = vld [vmem:[%s0 + $0x598] sm:$0xff]
  %v194 = vld [vmem:[%s0 + $0x5a0] sm:$0xff]
  %v195 = vld [vmem:[%s0 + $0x5a8] sm:$0xff]
  %v196 = vld [vmem:[%s0 + $0x5b0] sm:$0xff]
  %v197 = vld [vmem:[%s0 + $0x5b8] sm:$0xff]
  %v198 = vld [vmem:[%s0 + $0x5c0] sm:$0xff]
  %v199 = vld [vmem:[%s0 + $0x5c8] sm:$0xff]
  %v200 = vld [vmem:[%s0 + $0x5d0] sm:$0xff]
  %v201 = vld [vmem:[%s0 + $0x5d8] sm:$0xff]
  %v202 = vld [vmem:[%s0 + $0x5e0] sm:$0xff]
  %v203 = vld [vmem:[%s0 + $0x5e8] sm:$0xff]
  %v204 = vld [vmem:[%s0 + $0x5f0] sm:$0xff]
  %v205 = vld [vmem:[%s0 + $0x5f8] sm:$0xff]
  %v206 = vld [vmem:[%s0 + $0x600] sm:$0xff]
  %v207 = vld [vmem:[%s0 + $0x608] sm:$0xff]
  %v208 = vld [vmem:[%s0 + $0x610] sm:$0xff]
  %v209 = vld [vmem:[%s0 + $0x618] sm:$0xff]
  %v210 = vld [vmem:[%s0 + $0x620] sm:$0xff]
  %v211 = vld [vmem:[%s0 + $0x628] sm:$0xff]
  %v212 = vld [vmem:[%s0 + $0x630] sm:$0xff]
  %v213 = vld [vmem:[%s0 + $0x638] sm:$0xff]
  %v214 = vld [vmem:[%s0 + $0x640] sm:$0xff]
  %v215 = vld [vmem:[%s0 + $0x648] sm:$0xff]
  %v216 = vld [vmem:[%s0 + $0x650] sm:$0xff]
  %v217 = vld [vmem:[%s0 + $0x658] sm:$0xff]
  %v218 = vld [vmem:[%s0 + $0x660] sm:$0xff]
  %v219 = vld [vmem:[%s0 + $0x668] sm:$0xff]
  %v220 = vld [vmem:[%s0 + $0x670] sm:$0xff]
  %v221 = vld [vmem:[%s0 + $0x678] sm:$0xff]
  %v222 = vld [vmem:[%s0 + $0x680] sm:$0xff]
  %v223 = vld [vmem:[%s0 + $0x688] sm:$0xff]
  %v224 = vld [vmem:[%s0 + $0x690] sm:$0xff]
  %v225 = vld [vmem:[%s0 + $0x698] sm:$0xff]
  %v226 = vld [vmem:[%s0 + $0x6a0] sm:$0xff]
  %v227 = vld [vmem:[%s0 + $0x6a8] sm:$0xff]
  %v228 = vld [vmem:[%s0 + $0x6b0] sm:$0xff]
  %v229 = vld [vmem:[%s0 + $0x6b8] sm:$0xff]
  %v230 = vld [vmem:[%s0 + $0x6c0] sm:$0xff]
  %v231 = vld [vmem:[%s0 + $0x6c8] sm:$0xff]
  %v232 = vld [vmem:[%s0 + $0x6d0] sm:$0xff]
  %v233 = vld [vmem:[%s0 + $0x6d8] sm:$0xff]
  %v234 = vld [vmem:[%s0 + $0x6e0] sm:$0xff]
  %v235 = vld [vmem:[%s0 + $0x6e8] sm:$0xff]
  %v236 = vld [vmem:[%s0 + $0x6f0] sm:$0xff]
  %v237 = vld [vmem:[%s0 + $0x6f8] sm:$0xff]
  %v238 = vld [vmem:[%s0 + $0x700] sm:$0xff]
  %v239 = vld [vmem:[%s0 + $0x708] sm:$0xff]
  %v240 = vld [vmem:[%s0 + $0x710] sm:$0xff]
  %v241 = vld [vmem:[%s0 + $0x718] sm:$0xff]
  %v242 = vld [vmem:[%s0 + $0x720] sm:$0xff]
  %v243 = vld [vmem:[%s0 + $0x728] sm:$0xff]
  %v244 = vld [vmem:[%s0 + $0x730] sm:$0xff]
  %v245 = vld [vmem:[%s0 + $0x738] sm:$0xff]
  %v246 = vld [vmem:[%s0 + $0x740] sm:$0xff]
  %v247 = vld [vmem:[%s0 + $0x748] sm:$0xff]
  %v248 = vld [vmem:[%s0 + $0x750] sm:$0xff]
  %v249 = vld [vmem:[%s0 + $0x758] sm:$0xff]
  %v250 = vld [vmem:[%s0 + $0x760] sm:$0xff]
  %v251 = vld [vmem:[%s0 + $0x768] sm:$0xff]
  %v252 = vld [vmem:[%s0 + $0x770] sm:$0xff]
  %v253 = vld [vmem:[%s0 + $0x778] sm:$0xff]
  %v254 = vld [vmem:[%s0 + $0x780] sm:$0xff]
  %v255 = vld [vmem:[%s0 + $0x788] sm:$0xff]
  %v256 = vld [vmem:[%s0 + $0x790] sm:$0xff]
  %v257 = vld [vmem:[%s0 + $0x798] sm:$0xff]
  %v258 = vld [vmem:[%s0 + $0x7a0] sm:$0xff]
  %v259 = vld [vmem:[%s0 + $0x7a8] sm:$0xff]
  %v260 = vld [vmem:[%s0 + $0x7b0] sm:$0xff]
  %v261 = vld [vmem:[%s0 + $0x7b8] sm:$0xff]
  %v262 = vld [vmem:[%s0 + $0x7c0] sm:$0xff]
  %v263 = vld [vmem:[%s0 + $0x7c8] sm:$0xff]
  %v264 = vld [vmem:[%s0 + $0x7d0] sm:$0xff]
  %v265 = vld [vmem:[%s0 + $0x7d8] sm:$0xff]
  %v266 = vld [vmem:[%s0 + $0x7e0] sm:$0xff]
  %v267 = vld [vmem:[%s0 + $0x7e8] sm:$0xff]
  %v268 = vld [vmem:[%s0 + $0x7f0] sm:$0xff]
  %v269 = vld [vmem:[%s0 + $0x7f8] sm:$0xff]
  %v270 = vld [vmem:[%s0 + $0x800] sm:$0xff]
  %v271 = vld [vmem:[%s0 + $0x808] sm:$0xff]
  %v272 = vld [vmem:[%s0 + $0x810] sm:$0xff]
  %v273 = vld [vmem:[%s0 + $0x818] sm:$0xff]
  %v274 = vld [vmem:[%s0 + $0x820] sm:$0xff]
  %v275 = vld [vmem:[%s0 + $0x828] sm:$0xff]
  %v276 = vld [vmem:[%s0 + $0x830] sm:$0xff]
  %v277 = vld [vmem:[%s0 + $0x838] sm:$0xff]
  %v278 = vld [vmem:[%s0 + $0x840] sm:$0xff]
  %v279 = vld [vmem:[%s0 + $0x848] sm:$0xff]
  %v280 = vld [vmem:[%s0 + $0x850] sm:$0xff]
  %v281 = vld [vmem:[%s0 + $0x858] sm:$0xff]
  %v282 = vld [vmem:[%s0 + $0x860] sm:$0xff]
  %v283 = vld [vmem:[%s0 + $0x868] sm:$0xff]
  %v284 = vld [vmem:[%s0 + $0x870] sm:$0xff]
  %v285 = vld [vmem:[%s0 + $0x878] sm:$0xff]
  %v286 = vld [vmem:[%s0 + $0x880] sm:$0xff]
  %v287 = vld [vmem:[%s0 + $0x888] sm:$0xff]
  %v288 = vld [vmem:[%s0 + $0x890] sm:$0xff]
  %v289 = vld [vmem:[%s0 + $0x898] sm:$0xff]
  %v290 = vld [vmem:[%s0 + $0x8a0] sm:$0xff]
  %v291 = vld [vmem:[%s0 + $0x8a8] sm:$0xff]
  %v292 = vld [vmem:[%s0 + $0x8b0] sm:$0xff]
  %v293 = vld [vmem:[%s0 + $0x8b8] sm:$0xff]
  %v294 = vld [vmem:[%s0 + $0x8c0] sm:$0xff]
  %v295 = vld [vmem:[%s0 + $0x8c8] sm:$0xff]
  %v296 = vld [vmem:[%s0 + $0x8d0] sm:$0xff]
  %v297 = vld [vmem:[%s0 + $0x8d8] sm:$0xff]
  %v298 = vld [vmem:[%s0 + $0x8e0] sm:$0xff]
  %v299 = vld [vmem:[%s0 + $0x8e8] sm:$0xff]
  %v300 = vld [vmem:[%s0 + $0x8f0] sm:$0xff]
  %v301 = vld [vmem:[%s0 + $0x8f8] sm:$0xff]
  %v302 = vld [vmem:[%s0 + $0x900] sm:$0xff]
  %v303 = vld [vmem:[%s0 + $0x908] sm:$0xff]
  %v304 = vld [vmem:[%s0 + $0x910] sm:$0xff]
  %v305 = vld [vmem:[%s0 + $0x918] sm:$0xff]
  %v306 = vld [vmem:[%s0 + $0x920] sm:$0xff]
  %v307 = vld [vmem:[%s0 + $0x928] sm:$0xff]
  %v308 = vld [vmem:[%s0 + $0x930] sm:$0xff]
  %v309 = vld [vmem:[%s0 + $0x938] sm:$0xff]
  %v310 = vld [vmem:[%s0 + $0x940] sm:$0xff]
  %v311 = vld [vmem:[%s0 + $0x948] sm:$0xff]
  %v312 = vld [vmem:[%s0 + $0x950] sm:$0xff]
  %v313 = vld [vmem:[%s0 + $0x958] sm:$0xff]
  %v314 = vld [vmem:[%s0 + $0x960] sm:$0xff]
  %v315 = vld [vmem:[%s0 + $0x968] sm:$0xff]
  %v316 = vld [vmem:[%s0 + $0x970] sm:$0xff]
  %v317 = vld [vmem:[%s0 + $0x978] sm:$0xff]
  %v318 = vld [vmem:[%s0 + $0x980] sm:$0xff]
  %v319 = vld [vmem:[%s0 + $0x988] sm:$0xff]
  %v320 = vld [vmem:[%s0 + $0x990] sm:$0xff]
  %v321 = vld [vmem:[%s0 + $0x998] sm:$0xff]
  %v322 = vld [vmem:[%s0 + $0x9a0] sm:$0xff]
  %v323 = vld [vmem:[%s0 + $0x9a8] sm:$0xff]
  %v324 = vld [vmem:[%s0 + $0x9b0] sm:$0xff]
  %v325 = vld [vmem:[%s0 + $0x9b8] sm:$0xff]
  %v326 = vld [vmem:[%s0 + $0x9c0] sm:$0xff]
  %v327 = vld [vmem:[%s0 + $0x9c8] sm:$0xff]
  %v328 = vld [vmem:[%s0 + $0x9d0] sm:$0xff]
  %v329 = vld [vmem:[%s0 + $0x9d8] sm:$0xff]
  %v330 = vld [vmem:[%s0 + $0x9e0] sm:$0xff]
  %v331 = vld [vmem:[%s0 + $0x9e8] sm:$0xff]
  %v332 = vld [vmem:[%s0 + $0x9f0] sm:$0xff]
  %v333 = vld [vmem:[%s0 + $0x9f8] sm:$0xff]
  %v334 = vld [vmem:[%s0 + $0xa00] sm:$0xff]
  %v335 = vld [vmem:[%s0 + $0xa08] sm:$0xff]
  %v336 = vld [vmem:[%s0 + $0xa10] sm:$0xff]
  %v337 = vld [vmem:[%s0 + $0xa18] sm:$0xff]
  %v338 = vld [vmem:[%s0 + $0xa20] sm:$0xff]
  %v339 = vld [vmem:[%s1] sm:$0xff]
  %v340 = vld [vmem:[%s1 + $0x8] sm:$0xff]
  %v341 = vld [vmem:[%s1 + $0x10] sm:$0xff]
  %v342 = vld [vmem:[%s1 + $0x18] sm:$0xff]
  %v343 = vld [vmem:[%s1 + $0x20] sm:$0xff]
  %v344 = vld [vmem:[%s1 + $0x28] sm:$0xff]
  %v345 = vld [vmem:[%s1 + $0x30] sm:$0xff]
  %v346 = vld [vmem:[%s1 + $0x38] sm:$0xff]
  %v347 = vld [vmem:[%s1 + $0x40] sm:$0xff]
  %v348 = vld [vmem:[%s1 + $0x48] sm:$0xff]
  %v349 = vld [vmem:[%s1 + $0x50] sm:$0xff]
  %v350 = vld [vmem:[%s1 + $0x58] sm:$0xff]
  %v351 = vld [vmem:[%s1 + $0x60] sm:$0xff]
  %v352 = vld [vmem:[%s1 + $0x68] sm:$0xff]
  %v353 = vld [vmem:[%s1 + $0x70] sm:$0xff]
  %v354 = vld [vmem:[%s1 + $0x78] sm:$0xff]
  %v355 = vld [vmem:[%s1 + $0x80] sm:$0xff]
  %v356 = vld [vmem:[%s1 + $0x88] sm:$0xff]
  %v357 = vld [vmem:[%s1 + $0x90] sm:$0xff]
  %v358 = vld [vmem:[%s1 + $0x98] sm:$0xff]
  %v359 = vld [vmem:[%s1 + $0xa0] sm:$0xff]
  %v360 = vld [vmem:[%s1 + $0xa8] sm:$0xff]
  %v361 = vld [vmem:[%s1 + $0xb0] sm:$0xff]
  %v362 = vld [vmem:[%s1 + $0xb8] sm:$0xff]
  %v363 = vld [vmem:[%s1 + $0xc0] sm:$0xff]
  %v364 = vld [vmem:[%s1 + $0xc8] sm:$0xff]
  %v365 = vld [vmem:[%s1 + $0xd0] sm:$0xff]
  %v366 = vld [vmem:[%s1 + $0xd8] sm:$0xff]
  %v367 = vld [vmem:[%s1 + $0xe0] sm:$0xff]
  %v368 = vld [vmem:[%s1 + $0xe8] sm:$0xff]
  %v369 = vld [vmem:[%s1 + $0xf0] sm:$0xff]
  %v370 = vld [vmem:[%s1 + $0xf8] sm:$0xff]
  %v371 = vld [vmem:[%s1 + $0x100] sm:$0xff]
  %v372 = vld [vmem:[%s1 + $0x108] sm:$0xff]
  %v373 = vld [vmem:[%s1 + $0x110] sm:$0xff]
  %v374 = vld [vmem:[%s1 + $0x118] sm:$0xff]
  %v375 = vld [vmem:[%s1 + $0x120] sm:$0xff]
  %v376 = vld [vmem:[%s1 + $0x128] sm:$0xff]
  %v377 = vld [vmem:[%s1 + $0x130] sm:$0xff]
  %v378 = vld [vmem:[%s1 + $0x138] sm:$0xff]
  %v379 = vld [vmem:[%s1 + $0x140] sm:$0xff]
  %v380 = vld [vmem:[%s1 + $0x148] sm:$0xff]
  %v381 = vld [vmem:[%s1 + $0x150] sm:$0xff]
  %v382 = vld [vmem:[%s1 + $0x158] sm:$0xff]
  %v383 = vld [vmem:[%s1 + $0x160] sm:$0xff]
  %v384 = vld [vmem:[%s1 + $0x168] sm:$0xff]
  %v385 = vld [vmem:[%s1 + $0x170] sm:$0xff]
  %v386 = vld [vmem:[%s1 + $0x178] sm:$0xff]
  %v387 = vld [vmem:[%s1 + $0x180] sm:$0xff]
  %v388 = vld [vmem:[%s1 + $0x188] sm:$0xff]
  %v389 = vld [vmem:[%s1 + $0x190] sm:$0xff]
  %v390 = vld [vmem:[%s1 + $0x198] sm:$0xff]
  %v391 = vld [vmem:[%s1 + $0x1a0] sm:$0xff]
  %v392 = vld [vmem:[%s1 + $0x1a8] sm:$0xff]
  %v393 = vld [vmem:[%s1 + $0x1b0] sm:$0xff]
  %v394 = vld [vmem:[%s1 + $0x1b8] sm:$0xff]
  %v395 = vld [vmem:[%s1 + $0x1c0] sm:$0xff]
  %v396 = vld [vmem:[%s1 + $0x1c8] sm:$0xff]
  %v397 = vld [vmem:[%s1 + $0x1d0] sm:$0xff]
  %v398 = vld [vmem:[%s1 + $0x1d8] sm:$0xff]
  %v399 = vld [vmem:[%s1 + $0x1e0] sm:$0xff]
  %v400 = vld [vmem:[%s1 + $0x1e8] sm:$0xff]
  %v401 = vld [vmem:[%s1 + $0x1f0] sm:$0xff]
  %v402 = vld [vmem:[%s1 + $0x1f8] sm:$0xff]
  %v403 = vld [vmem:[%s1 + $0x200] sm:$0xff]
  %v404 = vld [vmem:[%s1 + $0x208] sm:$0xff]
  %v405 = vld [vmem:[%s1 + $0x210] sm:$0xff]
  %v406 = vld [vmem:[%s1 + $0x218] sm:$0xff]
  %v407 = vld [vmem:[%s1 + $0x220] sm:$0xff]
  %v408 = vld [vmem:[%s1 + $0x228] sm:$0xff]
  %v409 = vld [vmem:[%s1 + $0x230] sm:$0xff]
  %v410 = vld [vmem:[%s1 + $0x238] sm:$0xff]
  %v411 = vld [vmem:[%s1 + $0x240] sm:$0xff]
  %v412 = vld [vmem:[%s1 + $0x248] sm:$0xff]
  %v413 = vld [vmem:[%s1 + $0x250] sm:$0xff]
  %v414 = vld [vmem:[%s1 + $0x258] sm:$0xff]
  %v415 = vld [vmem:[%s1 + $0x260] sm:$0xff]
  %v416 = vld [vmem:[%s1 + $0x268] sm:$0xff]
  %v417 = vld [vmem:[%s1 + $0x270] sm:$0xff]
  %v418 = vld [vmem:[%s1 + $0x278] sm:$0xff]
  %v419 = vld [vmem:[%s1 + $0x280] sm:$0xff]
  %v420 = vld [vmem:[%s1 + $0x288] sm:$0xff]
  %v421 = vld [vmem:[%s1 + $0x290] sm:$0xff]
  %v422 = vld [vmem:[%s1 + $0x298] sm:$0xff]
  %v423 = vld [vmem:[%s1 + $0x2a0] sm:$0xff]
  %v424 = vld [vmem:[%s1 + $0x2a8] sm:$0xff]
  %v425 = vld [vmem:[%s1 + $0x2b0] sm:$0xff]
  %v426 = vld [vmem:[%s1 + $0x2b8] sm:$0xff]
  %v427 = vld [vmem:[%s1 + $0x2c0] sm:$0xff]
  %v428 = vld [vmem:[%s1 + $0x2c8] sm:$0xff]
  %v429 = vld [vmem:[%s1 + $0x2d0] sm:$0xff]
  %v430 = vld [vmem:[%s1 + $0x2d8] sm:$0xff]
  %v431 = vld [vmem:[%s1 + $0x2e0] sm:$0xff]
  %v432 = vld [vmem:[%s1 + $0x2e8] sm:$0xff]
  %v433 = vld [vmem:[%s1 + $0x2f0] sm:$0xff]
  %v434 = vld [vmem:[%s1 + $0x2f8] sm:$0xff]
  %v435 = vld [vmem:[%s1 + $0x300] sm:$0xff]
  %v436 = vld [vmem:[%s1 + $0x308] sm:$0xff]
  %v437 = vld [vmem:[%s1 + $0x310] sm:$0xff]
  %v438 = vld [vmem:[%s1 + $0x318] sm:$0xff]
  %v439 = vld [vmem:[%s1 + $0x320] sm:$0xff]
  %v440 = vld [vmem:[%s1 + $0x328] sm:$0xff]
  %v441 = vld [vmem:[%s1 + $0x330] sm:$0xff]
  %v442 = vld [vmem:[%s1 + $0x338] sm:$0xff]
  %v443 = vld [vmem:[%s1 + $0x340] sm:$0xff]
  %v444 = vld [vmem:[%s1 + $0x348] sm:$0xff]
  %v445 = vld [vmem:[%s1 + $0x350] sm:$0xff]
  %v446 = vld [vmem:[%s1 + $0x358] sm:$0xff]
  %v447 = vld [vmem:[%s1 + $0x360] sm:$0xff]
  %v448 = vld [vmem:[%s1 + $0x368] sm:$0xff]
  %v449 = vld [vmem:[%s1 + $0x370] sm:$0xff]
  %v450 = vld [vmem:[%s1 + $0x378] sm:$0xff]
  %v451 = vld [vmem:[%s1 + $0x380] sm:$0xff]
  %v452 = vld [vmem:[%s1 + $0x388] sm:$0xff]
  %v453 = vld [vmem:[%s1 + $0x390] sm:$0xff]
  %v454 = vld [vmem:[%s1 + $0x398] sm:$0xff]
  %v455 = vld [vmem:[%s1 + $0x3a0] sm:$0xff]
  %v456 = vld [vmem:[%s1 + $0x3a8] sm:$0xff]
  %v457 = vld [vmem:[%s1 + $0x3b0] sm:$0xff]
  %v458 = vld [vmem:[%s1 + $0x3b8] sm:$0xff]
  %v459 = vld [vmem:[%s1 + $0x3c0] sm:$0xff]
  %v460 = vld [vmem:[%s1 + $0x3c8] sm:$0xff]
  %v461 = vld [vmem:[%s1 + $0x3d0] sm:$0xff]
  %v462 = vld [vmem:[%s1 + $0x3d8] sm:$0xff]
  %v463 = vld [vmem:[%s1 + $0x3e0] sm:$0xff]
  %v464 = vld [vmem:[%s1 + $0x3e8] sm:$0xff]
  %v465 = vld [vmem:[%s1 + $0x3f0] sm:$0xff]
  %v466 = vld [vmem:[%s1 + $0x3f8] sm:$0xff]
  %v467 = vld [vmem:[%s1 + $0x400] sm:$0xff]
  %v468 = vld [vmem:[%s1 + $0x408] sm:$0xff]
  %v469 = vld [vmem:[%s1 + $0x410] sm:$0xff]
  %v470 = vld [vmem:[%s1 + $0x418] sm:$0xff]
  %v471 = vld [vmem:[%s1 + $0x420] sm:$0xff]
  %v472 = vld [vmem:[%s1 + $0x428] sm:$0xff]
  %v473 = vld [vmem:[%s1 + $0x430] sm:$0xff]
  %v474 = vld [vmem:[%s1 + $0x438] sm:$0xff]
  %v475 = vld [vmem:[%s1 + $0x440] sm:$0xff]
  %v476 = vld [vmem:[%s1 + $0x448] sm:$0xff]
  %v477 = vld [vmem:[%s1 + $0x450] sm:$0xff]
  %v478 = vld [vmem:[%s1 + $0x458] sm:$0xff]
  %v479 = vld [vmem:[%s1 + $0x460] sm:$0xff]
  %v480 = vld [vmem:[%s1 + $0x468] sm:$0xff]
  %v481 = vld [vmem:[%s1 + $0x470] sm:$0xff]
  %v482 = vld [vmem:[%s1 + $0x478] sm:$0xff]
  %v483 = vld [vmem:[%s1 + $0x480] sm:$0xff]
  %v484 = vld [vmem:[%s1 + $0x488] sm:$0xff]
  %v485 = vld [vmem:[%s1 + $0x490] sm:$0xff]
  %v486 = vld [vmem:[%s1 + $0x498] sm:$0xff]
  %v487 = vld [vmem:[%s1 + $0x4a0] sm:$0xff]
  %v488 = vld [vmem:[%s1 + $0x4a8] sm:$0xff]
  %v489 = vld [vmem:[%s1 + $0x4b0] sm:$0xff]
  %v490 = vld [vmem:[%s1 + $0x4b8] sm:$0xff]
  %v491 = vld [vmem:[%s1 + $0x4c0] sm:$0xff]
  %v492 = vld [vmem:[%s1 + $0x4c8] sm:$0xff]
  %v493 = vld [vmem:[%s1 + $0x4d0] sm:$0xff]
  %v494 = vld [vmem:[%s1 + $0x4d8] sm:$0xff]
  %v495 = vld [vmem:[%s1 + $0x4e0] sm:$0xff]
  %v496 = vld [vmem:[%s1 + $0x4e8] sm:$0xff]
  %v497 = vld [vmem:[%s1 + $0x4f0] sm:$0xff]
  %v498 = vld [vmem:[%s1 + $0x4f8] sm:$0xff]
  %v499 = vld [vmem:[%s1 + $0x500] sm:$0xff]
  %v500 = vld [vmem:[%s1 + $0x508] sm:$0xff]
  %v501 = vld [vmem:[%s1 + $0x510] sm:$0xff]
  %v502 = vld [vmem:[%s1 + $0x518] sm:$0xff]
  %v503 = vld [vmem:[%s1 + $0x520] sm:$0xff]
  %v504 = vld [vmem:[%s1 + $0x528] sm:$0xff]
  %v505 = vld [vmem:[%s1 + $0x530] sm:$0xff]
  %v506 = vld [vmem:[%s1 + $0x538] sm:$0xff]
  %v507 = vld [vmem:[%s1 + $0x540] sm:$0xff]
  %v508 = vld [vmem:[%s1 + $0x548] sm:$0xff]
  %v509 = vld [vmem:[%s1 + $0x550] sm:$0xff]
  %v510 = vld [vmem:[%s1 + $0x558] sm:$0xff]
  %v511 = vld [vmem:[%s1 + $0x560] sm:$0xff]
  %v512 = vld [vmem:[%s1 + $0x568] sm:$0xff]
  %v513 = vld [vmem:[%s1 + $0x570] sm:$0xff]
  %v514 = vld [vmem:[%s1 + $0x578] sm:$0xff]
  %v515 = vld [vmem:[%s1 + $0x580] sm:$0xff]
  %v516 = vld [vmem:[%s1 + $0x588] sm:$0xff]
  %v517 = vld [vmem:[%s1 + $0x590] sm:$0xff]
  %v518 = vld [vmem:[%s1 + $0x598] sm:$0xff]
  %v519 = vld [vmem:[%s1 + $0x5a0] sm:$0xff]
  %v520 = vld [vmem:[%s1 + $0x5a8] sm:$0xff]
  %v521 = vld [vmem:[%s1 + $0x5b0] sm:$0xff]
  %v522 = vld [vmem:[%s1 + $0x5b8] sm:$0xff]
  %v523 = vld [vmem:[%s1 + $0x5c0] sm:$0xff]
  %v524 = vld [vmem:[%s1 + $0x5c8] sm:$0xff]
  %v525 = vld [vmem:[%s1 + $0x5d0] sm:$0xff]
  %v526 = vld [vmem:[%s1 + $0x5d8] sm:$0xff]
  %v527 = vld [vmem:[%s1 + $0x5e0] sm:$0xff]
  %v528 = vld [vmem:[%s1 + $0x5e8] sm:$0xff]
  %v529 = vld [vmem:[%s1 + $0x5f0] sm:$0xff]
  %v530 = vld [vmem:[%s1 + $0x5f8] sm:$0xff]
  %v531 = vld [vmem:[%s1 + $0x600] sm:$0xff]
  %v532 = vld [vmem:[%s1 + $0x608] sm:$0xff]
  %v533 = vld [vmem:[%s1 + $0x610] sm:$0xff]
  %v534 = vld [vmem:[%s1 + $0x618] sm:$0xff]
  %v535 = vld [vmem:[%s1 + $0x620] sm:$0xff]
  %v536 = vld [vmem:[%s1 + $0x628] sm:$0xff]
  %v537 = vld [vmem:[%s1 + $0x630] sm:$0xff]
  %v538 = vld [vmem:[%s1 + $0x638] sm:$0xff]
  %v539 = vld [vmem:[%s2] sm:$0x1]
  %v541 = vlaneseq
  %v542 = vshrl.u32 %v541, 7
  %v543 = vsub.s32 0, %v542
  %v544 = vrot.slane %v539, %v543
  %vm546 = vcmask 523264
  %v548 = vsel %vm546, %v26, 0
  %v551 = vsel %vm546, %v39, 0
  %v554 = vsel %vm546, %v52, 0
  %v557 = vsel %vm546, %v65, 0
  %v560 = vsel %vm546, %v78, 0
  %v563 = vsel %vm546, %v91, 0
  %v566 = vsel %vm546, %v104, 0
  %v569 = vsel %vm546, %v117, 0
  %v572 = vsel %vm546, %v130, 0
  %v575 = vsel %vm546, %v143, 0
  %v578 = vsel %vm546, %v156, 0
  %v581 = vsel %vm546, %v169, 0
  %v584 = vsel %vm546, %v182, 0
  %v587 = vsel %vm546, %v195, 0
  %v590 = vsel %vm546, %v208, 0
  %v593 = vsel %vm546, %v221, 0
  %v596 = vsel %vm546, %v234, 0
  %v599 = vsel %vm546, %v247, 0
  %v602 = vsel %vm546, %v260, 0
  %v605 = vsel %vm546, %v273, 0
  %v608 = vsel %vm546, %v286, 0
  %v611 = vsel %vm546, %v299, 0
  %v614 = vsel %vm546, %v312, 0
  %v617 = vsel %vm546, %v325, 0
  %v620 = vsel %vm546, %v338, 0
  %622 = vmatprep.subr.mxu0 0.0
  %623 = vmatpush1.msra.mxu0 %v339
  %624 = vmatprep.subr.mxu0 0.0
  %625 = vmatpush1.msra.mxu0 %v340
  %626 = vmatprep.subr.mxu0 0.0
  %627 = vmatpush1.msra.mxu0 %v341
  %628 = vmatprep.subr.mxu0 0.0
  %629 = vmatpush1.msra.mxu0 %v342
  %630 = vmatprep.subr.mxu0 0.0
  %631 = vmatpush1.msra.mxu0 %v343
  %632 = vmatprep.subr.mxu0 0.0
  %633 = vmatpush1.msra.mxu0 %v344
  %634 = vmatprep.subr.mxu0 0.0
  %635 = vmatpush1.msra.mxu0 %v345
  %636 = vmatprep.subr.mxu0 0.0
  %637 = vmatpush1.msra.mxu0 %v346
  %638 = vmatprep.subr.mxu0 0.0
  %639 = vmatpush1.msra.mxu0 %v347
  %640 = vmatprep.subr.mxu0 0.0
  %641 = vmatpush1.msra.mxu0 %v348
  %642 = vmatprep.subr.mxu0 0.0
  %643 = vmatpush1.msra.mxu0 %v349
  %644 = vmatprep.subr.mxu0 0.0
  %645 = vmatpush1.msra.mxu0 %v350
  %646 = vmatprep.subr.mxu0 0.0
  %647 = vmatpush1.msra.mxu0 %v351
  %648 = vmatprep.subr.mxu0 0.0
  %649 = vmatpush1.msra.mxu0 %v352
  %650 = vmatprep.subr.mxu0 0.0
  %651 = vmatpush1.msra.mxu0 %v353
  %652 = vmatprep.subr.mxu0 0.0
  %653 = vmatpush1.msra.mxu0 %v354
  %654 = vmatprep.subr.mxu0 0.0
  %655 = vmatpush1.msra.mxu0 %v355
  %656 = vmatprep.subr.mxu0 0.0
  %657 = vmatpush1.msra.mxu0 %v356
  %658 = vmatprep.subr.mxu0 0.0
  %659 = vmatpush1.msra.mxu0 %v357
  %660 = vmatprep.subr.mxu0 0.0
  %661 = vmatpush1.msra.mxu0 %v358
  %662 = vmatprep.subr.mxu0 0.0
  %663 = vmatpush1.msra.mxu0 %v359
  %664 = vmatprep.subr.mxu0 0.0
  %665 = vmatpush1.msra.mxu0 %v360
  %666 = vmatprep.subr.mxu0 0.0
  %667 = vmatpush1.msra.mxu0 %v361
  %668 = vmatprep.subr.mxu0 0.0
  %669 = vmatpush1.msra.mxu0 %v362
  %670 = vmatprep.subr.mxu0 0.0
  %671 = vmatpush1.msra.mxu0 %v363
  %672 = vmatprep.subr.mxu0 0.0
  %673 = vmatpush1.msra.mxu0 %v364
  %674 = vmatprep.subr.mxu0 0.0
  %675 = vmatpush1.msra.mxu0 %v365
  %676 = vmatprep.subr.mxu0 0.0
  %677 = vmatpush1.msra.mxu0 %v366
  %678 = vmatprep.subr.mxu0 0.0
  %679 = vmatpush1.msra.mxu0 %v367
  %680 = vmatprep.subr.mxu0 0.0
  %681 = vmatpush1.msra.mxu0 %v368
  %682 = vmatprep.subr.mxu0 0.0
  %683 = vmatpush1.msra.mxu0 %v369
  %684 = vmatprep.subr.mxu0 0.0
  %685 = vmatpush1.msra.mxu0 %v370
  %686 = vmatprep.mubr.f32.mxu0 %v15
  %687 = vmatmul.mubr.f32.gmra.mrb[0].mxu0 %v14
  %v688 = vpop.f32.mrb[0].mxu0
  %v689 = vadd.f32 %v544, %v688
  %v690 = vpop.f32.mrb[0].mxu0
  %691 = vmatprep.mubr.f32.mxu0 %v28
  %692 = vmatmul.mubr.f32.gmra.mrb[0].mxu0 %v27
  %v693 = vpop.f32.mrb[0].mxu0
  %v694 = vadd.f32 %v544, %v693
  %v695 = vpop.f32.mrb[0].mxu0
  %696 = vmatprep.mubr.f32.mxu0 %v41
  %697 = vmatmul.mubr.f32.gmra.mrb[0].mxu0 %v40
  %v698 = vpop.f32.mrb[0].mxu0
  %v699 = vadd.f32 %v544, %v698
  %v700 = vpop.f32.mrb[0].mxu0
  %701 = vmatprep.mubr.f32.mxu0 %v54
  %702 = vmatmul.mubr.f32.gmra.mrb[0].mxu0 %v53
  %v703 = vpop.f32.mrb[0].mxu0
  %v704 = vadd.f32 %v544, %v703
  %v705 = vpop.f32.mrb[0].mxu0
  %706 = vmatprep.mubr.f32.mxu0 %v67
  %707 = vmatmul.mubr.f32.gmra.mrb[0].mxu0 %v66
  %v708 = vpop.f32.mrb[0].mxu0
  %v709 = vadd.f32 %v544, %v708
  %v710 = vpop.f32.mrb[0].mxu0
  %711 = vmatprep.mubr.f32.mxu0 %v80
  %712 = vmatmul.mubr.f32.gmra.mrb[0].mxu0 %v79
  %v713 = vpop.f32.mrb[0].mxu0
  %v714 = vadd.f32 %v544, %v713
  %v715 = vpop.f32.mrb[0].mxu0
  %716 = vmatprep.mubr.f32.mxu0 %v93
  %717 = vmatmul.mubr.f32.gmra.mrb[0].mxu0 %v92
  %v718 = vpop.f32.mrb[0].mxu0
  %v719 = vadd.f32 %v544, %v718
  %v720 = vpop.f32.mrb[0].mxu0
  %721 = vmatprep.mubr.f32.mxu0 %v106
  %722 = vmatmul.mubr.f32.gmra.mrb[0].mxu0 %v105
  %v723 = vpop.f32.mrb[0].mxu0
  %v724 = vadd.f32 %v544, %v723
  %v725 = vpop.f32.mrb[0].mxu0
  %726 = vmatprep.mubr.f32.mxu0 %v119
  %727 = vmatmul.mubr.f32.gmra.mrb[0].mxu0 %v118
  %v728 = vpop.f32.mrb[0].mxu0
  %v729 = vadd.f32 %v544, %v728
  %v730 = vpop.f32.mrb[0].mxu0
  %731 = vmatprep.mubr.f32.mxu0 %v132
  %732 = vmatmul.mubr.f32.gmra.mrb[0].mxu0 %v131
  %v733 = vpop.f32.mrb[0].mxu0
  %v734 = vadd.f32 %v544, %v733
  %v735 = vpop.f32.mrb[0].mxu0
  %736 = vmatprep.mubr.f32.mxu0 %v145
  %737 = vmatmul.mubr.f32.gmra.mrb[0].mxu0 %v144
  %v738 = vpop.f32.mrb[0].mxu0
  %v739 = vadd.f32 %v544, %v738
  %v740 = vpop.f32.mrb[0].mxu0
  %741 = vmatprep.mubr.f32.mxu0 %v158
  %742 = vmatmul.mubr.f32.gmra.mrb[0].mxu0 %v157
  %v743 = vpop.f32.mrb[0].mxu0
  %v744 = vadd.f32 %v544, %v743
  %v745 = vpop.f32.mrb[0].mxu0
  %746 = vmatprep.mubr.f32.mxu0 %v171
  %747 = vmatmul.mubr.f32.gmra.mrb[0].mxu0 %v170
  %v748 = vpop.f32.mrb[0].mxu0
  %v749 = vadd.f32 %v544, %v748
  %v750 = vpop.f32.mrb[0].mxu0
  %751 = vmatprep.mubr.f32.mxu0 %v184
  %752 = vmatmul.mubr.f32.gmra.mrb[0].mxu0 %v183
  %v753 = vpop.f32.mrb[0].mxu0
  %v754 = vadd.f32 %v544, %v753
  %v755 = vpop.f32.mrb[0].mxu0
  %756 = vmatprep.mubr.f32.mxu0 %v197
  %757 = vmatmul.mubr.f32.gmra.mrb[0].mxu0 %v196
  %v758 = vpop.f32.mrb[0].mxu0
  %v759 = vadd.f32 %v544, %v758
  %v760 = vpop.f32.mrb[0].mxu0
  %761 = vmatprep.mubr.f32.mxu0 %v210
  %762 = vmatmul.mubr.f32.gmra.mrb[0].mxu0 %v209
  %v763 = vpop.f32.mrb[0].mxu0
  %v764 = vadd.f32 %v544, %v763
  %v765 = vpop.f32.mrb[0].mxu0
  %766 = vmatprep.mubr.f32.mxu0 %v223
  %767 = vmatmul.mubr.f32.gmra.mrb[0].mxu0 %v222
  %v768 = vpop.f32.mrb[0].mxu0
  %v769 = vadd.f32 %v544, %v768
  %v770 = vpop.f32.mrb[0].mxu0
  %771 = vmatprep.mubr.f32.mxu0 %v236
  %772 = vmatmul.mubr.f32.gmra.mrb[0].mxu0 %v235
  %v773 = vpop.f32.mrb[0].mxu0
  %v774 = vadd.f32 %v544, %v773
  %v775 = vpop.f32.mrb[0].mxu0
  %776 = vmatprep.mubr.f32.mxu0 %v249
  %777 = vmatmul.mubr.f32.gmra.mrb[0].mxu0 %v248
  %v778 = vpop.f32.mrb[0].mxu0
  %v779 = vadd.f32 %v544, %v778
  %v780 = vpop.f32.mrb[0].mxu0
  %781 = vmatprep.mubr.f32.mxu0 %v262
  %782 = vmatmul.mubr.f32.gmra.mrb[0].mxu0 %v261
  %v783 = vpop.f32.mrb[0].mxu0
  %v784 = vadd.f32 %v544, %v783
  %v785 = vpop.f32.mrb[0].mxu0
  %786 = vmatprep.mubr.f32.mxu0 %v275
  %787 = vmatmul.mubr.f32.gmra.mrb[0].mxu0 %v274
  %v788 = vpop.f32.mrb[0].mxu0
  %v789 = vadd.f32 %v544, %v788
  %v790 = vpop.f32.mrb[0].mxu0
  %791 = vmatprep.mubr.f32.mxu0 %v288
  %792 = vmatmul.mubr.f32.gmra.mrb[0].mxu0 %v287
  %v793 = vpop.f32.mrb[0].mxu0
  %v794 = vadd.f32 %v544, %v793
  %v795 = vpop.f32.mrb[0].mxu0
  %796 = vmatprep.mubr.f32.mxu0 %v301
  %797 = vmatmul.mubr.f32.gmra.mrb[0].mxu0 %v300
  %v798 = vpop.f32.mrb[0].mxu0
  %v799 = vadd.f32 %v544, %v798
  %v800 = vpop.f32.mrb[0].mxu0
  %801 = vmatprep.mubr.f32.mxu0 %v314
  %802 = vmatmul.mubr.f32.gmra.mrb[0].mxu0 %v313
  %v803 = vpop.f32.mrb[0].mxu0
  %v804 = vadd.f32 %v544, %v803
  %v805 = vpop.f32.mrb[0].mxu0
  %806 = vmatprep.mubr.f32.mxu0 %v327
  %807 = vmatmul.mubr.f32.gmra.mrb[0].mxu0 %v326
  %v808 = vpop.f32.mrb[0].mxu0
  %v809 = vadd.f32 %v544, %v808
  %v810 = vpop.f32.mrb[0].mxu0
  %811 = vdwg.mxu0
  %812 = vmatprep.subr.mxu0 0.0
  %813 = vmatpush1.msra.mxu0 %v371
  %814 = vmatprep.subr.mxu0 0.0
  %815 = vmatpush1.msra.mxu0 %v372
  %816 = vmatprep.subr.mxu0 0.0
  %817 = vmatpush1.msra.mxu0 %v373
  %818 = vmatprep.subr.mxu0 0.0
  %819 = vmatpush1.msra.mxu0 %v374
  %820 = vmatprep.subr.mxu0 0.0
  %821 = vmatpush1.msra.mxu0 %v375
  %822 = vmatprep.subr.mxu0 0.0
  %823 = vmatpush1.msra.mxu0 %v376
  %824 = vmatprep.subr.mxu0 0.0
  %825 = vmatpush1.msra.mxu0 %v377
  %826 = vmatprep.subr.mxu0 0.0
  %827 = vmatpush1.msra.mxu0 %v378
  %828 = vmatprep.subr.mxu0 0.0
  %829 = vmatpush1.msra.mxu0 %v379
  %830 = vmatprep.subr.mxu0 0.0
  %831 = vmatpush1.msra.mxu0 %v380
  %832 = vmatprep.subr.mxu0 0.0
  %833 = vmatpush1.msra.mxu0 %v381
  %834 = vmatprep.subr.mxu0 0.0
  %835 = vmatpush1.msra.mxu0 %v382
  %836 = vmatprep.subr.mxu0 0.0
  %837 = vmatpush1.msra.mxu0 %v383
  %838 = vmatprep.subr.mxu0 0.0
  %839 = vmatpush1.msra.mxu0 %v384
  %840 = vmatprep.subr.mxu0 0.0
  %841 = vmatpush1.msra.mxu0 %v385
  %842 = vmatprep.subr.mxu0 0.0
  %843 = vmatpush1.msra.mxu0 %v386
  %844 = vmatprep.subr.mxu0 0.0
  %845 = vmatpush1.msra.mxu0 %v387
  %846 = vmatprep.subr.mxu0 0.0
  %847 = vmatpush1.msra.mxu0 %v388
  %848 = vmatprep.subr.mxu0 0.0
  %849 = vmatpush1.msra.mxu0 %v389
  %850 = vmatprep.subr.mxu0 0.0
  %851 = vmatpush1.msra.mxu0 %v390
  %852 = vmatprep.subr.mxu0 0.0
  %853 = vmatpush1.msra.mxu0 %v391
  %854 = vmatprep.subr.mxu0 0.0
  %855 = vmatpush1.msra.mxu0 %v392
  %856 = vmatprep.subr.mxu0 0.0
  %857 = vmatpush1.msra.mxu0 %v393
  %858 = vmatprep.subr.mxu0 0.0
  %859 = vmatpush1.msra.mxu0 %v394
  %860 = vmatprep.subr.mxu0 0.0
  %861 = vmatpush1.msra.mxu0 %v395
  %862 = vmatprep.subr.mxu0 0.0
  %863 = vmatpush1.msra.mxu0 %v396
  %864 = vmatprep.subr.mxu0 0.0
  %865 = vmatpush1.msra.mxu0 %v397
  %866 = vmatprep.subr.mxu0 0.0
  %867 = vmatpush1.msra.mxu0 %v398
  %868 = vmatprep.subr.mxu0 0.0
  %869 = vmatpush1.msra.mxu0 %v399
  %870 = vmatprep.subr.mxu0 0.0
  %871 = vmatpush1.msra.mxu0 %v400
  %872 = vmatprep.subr.mxu0 0.0
  %873 = vmatpush1.msra.mxu0 %v401
  %874 = vmatprep.subr.mxu0 0.0
  %875 = vmatpush1.msra.mxu0 %v402
  %876 = vmatprep.mubr.f32.mxu0 %v17
  %877 = vmatmul.mubr.f32.gmra.mrb[0].mxu0 %v16
  %v878 = vpop.f32.mrb[0].mxu0
  %v879 = vadd.f32 %v689, %v878
  %v880 = vpop.f32.mrb[0].mxu0
  %881 = vmatprep.mubr.f32.mxu0 %v30
  %882 = vmatmul.mubr.f32.gmra.mrb[0].mxu0 %v29
  %v883 = vpop.f32.mrb[0].mxu0
  %v884 = vadd.f32 %v694, %v883
  %v885 = vpop.f32.mrb[0].mxu0
  %886 = vmatprep.mubr.f32.mxu0 %v43
  %887 = vmatmul.mubr.f32.gmra.mrb[0].mxu0 %v42
  %v888 = vpop.f32.mrb[0].mxu0
  %v889 = vadd.f32 %v699, %v888
  %v890 = vpop.f32.mrb[0].mxu0
  %891 = vmatprep.mubr.f32.mxu0 %v56
  %892 = vmatmul.mubr.f32.gmra.mrb[0].mxu0 %v55
  %v893 = vpop.f32.mrb[0].mxu0
  %v894 = vadd.f32 %v704, %v893
  %v895 = vpop.f32.mrb[0].mxu0
  %896 = vmatprep.mubr.f32.mxu0 %v69
  %897 = vmatmul.mubr.f32.gmra.mrb[0].mxu0 %v68
  %v898 = vpop.f32.mrb[0].mxu0
  %v899 = vadd.f32 %v709, %v898
  %v900 = vpop.f32.mrb[0].mxu0
  %901 = vmatprep.mubr.f32.mxu0 %v82
  %902 = vmatmul.mubr.f32.gmra.mrb[0].mxu0 %v81
  %v903 = vpop.f32.mrb[0].mxu0
  %v904 = vadd.f32 %v714, %v903
  %v905 = vpop.f32.mrb[0].mxu0
  %906 = vmatprep.mubr.f32.mxu0 %v95
  %907 = vmatmul.mubr.f32.gmra.mrb[0].mxu0 %v94
  %v908 = vpop.f32.mrb[0].mxu0
  %v909 = vadd.f32 %v719, %v908
  %v910 = vpop.f32.mrb[0].mxu0
  %911 = vmatprep.mubr.f32.mxu0 %v108
  %912 = vmatmul.mubr.f32.gmra.mrb[0].mxu0 %v107
  %v913 = vpop.f32.mrb[0].mxu0
  %v914 = vadd.f32 %v724, %v913
  %v915 = vpop.f32.mrb[0].mxu0
  %916 = vmatprep.mubr.f32.mxu0 %v121
  %917 = vmatmul.mubr.f32.gmra.mrb[0].mxu0 %v120
  %v918 = vpop.f32.mrb[0].mxu0
  %v919 = vadd.f32 %v729, %v918
  %v920 = vpop.f32.mrb[0].mxu0
  %921 = vmatprep.mubr.f32.mxu0 %v134
  %922 = vmatmul.mubr.f32.gmra.mrb[0].mxu0 %v133
  %v923 = vpop.f32.mrb[0].mxu0
  %v924 = vadd.f32 %v734, %v923
  %v925 = vpop.f32.mrb[0].mxu0
  %926 = vmatprep.mubr.f32.mxu0 %v147
  %927 = vmatmul.mubr.f32.gmra.mrb[0].mxu0 %v146
  %v928 = vpop.f32.mrb[0].mxu0
  %v929 = vadd.f32 %v739, %v928
  %v930 = vpop.f32.mrb[0].mxu0
  %931 = vmatprep.mubr.f32.mxu0 %v160
  %932 = vmatmul.mubr.f32.gmra.mrb[0].mxu0 %v159
  %v933 = vpop.f32.mrb[0].mxu0
  %v934 = vadd.f32 %v744, %v933
  %v935 = vpop.f32.mrb[0].mxu0
  %936 = vmatprep.mubr.f32.mxu0 %v173
  %937 = vmatmul.mubr.f32.gmra.mrb[0].mxu0 %v172
  %v938 = vpop.f32.mrb[0].mxu0
  %v939 = vadd.f32 %v749, %v938
  %v940 = vpop.f32.mrb[0].mxu0
  %941 = vmatprep.mubr.f32.mxu0 %v186
  %942 = vmatmul.mubr.f32.gmra.mrb[0].mxu0 %v185
  %v943 = vpop.f32.mrb[0].mxu0
  %v944 = vadd.f32 %v754, %v943
  %v945 = vpop.f32.mrb[0].mxu0
  %946 = vmatprep.mubr.f32.mxu0 %v199
  %947 = vmatmul.mubr.f32.gmra.mrb[0].mxu0 %v198
  %v948 = vpop.f32.mrb[0].mxu0
  %v949 = vadd.f32 %v759, %v948
  %v950 = vpop.f32.mrb[0].mxu0
  %951 = vmatprep.mubr.f32.mxu0 %v212
  %952 = vmatmul.mubr.f32.gmra.mrb[0].mxu0 %v211
  %v953 = vpop.f32.mrb[0].mxu0
  %v954 = vadd.f32 %v764, %v953
  %v955 = vpop.f32.mrb[0].mxu0
  %956 = vmatprep.mubr.f32.mxu0 %v225
  %957 = vmatmul.mubr.f32.gmra.mrb[0].mxu0 %v224
  %v958 = vpop.f32.mrb[0].mxu0
  %v959 = vadd.f32 %v769, %v958
  %v960 = vpop.f32.mrb[0].mxu0
  %961 = vmatprep.mubr.f32.mxu0 %v238
  %962 = vmatmul.mubr.f32.gmra.mrb[0].mxu0 %v237
  %v963 = vpop.f32.mrb[0].mxu0
  %v964 = vadd.f32 %v774, %v963
  %v965 = vpop.f32.mrb[0].mxu0
  %966 = vmatprep.mubr.f32.mxu0 %v251
  %967 = vmatmul.mubr.f32.gmra.mrb[0].mxu0 %v250
  %v968 = vpop.f32.mrb[0].mxu0
  %v969 = vadd.f32 %v779, %v968
  %v970 = vpop.f32.mrb[0].mxu0
  %971 = vmatprep.mubr.f32.mxu0 %v264
  %972 = vmatmul.mubr.f32.gmra.mrb[0].mxu0 %v263
  %v973 = vpop.f32.mrb[0].mxu0
  %v974 = vadd.f32 %v784, %v973
  %v975 = vpop.f32.mrb[0].mxu0
  %976 = vmatprep.mubr.f32.mxu0 %v277
  %977 = vmatmul.mubr.f32.gmra.mrb[0].mxu0 %v276
  %v978 = vpop.f32.mrb[0].mxu0
  %v979 = vadd.f32 %v789, %v978
  %v980 = vpop.f32.mrb[0].mxu0
  %981 = vmatprep.mubr.f32.mxu0 %v290
  %982 = vmatmul.mubr.f32.gmra.mrb[0].mxu0 %v289
  %v983 = vpop.f32.mrb[0].mxu0
  %v984 = vadd.f32 %v794, %v983
  %v985 = vpop.f32.mrb[0].mxu0
  %986 = vmatprep.mubr.f32.mxu0 %v303
  %987 = vmatmul.mubr.f32.gmra.mrb[0].mxu0 %v302
  %v988 = vpop.f32.mrb[0].mxu0
  %v989 = vadd.f32 %v799, %v988
  %v990 = vpop.f32.mrb[0].mxu0
  %991 = vmatprep.mubr.f32.mxu0 %v316
  %992 = vmatmul.mubr.f32.gmra.mrb[0].mxu0 %v315
  %v993 = vpop.f32.mrb[0].mxu0
  %v994 = vadd.f32 %v804, %v993
  %v995 = vpop.f32.mrb[0].mxu0
  %996 = vmatprep.mubr.f32.mxu0 %v329
  %997 = vmatmul.mubr.f32.gmra.mrb[0].mxu0 %v328
  %v998 = vpop.f32.mrb[0].mxu0
  %v999 = vadd.f32 %v809, %v998
  %v1000 = vpop.f32.mrb[0].mxu0
  %1001 = vdwg.mxu0
  %1002 = vmatprep.subr.mxu0 0.0
  %1003 = vmatpush1.msra.mxu0 %v403
  %1004 = vmatprep.subr.mxu0 0.0
  %1005 = vmatpush1.msra.mxu0 %v404
  %1006 = vmatprep.subr.mxu0 0.0
  %1007 = vmatpush1.msra.mxu0 %v405
  %1008 = vmatprep.subr.mxu0 0.0
  %1009 = vmatpush1.msra.mxu0 %v406
  %1010 = vmatprep.subr.mxu0 0.0
  %1011 = vmatpush1.msra.mxu0 %v407
  %1012 = vmatprep.subr.mxu0 0.0
  %1013 = vmatpush1.msra.mxu0 %v408
  %1014 = vmatprep.subr.mxu0 0.0
  %1015 = vmatpush1.msra.mxu0 %v409
  %1016 = vmatprep.subr.mxu0 0.0
  %1017 = vmatpush1.msra.mxu0 %v410
  %1018 = vmatprep.subr.mxu0 0.0
  %1019 = vmatpush1.msra.mxu0 %v411
  %1020 = vmatprep.subr.mxu0 0.0
  %1021 = vmatpush1.msra.mxu0 %v412
  %1022 = vmatprep.subr.mxu0 0.0
  %1023 = vmatpush1.msra.mxu0 %v413
  %1024 = vmatprep.subr.mxu0 0.0
  %1025 = vmatpush1.msra.mxu0 %v414
  %1026 = vmatprep.subr.mxu0 0.0
  %1027 = vmatpush1.msra.mxu0 %v415
  %1028 = vmatprep.subr.mxu0 0.0
  %1029 = vmatpush1.msra.mxu0 %v416
  %1030 = vmatprep.subr.mxu0 0.0
  %1031 = vmatpush1.msra.mxu0 %v417
  %1032 = vmatprep.subr.mxu0 0.0
  %1033 = vmatpush1.msra.mxu0 %v418
  %1034 = vmatprep.subr.mxu0 0.0
  %1035 = vmatpush1.msra.mxu0 %v419
  %1036 = vmatprep.subr.mxu0 0.0
  %1037 = vmatpush1.msra.mxu0 %v420
  %1038 = vmatprep.subr.mxu0 0.0
  %1039 = vmatpush1.msra.mxu0 %v421
  %1040 = vmatprep.subr.mxu0 0.0
  %1041 = vmatpush1.msra.mxu0 %v422
  %1042 = vmatprep.subr.mxu0 0.0
  %1043 = vmatpush1.msra.mxu0 %v423
  %1044 = vmatprep.subr.mxu0 0.0
  %1045 = vmatpush1.msra.mxu0 %v424
  %1046 = vmatprep.subr.mxu0 0.0
  %1047 = vmatpush1.msra.mxu0 %v425
  %1048 = vmatprep.subr.mxu0 0.0
  %1049 = vmatpush1.msra.mxu0 %v426
  %1050 = vmatprep.subr.mxu0 0.0
  %1051 = vmatpush1.msra.mxu0 %v427
  %1052 = vmatprep.subr.mxu0 0.0
  %1053 = vmatpush1.msra.mxu0 %v428
  %1054 = vmatprep.subr.mxu0 0.0
  %1055 = vmatpush1.msra.mxu0 %v429
  %1056 = vmatprep.subr.mxu0 0.0
  %1057 = vmatpush1.msra.mxu0 %v430
  %1058 = vmatprep.subr.mxu0 0.0
  %1059 = vmatpush1.msra.mxu0 %v431
  %1060 = vmatprep.subr.mxu0 0.0
  %1061 = vmatpush1.msra.mxu0 %v432
  %1062 = vmatprep.subr.mxu0 0.0
  %1063 = vmatpush1.msra.mxu0 %v433
  %1064 = vmatprep.subr.mxu0 0.0
  %1065 = vmatpush1.msra.mxu0 %v434
  %1066 = vmatprep.mubr.f32.mxu0 %v19
  %1067 = vmatmul.mubr.f32.gmra.mrb[0].mxu0 %v18
  %v1068 = vpop.f32.mrb[0].mxu0
  %v1069 = vadd.f32 %v879, %v1068
  %v1070 = vpop.f32.mrb[0].mxu0
  %1071 = vmatprep.mubr.f32.mxu0 %v32
  %1072 = vmatmul.mubr.f32.gmra.mrb[0].mxu0 %v31
  %v1073 = vpop.f32.mrb[0].mxu0
  %v1074 = vadd.f32 %v884, %v1073
  %v1075 = vpop.f32.mrb[0].mxu0
  %1076 = vmatprep.mubr.f32.mxu0 %v45
  %1077 = vmatmul.mubr.f32.gmra.mrb[0].mxu0 %v44
  %v1078 = vpop.f32.mrb[0].mxu0
  %v1079 = vadd.f32 %v889, %v1078
  %v1080 = vpop.f32.mrb[0].mxu0
  %1081 = vmatprep.mubr.f32.mxu0 %v58
  %1082 = vmatmul.mubr.f32.gmra.mrb[0].mxu0 %v57
  %v1083 = vpop.f32.mrb[0].mxu0
  %v1084 = vadd.f32 %v894, %v1083
  %v1085 = vpop.f32.mrb[0].mxu0
  %1086 = vmatprep.mubr.f32.mxu0 %v71
  %1087 = vmatmul.mubr.f32.gmra.mrb[0].mxu0 %v70
  %v1088 = vpop.f32.mrb[0].mxu0
  %v1089 = vadd.f32 %v899, %v1088
  %v1090 = vpop.f32.mrb[0].mxu0
  %1091 = vmatprep.mubr.f32.mxu0 %v84
  %1092 = vmatmul.mubr.f32.gmra.mrb[0].mxu0 %v83
  %v1093 = vpop.f32.mrb[0].mxu0
  %v1094 = vadd.f32 %v904, %v1093
  %v1095 = vpop.f32.mrb[0].mxu0
  %1096 = vmatprep.mubr.f32.mxu0 %v97
  %1097 = vmatmul.mubr.f32.gmra.mrb[0].mxu0 %v96
  %v1098 = vpop.f32.mrb[0].mxu0
  %v1099 = vadd.f32 %v909, %v1098
  %v1100 = vpop.f32.mrb[0].mxu0
  %1101 = vmatprep.mubr.f32.mxu0 %v110
  %1102 = vmatmul.mubr.f32.gmra.mrb[0].mxu0 %v109
  %v1103 = vpop.f32.mrb[0].mxu0
  %v1104 = vadd.f32 %v914, %v1103
  %v1105 = vpop.f32.mrb[0].mxu0
  %1106 = vmatprep.mubr.f32.mxu0 %v123
  %1107 = vmatmul.mubr.f32.gmra.mrb[0].mxu0 %v122
  %v1108 = vpop.f32.mrb[0].mxu0
  %v1109 = vadd.f32 %v919, %v1108
  %v1110 = vpop.f32.mrb[0].mxu0
  %1111 = vmatprep.mubr.f32.mxu0 %v136
  %1112 = vmatmul.mubr.f32.gmra.mrb[0].mxu0 %v135
  %v1113 = vpop.f32.mrb[0].mxu0
  %v1114 = vadd.f32 %v924, %v1113
  %v1115 = vpop.f32.mrb[0].mxu0
  %1116 = vmatprep.mubr.f32.mxu0 %v149
  %1117 = vmatmul.mubr.f32.gmra.mrb[0].mxu0 %v148
  %v1118 = vpop.f32.mrb[0].mxu0
  %v1119 = vadd.f32 %v929, %v1118
  %v1120 = vpop.f32.mrb[0].mxu0
  %1121 = vmatprep.mubr.f32.mxu0 %v162
  %1122 = vmatmul.mubr.f32.gmra.mrb[0].mxu0 %v161
  %v1123 = vpop.f32.mrb[0].mxu0
  %v1124 = vadd.f32 %v934, %v1123
  %v1125 = vpop.f32.mrb[0].mxu0
  %1126 = vmatprep.mubr.f32.mxu0 %v175
  %1127 = vmatmul.mubr.f32.gmra.mrb[0].mxu0 %v174
  %v1128 = vpop.f32.mrb[0].mxu0
  %v1129 = vadd.f32 %v939, %v1128
  %v1130 = vpop.f32.mrb[0].mxu0
  %1131 = vmatprep.mubr.f32.mxu0 %v188
  %1132 = vmatmul.mubr.f32.gmra.mrb[0].mxu0 %v187
  %v1133 = vpop.f32.mrb[0].mxu0
  %v1134 = vadd.f32 %v944, %v1133
  %v1135 = vpop.f32.mrb[0].mxu0
  %1136 = vmatprep.mubr.f32.mxu0 %v201
  %1137 = vmatmul.mubr.f32.gmra.mrb[0].mxu0 %v200
  %v1138 = vpop.f32.mrb[0].mxu0
  %v1139 = vadd.f32 %v949, %v1138
  %v1140 = vpop.f32.mrb[0].mxu0
  %1141 = vmatprep.mubr.f32.mxu0 %v214
  %1142 = vmatmul.mubr.f32.gmra.mrb[0].mxu0 %v213
  %v1143 = vpop.f32.mrb[0].mxu0
  %v1144 = vadd.f32 %v954, %v1143
  %v1145 = vpop.f32.mrb[0].mxu0
  %1146 = vmatprep.mubr.f32.mxu0 %v227
  %1147 = vmatmul.mubr.f32.gmra.mrb[0].mxu0 %v226
  %v1148 = vpop.f32.mrb[0].mxu0
  %v1149 = vadd.f32 %v959, %v1148
  %v1150 = vpop.f32.mrb[0].mxu0
  %1151 = vmatprep.mubr.f32.mxu0 %v240
  %1152 = vmatmul.mubr.f32.gmra.mrb[0].mxu0 %v239
  %v1153 = vpop.f32.mrb[0].mxu0
  %v1154 = vadd.f32 %v964, %v1153
  %v1155 = vpop.f32.mrb[0].mxu0
  %1156 = vmatprep.mubr.f32.mxu0 %v253
  %1157 = vmatmul.mubr.f32.gmra.mrb[0].mxu0 %v252
  %v1158 = vpop.f32.mrb[0].mxu0
  %v1159 = vadd.f32 %v969, %v1158
  %v1160 = vpop.f32.mrb[0].mxu0
  %1161 = vmatprep.mubr.f32.mxu0 %v266
  %1162 = vmatmul.mubr.f32.gmra.mrb[0].mxu0 %v265
  %v1163 = vpop.f32.mrb[0].mxu0
  %v1164 = vadd.f32 %v974, %v1163
  %v1165 = vpop.f32.mrb[0].mxu0
  %1166 = vmatprep.mubr.f32.mxu0 %v279
  %1167 = vmatmul.mubr.f32.gmra.mrb[0].mxu0 %v278
  %v1168 = vpop.f32.mrb[0].mxu0
  %v1169 = vadd.f32 %v979, %v1168
  %v1170 = vpop.f32.mrb[0].mxu0
  %1171 = vmatprep.mubr.f32.mxu0 %v292
  %1172 = vmatmul.mubr.f32.gmra.mrb[0].mxu0 %v291
  %v1173 = vpop.f32.mrb[0].mxu0
  %v1174 = vadd.f32 %v984, %v1173
  %v1175 = vpop.f32.mrb[0].mxu0
  %1176 = vmatprep.mubr.f32.mxu0 %v305
  %1177 = vmatmul.mubr.f32.gmra.mrb[0].mxu0 %v304
  %v1178 = vpop.f32.mrb[0].mxu0
  %v1179 = vadd.f32 %v989, %v1178
  %v1180 = vpop.f32.mrb[0].mxu0
  %1181 = vmatprep.mubr.f32.mxu0 %v318
  %1182 = vmatmul.mubr.f32.gmra.mrb[0].mxu0 %v317
  %v1183 = vpop.f32.mrb[0].mxu0
  %v1184 = vadd.f32 %v994, %v1183
  %v1185 = vpop.f32.mrb[0].mxu0
  %1186 = vmatprep.mubr.f32.mxu0 %v331
  %1187 = vmatmul.mubr.f32.gmra.mrb[0].mxu0 %v330
  %v1188 = vpop.f32.mrb[0].mxu0
  %v1189 = vadd.f32 %v999, %v1188
  %v1190 = vpop.f32.mrb[0].mxu0
  %1191 = vdwg.mxu0
  %1192 = vmatprep.subr.mxu0 0.0
  %1193 = vmatpush1.msra.mxu0 %v435
  %1194 = vmatprep.subr.mxu0 0.0
  %1195 = vmatpush1.msra.mxu0 %v436
  %1196 = vmatprep.subr.mxu0 0.0
  %1197 = vmatpush1.msra.mxu0 %v437
  %1198 = vmatprep.subr.mxu0 0.0
  %1199 = vmatpush1.msra.mxu0 %v438
  %1200 = vmatprep.subr.mxu0 0.0
  %1201 = vmatpush1.msra.mxu0 %v439
  %1202 = vmatprep.subr.mxu0 0.0
  %1203 = vmatpush1.msra.mxu0 %v440
  %1204 = vmatprep.subr.mxu0 0.0
  %1205 = vmatpush1.msra.mxu0 %v441
  %1206 = vmatprep.subr.mxu0 0.0
  %1207 = vmatpush1.msra.mxu0 %v442
  %1208 = vmatprep.subr.mxu0 0.0
  %1209 = vmatpush1.msra.mxu0 %v443
  %1210 = vmatprep.subr.mxu0 0.0
  %1211 = vmatpush1.msra.mxu0 %v444
  %1212 = vmatprep.subr.mxu0 0.0
  %1213 = vmatpush1.msra.mxu0 %v445
  %1214 = vmatprep.subr.mxu0 0.0
  %1215 = vmatpush1.msra.mxu0 %v446
  %1216 = vmatprep.subr.mxu0 0.0
  %1217 = vmatpush1.msra.mxu0 %v447
  %1218 = vmatprep.subr.mxu0 0.0
  %1219 = vmatpush1.msra.mxu0 %v448
  %1220 = vmatprep.subr.mxu0 0.0
  %1221 = vmatpush1.msra.mxu0 %v449
  %1222 = vmatprep.subr.mxu0 0.0
  %1223 = vmatpush1.msra.mxu0 %v450
  %1224 = vmatprep.subr.mxu0 0.0
  %1225 = vmatpush1.msra.mxu0 %v451
  %1226 = vmatprep.subr.mxu0 0.0
  %1227 = vmatpush1.msra.mxu0 %v452
  %1228 = vmatprep.subr.mxu0 0.0
  %1229 = vmatpush1.msra.mxu0 %v453
  %1230 = vmatprep.subr.mxu0 0.0
  %1231 = vmatpush1.msra.mxu0 %v454
  %1232 = vmatprep.subr.mxu0 0.0
  %1233 = vmatpush1.msra.mxu0 %v455
  %1234 = vmatprep.subr.mxu0 0.0
  %1235 = vmatpush1.msra.mxu0 %v456
  %1236 = vmatprep.subr.mxu0 0.0
  %1237 = vmatpush1.msra.mxu0 %v457
  %1238 = vmatprep.subr.mxu0 0.0
  %1239 = vmatpush1.msra.mxu0 %v458
  %1240 = vmatprep.subr.mxu0 0.0
  %1241 = vmatpush1.msra.mxu0 %v459
  %1242 = vmatprep.subr.mxu0 0.0
  %1243 = vmatpush1.msra.mxu0 %v460
  %1244 = vmatprep.subr.mxu0 0.0
  %1245 = vmatpush1.msra.mxu0 %v461
  %1246 = vmatprep.subr.mxu0 0.0
  %1247 = vmatpush1.msra.mxu0 %v462
  %1248 = vmatprep.subr.mxu0 0.0
  %1249 = vmatpush1.msra.mxu0 %v463
  %1250 = vmatprep.subr.mxu0 0.0
  %1251 = vmatpush1.msra.mxu0 %v464
  %1252 = vmatprep.subr.mxu0 0.0
  %1253 = vmatpush1.msra.mxu0 %v465
  %1254 = vmatprep.subr.mxu0 0.0
  %1255 = vmatpush1.msra.mxu0 %v466
  %1256 = vmatprep.mubr.f32.mxu0 %v21
  %1257 = vmatmul.mubr.f32.gmra.mrb[0].mxu0 %v20
  %v1258 = vpop.f32.mrb[0].mxu0
  %v1259 = vadd.f32 %v1069, %v1258
  %v1260 = vpop.f32.mrb[0].mxu0
  %1261 = vmatprep.mubr.f32.mxu0 %v34
  %1262 = vmatmul.mubr.f32.gmra.mrb[0].mxu0 %v33
  %v1263 = vpop.f32.mrb[0].mxu0
  %v1264 = vadd.f32 %v1074, %v1263
  %v1265 = vpop.f32.mrb[0].mxu0
  %1266 = vmatprep.mubr.f32.mxu0 %v47
  %1267 = vmatmul.mubr.f32.gmra.mrb[0].mxu0 %v46
  %v1268 = vpop.f32.mrb[0].mxu0
  %v1269 = vadd.f32 %v1079, %v1268
  %v1270 = vpop.f32.mrb[0].mxu0
  %1271 = vmatprep.mubr.f32.mxu0 %v60
  %1272 = vmatmul.mubr.f32.gmra.mrb[0].mxu0 %v59
  %v1273 = vpop.f32.mrb[0].mxu0
  %v1274 = vadd.f32 %v1084, %v1273
  %v1275 = vpop.f32.mrb[0].mxu0
  %1276 = vmatprep.mubr.f32.mxu0 %v73
  %1277 = vmatmul.mubr.f32.gmra.mrb[0].mxu0 %v72
  %v1278 = vpop.f32.mrb[0].mxu0
  %v1279 = vadd.f32 %v1089, %v1278
  %v1280 = vpop.f32.mrb[0].mxu0
  %1281 = vmatprep.mubr.f32.mxu0 %v86
  %1282 = vmatmul.mubr.f32.gmra.mrb[0].mxu0 %v85
  %v1283 = vpop.f32.mrb[0].mxu0
  %v1284 = vadd.f32 %v1094, %v1283
  %v1285 = vpop.f32.mrb[0].mxu0
  %1286 = vmatprep.mubr.f32.mxu0 %v99
  %1287 = vmatmul.mubr.f32.gmra.mrb[0].mxu0 %v98
  %v1288 = vpop.f32.mrb[0].mxu0
  %v1289 = vadd.f32 %v1099, %v1288
  %v1290 = vpop.f32.mrb[0].mxu0
  %1291 = vmatprep.mubr.f32.mxu0 %v112
  %1292 = vmatmul.mubr.f32.gmra.mrb[0].mxu0 %v111
  %v1293 = vpop.f32.mrb[0].mxu0
  %v1294 = vadd.f32 %v1104, %v1293
  %v1295 = vpop.f32.mrb[0].mxu0
  %1296 = vmatprep.mubr.f32.mxu0 %v125
  %1297 = vmatmul.mubr.f32.gmra.mrb[0].mxu0 %v124
  %v1298 = vpop.f32.mrb[0].mxu0
  %v1299 = vadd.f32 %v1109, %v1298
  %v1300 = vpop.f32.mrb[0].mxu0
  %1301 = vmatprep.mubr.f32.mxu0 %v138
  %1302 = vmatmul.mubr.f32.gmra.mrb[0].mxu0 %v137
  %v1303 = vpop.f32.mrb[0].mxu0
  %v1304 = vadd.f32 %v1114, %v1303
  %v1305 = vpop.f32.mrb[0].mxu0
  %1306 = vmatprep.mubr.f32.mxu0 %v151
  %1307 = vmatmul.mubr.f32.gmra.mrb[0].mxu0 %v150
  %v1308 = vpop.f32.mrb[0].mxu0
  %v1309 = vadd.f32 %v1119, %v1308
  %v1310 = vpop.f32.mrb[0].mxu0
  %1311 = vmatprep.mubr.f32.mxu0 %v164
  %1312 = vmatmul.mubr.f32.gmra.mrb[0].mxu0 %v163
  %v1313 = vpop.f32.mrb[0].mxu0
  %v1314 = vadd.f32 %v1124, %v1313
  %v1315 = vpop.f32.mrb[0].mxu0
  %1316 = vmatprep.mubr.f32.mxu0 %v177
  %1317 = vmatmul.mubr.f32.gmra.mrb[0].mxu0 %v176
  %v1318 = vpop.f32.mrb[0].mxu0
  %v1319 = vadd.f32 %v1129, %v1318
  %v1320 = vpop.f32.mrb[0].mxu0
  %1321 = vmatprep.mubr.f32.mxu0 %v190
  %1322 = vmatmul.mubr.f32.gmra.mrb[0].mxu0 %v189
  %v1323 = vpop.f32.mrb[0].mxu0
  %v1324 = vadd.f32 %v1134, %v1323
  %v1325 = vpop.f32.mrb[0].mxu0
  %1326 = vmatprep.mubr.f32.mxu0 %v203
  %1327 = vmatmul.mubr.f32.gmra.mrb[0].mxu0 %v202
  %v1328 = vpop.f32.mrb[0].mxu0
  %v1329 = vadd.f32 %v1139, %v1328
  %v1330 = vpop.f32.mrb[0].mxu0
  %1331 = vmatprep.mubr.f32.mxu0 %v216
  %1332 = vmatmul.mubr.f32.gmra.mrb[0].mxu0 %v215
  %v1333 = vpop.f32.mrb[0].mxu0
  %v1334 = vadd.f32 %v1144, %v1333
  %v1335 = vpop.f32.mrb[0].mxu0
  %1336 = vmatprep.mubr.f32.mxu0 %v229
  %1337 = vmatmul.mubr.f32.gmra.mrb[0].mxu0 %v228
  %v1338 = vpop.f32.mrb[0].mxu0
  %v1339 = vadd.f32 %v1149, %v1338
  %v1340 = vpop.f32.mrb[0].mxu0
  %1341 = vmatprep.mubr.f32.mxu0 %v242
  %1342 = vmatmul.mubr.f32.gmra.mrb[0].mxu0 %v241
  %v1343 = vpop.f32.mrb[0].mxu0
  %v1344 = vadd.f32 %v1154, %v1343
  %v1345 = vpop.f32.mrb[0].mxu0
  %1346 = vmatprep.mubr.f32.mxu0 %v255
  %1347 = vmatmul.mubr.f32.gmra.mrb[0].mxu0 %v254
  %v1348 = vpop.f32.mrb[0].mxu0
  %v1349 = vadd.f32 %v1159, %v1348
  %v1350 = vpop.f32.mrb[0].mxu0
  %1351 = vmatprep.mubr.f32.mxu0 %v268
  %1352 = vmatmul.mubr.f32.gmra.mrb[0].mxu0 %v267
  %v1353 = vpop.f32.mrb[0].mxu0
  %v1354 = vadd.f32 %v1164, %v1353
  %v1355 = vpop.f32.mrb[0].mxu0
  %1356 = vmatprep.mubr.f32.mxu0 %v281
  %1357 = vmatmul.mubr.f32.gmra.mrb[0].mxu0 %v280
  %v1358 = vpop.f32.mrb[0].mxu0
  %v1359 = vadd.f32 %v1169, %v1358
  %v1360 = vpop.f32.mrb[0].mxu0
  %1361 = vmatprep.mubr.f32.mxu0 %v294
  %1362 = vmatmul.mubr.f32.gmra.mrb[0].mxu0 %v293
  %v1363 = vpop.f32.mrb[0].mxu0
  %v1364 = vadd.f32 %v1174, %v1363
  %v1365 = vpop.f32.mrb[0].mxu0
  %1366 = vmatprep.mubr.f32.mxu0 %v307
  %1367 = vmatmul.mubr.f32.gmra.mrb[0].mxu0 %v306
  %v1368 = vpop.f32.mrb[0].mxu0
  %v1369 = vadd.f32 %v1179, %v1368
  %v1370 = vpop.f32.mrb[0].mxu0
  %1371 = vmatprep.mubr.f32.mxu0 %v320
  %1372 = vmatmul.mubr.f32.gmra.mrb[0].mxu0 %v319
  %v1373 = vpop.f32.mrb[0].mxu0
  %v1374 = vadd.f32 %v1184, %v1373
  %v1375 = vpop.f32.mrb[0].mxu0
  %1376 = vmatprep.mubr.f32.mxu0 %v333
  %1377 = vmatmul.mubr.f32.gmra.mrb[0].mxu0 %v332
  %v1378 = vpop.f32.mrb[0].mxu0
  %v1379 = vadd.f32 %v1189, %v1378
  %v1380 = vpop.f32.mrb[0].mxu0
  %1381 = vdwg.mxu0
  %1382 = vmatprep.subr.mxu0 0.0
  %1383 = vmatpush1.msra.mxu0 %v467
  %1384 = vmatprep.subr.mxu0 0.0
  %1385 = vmatpush1.msra.mxu0 %v468
  %1386 = vmatprep.subr.mxu0 0.0
  %1387 = vmatpush1.msra.mxu0 %v469
  %1388 = vmatprep.subr.mxu0 0.0
  %1389 = vmatpush1.msra.mxu0 %v470
  %1390 = vmatprep.subr.mxu0 0.0
  %1391 = vmatpush1.msra.mxu0 %v471
  %1392 = vmatprep.subr.mxu0 0.0
  %1393 = vmatpush1.msra.mxu0 %v472
  %1394 = vmatprep.subr.mxu0 0.0
  %1395 = vmatpush1.msra.mxu0 %v473
  %1396 = vmatprep.subr.mxu0 0.0
  %1397 = vmatpush1.msra.mxu0 %v474
  %1398 = vmatprep.subr.mxu0 0.0
  %1399 = vmatpush1.msra.mxu0 %v475
  %1400 = vmatprep.subr.mxu0 0.0
  %1401 = vmatpush1.msra.mxu0 %v476
  %1402 = vmatprep.subr.mxu0 0.0
  %1403 = vmatpush1.msra.mxu0 %v477
  %1404 = vmatprep.subr.mxu0 0.0
  %1405 = vmatpush1.msra.mxu0 %v478
  %1406 = vmatprep.subr.mxu0 0.0
  %1407 = vmatpush1.msra.mxu0 %v479
  %1408 = vmatprep.subr.mxu0 0.0
  %1409 = vmatpush1.msra.mxu0 %v480
  %1410 = vmatprep.subr.mxu0 0.0
  %1411 = vmatpush1.msra.mxu0 %v481
  %1412 = vmatprep.subr.mxu0 0.0
  %1413 = vmatpush1.msra.mxu0 %v482
  %1414 = vmatprep.subr.mxu0 0.0
  %1415 = vmatpush1.msra.mxu0 %v483
  %1416 = vmatprep.subr.mxu0 0.0
  %1417 = vmatpush1.msra.mxu0 %v484
  %1418 = vmatprep.subr.mxu0 0.0
  %1419 = vmatpush1.msra.mxu0 %v485
  %1420 = vmatprep.subr.mxu0 0.0
  %1421 = vmatpush1.msra.mxu0 %v486
  %1422 = vmatprep.subr.mxu0 0.0
  %1423 = vmatpush1.msra.mxu0 %v487
  %1424 = vmatprep.subr.mxu0 0.0
  %1425 = vmatpush1.msra.mxu0 %v488
  %1426 = vmatprep.subr.mxu0 0.0
  %1427 = vmatpush1.msra.mxu0 %v489
  %1428 = vmatprep.subr.mxu0 0.0
  %1429 = vmatpush1.msra.mxu0 %v490
  %1430 = vmatprep.subr.mxu0 0.0
  %1431 = vmatpush1.msra.mxu0 %v491
  %1432 = vmatprep.subr.mxu0 0.0
  %1433 = vmatpush1.msra.mxu0 %v492
  %1434 = vmatprep.subr.mxu0 0.0
  %1435 = vmatpush1.msra.mxu0 %v493
  %1436 = vmatprep.subr.mxu0 0.0
  %1437 = vmatpush1.msra.mxu0 %v494
  %1438 = vmatprep.subr.mxu0 0.0
  %1439 = vmatpush1.msra.mxu0 %v495
  %1440 = vmatprep.subr.mxu0 0.0
  %1441 = vmatpush1.msra.mxu0 %v496
  %1442 = vmatprep.subr.mxu0 0.0
  %1443 = vmatpush1.msra.mxu0 %v497
  %1444 = vmatprep.subr.mxu0 0.0
  %1445 = vmatpush1.msra.mxu0 %v498
  %1446 = vmatprep.mubr.f32.mxu0 %v23
  %1447 = vmatmul.mubr.f32.gmra.mrb[0].mxu0 %v22
  %v1448 = vpop.f32.mrb[0].mxu0
  %v1449 = vadd.f32 %v1259, %v1448
  %v1450 = vpop.f32.mrb[0].mxu0
  %1451 = vmatprep.mubr.f32.mxu0 %v36
  %1452 = vmatmul.mubr.f32.gmra.mrb[0].mxu0 %v35
  %v1453 = vpop.f32.mrb[0].mxu0
  %v1454 = vadd.f32 %v1264, %v1453
  %v1455 = vpop.f32.mrb[0].mxu0
  %1456 = vmatprep.mubr.f32.mxu0 %v49
  %1457 = vmatmul.mubr.f32.gmra.mrb[0].mxu0 %v48
  %v1458 = vpop.f32.mrb[0].mxu0
  %v1459 = vadd.f32 %v1269, %v1458
  %v1460 = vpop.f32.mrb[0].mxu0
  %1461 = vmatprep.mubr.f32.mxu0 %v62
  %1462 = vmatmul.mubr.f32.gmra.mrb[0].mxu0 %v61
  %v1463 = vpop.f32.mrb[0].mxu0
  %v1464 = vadd.f32 %v1274, %v1463
  %v1465 = vpop.f32.mrb[0].mxu0
  %1466 = vmatprep.mubr.f32.mxu0 %v75
  %1467 = vmatmul.mubr.f32.gmra.mrb[0].mxu0 %v74
  %v1468 = vpop.f32.mrb[0].mxu0
  %v1469 = vadd.f32 %v1279, %v1468
  %v1470 = vpop.f32.mrb[0].mxu0
  %1471 = vmatprep.mubr.f32.mxu0 %v88
  %1472 = vmatmul.mubr.f32.gmra.mrb[0].mxu0 %v87
  %v1473 = vpop.f32.mrb[0].mxu0
  %v1474 = vadd.f32 %v1284, %v1473
  %v1475 = vpop.f32.mrb[0].mxu0
  %1476 = vmatprep.mubr.f32.mxu0 %v101
  %1477 = vmatmul.mubr.f32.gmra.mrb[0].mxu0 %v100
  %v1478 = vpop.f32.mrb[0].mxu0
  %v1479 = vadd.f32 %v1289, %v1478
  %v1480 = vpop.f32.mrb[0].mxu0
  %1481 = vmatprep.mubr.f32.mxu0 %v114
  %1482 = vmatmul.mubr.f32.gmra.mrb[0].mxu0 %v113
  %v1483 = vpop.f32.mrb[0].mxu0
  %v1484 = vadd.f32 %v1294, %v1483
  %v1485 = vpop.f32.mrb[0].mxu0
  %1486 = vmatprep.mubr.f32.mxu0 %v127
  %1487 = vmatmul.mubr.f32.gmra.mrb[0].mxu0 %v126
  %v1488 = vpop.f32.mrb[0].mxu0
  %v1489 = vadd.f32 %v1299, %v1488
  %v1490 = vpop.f32.mrb[0].mxu0
  %1491 = vmatprep.mubr.f32.mxu0 %v140
  %1492 = vmatmul.mubr.f32.gmra.mrb[0].mxu0 %v139
  %v1493 = vpop.f32.mrb[0].mxu0
  %v1494 = vadd.f32 %v1304, %v1493
  %v1495 = vpop.f32.mrb[0].mxu0
  %1496 = vmatprep.mubr.f32.mxu0 %v153
  %1497 = vmatmul.mubr.f32.gmra.mrb[0].mxu0 %v152
  %v1498 = vpop.f32.mrb[0].mxu0
  %v1499 = vadd.f32 %v1309, %v1498
  %v1500 = vpop.f32.mrb[0].mxu0
  %1501 = vmatprep.mubr.f32.mxu0 %v166
  %1502 = vmatmul.mubr.f32.gmra.mrb[0].mxu0 %v165
  %v1503 = vpop.f32.mrb[0].mxu0
  %v1504 = vadd.f32 %v1314, %v1503
  %v1505 = vpop.f32.mrb[0].mxu0
  %1506 = vmatprep.mubr.f32.mxu0 %v179
  %1507 = vmatmul.mubr.f32.gmra.mrb[0].mxu0 %v178
  %v1508 = vpop.f32.mrb[0].mxu0
  %v1509 = vadd.f32 %v1319, %v1508
  %v1510 = vpop.f32.mrb[0].mxu0
  %1511 = vmatprep.mubr.f32.mxu0 %v192
  %1512 = vmatmul.mubr.f32.gmra.mrb[0].mxu0 %v191
  %v1513 = vpop.f32.mrb[0].mxu0
  %v1514 = vadd.f32 %v1324, %v1513
  %v1515 = vpop.f32.mrb[0].mxu0
  %1516 = vmatprep.mubr.f32.mxu0 %v205
  %1517 = vmatmul.mubr.f32.gmra.mrb[0].mxu0 %v204
  %v1518 = vpop.f32.mrb[0].mxu0
  %v1519 = vadd.f32 %v1329, %v1518
  %v1520 = vpop.f32.mrb[0].mxu0
  %1521 = vmatprep.mubr.f32.mxu0 %v218
  %1522 = vmatmul.mubr.f32.gmra.mrb[0].mxu0 %v217
  %v1523 = vpop.f32.mrb[0].mxu0
  %v1524 = vadd.f32 %v1334, %v1523
  %v1525 = vpop.f32.mrb[0].mxu0
  %1526 = vmatprep.mubr.f32.mxu0 %v231
  %1527 = vmatmul.mubr.f32.gmra.mrb[0].mxu0 %v230
  %v1528 = vpop.f32.mrb[0].mxu0
  %v1529 = vadd.f32 %v1339, %v1528
  %v1530 = vpop.f32.mrb[0].mxu0
  %1531 = vmatprep.mubr.f32.mxu0 %v244
  %1532 = vmatmul.mubr.f32.gmra.mrb[0].mxu0 %v243
  %v1533 = vpop.f32.mrb[0].mxu0
  %v1534 = vadd.f32 %v1344, %v1533
  %v1535 = vpop.f32.mrb[0].mxu0
  %1536 = vmatprep.mubr.f32.mxu0 %v257
  %1537 = vmatmul.mubr.f32.gmra.mrb[0].mxu0 %v256
  %v1538 = vpop.f32.mrb[0].mxu0
  %v1539 = vadd.f32 %v1349, %v1538
  %v1540 = vpop.f32.mrb[0].mxu0
  %1541 = vmatprep.mubr.f32.mxu0 %v270
  %1542 = vmatmul.mubr.f32.gmra.mrb[0].mxu0 %v269
  %v1543 = vpop.f32.mrb[0].mxu0
  %v1544 = vadd.f32 %v1354, %v1543
  %v1545 = vpop.f32.mrb[0].mxu0
  %1546 = vmatprep.mubr.f32.mxu0 %v283
  %1547 = vmatmul.mubr.f32.gmra.mrb[0].mxu0 %v282
  %v1548 = vpop.f32.mrb[0].mxu0
  %v1549 = vadd.f32 %v1359, %v1548
  %v1550 = vpop.f32.mrb[0].mxu0
  %1551 = vmatprep.mubr.f32.mxu0 %v296
  %1552 = vmatmul.mubr.f32.gmra.mrb[0].mxu0 %v295
  %v1553 = vpop.f32.mrb[0].mxu0
  %v1554 = vadd.f32 %v1364, %v1553
  %v1555 = vpop.f32.mrb[0].mxu0
  %1556 = vmatprep.mubr.f32.mxu0 %v309
  %1557 = vmatmul.mubr.f32.gmra.mrb[0].mxu0 %v308
  %v1558 = vpop.f32.mrb[0].mxu0
  %v1559 = vadd.f32 %v1369, %v1558
  %v1560 = vpop.f32.mrb[0].mxu0
  %1561 = vmatprep.mubr.f32.mxu0 %v322
  %1562 = vmatmul.mubr.f32.gmra.mrb[0].mxu0 %v321
  %v1563 = vpop.f32.mrb[0].mxu0
  %v1564 = vadd.f32 %v1374, %v1563
  %v1565 = vpop.f32.mrb[0].mxu0
  %1566 = vmatprep.mubr.f32.mxu0 %v335
  %1567 = vmatmul.mubr.f32.gmra.mrb[0].mxu0 %v334
  %v1568 = vpop.f32.mrb[0].mxu0
  %v1569 = vadd.f32 %v1379, %v1568
  %v1570 = vpop.f32.mrb[0].mxu0
  %1571 = vdwg.mxu0
  %1572 = vmatprep.subr.mxu0 0.0
  %1573 = vmatpush1.msra.mxu0 %v499
  %1574 = vmatprep.subr.mxu0 0.0
  %1575 = vmatpush1.msra.mxu0 %v500
  %1576 = vmatprep.subr.mxu0 0.0
  %1577 = vmatpush1.msra.mxu0 %v501
  %1578 = vmatprep.subr.mxu0 0.0
  %1579 = vmatpush1.msra.mxu0 %v502
  %1580 = vmatprep.subr.mxu0 0.0
  %1581 = vmatpush1.msra.mxu0 %v503
  %1582 = vmatprep.subr.mxu0 0.0
  %1583 = vmatpush1.msra.mxu0 %v504
  %1584 = vmatprep.subr.mxu0 0.0
  %1585 = vmatpush1.msra.mxu0 %v505
  %1586 = vmatprep.subr.mxu0 0.0
  %1587 = vmatpush1.msra.mxu0 %v506
  %1588 = vmatprep.subr.mxu0 0.0
  %1589 = vmatpush1.msra.mxu0 %v507
  %1590 = vmatprep.subr.mxu0 0.0
  %1591 = vmatpush1.msra.mxu0 %v508
  %1592 = vmatprep.subr.mxu0 0.0
  %1593 = vmatpush1.msra.mxu0 %v509
  %1594 = vmatprep.subr.mxu0 0.0
  %1595 = vmatpush1.msra.mxu0 %v510
  %1596 = vmatprep.subr.mxu0 0.0
  %1597 = vmatpush1.msra.mxu0 %v511
  %1598 = vmatprep.subr.mxu0 0.0
  %1599 = vmatpush1.msra.mxu0 %v512
  %1600 = vmatprep.subr.mxu0 0.0
  %1601 = vmatpush1.msra.mxu0 %v513
  %1602 = vmatprep.subr.mxu0 0.0
  %1603 = vmatpush1.msra.mxu0 %v514
  %1604 = vmatprep.subr.mxu0 0.0
  %1605 = vmatpush1.msra.mxu0 %v515
  %1606 = vmatprep.subr.mxu0 0.0
  %1607 = vmatpush1.msra.mxu0 %v516
  %1608 = vmatprep.subr.mxu0 0.0
  %1609 = vmatpush1.msra.mxu0 %v517
  %1610 = vmatprep.subr.mxu0 0.0
  %1611 = vmatpush1.msra.mxu0 %v518
  %1612 = vmatprep.subr.mxu0 0.0
  %1613 = vmatpush1.msra.mxu0 %v519
  %1614 = vmatprep.subr.mxu0 0.0
  %1615 = vmatpush1.msra.mxu0 %v520
  %1616 = vmatprep.subr.mxu0 0.0
  %1617 = vmatpush1.msra.mxu0 %v521
  %1618 = vmatprep.subr.mxu0 0.0
  %1619 = vmatpush1.msra.mxu0 %v522
  %1620 = vmatprep.subr.mxu0 0.0
  %1621 = vmatpush1.msra.mxu0 %v523
  %1622 = vmatprep.subr.mxu0 0.0
  %1623 = vmatpush1.msra.mxu0 %v524
  %1624 = vmatprep.subr.mxu0 0.0
  %1625 = vmatpush1.msra.mxu0 %v525
  %1626 = vmatprep.subr.mxu0 0.0
  %1627 = vmatpush1.msra.mxu0 %v526
  %1628 = vmatprep.subr.mxu0 0.0
  %1629 = vmatpush1.msra.mxu0 %v527
  %1630 = vmatprep.subr.mxu0 0.0
  %1631 = vmatpush1.msra.mxu0 %v528
  %1632 = vmatprep.subr.mxu0 0.0
  %1633 = vmatpush1.msra.mxu0 %v529
  %1634 = vmatprep.subr.mxu0 0.0
  %1635 = vmatpush1.msra.mxu0 %v530
  %1636 = vmatprep.mubr.f32.mxu0 %v25
  %1637 = vmatmul.mubr.f32.gmra.mrb[0].mxu0 %v24
  %v1638 = vpop.f32.mrb[0].mxu0
  %v1639 = vadd.f32 %v1449, %v1638
  %v1640 = vpop.f32.mrb[0].mxu0
  %1641 = vmatprep.mubr.f32.mxu0 %v38
  %1642 = vmatmul.mubr.f32.gmra.mrb[0].mxu0 %v37
  %v1643 = vpop.f32.mrb[0].mxu0
  %v1644 = vadd.f32 %v1454, %v1643
  %v1645 = vpop.f32.mrb[0].mxu0
  %1646 = vmatprep.mubr.f32.mxu0 %v51
  %1647 = vmatmul.mubr.f32.gmra.mrb[0].mxu0 %v50
  %v1648 = vpop.f32.mrb[0].mxu0
  %v1649 = vadd.f32 %v1459, %v1648
  %v1650 = vpop.f32.mrb[0].mxu0
  %1651 = vmatprep.mubr.f32.mxu0 %v64
  %1652 = vmatmul.mubr.f32.gmra.mrb[0].mxu0 %v63
  %v1653 = vpop.f32.mrb[0].mxu0
  %v1654 = vadd.f32 %v1464, %v1653
  %v1655 = vpop.f32.mrb[0].mxu0
  %1656 = vmatprep.mubr.f32.mxu0 %v77
  %1657 = vmatmul.mubr.f32.gmra.mrb[0].mxu0 %v76
  %v1658 = vpop.f32.mrb[0].mxu0
  %v1659 = vadd.f32 %v1469, %v1658
  %v1660 = vpop.f32.mrb[0].mxu0
  %1661 = vmatprep.mubr.f32.mxu0 %v90
  %1662 = vmatmul.mubr.f32.gmra.mrb[0].mxu0 %v89
  %v1663 = vpop.f32.mrb[0].mxu0
  %v1664 = vadd.f32 %v1474, %v1663
  %v1665 = vpop.f32.mrb[0].mxu0
  %1666 = vmatprep.mubr.f32.mxu0 %v103
  %1667 = vmatmul.mubr.f32.gmra.mrb[0].mxu0 %v102
  %v1668 = vpop.f32.mrb[0].mxu0
  %v1669 = vadd.f32 %v1479, %v1668
  %v1670 = vpop.f32.mrb[0].mxu0
  %1671 = vmatprep.mubr.f32.mxu0 %v116
  %1672 = vmatmul.mubr.f32.gmra.mrb[0].mxu0 %v115
  %v1673 = vpop.f32.mrb[0].mxu0
  %v1674 = vadd.f32 %v1484, %v1673
  %v1675 = vpop.f32.mrb[0].mxu0
  %1676 = vmatprep.mubr.f32.mxu0 %v129
  %1677 = vmatmul.mubr.f32.gmra.mrb[0].mxu0 %v128
  %v1678 = vpop.f32.mrb[0].mxu0
  %v1679 = vadd.f32 %v1489, %v1678
  %v1680 = vpop.f32.mrb[0].mxu0
  %1681 = vmatprep.mubr.f32.mxu0 %v142
  %1682 = vmatmul.mubr.f32.gmra.mrb[0].mxu0 %v141
  %v1683 = vpop.f32.mrb[0].mxu0
  %v1684 = vadd.f32 %v1494, %v1683
  %v1685 = vpop.f32.mrb[0].mxu0
  %1686 = vmatprep.mubr.f32.mxu0 %v155
  %1687 = vmatmul.mubr.f32.gmra.mrb[0].mxu0 %v154
  %v1688 = vpop.f32.mrb[0].mxu0
  %v1689 = vadd.f32 %v1499, %v1688
  %v1690 = vpop.f32.mrb[0].mxu0
  %1691 = vmatprep.mubr.f32.mxu0 %v168
  %1692 = vmatmul.mubr.f32.gmra.mrb[0].mxu0 %v167
  %v1693 = vpop.f32.mrb[0].mxu0
  %v1694 = vadd.f32 %v1504, %v1693
  %v1695 = vpop.f32.mrb[0].mxu0
  %1696 = vmatprep.mubr.f32.mxu0 %v181
  %1697 = vmatmul.mubr.f32.gmra.mrb[0].mxu0 %v180
  %v1698 = vpop.f32.mrb[0].mxu0
  %v1699 = vadd.f32 %v1509, %v1698
  %v1700 = vpop.f32.mrb[0].mxu0
  %1701 = vmatprep.mubr.f32.mxu0 %v194
  %1702 = vmatmul.mubr.f32.gmra.mrb[0].mxu0 %v193
  %v1703 = vpop.f32.mrb[0].mxu0
  %v1704 = vadd.f32 %v1514, %v1703
  %v1705 = vpop.f32.mrb[0].mxu0
  %1706 = vmatprep.mubr.f32.mxu0 %v207
  %1707 = vmatmul.mubr.f32.gmra.mrb[0].mxu0 %v206
  %v1708 = vpop.f32.mrb[0].mxu0
  %v1709 = vadd.f32 %v1519, %v1708
  %v1710 = vpop.f32.mrb[0].mxu0
  %1711 = vmatprep.mubr.f32.mxu0 %v220
  %1712 = vmatmul.mubr.f32.gmra.mrb[0].mxu0 %v219
  %v1713 = vpop.f32.mrb[0].mxu0
  %v1714 = vadd.f32 %v1524, %v1713
  %v1715 = vpop.f32.mrb[0].mxu0
  %1716 = vmatprep.mubr.f32.mxu0 %v233
  %1717 = vmatmul.mubr.f32.gmra.mrb[0].mxu0 %v232
  %v1718 = vpop.f32.mrb[0].mxu0
  %v1719 = vadd.f32 %v1529, %v1718
  %v1720 = vpop.f32.mrb[0].mxu0
  %1721 = vmatprep.mubr.f32.mxu0 %v246
  %1722 = vmatmul.mubr.f32.gmra.mrb[0].mxu0 %v245
  %v1723 = vpop.f32.mrb[0].mxu0
  %v1724 = vadd.f32 %v1534, %v1723
  %v1725 = vpop.f32.mrb[0].mxu0
  %1726 = vmatprep.mubr.f32.mxu0 %v259
  %1727 = vmatmul.mubr.f32.gmra.mrb[0].mxu0 %v258
  %v1728 = vpop.f32.mrb[0].mxu0
  %v1729 = vadd.f32 %v1539, %v1728
  %v1730 = vpop.f32.mrb[0].mxu0
  %1731 = vmatprep.mubr.f32.mxu0 %v272
  %1732 = vmatmul.mubr.f32.gmra.mrb[0].mxu0 %v271
  %v1733 = vpop.f32.mrb[0].mxu0
  %v1734 = vadd.f32 %v1544, %v1733
  %v1735 = vpop.f32.mrb[0].mxu0
  %1736 = vmatprep.mubr.f32.mxu0 %v285
  %1737 = vmatmul.mubr.f32.gmra.mrb[0].mxu0 %v284
  %v1738 = vpop.f32.mrb[0].mxu0
  %v1739 = vadd.f32 %v1549, %v1738
  %v1740 = vpop.f32.mrb[0].mxu0
  %1741 = vmatprep.mubr.f32.mxu0 %v298
  %1742 = vmatmul.mubr.f32.gmra.mrb[0].mxu0 %v297
  %v1743 = vpop.f32.mrb[0].mxu0
  %v1744 = vadd.f32 %v1554, %v1743
  %v1745 = vpop.f32.mrb[0].mxu0
  %1746 = vmatprep.mubr.f32.mxu0 %v311
  %1747 = vmatmul.mubr.f32.gmra.mrb[0].mxu0 %v310
  %v1748 = vpop.f32.mrb[0].mxu0
  %v1749 = vadd.f32 %v1559, %v1748
  %v1750 = vpop.f32.mrb[0].mxu0
  %1751 = vmatprep.mubr.f32.mxu0 %v324
  %1752 = vmatmul.mubr.f32.gmra.mrb[0].mxu0 %v323
  %v1753 = vpop.f32.mrb[0].mxu0
  %v1754 = vadd.f32 %v1564, %v1753
  %v1755 = vpop.f32.mrb[0].mxu0
  %1756 = vmatprep.mubr.f32.mxu0 %v337
  %1757 = vmatmul.mubr.f32.gmra.mrb[0].mxu0 %v336
  %v1758 = vpop.f32.mrb[0].mxu0
  %v1759 = vadd.f32 %v1569, %v1758
  %v1760 = vpop.f32.mrb[0].mxu0
  %1761 = vdwg.mxu0
  %1762 = vmatprep.subr.mxu0 0.0
  %1763 = vmatpush1.msra.mxu0 %v531
  %1764 = vmatprep.subr.mxu0 0.0
  %1765 = vmatpush1.msra.mxu0 %v532
  %1766 = vmatprep.subr.mxu0 0.0
  %1767 = vmatpush1.msra.mxu0 %v533
  %1768 = vmatprep.subr.mxu0 0.0
  %1769 = vmatpush1.msra.mxu0 %v534
  %1770 = vmatprep.subr.mxu0 0.0
  %1771 = vmatpush1.msra.mxu0 %v535
  %1772 = vmatprep.subr.mxu0 0.0
  %1773 = vmatpush1.msra.mxu0 %v536
  %1774 = vmatprep.subr.mxu0 0.0
  %1775 = vmatpush1.msra.mxu0 %v537
  %1776 = vmatprep.subr.mxu0 0.0
  %1777 = vmatpush1.msra.mxu0 %v538
  %1778 = vmatprep.subr.mxu0 0.0
  %1779 = vmatpush1.msra.mxu0 0.0
  %1780 = vmatprep.subr.mxu0 0.0
  %1781 = vmatpush1.msra.mxu0 0.0
  %1782 = vmatprep.subr.mxu0 0.0
  %1783 = vmatpush1.msra.mxu0 0.0
  %1784 = vmatprep.subr.mxu0 0.0
  %1785 = vmatpush1.msra.mxu0 0.0
  %1786 = vmatprep.subr.mxu0 0.0
  %1787 = vmatpush1.msra.mxu0 0.0
  %1788 = vmatprep.subr.mxu0 0.0
  %1789 = vmatpush1.msra.mxu0 0.0
  %1790 = vmatprep.subr.mxu0 0.0
  %1791 = vmatpush1.msra.mxu0 0.0
  %1792 = vmatprep.subr.mxu0 0.0
  %1793 = vmatpush1.msra.mxu0 0.0
  %1794 = vmatprep.subr.mxu0 0.0
  %1795 = vmatpush1.msra.mxu0 0.0
  %1796 = vmatprep.subr.mxu0 0.0
  %1797 = vmatpush1.msra.mxu0 0.0
  %1798 = vmatprep.subr.mxu0 0.0
  %1799 = vmatpush1.msra.mxu0 0.0
  %1800 = vmatprep.subr.mxu0 0.0
  %1801 = vmatpush1.msra.mxu0 0.0
  %1802 = vmatprep.subr.mxu0 0.0
  %1803 = vmatpush1.msra.mxu0 0.0
  %1804 = vmatprep.subr.mxu0 0.0
  %1805 = vmatpush1.msra.mxu0 0.0
  %1806 = vmatprep.subr.mxu0 0.0
  %1807 = vmatpush1.msra.mxu0 0.0
  %1808 = vmatprep.subr.mxu0 0.0
  %1809 = vmatpush1.msra.mxu0 0.0
  %1810 = vmatprep.subr.mxu0 0.0
  %1811 = vmatpush1.msra.mxu0 0.0
  %1812 = vmatprep.subr.mxu0 0.0
  %1813 = vmatpush1.msra.mxu0 0.0
  %1814 = vmatprep.subr.mxu0 0.0
  %1815 = vmatpush1.msra.mxu0 0.0
  %1816 = vmatprep.subr.mxu0 0.0
  %1817 = vmatpush1.msra.mxu0 0.0
  %1818 = vmatprep.subr.mxu0 0.0
  %1819 = vmatpush1.msra.mxu0 0.0
  %1820 = vmatprep.subr.mxu0 0.0
  %1821 = vmatpush1.msra.mxu0 0.0
  %1822 = vmatprep.subr.mxu0 0.0
  %1823 = vmatpush1.msra.mxu0 0.0
  %1824 = vmatprep.subr.mxu0 0.0
  %1825 = vmatpush1.msra.mxu0 0.0
  %1826 = vmatprep.mubr.f32.mxu0 0.0
  %1827 = vmatmul.mubr.f32.gmra.mrb[0].mxu0 %v548
  %v1828 = vpop.f32.mrb[0].mxu0
  %v1829 = vadd.f32 %v1639, %v1828
  %v1830 = vpop.f32.mrb[0].mxu0
  %1831 = vmatprep.mubr.f32.mxu0 0.0
  %1832 = vmatmul.mubr.f32.gmra.mrb[0].mxu0 %v551
  %v1833 = vpop.f32.mrb[0].mxu0
  %v1834 = vadd.f32 %v1644, %v1833
  %v1835 = vpop.f32.mrb[0].mxu0
  %1836 = vmatprep.mubr.f32.mxu0 0.0
  %1837 = vmatmul.mubr.f32.gmra.mrb[0].mxu0 %v554
  %v1838 = vpop.f32.mrb[0].mxu0
  %v1839 = vadd.f32 %v1649, %v1838
  %v1840 = vpop.f32.mrb[0].mxu0
  %1841 = vmatprep.mubr.f32.mxu0 0.0
  %1842 = vmatmul.mubr.f32.gmra.mrb[0].mxu0 %v557
  %v1843 = vpop.f32.mrb[0].mxu0
  %v1844 = vadd.f32 %v1654, %v1843
  %v1845 = vpop.f32.mrb[0].mxu0
  %1846 = vmatprep.mubr.f32.mxu0 0.0
  %1847 = vmatmul.mubr.f32.gmra.mrb[0].mxu0 %v560
  %v1848 = vpop.f32.mrb[0].mxu0
  %v1849 = vadd.f32 %v1659, %v1848
  %v1850 = vpop.f32.mrb[0].mxu0
  %1851 = vmatprep.mubr.f32.mxu0 0.0
  %1852 = vmatmul.mubr.f32.gmra.mrb[0].mxu0 %v563
  %v1853 = vpop.f32.mrb[0].mxu0
  %v1854 = vadd.f32 %v1664, %v1853
  %v1855 = vpop.f32.mrb[0].mxu0
  %1856 = vmatprep.mubr.f32.mxu0 0.0
  %1857 = vmatmul.mubr.f32.gmra.mrb[0].mxu0 %v566
  %v1858 = vpop.f32.mrb[0].mxu0
  %v1859 = vadd.f32 %v1669, %v1858
  %v1860 = vpop.f32.mrb[0].mxu0
  %1861 = vmatprep.mubr.f32.mxu0 0.0
  %1862 = vmatmul.mubr.f32.gmra.mrb[0].mxu0 %v569
  %v1863 = vpop.f32.mrb[0].mxu0
  %v1864 = vadd.f32 %v1674, %v1863
  %v1865 = vpop.f32.mrb[0].mxu0
  %1866 = vmatprep.mubr.f32.mxu0 0.0
  %1867 = vmatmul.mubr.f32.gmra.mrb[0].mxu0 %v572
  %v1868 = vpop.f32.mrb[0].mxu0
  %v1869 = vadd.f32 %v1679, %v1868
  %v1870 = vpop.f32.mrb[0].mxu0
  %1871 = vmatprep.mubr.f32.mxu0 0.0
  %1872 = vmatmul.mubr.f32.gmra.mrb[0].mxu0 %v575
  %v1873 = vpop.f32.mrb[0].mxu0
  %v1874 = vadd.f32 %v1684, %v1873
  %v1875 = vpop.f32.mrb[0].mxu0
  %1876 = vmatprep.mubr.f32.mxu0 0.0
  %1877 = vmatmul.mubr.f32.gmra.mrb[0].mxu0 %v578
  %v1878 = vpop.f32.mrb[0].mxu0
  %v1879 = vadd.f32 %v1689, %v1878
  %v1880 = vpop.f32.mrb[0].mxu0
  %1881 = vmatprep.mubr.f32.mxu0 0.0
  %1882 = vmatmul.mubr.f32.gmra.mrb[0].mxu0 %v581
  %v1883 = vpop.f32.mrb[0].mxu0
  %v1884 = vadd.f32 %v1694, %v1883
  %v1885 = vpop.f32.mrb[0].mxu0
  %1886 = vmatprep.mubr.f32.mxu0 0.0
  %1887 = vmatmul.mubr.f32.gmra.mrb[0].mxu0 %v584
  %v1888 = vpop.f32.mrb[0].mxu0
  %v1889 = vadd.f32 %v1699, %v1888
  %v1890 = vpop.f32.mrb[0].mxu0
  %1891 = vmatprep.mubr.f32.mxu0 0.0
  %1892 = vmatmul.mubr.f32.gmra.mrb[0].mxu0 %v587
  %v1893 = vpop.f32.mrb[0].mxu0
  %v1894 = vadd.f32 %v1704, %v1893
  %v1895 = vpop.f32.mrb[0].mxu0
  %1896 = vmatprep.mubr.f32.mxu0 0.0
  %1897 = vmatmul.mubr.f32.gmra.mrb[0].mxu0 %v590
  %v1898 = vpop.f32.mrb[0].mxu0
  %v1899 = vadd.f32 %v1709, %v1898
  %v1900 = vpop.f32.mrb[0].mxu0
  %1901 = vmatprep.mubr.f32.mxu0 0.0
  %1902 = vmatmul.mubr.f32.gmra.mrb[0].mxu0 %v593
  %v1903 = vpop.f32.mrb[0].mxu0
  %v1904 = vadd.f32 %v1714, %v1903
  %v1905 = vpop.f32.mrb[0].mxu0
  %1906 = vmatprep.mubr.f32.mxu0 0.0
  %1907 = vmatmul.mubr.f32.gmra.mrb[0].mxu0 %v596
  %v1908 = vpop.f32.mrb[0].mxu0
  %v1909 = vadd.f32 %v1719, %v1908
  %v1910 = vpop.f32.mrb[0].mxu0
  %1911 = vmatprep.mubr.f32.mxu0 0.0
  %1912 = vmatmul.mubr.f32.gmra.mrb[0].mxu0 %v599
  %v1913 = vpop.f32.mrb[0].mxu0
  %v1914 = vadd.f32 %v1724, %v1913
  %v1915 = vpop.f32.mrb[0].mxu0
  %1916 = vmatprep.mubr.f32.mxu0 0.0
  %1917 = vmatmul.mubr.f32.gmra.mrb[0].mxu0 %v602
  %v1918 = vpop.f32.mrb[0].mxu0
  %v1919 = vadd.f32 %v1729, %v1918
  %v1920 = vpop.f32.mrb[0].mxu0
  %1921 = vmatprep.mubr.f32.mxu0 0.0
  %1922 = vmatmul.mubr.f32.gmra.mrb[0].mxu0 %v605
  %v1923 = vpop.f32.mrb[0].mxu0
  %v1924 = vadd.f32 %v1734, %v1923
  %v1925 = vpop.f32.mrb[0].mxu0
  %1926 = vmatprep.mubr.f32.mxu0 0.0
  %1927 = vmatmul.mubr.f32.gmra.mrb[0].mxu0 %v608
  %v1928 = vpop.f32.mrb[0].mxu0
  %v1929 = vadd.f32 %v1739, %v1928
  %v1930 = vpop.f32.mrb[0].mxu0
  %1931 = vmatprep.mubr.f32.mxu0 0.0
  %1932 = vmatmul.mubr.f32.gmra.mrb[0].mxu0 %v611
  %v1933 = vpop.f32.mrb[0].mxu0
  %v1934 = vadd.f32 %v1744, %v1933
  %v1935 = vpop.f32.mrb[0].mxu0
  %1936 = vmatprep.mubr.f32.mxu0 0.0
  %1937 = vmatmul.mubr.f32.gmra.mrb[0].mxu0 %v614
  %v1938 = vpop.f32.mrb[0].mxu0
  %v1939 = vadd.f32 %v1749, %v1938
  %v1940 = vpop.f32.mrb[0].mxu0
  %1941 = vmatprep.mubr.f32.mxu0 0.0
  %1942 = vmatmul.mubr.f32.gmra.mrb[0].mxu0 %v617
  %v1943 = vpop.f32.mrb[0].mxu0
  %v1944 = vadd.f32 %v1754, %v1943
  %v1945 = vpop.f32.mrb[0].mxu0
  %1946 = vmatprep.mubr.f32.mxu0 0.0
  %1947 = vmatmul.mubr.f32.gmra.mrb[0].mxu0 %v620
  %v1948 = vpop.f32.mrb[0].mxu0
  %v1949 = vadd.f32 %v1759, %v1948
  %v1950 = vpop.f32.mrb[0].mxu0
  %1951 = vdwg.mxu0
  %vm1952 = vcmp.gt.f32.partialorder %v1829, 0.0
  %vm1953 = vcmp.gt.f32.partialorder %v1834, 0.0
  %vm1954 = vcmp.gt.f32.partialorder %v1839, 0.0
  %vm1955 = vcmp.gt.f32.partialorder %v1844, 0.0
  %vm1956 = vcmp.gt.f32.partialorder %v1849, 0.0
  %vm1957 = vcmp.gt.f32.partialorder %v1854, 0.0
  %vm1958 = vcmp.gt.f32.partialorder %v1859, 0.0
  %vm1959 = vcmp.gt.f32.partialorder %v1864, 0.0
  %vm1960 = vcmp.gt.f32.partialorder %v1869, 0.0
  %vm1961 = vcmp.gt.f32.partialorder %v1874, 0.0
  %vm1962 = vcmp.gt.f32.partialorder %v1879, 0.0
  %vm1963 = vcmp.gt.f32.partialorder %v1884, 0.0
  %vm1964 = vcmp.gt.f32.partialorder %v1889, 0.0
  %vm1965 = vcmp.gt.f32.partialorder %v1894, 0.0
  %vm1966 = vcmp.gt.f32.partialorder %v1899, 0.0
  %vm1967 = vcmp.gt.f32.partialorder %v1904, 0.0
  %vm1968 = vcmp.gt.f32.partialorder %v1909, 0.0
  %vm1969 = vcmp.gt.f32.partialorder %v1914, 0.0
  %vm1970 = vcmp.gt.f32.partialorder %v1919, 0.0
  %vm1971 = vcmp.gt.f32.partialorder %v1924, 0.0
  %vm1972 = vcmp.gt.f32.partialorder %v1929, 0.0
  %vm1973 = vcmp.gt.f32.partialorder %v1934, 0.0
  %vm1974 = vcmp.gt.f32.partialorder %v1939, 0.0
  %vm1975 = vcmp.gt.f32.partialorder %v1944, 0.0
  %vm1976 = vcmp.gt.f32.partialorder %v1949, 0.0
  %v1977 = vmul.f32 %v1829, 0.2
  %v1978 = vmul.f32 %v1834, 0.2
  %v1979 = vmul.f32 %v1839, 0.2
  %v1980 = vmul.f32 %v1844, 0.2
  %v1981 = vmul.f32 %v1849, 0.2
  %v1982 = vmul.f32 %v1854, 0.2
  %v1983 = vmul.f32 %v1859, 0.2
  %v1984 = vmul.f32 %v1864, 0.2
  %v1985 = vmul.f32 %v1869, 0.2
  %v1986 = vmul.f32 %v1874, 0.2
  %v1987 = vmul.f32 %v1879, 0.2
  %v1988 = vmul.f32 %v1884, 0.2
  %v1989 = vmul.f32 %v1889, 0.2
  %v1990 = vmul.f32 %v1894, 0.2
  %v1991 = vmul.f32 %v1899, 0.2
  %v1992 = vmul.f32 %v1904, 0.2
  %v1993 = vmul.f32 %v1909, 0.2
  %v1994 = vmul.f32 %v1914, 0.2
  %v1995 = vmul.f32 %v1919, 0.2
  %v1996 = vmul.f32 %v1924, 0.2
  %v1997 = vmul.f32 %v1929, 0.2
  %v1998 = vmul.f32 %v1934, 0.2
  %v1999 = vmul.f32 %v1939, 0.2
  %v2000 = vmul.f32 %v1944, 0.2
  %v2001 = vmul.f32 %v1949, 0.2
  %v2002 = vsel %vm1952, %v1829, %v1977
  %v2003 = vsel %vm1953, %v1834, %v1978
  %v2004 = vsel %vm1954, %v1839, %v1979
  %v2005 = vsel %vm1955, %v1844, %v1980
  %v2006 = vsel %vm1956, %v1849, %v1981
  %v2007 = vsel %vm1957, %v1854, %v1982
  %v2008 = vsel %vm1958, %v1859, %v1983
  %v2009 = vsel %vm1959, %v1864, %v1984
  %v2010 = vsel %vm1960, %v1869, %v1985
  %v2011 = vsel %vm1961, %v1874, %v1986
  %v2012 = vsel %vm1962, %v1879, %v1987
  %v2013 = vsel %vm1963, %v1884, %v1988
  %v2014 = vsel %vm1964, %v1889, %v1989
  %v2015 = vsel %vm1965, %v1894, %v1990
  %v2016 = vsel %vm1966, %v1899, %v1991
  %v2017 = vsel %vm1967, %v1904, %v1992
  %v2018 = vsel %vm1968, %v1909, %v1993
  %v2019 = vsel %vm1969, %v1914, %v1994
  %v2020 = vsel %vm1970, %v1919, %v1995
  %v2021 = vsel %vm1971, %v1924, %v1996
  %v2022 = vsel %vm1972, %v1929, %v1997
  %v2023 = vsel %vm1973, %v1934, %v1998
  %v2024 = vsel %vm1974, %v1939, %v1999
  %v2025 = vsel %vm1975, %v1944, %v2000
  %v2026 = vsel %vm1976, %v1949, %v2001
  %2027 = vst [vmem:[%s3] sm:$0xff] %v2002
  %2028 = vst [vmem:[%s3 + $0x8] sm:$0xff] %v2003
  %2029 = vst [vmem:[%s3 + $0x10] sm:$0xff] %v2004
  %2030 = vst [vmem:[%s3 + $0x18] sm:$0xff] %v2005
  %2031 = vst [vmem:[%s3 + $0x20] sm:$0xff] %v2006
  %2032 = vst [vmem:[%s3 + $0x28] sm:$0xff] %v2007
  %2033 = vst [vmem:[%s3 + $0x30] sm:$0xff] %v2008
  %2034 = vst [vmem:[%s3 + $0x38] sm:$0xff] %v2009
  %2035 = vst [vmem:[%s3 + $0x40] sm:$0xff] %v2010
  %2036 = vst [vmem:[%s3 + $0x48] sm:$0xff] %v2011
  %2037 = vst [vmem:[%s3 + $0x50] sm:$0xff] %v2012
  %2038 = vst [vmem:[%s3 + $0x58] sm:$0xff] %v2013
  %2039 = vst [vmem:[%s3 + $0x60] sm:$0xff] %v2014
  %2040 = vst [vmem:[%s3 + $0x68] sm:$0xff] %v2015
  %2041 = vst [vmem:[%s3 + $0x70] sm:$0xff] %v2016
  %2042 = vst [vmem:[%s3 + $0x78] sm:$0xff] %v2017
  %2043 = vst [vmem:[%s3 + $0x80] sm:$0xff] %v2018
  %2044 = vst [vmem:[%s3 + $0x88] sm:$0xff] %v2019
  %2045 = vst [vmem:[%s3 + $0x90] sm:$0xff] %v2020
  %2046 = vst [vmem:[%s3 + $0x98] sm:$0xff] %v2021
  %2047 = vst [vmem:[%s3 + $0xa0] sm:$0xff] %v2022
  %2048 = vst [vmem:[%s3 + $0xa8] sm:$0xff] %v2023
  %2049 = vst [vmem:[%s3 + $0xb0] sm:$0xff] %v2024
  %2050 = vst [vmem:[%s3 + $0xb8] sm:$0xff] %v2025
  %2051 = vst [vmem:[%s3 + $0xc0] sm:$0xff] %v2026
  // Predicated region
  $region14: #{mcnn2_forward.4} parent=0 // pred_check
    _
  $region15: #{mcnn2_forward.4} parent=0 // pred_check_branch
    %2053 = sbr.rel (0) target = $region17
  $region16: #{mcnn2_forward.4} parent=0 // pred_region
    _
  $region17: #{mcnn2_forward.4} parent=0 // pred_fallthru
    _
  // Predicated region
  $region18: #{mcnn2_forward.4} parent=0 // pred_check
    _
  $region19: #{mcnn2_forward.4} parent=0 // pred_check_branch
    %2055 = sbr.rel (0) target = $region21
  $region20: #{mcnn2_forward.4} parent=0 // pred_region
    _
  $region21: #{mcnn2_forward.4} parent=0 // pred_fallthru
    _

// kernel: mcnn2_forward.5
$region0: #{mcnn2_forward.5}
  #allocation0 [shape = 'u32[]', space=smem, size = 0x4, offset = 0x4, fixed_abs, tag = 'smem constant byte address 0x4 - core index']
  #allocation1 [shape = 'u32[144,128]{1,0:T(1,128)}', space=vmem, size = 0x12000, scoped, tag = 'internal scratch']
  %s0 = inlined_call_operand.vmem [shape: f32[2,12800], index: 0, kind: input, shape index: {}]
  %s1 = inlined_call_operand.vmem [shape: f32[12800,10], index: 1, kind: input, shape index: {}]
  %s2 = inlined_call_operand.vmem [shape: f32[1,10], index: 2, kind: input, shape index: {}]
  %s3 = inlined_call_operand.hbm [shape: f32[2,10], index: 3, kind: output, shape index: {}]
  %s4 = sld [smem:[#allocation0]]
  $region22: #{mcnn2_forward.5} parent=0
    _
  %s6 = ssub.s32 1, %s4
  %s7 = scalar_select 0, %s6, %s4
  $region1: #{mcnn2_forward.5} parent=0
    #allocation2 [shape = 'u8[1024]{0}', space=vmem, size = 0x400, scoped, tag = 'output window, operand 0, single buffered']
    #allocation3 [shape = 's32[1]{0}', space=sflag, size = 0x4, scoped, tag = 'scoped memory for mcnn2_forward.5']
    %8 = vsyncpa [#allocation3], 0
    // Predicated region
    $region2: #{mcnn2_forward.5} parent=1 // pred_check
      _
    $region3: #{mcnn2_forward.5} parent=1 // pred_check_branch
      %10 = sbr.rel (0) target = $region5
    $region4: #{mcnn2_forward.5} parent=1 // pred_region
      _
    $region5: #{mcnn2_forward.5} parent=1 // pred_fallthru
      _
    // Predicated region
    $region6: #{mcnn2_forward.5} parent=1 // pred_check
      _
    $region7: #{mcnn2_forward.5} parent=1 // pred_check_branch
      %12 = sbr.rel (0) target = $region9
    $region8: #{mcnn2_forward.5} parent=1 // pred_region
      _
    $region9: #{mcnn2_forward.5} parent=1 // pred_fallthru
      _
    // Predicated region
    $region10: #{mcnn2_forward.5} parent=1 // pred_check
      _
    $region11: #{mcnn2_forward.5} parent=1 // pred_check_branch
      %14 = sbr.rel (0) target = $region13
    $region12: #{mcnn2_forward.5} parent=1 // pred_region
      _
    $region13: #{mcnn2_forward.5} parent=1 // pred_fallthru
      _
    %v15 = vld [vmem:[%s0] sm:$0xff]
    %v16 = vld [vmem:[%s0 + $0x8] sm:$0xff]
    %v17 = vld [vmem:[%s0 + $0x10] sm:$0xff]
    %v18 = vld [vmem:[%s0 + $0x18] sm:$0xff]
    %v19 = vld [vmem:[%s0 + $0x20] sm:$0xff]
    %v20 = vld [vmem:[%s0 + $0x28] sm:$0xff]
    %v21 = vld [vmem:[%s0 + $0x30] sm:$0xff]
    %v22 = vld [vmem:[%s0 + $0x38] sm:$0xff]
    %v23 = vld [vmem:[%s0 + $0x40] sm:$0xff]
    %v24 = vld [vmem:[%s0 + $0x48] sm:$0xff]
    %v25 = vld [vmem:[%s0 + $0x50] sm:$0xff]
    %v26 = vld [vmem:[%s0 + $0x58] sm:$0xff]
    %v27 = vld [vmem:[%s0 + $0x60] sm:$0xff]
    %v28 = vld [vmem:[%s0 + $0x68] sm:$0xff]
    %v29 = vld [vmem:[%s0 + $0x70] sm:$0xff]
    %v30 = vld [vmem:[%s0 + $0x78] sm:$0xff]
    %v31 = vld [vmem:[%s0 + $0x80] sm:$0xff]
    %v32 = vld [vmem:[%s0 + $0x88] sm:$0xff]
    %v33 = vld [vmem:[%s0 + $0x90] sm:$0xff]
    %v34 = vld [vmem:[%s0 + $0x98] sm:$0xff]
    %v35 = vld [vmem:[%s0 + $0xa0] sm:$0xff]
    %v36 = vld [vmem:[%s0 + $0xa8] sm:$0xff]
    %v37 = vld [vmem:[%s0 + $0xb0] sm:$0xff]
    %v38 = vld [vmem:[%s0 + $0xb8] sm:$0xff]
    %v39 = vld [vmem:[%s0 + $0xc0] sm:$0xff]
    %v40 = vld [vmem:[%s1] sm:$0xff]
    %v41 = vld [vmem:[%s1 + $0x8] sm:$0xff]
    %v42 = vld [vmem:[%s1 + $0x10] sm:$0xff]
    %v43 = vld [vmem:[%s1 + $0x18] sm:$0xff]
    %v44 = vld [vmem:[%s1 + $0x20] sm:$0xff]
    %v45 = vld [vmem:[%s1 + $0x28] sm:$0xff]
    %v46 = vld [vmem:[%s1 + $0x30] sm:$0xff]
    %v47 = vld [vmem:[%s1 + $0x38] sm:$0xff]
    %v48 = vld [vmem:[%s1 + $0x40] sm:$0xff]
    %v49 = vld [vmem:[%s1 + $0x48] sm:$0xff]
    %v50 = vld [vmem:[%s1 + $0x50] sm:$0xff]
    %v51 = vld [vmem:[%s1 + $0x58] sm:$0xff]
    %v52 = vld [vmem:[%s1 + $0x60] sm:$0xff]
    %v53 = vld [vmem:[%s1 + $0x68] sm:$0xff]
    %v54 = vld [vmem:[%s1 + $0x70] sm:$0xff]
    %v55 = vld [vmem:[%s1 + $0x78] sm:$0xff]
    %v56 = vld [vmem:[%s1 + $0x80] sm:$0xff]
    %v57 = vld [vmem:[%s1 + $0x88] sm:$0xff]
    %v58 = vld [vmem:[%s1 + $0x90] sm:$0xff]
    %v59 = vld [vmem:[%s1 + $0x98] sm:$0xff]
    %v60 = vld [vmem:[%s1 + $0xa0] sm:$0xff]
    %v61 = vld [vmem:[%s1 + $0xa8] sm:$0xff]
    %v62 = vld [vmem:[%s1 + $0xb0] sm:$0xff]
    %v63 = vld [vmem:[%s1 + $0xb8] sm:$0xff]
    %v64 = vld [vmem:[%s1 + $0xc0] sm:$0xff]
    %v65 = vld [vmem:[%s1 + $0xc8] sm:$0xff]
    %v66 = vld [vmem:[%s1 + $0xd0] sm:$0xff]
    %v67 = vld [vmem:[%s1 + $0xd8] sm:$0xff]
    %v68 = vld [vmem:[%s1 + $0xe0] sm:$0xff]
    %v69 = vld [vmem:[%s1 + $0xe8] sm:$0xff]
    %v70 = vld [vmem:[%s1 + $0xf0] sm:$0xff]
    %v71 = vld [vmem:[%s1 + $0xf8] sm:$0xff]
    %v72 = vld [vmem:[%s1 + $0x100] sm:$0xff]
    %v73 = vld [vmem:[%s1 + $0x108] sm:$0xff]
    %v74 = vld [vmem:[%s1 + $0x110] sm:$0xff]
    %v75 = vld [vmem:[%s1 + $0x118] sm:$0xff]
    %v76 = vld [vmem:[%s1 + $0x120] sm:$0xff]
    %v77 = vld [vmem:[%s1 + $0x128] sm:$0xff]
    %v78 = vld [vmem:[%s1 + $0x130] sm:$0xff]
    %v79 = vld [vmem:[%s1 + $0x138] sm:$0xff]
    %v80 = vld [vmem:[%s1 + $0x140] sm:$0xff]
    %v81 = vld [vmem:[%s1 + $0x148] sm:$0xff]
    %v82 = vld [vmem:[%s1 + $0x150] sm:$0xff]
    %v83 = vld [vmem:[%s1 + $0x158] sm:$0xff]
    %v84 = vld [vmem:[%s1 + $0x160] sm:$0xff]
    %v85 = vld [vmem:[%s1 + $0x168] sm:$0xff]
    %v86 = vld [vmem:[%s1 + $0x170] sm:$0xff]
    %v87 = vld [vmem:[%s1 + $0x178] sm:$0xff]
    %v88 = vld [vmem:[%s1 + $0x180] sm:$0xff]
    %v89 = vld [vmem:[%s1 + $0x188] sm:$0xff]
    %v90 = vld [vmem:[%s1 + $0x190] sm:$0xff]
    %v91 = vld [vmem:[%s1 + $0x198] sm:$0xff]
    %v92 = vld [vmem:[%s1 + $0x1a0] sm:$0xff]
    %v93 = vld [vmem:[%s1 + $0x1a8] sm:$0xff]
    %v94 = vld [vmem:[%s1 + $0x1b0] sm:$0xff]
    %v95 = vld [vmem:[%s1 + $0x1b8] sm:$0xff]
    %v96 = vld [vmem:[%s1 + $0x1c0] sm:$0xff]
    %v97 = vld [vmem:[%s1 + $0x1c8] sm:$0xff]
    %v98 = vld [vmem:[%s1 + $0x1d0] sm:$0xff]
    %v99 = vld [vmem:[%s1 + $0x1d8] sm:$0xff]
    %v100 = vld [vmem:[%s1 + $0x1e0] sm:$0xff]
    %v101 = vld [vmem:[%s1 + $0x1e8] sm:$0xff]
    %v102 = vld [vmem:[%s1 + $0x1f0] sm:$0xff]
    %v103 = vld [vmem:[%s1 + $0x1f8] sm:$0xff]
    %v104 = vld [vmem:[%s1 + $0x200] sm:$0xff]
    %v105 = vld [vmem:[%s1 + $0x208] sm:$0xff]
    %v106 = vld [vmem:[%s1 + $0x210] sm:$0xff]
    %v107 = vld [vmem:[%s1 + $0x218] sm:$0xff]
    %v108 = vld [vmem:[%s1 + $0x220] sm:$0xff]
    %v109 = vld [vmem:[%s1 + $0x228] sm:$0xff]
    %v110 = vld [vmem:[%s1 + $0x230] sm:$0xff]
    %v111 = vld [vmem:[%s1 + $0x238] sm:$0xff]
    %v112 = vld [vmem:[%s1 + $0x240] sm:$0xff]
    %v113 = vld [vmem:[%s1 + $0x248] sm:$0xff]
    %v114 = vld [vmem:[%s1 + $0x250] sm:$0xff]
    %v115 = vld [vmem:[%s1 + $0x258] sm:$0xff]
    %v116 = vld [vmem:[%s1 + $0x260] sm:$0xff]
    %v117 = vld [vmem:[%s1 + $0x268] sm:$0xff]
    %v118 = vld [vmem:[%s1 + $0x270] sm:$0xff]
    %v119 = vld [vmem:[%s1 + $0x278] sm:$0xff]
    %v120 = vld [vmem:[%s1 + $0x280] sm:$0xff]
    %v121 = vld [vmem:[%s1 + $0x288] sm:$0xff]
    %v122 = vld [vmem:[%s1 + $0x290] sm:$0xff]
    %v123 = vld [vmem:[%s1 + $0x298] sm:$0xff]
    %v124 = vld [vmem:[%s1 + $0x2a0] sm:$0xff]
    %v125 = vld [vmem:[%s1 + $0x2a8] sm:$0xff]
    %v126 = vld [vmem:[%s1 + $0x2b0] sm:$0xff]
    %v127 = vld [vmem:[%s1 + $0x2b8] sm:$0xff]
    %v128 = vld [vmem:[%s1 + $0x2c0] sm:$0xff]
    %v129 = vld [vmem:[%s1 + $0x2c8] sm:$0xff]
    %v130 = vld [vmem:[%s1 + $0x2d0] sm:$0xff]
    %v131 = vld [vmem:[%s1 + $0x2d8] sm:$0xff]
    %v132 = vld [vmem:[%s1 + $0x2e0] sm:$0xff]
    %v133 = vld [vmem:[%s1 + $0x2e8] sm:$0xff]
    %v134 = vld [vmem:[%s1 + $0x2f0] sm:$0xff]
    %v135 = vld [vmem:[%s1 + $0x2f8] sm:$0xff]
    %v136 = vld [vmem:[%s1 + $0x300] sm:$0xff]
    %v137 = vld [vmem:[%s1 + $0x308] sm:$0xff]
    %v138 = vld [vmem:[%s1 + $0x310] sm:$0xff]
    %v139 = vld [vmem:[%s1 + $0x318] sm:$0xff]
    %v140 = vld [vmem:[%s1 + $0x320] sm:$0xff]
    %v141 = vld [vmem:[%s1 + $0x328] sm:$0xff]
    %v142 = vld [vmem:[%s1 + $0x330] sm:$0xff]
    %v143 = vld [vmem:[%s1 + $0x338] sm:$0xff]
    %v144 = vld [vmem:[%s1 + $0x340] sm:$0xff]
    %v145 = vld [vmem:[%s1 + $0x348] sm:$0xff]
    %v146 = vld [vmem:[%s1 + $0x350] sm:$0xff]
    %v147 = vld [vmem:[%s1 + $0x358] sm:$0xff]
    %v148 = vld [vmem:[%s1 + $0x360] sm:$0xff]
    %v149 = vld [vmem:[%s1 + $0x368] sm:$0xff]
    %v150 = vld [vmem:[%s1 + $0x370] sm:$0xff]
    %v151 = vld [vmem:[%s1 + $0x378] sm:$0xff]
    %v152 = vld [vmem:[%s1 + $0x380] sm:$0xff]
    %v153 = vld [vmem:[%s1 + $0x388] sm:$0xff]
    %v154 = vld [vmem:[%s1 + $0x390] sm:$0xff]
    %v155 = vld [vmem:[%s1 + $0x398] sm:$0xff]
    %v156 = vld [vmem:[%s1 + $0x3a0] sm:$0xff]
    %v157 = vld [vmem:[%s1 + $0x3a8] sm:$0xff]
    %v158 = vld [vmem:[%s1 + $0x3b0] sm:$0xff]
    %v159 = vld [vmem:[%s1 + $0x3b8] sm:$0xff]
    %v160 = vld [vmem:[%s1 + $0x3c0] sm:$0xff]
    %v161 = vld [vmem:[%s1 + $0x3c8] sm:$0xff]
    %v162 = vld [vmem:[%s1 + $0x3d0] sm:$0xff]
    %v163 = vld [vmem:[%s1 + $0x3d8] sm:$0xff]
    %v164 = vld [vmem:[%s1 + $0x3e0] sm:$0xff]
    %v165 = vld [vmem:[%s1 + $0x3e8] sm:$0xff]
    %v166 = vld [vmem:[%s1 + $0x3f0] sm:$0xff]
    %v167 = vld [vmem:[%s1 + $0x3f8] sm:$0xff]
    %v168 = vld [vmem:[%s1 + $0x400] sm:$0xff]
    %v169 = vld [vmem:[%s1 + $0x408] sm:$0xff]
    %v170 = vld [vmem:[%s1 + $0x410] sm:$0xff]
    %v171 = vld [vmem:[%s1 + $0x418] sm:$0xff]
    %v172 = vld [vmem:[%s1 + $0x420] sm:$0xff]
    %v173 = vld [vmem:[%s1 + $0x428] sm:$0xff]
    %v174 = vld [vmem:[%s1 + $0x430] sm:$0xff]
    %v175 = vld [vmem:[%s1 + $0x438] sm:$0xff]
    %v176 = vld [vmem:[%s1 + $0x440] sm:$0xff]
    %v177 = vld [vmem:[%s1 + $0x448] sm:$0xff]
    %v178 = vld [vmem:[%s1 + $0x450] sm:$0xff]
    %v179 = vld [vmem:[%s1 + $0x458] sm:$0xff]
    %v180 = vld [vmem:[%s1 + $0x460] sm:$0xff]
    %v181 = vld [vmem:[%s1 + $0x468] sm:$0xff]
    %v182 = vld [vmem:[%s1 + $0x470] sm:$0xff]
    %v183 = vld [vmem:[%s1 + $0x478] sm:$0xff]
    %v184 = vld [vmem:[%s1 + $0x480] sm:$0xff]
    %v185 = vld [vmem:[%s1 + $0x488] sm:$0xff]
    %v186 = vld [vmem:[%s1 + $0x490] sm:$0xff]
    %v187 = vld [vmem:[%s1 + $0x498] sm:$0xff]
    %v188 = vld [vmem:[%s1 + $0x4a0] sm:$0xff]
    %v189 = vld [vmem:[%s1 + $0x4a8] sm:$0xff]
    %v190 = vld [vmem:[%s1 + $0x4b0] sm:$0xff]
    %v191 = vld [vmem:[%s1 + $0x4b8] sm:$0xff]
    %v192 = vld [vmem:[%s1 + $0x4c0] sm:$0xff]
    %v193 = vld [vmem:[%s1 + $0x4c8] sm:$0xff]
    %v194 = vld [vmem:[%s1 + $0x4d0] sm:$0xff]
    %v195 = vld [vmem:[%s1 + $0x4d8] sm:$0xff]
    %v196 = vld [vmem:[%s1 + $0x4e0] sm:$0xff]
    %v197 = vld [vmem:[%s1 + $0x4e8] sm:$0xff]
    %v198 = vld [vmem:[%s1 + $0x4f0] sm:$0xff]
    %v199 = vld [vmem:[%s1 + $0x4f8] sm:$0xff]
    %v200 = vld [vmem:[%s1 + $0x500] sm:$0xff]
    %v201 = vld [vmem:[%s1 + $0x508] sm:$0xff]
    %v202 = vld [vmem:[%s1 + $0x510] sm:$0xff]
    %v203 = vld [vmem:[%s1 + $0x518] sm:$0xff]
    %v204 = vld [vmem:[%s1 + $0x520] sm:$0xff]
    %v205 = vld [vmem:[%s1 + $0x528] sm:$0xff]
    %v206 = vld [vmem:[%s1 + $0x530] sm:$0xff]
    %v207 = vld [vmem:[%s1 + $0x538] sm:$0xff]
    %v208 = vld [vmem:[%s1 + $0x540] sm:$0xff]
    %v209 = vld [vmem:[%s1 + $0x548] sm:$0xff]
    %v210 = vld [vmem:[%s1 + $0x550] sm:$0xff]
    %v211 = vld [vmem:[%s1 + $0x558] sm:$0xff]
    %v212 = vld [vmem:[%s1 + $0x560] sm:$0xff]
    %v213 = vld [vmem:[%s1 + $0x568] sm:$0xff]
    %v214 = vld [vmem:[%s1 + $0x570] sm:$0xff]
    %v215 = vld [vmem:[%s1 + $0x578] sm:$0xff]
    %v216 = vld [vmem:[%s1 + $0x580] sm:$0xff]
    %v217 = vld [vmem:[%s1 + $0x588] sm:$0xff]
    %v218 = vld [vmem:[%s1 + $0x590] sm:$0xff]
    %v219 = vld [vmem:[%s1 + $0x598] sm:$0xff]
    %v220 = vld [vmem:[%s1 + $0x5a0] sm:$0xff]
    %v221 = vld [vmem:[%s1 + $0x5a8] sm:$0xff]
    %v222 = vld [vmem:[%s1 + $0x5b0] sm:$0xff]
    %v223 = vld [vmem:[%s1 + $0x5b8] sm:$0xff]
    %v224 = vld [vmem:[%s1 + $0x5c0] sm:$0xff]
    %v225 = vld [vmem:[%s1 + $0x5c8] sm:$0xff]
    %v226 = vld [vmem:[%s1 + $0x5d0] sm:$0xff]
    %v227 = vld [vmem:[%s1 + $0x5d8] sm:$0xff]
    %v228 = vld [vmem:[%s1 + $0x5e0] sm:$0xff]
    %v229 = vld [vmem:[%s1 + $0x5e8] sm:$0xff]
    %v230 = vld [vmem:[%s1 + $0x5f0] sm:$0xff]
    %v231 = vld [vmem:[%s1 + $0x5f8] sm:$0xff]
    %v232 = vld [vmem:[%s1 + $0x600] sm:$0xff]
    %v233 = vld [vmem:[%s1 + $0x608] sm:$0xff]
    %v234 = vld [vmem:[%s1 + $0x610] sm:$0xff]
    %v235 = vld [vmem:[%s1 + $0x618] sm:$0xff]
    %v236 = vld [vmem:[%s1 + $0x620] sm:$0xff]
    %v237 = vld [vmem:[%s1 + $0x628] sm:$0xff]
    %v238 = vld [vmem:[%s1 + $0x630] sm:$0xff]
    %v239 = vld [vmem:[%s1 + $0x638] sm:$0xff]
    %v240 = vld [vmem:[%s1 + $0x640] sm:$0xff]
    %v241 = vld [vmem:[%s1 + $0x648] sm:$0xff]
    %v242 = vld [vmem:[%s1 + $0x650] sm:$0xff]
    %v243 = vld [vmem:[%s1 + $0x658] sm:$0xff]
    %v244 = vld [vmem:[%s1 + $0x660] sm:$0xff]
    %v245 = vld [vmem:[%s1 + $0x668] sm:$0xff]
    %v246 = vld [vmem:[%s1 + $0x670] sm:$0xff]
    %v247 = vld [vmem:[%s1 + $0x678] sm:$0xff]
    %v248 = vld [vmem:[%s1 + $0x680] sm:$0xff]
    %v249 = vld [vmem:[%s1 + $0x688] sm:$0xff]
    %v250 = vld [vmem:[%s1 + $0x690] sm:$0xff]
    %v251 = vld [vmem:[%s1 + $0x698] sm:$0xff]
    %v252 = vld [vmem:[%s1 + $0x6a0] sm:$0xff]
    %v253 = vld [vmem:[%s1 + $0x6a8] sm:$0xff]
    %v254 = vld [vmem:[%s1 + $0x6b0] sm:$0xff]
    %v255 = vld [vmem:[%s1 + $0x6b8] sm:$0xff]
    %v256 = vld [vmem:[%s1 + $0x6c0] sm:$0xff]
    %v257 = vld [vmem:[%s1 + $0x6c8] sm:$0xff]
    %v258 = vld [vmem:[%s1 + $0x6d0] sm:$0xff]
    %v259 = vld [vmem:[%s1 + $0x6d8] sm:$0xff]
    %v260 = vld [vmem:[%s1 + $0x6e0] sm:$0xff]
    %v261 = vld [vmem:[%s1 + $0x6e8] sm:$0xff]
    %v262 = vld [vmem:[%s1 + $0x6f0] sm:$0xff]
    %v263 = vld [vmem:[%s1 + $0x6f8] sm:$0xff]
    %v264 = vld [vmem:[%s1 + $0x700] sm:$0xff]
    %v265 = vld [vmem:[%s1 + $0x708] sm:$0xff]
    %v266 = vld [vmem:[%s1 + $0x710] sm:$0xff]
    %v267 = vld [vmem:[%s1 + $0x718] sm:$0xff]
    %v268 = vld [vmem:[%s1 + $0x720] sm:$0xff]
    %v269 = vld [vmem:[%s1 + $0x728] sm:$0xff]
    %v270 = vld [vmem:[%s1 + $0x730] sm:$0xff]
    %v271 = vld [vmem:[%s1 + $0x738] sm:$0xff]
    %v272 = vld [vmem:[%s1 + $0x740] sm:$0xff]
    %v273 = vld [vmem:[%s1 + $0x748] sm:$0xff]
    %v274 = vld [vmem:[%s1 + $0x750] sm:$0xff]
    %v275 = vld [vmem:[%s1 + $0x758] sm:$0xff]
    %v276 = vld [vmem:[%s1 + $0x760] sm:$0xff]
    %v277 = vld [vmem:[%s1 + $0x768] sm:$0xff]
    %v278 = vld [vmem:[%s1 + $0x770] sm:$0xff]
    %v279 = vld [vmem:[%s1 + $0x778] sm:$0xff]
    %v280 = vld [vmem:[%s1 + $0x780] sm:$0xff]
    %v281 = vld [vmem:[%s1 + $0x788] sm:$0xff]
    %v282 = vld [vmem:[%s1 + $0x790] sm:$0xff]
    %v283 = vld [vmem:[%s1 + $0x798] sm:$0xff]
    %v284 = vld [vmem:[%s1 + $0x7a0] sm:$0xff]
    %v285 = vld [vmem:[%s1 + $0x7a8] sm:$0xff]
    %v286 = vld [vmem:[%s1 + $0x7b0] sm:$0xff]
    %v287 = vld [vmem:[%s1 + $0x7b8] sm:$0xff]
    %v288 = vld [vmem:[%s1 + $0x7c0] sm:$0xff]
    %v289 = vld [vmem:[%s1 + $0x7c8] sm:$0xff]
    %v290 = vld [vmem:[%s1 + $0x7d0] sm:$0xff]
    %v291 = vld [vmem:[%s1 + $0x7d8] sm:$0xff]
    %v292 = vld [vmem:[%s1 + $0x7e0] sm:$0xff]
    %v293 = vld [vmem:[%s1 + $0x7e8] sm:$0xff]
    %v294 = vld [vmem:[%s1 + $0x7f0] sm:$0xff]
    %v295 = vld [vmem:[%s1 + $0x7f8] sm:$0xff]
    %v296 = vld [vmem:[%s1 + $0x800] sm:$0xff]
    %v297 = vld [vmem:[%s1 + $0x808] sm:$0xff]
    %v298 = vld [vmem:[%s1 + $0x810] sm:$0xff]
    %v299 = vld [vmem:[%s1 + $0x818] sm:$0xff]
    %v300 = vld [vmem:[%s1 + $0x820] sm:$0xff]
    %v301 = vld [vmem:[%s1 + $0x828] sm:$0xff]
    %v302 = vld [vmem:[%s1 + $0x830] sm:$0xff]
    %v303 = vld [vmem:[%s1 + $0x838] sm:$0xff]
    %v304 = vld [vmem:[%s1 + $0x840] sm:$0xff]
    %v305 = vld [vmem:[%s1 + $0x848] sm:$0xff]
    %v306 = vld [vmem:[%s1 + $0x850] sm:$0xff]
    %v307 = vld [vmem:[%s1 + $0x858] sm:$0xff]
    %v308 = vld [vmem:[%s1 + $0x860] sm:$0xff]
    %v309 = vld [vmem:[%s1 + $0x868] sm:$0xff]
    %v310 = vld [vmem:[%s1 + $0x870] sm:$0xff]
    %v311 = vld [vmem:[%s1 + $0x878] sm:$0xff]
    %v312 = vld [vmem:[%s1 + $0x880] sm:$0xff]
    %v313 = vld [vmem:[%s1 + $0x888] sm:$0xff]
    %v314 = vld [vmem:[%s1 + $0x890] sm:$0xff]
    %v315 = vld [vmem:[%s1 + $0x898] sm:$0xff]
    %v316 = vld [vmem:[%s1 + $0x8a0] sm:$0xff]
    %v317 = vld [vmem:[%s1 + $0x8a8] sm:$0xff]
    %v318 = vld [vmem:[%s1 + $0x8b0] sm:$0xff]
    %v319 = vld [vmem:[%s1 + $0x8b8] sm:$0xff]
    %v320 = vld [vmem:[%s1 + $0x8c0] sm:$0xff]
    %v321 = vld [vmem:[%s1 + $0x8c8] sm:$0xff]
    %v322 = vld [vmem:[%s1 + $0x8d0] sm:$0xff]
    %v323 = vld [vmem:[%s1 + $0x8d8] sm:$0xff]
    %v324 = vld [vmem:[%s1 + $0x8e0] sm:$0xff]
    %v325 = vld [vmem:[%s1 + $0x8e8] sm:$0xff]
    %v326 = vld [vmem:[%s1 + $0x8f0] sm:$0xff]
    %v327 = vld [vmem:[%s1 + $0x8f8] sm:$0xff]
    %v328 = vld [vmem:[%s1 + $0x900] sm:$0xff]
    %v329 = vld [vmem:[%s1 + $0x908] sm:$0xff]
    %v330 = vld [vmem:[%s1 + $0x910] sm:$0xff]
    %v331 = vld [vmem:[%s1 + $0x918] sm:$0xff]
    %v332 = vld [vmem:[%s1 + $0x920] sm:$0xff]
    %v333 = vld [vmem:[%s1 + $0x928] sm:$0xff]
    %v334 = vld [vmem:[%s1 + $0x930] sm:$0xff]
    %v335 = vld [vmem:[%s1 + $0x938] sm:$0xff]
    %v336 = vld [vmem:[%s1 + $0x940] sm:$0xff]
    %v337 = vld [vmem:[%s1 + $0x948] sm:$0xff]
    %v338 = vld [vmem:[%s1 + $0x950] sm:$0xff]
    %v339 = vld [vmem:[%s1 + $0x958] sm:$0xff]
    %v340 = vld [vmem:[%s1 + $0x960] sm:$0xff]
    %v341 = vld [vmem:[%s1 + $0x968] sm:$0xff]
    %v342 = vld [vmem:[%s1 + $0x970] sm:$0xff]
    %v343 = vld [vmem:[%s1 + $0x978] sm:$0xff]
    %v344 = vld [vmem:[%s1 + $0x980] sm:$0xff]
    %v345 = vld [vmem:[%s1 + $0x988] sm:$0xff]
    %v346 = vld [vmem:[%s1 + $0x990] sm:$0xff]
    %v347 = vld [vmem:[%s1 + $0x998] sm:$0xff]
    %v348 = vld [vmem:[%s1 + $0x9a0] sm:$0xff]
    %v349 = vld [vmem:[%s1 + $0x9a8] sm:$0xff]
    %v350 = vld [vmem:[%s1 + $0x9b0] sm:$0xff]
    %v351 = vld [vmem:[%s1 + $0x9b8] sm:$0xff]
    %v352 = vld [vmem:[%s1 + $0x9c0] sm:$0xff]
    %v353 = vld [vmem:[%s1 + $0x9c8] sm:$0xff]
    %v354 = vld [vmem:[%s1 + $0x9d0] sm:$0xff]
    %v355 = vld [vmem:[%s1 + $0x9d8] sm:$0xff]
    %v356 = vld [vmem:[%s1 + $0x9e0] sm:$0xff]
    %v357 = vld [vmem:[%s1 + $0x9e8] sm:$0xff]
    %v358 = vld [vmem:[%s1 + $0x9f0] sm:$0xff]
    %v359 = vld [vmem:[%s1 + $0x9f8] sm:$0xff]
    %v360 = vld [vmem:[%s1 + $0xa00] sm:$0xff]
    %v361 = vld [vmem:[%s1 + $0xa08] sm:$0xff]
    %v362 = vld [vmem:[%s1 + $0xa10] sm:$0xff]
    %v363 = vld [vmem:[%s1 + $0xa18] sm:$0xff]
    %v364 = vld [vmem:[%s1 + $0xa20] sm:$0xff]
    %v365 = vld [vmem:[%s1 + $0xa28] sm:$0xff]
    %v366 = vld [vmem:[%s1 + $0xa30] sm:$0xff]
    %v367 = vld [vmem:[%s1 + $0xa38] sm:$0xff]
    %v368 = vld [vmem:[%s1 + $0xa40] sm:$0xff]
    %v369 = vld [vmem:[%s1 + $0xa48] sm:$0xff]
    %v370 = vld [vmem:[%s1 + $0xa50] sm:$0xff]
    %v371 = vld [vmem:[%s1 + $0xa58] sm:$0xff]
    %v372 = vld [vmem:[%s1 + $0xa60] sm:$0xff]
    %v373 = vld [vmem:[%s1 + $0xa68] sm:$0xff]
    %v374 = vld [vmem:[%s1 + $0xa70] sm:$0xff]
    %v375 = vld [vmem:[%s1 + $0xa78] sm:$0xff]
    %v376 = vld [vmem:[%s1 + $0xa80] sm:$0xff]
    %v377 = vld [vmem:[%s1 + $0xa88] sm:$0xff]
    %v378 = vld [vmem:[%s1 + $0xa90] sm:$0xff]
    %v379 = vld [vmem:[%s1 + $0xa98] sm:$0xff]
    %v380 = vld [vmem:[%s1 + $0xaa0] sm:$0xff]
    %v381 = vld [vmem:[%s1 + $0xaa8] sm:$0xff]
    %v382 = vld [vmem:[%s1 + $0xab0] sm:$0xff]
    %v383 = vld [vmem:[%s1 + $0xab8] sm:$0xff]
    %v384 = vld [vmem:[%s1 + $0xac0] sm:$0xff]
    %v385 = vld [vmem:[%s1 + $0xac8] sm:$0xff]
    %v386 = vld [vmem:[%s1 + $0xad0] sm:$0xff]
    %v387 = vld [vmem:[%s1 + $0xad8] sm:$0xff]
    %v388 = vld [vmem:[%s1 + $0xae0] sm:$0xff]
    %v389 = vld [vmem:[%s1 + $0xae8] sm:$0xff]
    %v390 = vld [vmem:[%s1 + $0xaf0] sm:$0xff]
    %v391 = vld [vmem:[%s1 + $0xaf8] sm:$0xff]
    %v392 = vld [vmem:[%s1 + $0xb00] sm:$0xff]
    %v393 = vld [vmem:[%s1 + $0xb08] sm:$0xff]
    %v394 = vld [vmem:[%s1 + $0xb10] sm:$0xff]
    %v395 = vld [vmem:[%s1 + $0xb18] sm:$0xff]
    %v396 = vld [vmem:[%s1 + $0xb20] sm:$0xff]
    %v397 = vld [vmem:[%s1 + $0xb28] sm:$0xff]
    %v398 = vld [vmem:[%s1 + $0xb30] sm:$0xff]
    %v399 = vld [vmem:[%s1 + $0xb38] sm:$0xff]
    %v400 = vld [vmem:[%s1 + $0xb40] sm:$0xff]
    %v401 = vld [vmem:[%s1 + $0xb48] sm:$0xff]
    %v402 = vld [vmem:[%s1 + $0xb50] sm:$0xff]
    %v403 = vld [vmem:[%s1 + $0xb58] sm:$0xff]
    %v404 = vld [vmem:[%s1 + $0xb60] sm:$0xff]
    %v405 = vld [vmem:[%s1 + $0xb68] sm:$0xff]
    %v406 = vld [vmem:[%s1 + $0xb70] sm:$0xff]
    %v407 = vld [vmem:[%s1 + $0xb78] sm:$0xff]
    %v408 = vld [vmem:[%s1 + $0xb80] sm:$0xff]
    %v409 = vld [vmem:[%s1 + $0xb88] sm:$0xff]
    %v410 = vld [vmem:[%s1 + $0xb90] sm:$0xff]
    %v411 = vld [vmem:[%s1 + $0xb98] sm:$0xff]
    %v412 = vld [vmem:[%s1 + $0xba0] sm:$0xff]
    %v413 = vld [vmem:[%s1 + $0xba8] sm:$0xff]
    %v414 = vld [vmem:[%s1 + $0xbb0] sm:$0xff]
    %v415 = vld [vmem:[%s1 + $0xbb8] sm:$0xff]
    %v416 = vld [vmem:[%s1 + $0xbc0] sm:$0xff]
    %v417 = vld [vmem:[%s1 + $0xbc8] sm:$0xff]
    %v418 = vld [vmem:[%s1 + $0xbd0] sm:$0xff]
    %v419 = vld [vmem:[%s1 + $0xbd8] sm:$0xff]
    %v420 = vld [vmem:[%s1 + $0xbe0] sm:$0xff]
    %v421 = vld [vmem:[%s1 + $0xbe8] sm:$0xff]
    %v422 = vld [vmem:[%s1 + $0xbf0] sm:$0xff]
    %v423 = vld [vmem:[%s1 + $0xbf8] sm:$0xff]
    %v424 = vld [vmem:[%s1 + $0xc00] sm:$0xff]
    %v425 = vld [vmem:[%s1 + $0xc08] sm:$0xff]
    %v426 = vld [vmem:[%s1 + $0xc10] sm:$0xff]
    %v427 = vld [vmem:[%s1 + $0xc18] sm:$0xff]
    %v428 = vld [vmem:[%s1 + $0xc20] sm:$0xff]
    %v429 = vld [vmem:[%s1 + $0xc28] sm:$0xff]
    %v430 = vld [vmem:[%s1 + $0xc30] sm:$0xff]
    %v431 = vld [vmem:[%s1 + $0xc38] sm:$0xff]
    %v432 = vld [vmem:[%s1 + $0xc40] sm:$0xff]
    %v433 = vld [vmem:[%s1 + $0xc48] sm:$0xff]
    %v434 = vld [vmem:[%s1 + $0xc50] sm:$0xff]
    %v435 = vld [vmem:[%s1 + $0xc58] sm:$0xff]
    %v436 = vld [vmem:[%s1 + $0xc60] sm:$0xff]
    %v437 = vld [vmem:[%s1 + $0xc68] sm:$0xff]
    %v438 = vld [vmem:[%s1 + $0xc70] sm:$0xff]
    %v439 = vld [vmem:[%s1 + $0xc78] sm:$0xff]
    %v440 = vld [vmem:[%s1 + $0xc80] sm:$0xff]
    %v441 = vld [vmem:[%s1 + $0xc88] sm:$0xff]
    %v442 = vld [vmem:[%s1 + $0xc90] sm:$0xff]
    %v443 = vld [vmem:[%s1 + $0xc98] sm:$0xff]
    %v444 = vld [vmem:[%s1 + $0xca0] sm:$0xff]
    %v445 = vld [vmem:[%s1 + $0xca8] sm:$0xff]
    %v446 = vld [vmem:[%s1 + $0xcb0] sm:$0xff]
    %v447 = vld [vmem:[%s1 + $0xcb8] sm:$0xff]
    %v448 = vld [vmem:[%s1 + $0xcc0] sm:$0xff]
    %v449 = vld [vmem:[%s1 + $0xcc8] sm:$0xff]
    %v450 = vld [vmem:[%s1 + $0xcd0] sm:$0xff]
    %v451 = vld [vmem:[%s1 + $0xcd8] sm:$0xff]
    %v452 = vld [vmem:[%s1 + $0xce0] sm:$0xff]
    %v453 = vld [vmem:[%s1 + $0xce8] sm:$0xff]
    %v454 = vld [vmem:[%s1 + $0xcf0] sm:$0xff]
    %v455 = vld [vmem:[%s1 + $0xcf8] sm:$0xff]
    %v456 = vld [vmem:[%s1 + $0xd00] sm:$0xff]
    %v457 = vld [vmem:[%s1 + $0xd08] sm:$0xff]
    %v458 = vld [vmem:[%s1 + $0xd10] sm:$0xff]
    %v459 = vld [vmem:[%s1 + $0xd18] sm:$0xff]
    %v460 = vld [vmem:[%s1 + $0xd20] sm:$0xff]
    %v461 = vld [vmem:[%s1 + $0xd28] sm:$0xff]
    %v462 = vld [vmem:[%s1 + $0xd30] sm:$0xff]
    %v463 = vld [vmem:[%s1 + $0xd38] sm:$0xff]
    %v464 = vld [vmem:[%s1 + $0xd40] sm:$0xff]
    %v465 = vld [vmem:[%s1 + $0xd48] sm:$0xff]
    %v466 = vld [vmem:[%s1 + $0xd50] sm:$0xff]
    %v467 = vld [vmem:[%s1 + $0xd58] sm:$0xff]
    %v468 = vld [vmem:[%s1 + $0xd60] sm:$0xff]
    %v469 = vld [vmem:[%s1 + $0xd68] sm:$0xff]
    %v470 = vld [vmem:[%s1 + $0xd70] sm:$0xff]
    %v471 = vld [vmem:[%s1 + $0xd78] sm:$0xff]
    %v472 = vld [vmem:[%s1 + $0xd80] sm:$0xff]
    %v473 = vld [vmem:[%s1 + $0xd88] sm:$0xff]
    %v474 = vld [vmem:[%s1 + $0xd90] sm:$0xff]
    %v475 = vld [vmem:[%s1 + $0xd98] sm:$0xff]
    %v476 = vld [vmem:[%s1 + $0xda0] sm:$0xff]
    %v477 = vld [vmem:[%s1 + $0xda8] sm:$0xff]
    %v478 = vld [vmem:[%s1 + $0xdb0] sm:$0xff]
    %v479 = vld [vmem:[%s1 + $0xdb8] sm:$0xff]
    %v480 = vld [vmem:[%s1 + $0xdc0] sm:$0xff]
    %v481 = vld [vmem:[%s1 + $0xdc8] sm:$0xff]
    %v482 = vld [vmem:[%s1 + $0xdd0] sm:$0xff]
    %v483 = vld [vmem:[%s1 + $0xdd8] sm:$0xff]
    %v484 = vld [vmem:[%s1 + $0xde0] sm:$0xff]
    %v485 = vld [vmem:[%s1 + $0xde8] sm:$0xff]
    %v486 = vld [vmem:[%s1 + $0xdf0] sm:$0xff]
    %v487 = vld [vmem:[%s1 + $0xdf8] sm:$0xff]
    %v488 = vld [vmem:[%s1 + $0xe00] sm:$0xff]
    %v489 = vld [vmem:[%s1 + $0xe08] sm:$0xff]
    %v490 = vld [vmem:[%s1 + $0xe10] sm:$0xff]
    %v491 = vld [vmem:[%s1 + $0xe18] sm:$0xff]
    %v492 = vld [vmem:[%s1 + $0xe20] sm:$0xff]
    %v493 = vld [vmem:[%s1 + $0xe28] sm:$0xff]
    %v494 = vld [vmem:[%s1 + $0xe30] sm:$0xff]
    %v495 = vld [vmem:[%s1 + $0xe38] sm:$0xff]
    %v496 = vld [vmem:[%s1 + $0xe40] sm:$0xff]
    %v497 = vld [vmem:[%s1 + $0xe48] sm:$0xff]
    %v498 = vld [vmem:[%s1 + $0xe50] sm:$0xff]
    %v499 = vld [vmem:[%s1 + $0xe58] sm:$0xff]
    %v500 = vld [vmem:[%s1 + $0xe60] sm:$0xff]
    %v501 = vld [vmem:[%s1 + $0xe68] sm:$0xff]
    %v502 = vld [vmem:[%s1 + $0xe70] sm:$0xff]
    %v503 = vld [vmem:[%s1 + $0xe78] sm:$0xff]
    %v504 = vld [vmem:[%s1 + $0xe80] sm:$0xff]
    %v505 = vld [vmem:[%s1 + $0xe88] sm:$0xff]
    %v506 = vld [vmem:[%s1 + $0xe90] sm:$0xff]
    %v507 = vld [vmem:[%s1 + $0xe98] sm:$0xff]
    %v508 = vld [vmem:[%s1 + $0xea0] sm:$0xff]
    %v509 = vld [vmem:[%s1 + $0xea8] sm:$0xff]
    %v510 = vld [vmem:[%s1 + $0xeb0] sm:$0xff]
    %v511 = vld [vmem:[%s1 + $0xeb8] sm:$0xff]
    %v512 = vld [vmem:[%s1 + $0xec0] sm:$0xff]
    %v513 = vld [vmem:[%s1 + $0xec8] sm:$0xff]
    %v514 = vld [vmem:[%s1 + $0xed0] sm:$0xff]
    %v515 = vld [vmem:[%s1 + $0xed8] sm:$0xff]
    %v516 = vld [vmem:[%s1 + $0xee0] sm:$0xff]
    %v517 = vld [vmem:[%s1 + $0xee8] sm:$0xff]
    %v518 = vld [vmem:[%s1 + $0xef0] sm:$0xff]
    %v519 = vld [vmem:[%s1 + $0xef8] sm:$0xff]
    %v520 = vld [vmem:[%s1 + $0xf00] sm:$0xff]
    %v521 = vld [vmem:[%s1 + $0xf08] sm:$0xff]
    %v522 = vld [vmem:[%s1 + $0xf10] sm:$0xff]
    %v523 = vld [vmem:[%s1 + $0xf18] sm:$0xff]
    %v524 = vld [vmem:[%s1 + $0xf20] sm:$0xff]
    %v525 = vld [vmem:[%s1 + $0xf28] sm:$0xff]
    %v526 = vld [vmem:[%s1 + $0xf30] sm:$0xff]
    %v527 = vld [vmem:[%s1 + $0xf38] sm:$0xff]
    %v528 = vld [vmem:[%s1 + $0xf40] sm:$0xff]
    %v529 = vld [vmem:[%s1 + $0xf48] sm:$0xff]
    %v530 = vld [vmem:[%s1 + $0xf50] sm:$0xff]
    %v531 = vld [vmem:[%s1 + $0xf58] sm:$0xff]
    %v532 = vld [vmem:[%s1 + $0xf60] sm:$0xff]
    %v533 = vld [vmem:[%s1 + $0xf68] sm:$0xff]
    %v534 = vld [vmem:[%s1 + $0xf70] sm:$0xff]
    %v535 = vld [vmem:[%s1 + $0xf78] sm:$0xff]
    %v536 = vld [vmem:[%s1 + $0xf80] sm:$0xff]
    %v537 = vld [vmem:[%s1 + $0xf88] sm:$0xff]
    %v538 = vld [vmem:[%s1 + $0xf90] sm:$0xff]
    %v539 = vld [vmem:[%s1 + $0xf98] sm:$0xff]
    %v540 = vld [vmem:[%s1 + $0xfa0] sm:$0xff]
    %v541 = vld [vmem:[%s1 + $0xfa8] sm:$0xff]
    %v542 = vld [vmem:[%s1 + $0xfb0] sm:$0xff]
    %v543 = vld [vmem:[%s1 + $0xfb8] sm:$0xff]
    %v544 = vld [vmem:[%s1 + $0xfc0] sm:$0xff]
    %v545 = vld [vmem:[%s1 + $0xfc8] sm:$0xff]
    %v546 = vld [vmem:[%s1 + $0xfd0] sm:$0xff]
    %v547 = vld [vmem:[%s1 + $0xfd8] sm:$0xff]
    %v548 = vld [vmem:[%s1 + $0xfe0] sm:$0xff]
    %v549 = vld [vmem:[%s1 + $0xfe8] sm:$0xff]
    %v550 = vld [vmem:[%s1 + $0xff0] sm:$0xff]
    %v551 = vld [vmem:[%s1 + $0xff8] sm:$0xff]
    %v552 = vld [vmem:[%s1 + $0x1000] sm:$0xff]
    %v553 = vld [vmem:[%s1 + $0x1008] sm:$0xff]
    %v554 = vld [vmem:[%s1 + $0x1010] sm:$0xff]
    %v555 = vld [vmem:[%s1 + $0x1018] sm:$0xff]
    %v556 = vld [vmem:[%s1 + $0x1020] sm:$0xff]
    %v557 = vld [vmem:[%s1 + $0x1028] sm:$0xff]
    %v558 = vld [vmem:[%s1 + $0x1030] sm:$0xff]
    %v559 = vld [vmem:[%s1 + $0x1038] sm:$0xff]
    %v560 = vld [vmem:[%s1 + $0x1040] sm:$0xff]
    %v561 = vld [vmem:[%s1 + $0x1048] sm:$0xff]
    %v562 = vld [vmem:[%s1 + $0x1050] sm:$0xff]
    %v563 = vld [vmem:[%s1 + $0x1058] sm:$0xff]
    %v564 = vld [vmem:[%s1 + $0x1060] sm:$0xff]
    %v565 = vld [vmem:[%s1 + $0x1068] sm:$0xff]
    %v566 = vld [vmem:[%s1 + $0x1070] sm:$0xff]
    %v567 = vld [vmem:[%s1 + $0x1078] sm:$0xff]
    %v568 = vld [vmem:[%s1 + $0x1080] sm:$0xff]
    %v569 = vld [vmem:[%s1 + $0x1088] sm:$0xff]
    %v570 = vld [vmem:[%s1 + $0x1090] sm:$0xff]
    %v571 = vld [vmem:[%s1 + $0x1098] sm:$0xff]
    %v572 = vld [vmem:[%s1 + $0x10a0] sm:$0xff]
    %v573 = vld [vmem:[%s1 + $0x10a8] sm:$0xff]
    %v574 = vld [vmem:[%s1 + $0x10b0] sm:$0xff]
    %v575 = vld [vmem:[%s1 + $0x10b8] sm:$0xff]
    %v576 = vld [vmem:[%s1 + $0x10c0] sm:$0xff]
    %v577 = vld [vmem:[%s1 + $0x10c8] sm:$0xff]
    %v578 = vld [vmem:[%s1 + $0x10d0] sm:$0xff]
    %v579 = vld [vmem:[%s1 + $0x10d8] sm:$0xff]
    %v580 = vld [vmem:[%s1 + $0x10e0] sm:$0xff]
    %v581 = vld [vmem:[%s1 + $0x10e8] sm:$0xff]
    %v582 = vld [vmem:[%s1 + $0x10f0] sm:$0xff]
    %v583 = vld [vmem:[%s1 + $0x10f8] sm:$0xff]
    %v584 = vld [vmem:[%s1 + $0x1100] sm:$0xff]
    %v585 = vld [vmem:[%s1 + $0x1108] sm:$0xff]
    %v586 = vld [vmem:[%s1 + $0x1110] sm:$0xff]
    %v587 = vld [vmem:[%s1 + $0x1118] sm:$0xff]
    %v588 = vld [vmem:[%s1 + $0x1120] sm:$0xff]
    %v589 = vld [vmem:[%s1 + $0x1128] sm:$0xff]
    %v590 = vld [vmem:[%s1 + $0x1130] sm:$0xff]
    %v591 = vld [vmem:[%s1 + $0x1138] sm:$0xff]
    %v592 = vld [vmem:[%s1 + $0x1140] sm:$0xff]
    %v593 = vld [vmem:[%s1 + $0x1148] sm:$0xff]
    %v594 = vld [vmem:[%s1 + $0x1150] sm:$0xff]
    %v595 = vld [vmem:[%s1 + $0x1158] sm:$0xff]
    %v596 = vld [vmem:[%s1 + $0x1160] sm:$0xff]
    %v597 = vld [vmem:[%s1 + $0x1168] sm:$0xff]
    %v598 = vld [vmem:[%s1 + $0x1170] sm:$0xff]
    %v599 = vld [vmem:[%s1 + $0x1178] sm:$0xff]
    %v600 = vld [vmem:[%s1 + $0x1180] sm:$0xff]
    %v601 = vld [vmem:[%s1 + $0x1188] sm:$0xff]
    %v602 = vld [vmem:[%s1 + $0x1190] sm:$0xff]
    %v603 = vld [vmem:[%s1 + $0x1198] sm:$0xff]
    %v604 = vld [vmem:[%s1 + $0x11a0] sm:$0xff]
    %v605 = vld [vmem:[%s1 + $0x11a8] sm:$0xff]
    %v606 = vld [vmem:[%s1 + $0x11b0] sm:$0xff]
    %v607 = vld [vmem:[%s1 + $0x11b8] sm:$0xff]
    %v608 = vld [vmem:[%s1 + $0x11c0] sm:$0xff]
    %v609 = vld [vmem:[%s1 + $0x11c8] sm:$0xff]
    %v610 = vld [vmem:[%s1 + $0x11d0] sm:$0xff]
    %v611 = vld [vmem:[%s1 + $0x11d8] sm:$0xff]
    %v612 = vld [vmem:[%s1 + $0x11e0] sm:$0xff]
    %v613 = vld [vmem:[%s1 + $0x11e8] sm:$0xff]
    %v614 = vld [vmem:[%s1 + $0x11f0] sm:$0xff]
    %v615 = vld [vmem:[%s1 + $0x11f8] sm:$0xff]
    %v616 = vld [vmem:[%s1 + $0x1200] sm:$0xff]
    %v617 = vld [vmem:[%s1 + $0x1208] sm:$0xff]
    %v618 = vld [vmem:[%s1 + $0x1210] sm:$0xff]
    %v619 = vld [vmem:[%s1 + $0x1218] sm:$0xff]
    %v620 = vld [vmem:[%s1 + $0x1220] sm:$0xff]
    %v621 = vld [vmem:[%s1 + $0x1228] sm:$0xff]
    %v622 = vld [vmem:[%s1 + $0x1230] sm:$0xff]
    %v623 = vld [vmem:[%s1 + $0x1238] sm:$0xff]
    %v624 = vld [vmem:[%s1 + $0x1240] sm:$0xff]
    %v625 = vld [vmem:[%s1 + $0x1248] sm:$0xff]
    %v626 = vld [vmem:[%s1 + $0x1250] sm:$0xff]
    %v627 = vld [vmem:[%s1 + $0x1258] sm:$0xff]
    %v628 = vld [vmem:[%s1 + $0x1260] sm:$0xff]
    %v629 = vld [vmem:[%s1 + $0x1268] sm:$0xff]
    %v630 = vld [vmem:[%s1 + $0x1270] sm:$0xff]
    %v631 = vld [vmem:[%s1 + $0x1278] sm:$0xff]
    %v632 = vld [vmem:[%s1 + $0x1280] sm:$0xff]
    %v633 = vld [vmem:[%s1 + $0x1288] sm:$0xff]
    %v634 = vld [vmem:[%s1 + $0x1290] sm:$0xff]
    %v635 = vld [vmem:[%s1 + $0x1298] sm:$0xff]
    %v636 = vld [vmem:[%s1 + $0x12a0] sm:$0xff]
    %v637 = vld [vmem:[%s1 + $0x12a8] sm:$0xff]
    %v638 = vld [vmem:[%s1 + $0x12b0] sm:$0xff]
    %v639 = vld [vmem:[%s1 + $0x12b8] sm:$0xff]
    %v640 = vld [vmem:[%s1 + $0x12c0] sm:$0xff]
    %v641 = vld [vmem:[%s1 + $0x12c8] sm:$0xff]
    %v642 = vld [vmem:[%s1 + $0x12d0] sm:$0xff]
    %v643 = vld [vmem:[%s1 + $0x12d8] sm:$0xff]
    %v644 = vld [vmem:[%s1 + $0x12e0] sm:$0xff]
    %v645 = vld [vmem:[%s1 + $0x12e8] sm:$0xff]
    %v646 = vld [vmem:[%s1 + $0x12f0] sm:$0xff]
    %v647 = vld [vmem:[%s1 + $0x12f8] sm:$0xff]
    %v648 = vld [vmem:[%s1 + $0x1300] sm:$0xff]
    %v649 = vld [vmem:[%s1 + $0x1308] sm:$0xff]
    %v650 = vld [vmem:[%s1 + $0x1310] sm:$0xff]
    %v651 = vld [vmem:[%s1 + $0x1318] sm:$0xff]
    %v652 = vld [vmem:[%s1 + $0x1320] sm:$0xff]
    %v653 = vld [vmem:[%s1 + $0x1328] sm:$0xff]
    %v654 = vld [vmem:[%s1 + $0x1330] sm:$0xff]
    %v655 = vld [vmem:[%s1 + $0x1338] sm:$0xff]
    %v656 = vld [vmem:[%s1 + $0x1340] sm:$0xff]
    %v657 = vld [vmem:[%s1 + $0x1348] sm:$0xff]
    %v658 = vld [vmem:[%s1 + $0x1350] sm:$0xff]
    %v659 = vld [vmem:[%s1 + $0x1358] sm:$0xff]
    %v660 = vld [vmem:[%s1 + $0x1360] sm:$0xff]
    %v661 = vld [vmem:[%s1 + $0x1368] sm:$0xff]
    %v662 = vld [vmem:[%s1 + $0x1370] sm:$0xff]
    %v663 = vld [vmem:[%s1 + $0x1378] sm:$0xff]
    %v664 = vld [vmem:[%s1 + $0x1380] sm:$0xff]
    %v665 = vld [vmem:[%s1 + $0x1388] sm:$0xff]
    %v666 = vld [vmem:[%s1 + $0x1390] sm:$0xff]
    %v667 = vld [vmem:[%s1 + $0x1398] sm:$0xff]
    %v668 = vld [vmem:[%s1 + $0x13a0] sm:$0xff]
    %v669 = vld [vmem:[%s1 + $0x13a8] sm:$0xff]
    %v670 = vld [vmem:[%s1 + $0x13b0] sm:$0xff]
    %v671 = vld [vmem:[%s1 + $0x13b8] sm:$0xff]
    %v672 = vld [vmem:[%s1 + $0x13c0] sm:$0xff]
    %v673 = vld [vmem:[%s1 + $0x13c8] sm:$0xff]
    %v674 = vld [vmem:[%s1 + $0x13d0] sm:$0xff]
    %v675 = vld [vmem:[%s1 + $0x13d8] sm:$0xff]
    %v676 = vld [vmem:[%s1 + $0x13e0] sm:$0xff]
    %v677 = vld [vmem:[%s1 + $0x13e8] sm:$0xff]
    %v678 = vld [vmem:[%s1 + $0x13f0] sm:$0xff]
    %v679 = vld [vmem:[%s1 + $0x13f8] sm:$0xff]
    %v680 = vld [vmem:[%s1 + $0x1400] sm:$0xff]
    %v681 = vld [vmem:[%s1 + $0x1408] sm:$0xff]
    %v682 = vld [vmem:[%s1 + $0x1410] sm:$0xff]
    %v683 = vld [vmem:[%s1 + $0x1418] sm:$0xff]
    %v684 = vld [vmem:[%s1 + $0x1420] sm:$0xff]
    %v685 = vld [vmem:[%s1 + $0x1428] sm:$0xff]
    %v686 = vld [vmem:[%s1 + $0x1430] sm:$0xff]
    %v687 = vld [vmem:[%s1 + $0x1438] sm:$0xff]
    %v688 = vld [vmem:[%s1 + $0x1440] sm:$0xff]
    %v689 = vld [vmem:[%s1 + $0x1448] sm:$0xff]
    %v690 = vld [vmem:[%s1 + $0x1450] sm:$0xff]
    %v691 = vld [vmem:[%s1 + $0x1458] sm:$0xff]
    %v692 = vld [vmem:[%s1 + $0x1460] sm:$0xff]
    %v693 = vld [vmem:[%s1 + $0x1468] sm:$0xff]
    %v694 = vld [vmem:[%s1 + $0x1470] sm:$0xff]
    %v695 = vld [vmem:[%s1 + $0x1478] sm:$0xff]
    %v696 = vld [vmem:[%s1 + $0x1480] sm:$0xff]
    %v697 = vld [vmem:[%s1 + $0x1488] sm:$0xff]
    %v698 = vld [vmem:[%s1 + $0x1490] sm:$0xff]
    %v699 = vld [vmem:[%s1 + $0x1498] sm:$0xff]
    %v700 = vld [vmem:[%s1 + $0x14a0] sm:$0xff]
    %v701 = vld [vmem:[%s1 + $0x14a8] sm:$0xff]
    %v702 = vld [vmem:[%s1 + $0x14b0] sm:$0xff]
    %v703 = vld [vmem:[%s1 + $0x14b8] sm:$0xff]
    %v704 = vld [vmem:[%s1 + $0x14c0] sm:$0xff]
    %v705 = vld [vmem:[%s1 + $0x14c8] sm:$0xff]
    %v706 = vld [vmem:[%s1 + $0x14d0] sm:$0xff]
    %v707 = vld [vmem:[%s1 + $0x14d8] sm:$0xff]
    %v708 = vld [vmem:[%s1 + $0x14e0] sm:$0xff]
    %v709 = vld [vmem:[%s1 + $0x14e8] sm:$0xff]
    %v710 = vld [vmem:[%s1 + $0x14f0] sm:$0xff]
    %v711 = vld [vmem:[%s1 + $0x14f8] sm:$0xff]
    %v712 = vld [vmem:[%s1 + $0x1500] sm:$0xff]
    %v713 = vld [vmem:[%s1 + $0x1508] sm:$0xff]
    %v714 = vld [vmem:[%s1 + $0x1510] sm:$0xff]
    %v715 = vld [vmem:[%s1 + $0x1518] sm:$0xff]
    %v716 = vld [vmem:[%s1 + $0x1520] sm:$0xff]
    %v717 = vld [vmem:[%s1 + $0x1528] sm:$0xff]
    %v718 = vld [vmem:[%s1 + $0x1530] sm:$0xff]
    %v719 = vld [vmem:[%s1 + $0x1538] sm:$0xff]
    %v720 = vld [vmem:[%s1 + $0x1540] sm:$0xff]
    %v721 = vld [vmem:[%s1 + $0x1548] sm:$0xff]
    %v722 = vld [vmem:[%s1 + $0x1550] sm:$0xff]
    %v723 = vld [vmem:[%s1 + $0x1558] sm:$0xff]
    %v724 = vld [vmem:[%s1 + $0x1560] sm:$0xff]
    %v725 = vld [vmem:[%s1 + $0x1568] sm:$0xff]
    %v726 = vld [vmem:[%s1 + $0x1570] sm:$0xff]
    %v727 = vld [vmem:[%s1 + $0x1578] sm:$0xff]
    %v728 = vld [vmem:[%s1 + $0x1580] sm:$0xff]
    %v729 = vld [vmem:[%s1 + $0x1588] sm:$0xff]
    %v730 = vld [vmem:[%s1 + $0x1590] sm:$0xff]
    %v731 = vld [vmem:[%s1 + $0x1598] sm:$0xff]
    %v732 = vld [vmem:[%s1 + $0x15a0] sm:$0xff]
    %v733 = vld [vmem:[%s1 + $0x15a8] sm:$0xff]
    %v734 = vld [vmem:[%s1 + $0x15b0] sm:$0xff]
    %v735 = vld [vmem:[%s1 + $0x15b8] sm:$0xff]
    %v736 = vld [vmem:[%s1 + $0x15c0] sm:$0xff]
    %v737 = vld [vmem:[%s1 + $0x15c8] sm:$0xff]
    %v738 = vld [vmem:[%s1 + $0x15d0] sm:$0xff]
    %v739 = vld [vmem:[%s1 + $0x15d8] sm:$0xff]
    %v740 = vld [vmem:[%s1 + $0x15e0] sm:$0xff]
    %v741 = vld [vmem:[%s1 + $0x15e8] sm:$0xff]
    %v742 = vld [vmem:[%s1 + $0x15f0] sm:$0xff]
    %v743 = vld [vmem:[%s1 + $0x15f8] sm:$0xff]
    %v744 = vld [vmem:[%s1 + $0x1600] sm:$0xff]
    %v745 = vld [vmem:[%s1 + $0x1608] sm:$0xff]
    %v746 = vld [vmem:[%s1 + $0x1610] sm:$0xff]
    %v747 = vld [vmem:[%s1 + $0x1618] sm:$0xff]
    %v748 = vld [vmem:[%s1 + $0x1620] sm:$0xff]
    %v749 = vld [vmem:[%s1 + $0x1628] sm:$0xff]
    %v750 = vld [vmem:[%s1 + $0x1630] sm:$0xff]
    %v751 = vld [vmem:[%s1 + $0x1638] sm:$0xff]
    %v752 = vld [vmem:[%s1 + $0x1640] sm:$0xff]
    %v753 = vld [vmem:[%s1 + $0x1648] sm:$0xff]
    %v754 = vld [vmem:[%s1 + $0x1650] sm:$0xff]
    %v755 = vld [vmem:[%s1 + $0x1658] sm:$0xff]
    %v756 = vld [vmem:[%s1 + $0x1660] sm:$0xff]
    %v757 = vld [vmem:[%s1 + $0x1668] sm:$0xff]
    %v758 = vld [vmem:[%s1 + $0x1670] sm:$0xff]
    %v759 = vld [vmem:[%s1 + $0x1678] sm:$0xff]
    %v760 = vld [vmem:[%s1 + $0x1680] sm:$0xff]
    %v761 = vld [vmem:[%s1 + $0x1688] sm:$0xff]
    %v762 = vld [vmem:[%s1 + $0x1690] sm:$0xff]
    %v763 = vld [vmem:[%s1 + $0x1698] sm:$0xff]
    %v764 = vld [vmem:[%s1 + $0x16a0] sm:$0xff]
    %v765 = vld [vmem:[%s1 + $0x16a8] sm:$0xff]
    %v766 = vld [vmem:[%s1 + $0x16b0] sm:$0xff]
    %v767 = vld [vmem:[%s1 + $0x16b8] sm:$0xff]
    %v768 = vld [vmem:[%s1 + $0x16c0] sm:$0xff]
    %v769 = vld [vmem:[%s1 + $0x16c8] sm:$0xff]
    %v770 = vld [vmem:[%s1 + $0x16d0] sm:$0xff]
    %v771 = vld [vmem:[%s1 + $0x16d8] sm:$0xff]
    %v772 = vld [vmem:[%s1 + $0x16e0] sm:$0xff]
    %v773 = vld [vmem:[%s1 + $0x16e8] sm:$0xff]
    %v774 = vld [vmem:[%s1 + $0x16f0] sm:$0xff]
    %v775 = vld [vmem:[%s1 + $0x16f8] sm:$0xff]
    %v776 = vld [vmem:[%s1 + $0x1700] sm:$0xff]
    %v777 = vld [vmem:[%s1 + $0x1708] sm:$0xff]
    %v778 = vld [vmem:[%s1 + $0x1710] sm:$0xff]
    %v779 = vld [vmem:[%s1 + $0x1718] sm:$0xff]
    %v780 = vld [vmem:[%s1 + $0x1720] sm:$0xff]
    %v781 = vld [vmem:[%s1 + $0x1728] sm:$0xff]
    %v782 = vld [vmem:[%s1 + $0x1730] sm:$0xff]
    %v783 = vld [vmem:[%s1 + $0x1738] sm:$0xff]
    %v784 = vld [vmem:[%s1 + $0x1740] sm:$0xff]
    %v785 = vld [vmem:[%s1 + $0x1748] sm:$0xff]
    %v786 = vld [vmem:[%s1 + $0x1750] sm:$0xff]
    %v787 = vld [vmem:[%s1 + $0x1758] sm:$0xff]
    %v788 = vld [vmem:[%s1 + $0x1760] sm:$0xff]
    %v789 = vld [vmem:[%s1 + $0x1768] sm:$0xff]
    %v790 = vld [vmem:[%s1 + $0x1770] sm:$0xff]
    %v791 = vld [vmem:[%s1 + $0x1778] sm:$0xff]
    %v792 = vld [vmem:[%s1 + $0x1780] sm:$0xff]
    %v793 = vld [vmem:[%s1 + $0x1788] sm:$0xff]
    %v794 = vld [vmem:[%s1 + $0x1790] sm:$0xff]
    %v795 = vld [vmem:[%s1 + $0x1798] sm:$0xff]
    %v796 = vld [vmem:[%s1 + $0x17a0] sm:$0xff]
    %v797 = vld [vmem:[%s1 + $0x17a8] sm:$0xff]
    %v798 = vld [vmem:[%s1 + $0x17b0] sm:$0xff]
    %v799 = vld [vmem:[%s1 + $0x17b8] sm:$0xff]
    %v800 = vld [vmem:[%s1 + $0x17c0] sm:$0xff]
    %v801 = vld [vmem:[%s1 + $0x17c8] sm:$0xff]
    %v802 = vld [vmem:[%s1 + $0x17d0] sm:$0xff]
    %v803 = vld [vmem:[%s1 + $0x17d8] sm:$0xff]
    %v804 = vld [vmem:[%s1 + $0x17e0] sm:$0xff]
    %v805 = vld [vmem:[%s1 + $0x17e8] sm:$0xff]
    %v806 = vld [vmem:[%s1 + $0x17f0] sm:$0xff]
    %v807 = vld [vmem:[%s1 + $0x17f8] sm:$0xff]
    %v808 = vld [vmem:[%s1 + $0x1800] sm:$0xff]
    %v809 = vld [vmem:[%s1 + $0x1808] sm:$0xff]
    %v810 = vld [vmem:[%s1 + $0x1810] sm:$0xff]
    %v811 = vld [vmem:[%s1 + $0x1818] sm:$0xff]
    %v812 = vld [vmem:[%s1 + $0x1820] sm:$0xff]
    %v813 = vld [vmem:[%s1 + $0x1828] sm:$0xff]
    %v814 = vld [vmem:[%s1 + $0x1830] sm:$0xff]
    %v815 = vld [vmem:[%s1 + $0x1838] sm:$0xff]
    %v816 = vld [vmem:[%s1 + $0x1840] sm:$0xff]
    %v817 = vld [vmem:[%s1 + $0x1848] sm:$0xff]
    %v818 = vld [vmem:[%s1 + $0x1850] sm:$0xff]
    %v819 = vld [vmem:[%s1 + $0x1858] sm:$0xff]
    %v820 = vld [vmem:[%s1 + $0x1860] sm:$0xff]
    %v821 = vld [vmem:[%s1 + $0x1868] sm:$0xff]
    %v822 = vld [vmem:[%s1 + $0x1870] sm:$0xff]
    %v823 = vld [vmem:[%s1 + $0x1878] sm:$0xff]
    %v824 = vld [vmem:[%s1 + $0x1880] sm:$0xff]
    %v825 = vld [vmem:[%s1 + $0x1888] sm:$0xff]
    %v826 = vld [vmem:[%s1 + $0x1890] sm:$0xff]
    %v827 = vld [vmem:[%s1 + $0x1898] sm:$0xff]
    %v828 = vld [vmem:[%s1 + $0x18a0] sm:$0xff]
    %v829 = vld [vmem:[%s1 + $0x18a8] sm:$0xff]
    %v830 = vld [vmem:[%s1 + $0x18b0] sm:$0xff]
    %v831 = vld [vmem:[%s1 + $0x18b8] sm:$0xff]
    %v832 = vld [vmem:[%s1 + $0x18c0] sm:$0xff]
    %v833 = vld [vmem:[%s1 + $0x18c8] sm:$0xff]
    %v834 = vld [vmem:[%s1 + $0x18d0] sm:$0xff]
    %v835 = vld [vmem:[%s1 + $0x18d8] sm:$0xff]
    %v836 = vld [vmem:[%s1 + $0x18e0] sm:$0xff]
    %v837 = vld [vmem:[%s1 + $0x18e8] sm:$0xff]
    %v838 = vld [vmem:[%s1 + $0x18f0] sm:$0xff]
    %v839 = vld [vmem:[%s1 + $0x18f8] sm:$0xff]
    %v840 = vld [vmem:[%s1 + $0x1900] sm:$0xff]
    %v841 = vld [vmem:[%s1 + $0x1908] sm:$0xff]
    %v842 = vld [vmem:[%s1 + $0x1910] sm:$0xff]
    %v843 = vld [vmem:[%s1 + $0x1918] sm:$0xff]
    %v844 = vld [vmem:[%s1 + $0x1920] sm:$0xff]
    %v845 = vld [vmem:[%s1 + $0x1928] sm:$0xff]
    %v846 = vld [vmem:[%s1 + $0x1930] sm:$0xff]
    %v847 = vld [vmem:[%s1 + $0x1938] sm:$0xff]
    %v848 = vld [vmem:[%s1 + $0x1940] sm:$0xff]
    %v849 = vld [vmem:[%s1 + $0x1948] sm:$0xff]
    %v850 = vld [vmem:[%s1 + $0x1950] sm:$0xff]
    %v851 = vld [vmem:[%s1 + $0x1958] sm:$0xff]
    %v852 = vld [vmem:[%s1 + $0x1960] sm:$0xff]
    %v853 = vld [vmem:[%s1 + $0x1968] sm:$0xff]
    %v854 = vld [vmem:[%s1 + $0x1970] sm:$0xff]
    %v855 = vld [vmem:[%s1 + $0x1978] sm:$0xff]
    %v856 = vld [vmem:[%s1 + $0x1980] sm:$0xff]
    %v857 = vld [vmem:[%s1 + $0x1988] sm:$0xff]
    %v858 = vld [vmem:[%s1 + $0x1990] sm:$0xff]
    %v859 = vld [vmem:[%s1 + $0x1998] sm:$0xff]
    %v860 = vld [vmem:[%s1 + $0x19a0] sm:$0xff]
    %v861 = vld [vmem:[%s1 + $0x19a8] sm:$0xff]
    %v862 = vld [vmem:[%s1 + $0x19b0] sm:$0xff]
    %v863 = vld [vmem:[%s1 + $0x19b8] sm:$0xff]
    %v864 = vld [vmem:[%s1 + $0x19c0] sm:$0xff]
    %v865 = vld [vmem:[%s1 + $0x19c8] sm:$0xff]
    %v866 = vld [vmem:[%s1 + $0x19d0] sm:$0xff]
    %v867 = vld [vmem:[%s1 + $0x19d8] sm:$0xff]
    %v868 = vld [vmem:[%s1 + $0x19e0] sm:$0xff]
    %v869 = vld [vmem:[%s1 + $0x19e8] sm:$0xff]
    %v870 = vld [vmem:[%s1 + $0x19f0] sm:$0xff]
    %v871 = vld [vmem:[%s1 + $0x19f8] sm:$0xff]
    %v872 = vld [vmem:[%s1 + $0x1a00] sm:$0xff]
    %v873 = vld [vmem:[%s1 + $0x1a08] sm:$0xff]
    %v874 = vld [vmem:[%s1 + $0x1a10] sm:$0xff]
    %v875 = vld [vmem:[%s1 + $0x1a18] sm:$0xff]
    %v876 = vld [vmem:[%s1 + $0x1a20] sm:$0xff]
    %v877 = vld [vmem:[%s1 + $0x1a28] sm:$0xff]
    %v878 = vld [vmem:[%s1 + $0x1a30] sm:$0xff]
    %v879 = vld [vmem:[%s1 + $0x1a38] sm:$0xff]
    %v880 = vld [vmem:[%s1 + $0x1a40] sm:$0xff]
    %v881 = vld [vmem:[%s1 + $0x1a48] sm:$0xff]
    %v882 = vld [vmem:[%s1 + $0x1a50] sm:$0xff]
    %v883 = vld [vmem:[%s1 + $0x1a58] sm:$0xff]
    %v884 = vld [vmem:[%s1 + $0x1a60] sm:$0xff]
    %v885 = vld [vmem:[%s1 + $0x1a68] sm:$0xff]
    %v886 = vld [vmem:[%s1 + $0x1a70] sm:$0xff]
    %v887 = vld [vmem:[%s1 + $0x1a78] sm:$0xff]
    %v888 = vld [vmem:[%s1 + $0x1a80] sm:$0xff]
    %v889 = vld [vmem:[%s1 + $0x1a88] sm:$0xff]
    %v890 = vld [vmem:[%s1 + $0x1a90] sm:$0xff]
    %v891 = vld [vmem:[%s1 + $0x1a98] sm:$0xff]
    %v892 = vld [vmem:[%s1 + $0x1aa0] sm:$0xff]
    %v893 = vld [vmem:[%s1 + $0x1aa8] sm:$0xff]
    %v894 = vld [vmem:[%s1 + $0x1ab0] sm:$0xff]
    %v895 = vld [vmem:[%s1 + $0x1ab8] sm:$0xff]
    %v896 = vld [vmem:[%s1 + $0x1ac0] sm:$0xff]
    %v897 = vld [vmem:[%s1 + $0x1ac8] sm:$0xff]
    %v898 = vld [vmem:[%s1 + $0x1ad0] sm:$0xff]
    %v899 = vld [vmem:[%s1 + $0x1ad8] sm:$0xff]
    %v900 = vld [vmem:[%s1 + $0x1ae0] sm:$0xff]
    %v901 = vld [vmem:[%s1 + $0x1ae8] sm:$0xff]
    %v902 = vld [vmem:[%s1 + $0x1af0] sm:$0xff]
    %v903 = vld [vmem:[%s1 + $0x1af8] sm:$0xff]
    %v904 = vld [vmem:[%s1 + $0x1b00] sm:$0xff]
    %v905 = vld [vmem:[%s1 + $0x1b08] sm:$0xff]
    %v906 = vld [vmem:[%s1 + $0x1b10] sm:$0xff]
    %v907 = vld [vmem:[%s1 + $0x1b18] sm:$0xff]
    %v908 = vld [vmem:[%s1 + $0x1b20] sm:$0xff]
    %v909 = vld [vmem:[%s1 + $0x1b28] sm:$0xff]
    %v910 = vld [vmem:[%s1 + $0x1b30] sm:$0xff]
    %v911 = vld [vmem:[%s1 + $0x1b38] sm:$0xff]
    %v912 = vld [vmem:[%s1 + $0x1b40] sm:$0xff]
    %v913 = vld [vmem:[%s1 + $0x1b48] sm:$0xff]
    %v914 = vld [vmem:[%s1 + $0x1b50] sm:$0xff]
    %v915 = vld [vmem:[%s1 + $0x1b58] sm:$0xff]
    %v916 = vld [vmem:[%s1 + $0x1b60] sm:$0xff]
    %v917 = vld [vmem:[%s1 + $0x1b68] sm:$0xff]
    %v918 = vld [vmem:[%s1 + $0x1b70] sm:$0xff]
    %v919 = vld [vmem:[%s1 + $0x1b78] sm:$0xff]
    %v920 = vld [vmem:[%s1 + $0x1b80] sm:$0xff]
    %v921 = vld [vmem:[%s1 + $0x1b88] sm:$0xff]
    %v922 = vld [vmem:[%s1 + $0x1b90] sm:$0xff]
    %v923 = vld [vmem:[%s1 + $0x1b98] sm:$0xff]
    %v924 = vld [vmem:[%s1 + $0x1ba0] sm:$0xff]
    %v925 = vld [vmem:[%s1 + $0x1ba8] sm:$0xff]
    %v926 = vld [vmem:[%s1 + $0x1bb0] sm:$0xff]
    %v927 = vld [vmem:[%s1 + $0x1bb8] sm:$0xff]
    %v928 = vld [vmem:[%s1 + $0x1bc0] sm:$0xff]
    %v929 = vld [vmem:[%s1 + $0x1bc8] sm:$0xff]
    %v930 = vld [vmem:[%s1 + $0x1bd0] sm:$0xff]
    %v931 = vld [vmem:[%s1 + $0x1bd8] sm:$0xff]
    %v932 = vld [vmem:[%s1 + $0x1be0] sm:$0xff]
    %v933 = vld [vmem:[%s1 + $0x1be8] sm:$0xff]
    %v934 = vld [vmem:[%s1 + $0x1bf0] sm:$0xff]
    %v935 = vld [vmem:[%s1 + $0x1bf8] sm:$0xff]
    %v936 = vld [vmem:[%s1 + $0x1c00] sm:$0xff]
    %v937 = vld [vmem:[%s1 + $0x1c08] sm:$0xff]
    %v938 = vld [vmem:[%s1 + $0x1c10] sm:$0xff]
    %v939 = vld [vmem:[%s1 + $0x1c18] sm:$0xff]
    %v940 = vld [vmem:[%s1 + $0x1c20] sm:$0xff]
    %v941 = vld [vmem:[%s1 + $0x1c28] sm:$0xff]
    %v942 = vld [vmem:[%s1 + $0x1c30] sm:$0xff]
    %v943 = vld [vmem:[%s1 + $0x1c38] sm:$0xff]
    %v944 = vld [vmem:[%s1 + $0x1c40] sm:$0xff]
    %v945 = vld [vmem:[%s1 + $0x1c48] sm:$0xff]
    %v946 = vld [vmem:[%s1 + $0x1c50] sm:$0xff]
    %v947 = vld [vmem:[%s1 + $0x1c58] sm:$0xff]
    %v948 = vld [vmem:[%s1 + $0x1c60] sm:$0xff]
    %v949 = vld [vmem:[%s1 + $0x1c68] sm:$0xff]
    %v950 = vld [vmem:[%s1 + $0x1c70] sm:$0xff]
    %v951 = vld [vmem:[%s1 + $0x1c78] sm:$0xff]
    %v952 = vld [vmem:[%s1 + $0x1c80] sm:$0xff]
    %v953 = vld [vmem:[%s1 + $0x1c88] sm:$0xff]
    %v954 = vld [vmem:[%s1 + $0x1c90] sm:$0xff]
    %v955 = vld [vmem:[%s1 + $0x1c98] sm:$0xff]
    %v956 = vld [vmem:[%s1 + $0x1ca0] sm:$0xff]
    %v957 = vld [vmem:[%s1 + $0x1ca8] sm:$0xff]
    %v958 = vld [vmem:[%s1 + $0x1cb0] sm:$0xff]
    %v959 = vld [vmem:[%s1 + $0x1cb8] sm:$0xff]
    %v960 = vld [vmem:[%s1 + $0x1cc0] sm:$0xff]
    %v961 = vld [vmem:[%s1 + $0x1cc8] sm:$0xff]
    %v962 = vld [vmem:[%s1 + $0x1cd0] sm:$0xff]
    %v963 = vld [vmem:[%s1 + $0x1cd8] sm:$0xff]
    %v964 = vld [vmem:[%s1 + $0x1ce0] sm:$0xff]
    %v965 = vld [vmem:[%s1 + $0x1ce8] sm:$0xff]
    %v966 = vld [vmem:[%s1 + $0x1cf0] sm:$0xff]
    %v967 = vld [vmem:[%s1 + $0x1cf8] sm:$0xff]
    %v968 = vld [vmem:[%s1 + $0x1d00] sm:$0xff]
    %v969 = vld [vmem:[%s1 + $0x1d08] sm:$0xff]
    %v970 = vld [vmem:[%s1 + $0x1d10] sm:$0xff]
    %v971 = vld [vmem:[%s1 + $0x1d18] sm:$0xff]
    %v972 = vld [vmem:[%s1 + $0x1d20] sm:$0xff]
    %v973 = vld [vmem:[%s1 + $0x1d28] sm:$0xff]
    %v974 = vld [vmem:[%s1 + $0x1d30] sm:$0xff]
    %v975 = vld [vmem:[%s1 + $0x1d38] sm:$0xff]
    %v976 = vld [vmem:[%s1 + $0x1d40] sm:$0xff]
    %v977 = vld [vmem:[%s1 + $0x1d48] sm:$0xff]
    %v978 = vld [vmem:[%s1 + $0x1d50] sm:$0xff]
    %v979 = vld [vmem:[%s1 + $0x1d58] sm:$0xff]
    %v980 = vld [vmem:[%s1 + $0x1d60] sm:$0xff]
    %v981 = vld [vmem:[%s1 + $0x1d68] sm:$0xff]
    %v982 = vld [vmem:[%s1 + $0x1d70] sm:$0xff]
    %v983 = vld [vmem:[%s1 + $0x1d78] sm:$0xff]
    %v984 = vld [vmem:[%s1 + $0x1d80] sm:$0xff]
    %v985 = vld [vmem:[%s1 + $0x1d88] sm:$0xff]
    %v986 = vld [vmem:[%s1 + $0x1d90] sm:$0xff]
    %v987 = vld [vmem:[%s1 + $0x1d98] sm:$0xff]
    %v988 = vld [vmem:[%s1 + $0x1da0] sm:$0xff]
    %v989 = vld [vmem:[%s1 + $0x1da8] sm:$0xff]
    %v990 = vld [vmem:[%s1 + $0x1db0] sm:$0xff]
    %v991 = vld [vmem:[%s1 + $0x1db8] sm:$0xff]
    %v992 = vld [vmem:[%s1 + $0x1dc0] sm:$0xff]
    %v993 = vld [vmem:[%s1 + $0x1dc8] sm:$0xff]
    %v994 = vld [vmem:[%s1 + $0x1dd0] sm:$0xff]
    %v995 = vld [vmem:[%s1 + $0x1dd8] sm:$0xff]
    %v996 = vld [vmem:[%s1 + $0x1de0] sm:$0xff]
    %v997 = vld [vmem:[%s1 + $0x1de8] sm:$0xff]
    %v998 = vld [vmem:[%s1 + $0x1df0] sm:$0xff]
    %v999 = vld [vmem:[%s1 + $0x1df8] sm:$0xff]
    %v1000 = vld [vmem:[%s1 + $0x1e00] sm:$0xff]
    %v1001 = vld [vmem:[%s1 + $0x1e08] sm:$0xff]
    %v1002 = vld [vmem:[%s1 + $0x1e10] sm:$0xff]
    %v1003 = vld [vmem:[%s1 + $0x1e18] sm:$0xff]
    %v1004 = vld [vmem:[%s1 + $0x1e20] sm:$0xff]
    %v1005 = vld [vmem:[%s1 + $0x1e28] sm:$0xff]
    %v1006 = vld [vmem:[%s1 + $0x1e30] sm:$0xff]
    %v1007 = vld [vmem:[%s1 + $0x1e38] sm:$0xff]
    %v1008 = vld [vmem:[%s1 + $0x1e40] sm:$0xff]
    %v1009 = vld [vmem:[%s1 + $0x1e48] sm:$0xff]
    %v1010 = vld [vmem:[%s1 + $0x1e50] sm:$0xff]
    %v1011 = vld [vmem:[%s1 + $0x1e58] sm:$0xff]
    %v1012 = vld [vmem:[%s1 + $0x1e60] sm:$0xff]
    %v1013 = vld [vmem:[%s1 + $0x1e68] sm:$0xff]
    %v1014 = vld [vmem:[%s1 + $0x1e70] sm:$0xff]
    %v1015 = vld [vmem:[%s1 + $0x1e78] sm:$0xff]
    %v1016 = vld [vmem:[%s1 + $0x1e80] sm:$0xff]
    %v1017 = vld [vmem:[%s1 + $0x1e88] sm:$0xff]
    %v1018 = vld [vmem:[%s1 + $0x1e90] sm:$0xff]
    %v1019 = vld [vmem:[%s1 + $0x1e98] sm:$0xff]
    %v1020 = vld [vmem:[%s1 + $0x1ea0] sm:$0xff]
    %v1021 = vld [vmem:[%s1 + $0x1ea8] sm:$0xff]
    %v1022 = vld [vmem:[%s1 + $0x1eb0] sm:$0xff]
    %v1023 = vld [vmem:[%s1 + $0x1eb8] sm:$0xff]
    %v1024 = vld [vmem:[%s1 + $0x1ec0] sm:$0xff]
    %v1025 = vld [vmem:[%s1 + $0x1ec8] sm:$0xff]
    %v1026 = vld [vmem:[%s1 + $0x1ed0] sm:$0xff]
    %v1027 = vld [vmem:[%s1 + $0x1ed8] sm:$0xff]
    %v1028 = vld [vmem:[%s1 + $0x1ee0] sm:$0xff]
    %v1029 = vld [vmem:[%s1 + $0x1ee8] sm:$0xff]
    %v1030 = vld [vmem:[%s1 + $0x1ef0] sm:$0xff]
    %v1031 = vld [vmem:[%s1 + $0x1ef8] sm:$0xff]
    %v1032 = vld [vmem:[%s1 + $0x1f00] sm:$0xff]
    %v1033 = vld [vmem:[%s1 + $0x1f08] sm:$0xff]
    %v1034 = vld [vmem:[%s1 + $0x1f10] sm:$0xff]
    %v1035 = vld [vmem:[%s1 + $0x1f18] sm:$0xff]
    %v1036 = vld [vmem:[%s1 + $0x1f20] sm:$0xff]
    %v1037 = vld [vmem:[%s1 + $0x1f28] sm:$0xff]
    %v1038 = vld [vmem:[%s1 + $0x1f30] sm:$0xff]
    %v1039 = vld [vmem:[%s1 + $0x1f38] sm:$0xff]
    %v1040 = vld [vmem:[%s1 + $0x1f40] sm:$0xff]
    %v1041 = vld [vmem:[%s1 + $0x1f48] sm:$0xff]
    %v1042 = vld [vmem:[%s1 + $0x1f50] sm:$0xff]
    %v1043 = vld [vmem:[%s1 + $0x1f58] sm:$0xff]
    %v1044 = vld [vmem:[%s1 + $0x1f60] sm:$0xff]
    %v1045 = vld [vmem:[%s1 + $0x1f68] sm:$0xff]
    %v1046 = vld [vmem:[%s1 + $0x1f70] sm:$0xff]
    %v1047 = vld [vmem:[%s1 + $0x1f78] sm:$0xff]
    %v1048 = vld [vmem:[%s1 + $0x1f80] sm:$0xff]
    %v1049 = vld [vmem:[%s1 + $0x1f88] sm:$0xff]
    %v1050 = vld [vmem:[%s1 + $0x1f90] sm:$0xff]
    %v1051 = vld [vmem:[%s1 + $0x1f98] sm:$0xff]
    %v1052 = vld [vmem:[%s1 + $0x1fa0] sm:$0xff]
    %v1053 = vld [vmem:[%s1 + $0x1fa8] sm:$0xff]
    %v1054 = vld [vmem:[%s1 + $0x1fb0] sm:$0xff]
    %v1055 = vld [vmem:[%s1 + $0x1fb8] sm:$0xff]
    %v1056 = vld [vmem:[%s1 + $0x1fc0] sm:$0xff]
    %v1057 = vld [vmem:[%s1 + $0x1fc8] sm:$0xff]
    %v1058 = vld [vmem:[%s1 + $0x1fd0] sm:$0xff]
    %v1059 = vld [vmem:[%s1 + $0x1fd8] sm:$0xff]
    %v1060 = vld [vmem:[%s1 + $0x1fe0] sm:$0xff]
    %v1061 = vld [vmem:[%s1 + $0x1fe8] sm:$0xff]
    %v1062 = vld [vmem:[%s1 + $0x1ff0] sm:$0xff]
    %v1063 = vld [vmem:[%s1 + $0x1ff8] sm:$0xff]
    %v1064 = vld [vmem:[%s1 + $0x2000] sm:$0xff]
    %v1065 = vld [vmem:[%s1 + $0x2008] sm:$0xff]
    %v1066 = vld [vmem:[%s1 + $0x2010] sm:$0xff]
    %v1067 = vld [vmem:[%s1 + $0x2018] sm:$0xff]
    %v1068 = vld [vmem:[%s1 + $0x2020] sm:$0xff]
    %v1069 = vld [vmem:[%s1 + $0x2028] sm:$0xff]
    %v1070 = vld [vmem:[%s1 + $0x2030] sm:$0xff]
    %v1071 = vld [vmem:[%s1 + $0x2038] sm:$0xff]
    %v1072 = vld [vmem:[%s1 + $0x2040] sm:$0xff]
    %v1073 = vld [vmem:[%s1 + $0x2048] sm:$0xff]
    %v1074 = vld [vmem:[%s1 + $0x2050] sm:$0xff]
    %v1075 = vld [vmem:[%s1 + $0x2058] sm:$0xff]
    %v1076 = vld [vmem:[%s1 + $0x2060] sm:$0xff]
    %v1077 = vld [vmem:[%s1 + $0x2068] sm:$0xff]
    %v1078 = vld [vmem:[%s1 + $0x2070] sm:$0xff]
    %v1079 = vld [vmem:[%s1 + $0x2078] sm:$0xff]
    %v1080 = vld [vmem:[%s1 + $0x2080] sm:$0xff]
    %v1081 = vld [vmem:[%s1 + $0x2088] sm:$0xff]
    %v1082 = vld [vmem:[%s1 + $0x2090] sm:$0xff]
    %v1083 = vld [vmem:[%s1 + $0x2098] sm:$0xff]
    %v1084 = vld [vmem:[%s1 + $0x20a0] sm:$0xff]
    %v1085 = vld [vmem:[%s1 + $0x20a8] sm:$0xff]
    %v1086 = vld [vmem:[%s1 + $0x20b0] sm:$0xff]
    %v1087 = vld [vmem:[%s1 + $0x20b8] sm:$0xff]
    %v1088 = vld [vmem:[%s1 + $0x20c0] sm:$0xff]
    %v1089 = vld [vmem:[%s1 + $0x20c8] sm:$0xff]
    %v1090 = vld [vmem:[%s1 + $0x20d0] sm:$0xff]
    %v1091 = vld [vmem:[%s1 + $0x20d8] sm:$0xff]
    %v1092 = vld [vmem:[%s1 + $0x20e0] sm:$0xff]
    %v1093 = vld [vmem:[%s1 + $0x20e8] sm:$0xff]
    %v1094 = vld [vmem:[%s1 + $0x20f0] sm:$0xff]
    %v1095 = vld [vmem:[%s1 + $0x20f8] sm:$0xff]
    %v1096 = vld [vmem:[%s1 + $0x2100] sm:$0xff]
    %v1097 = vld [vmem:[%s1 + $0x2108] sm:$0xff]
    %v1098 = vld [vmem:[%s1 + $0x2110] sm:$0xff]
    %v1099 = vld [vmem:[%s1 + $0x2118] sm:$0xff]
    %v1100 = vld [vmem:[%s1 + $0x2120] sm:$0xff]
    %v1101 = vld [vmem:[%s1 + $0x2128] sm:$0xff]
    %v1102 = vld [vmem:[%s1 + $0x2130] sm:$0xff]
    %v1103 = vld [vmem:[%s1 + $0x2138] sm:$0xff]
    %v1104 = vld [vmem:[%s1 + $0x2140] sm:$0xff]
    %v1105 = vld [vmem:[%s1 + $0x2148] sm:$0xff]
    %v1106 = vld [vmem:[%s1 + $0x2150] sm:$0xff]
    %v1107 = vld [vmem:[%s1 + $0x2158] sm:$0xff]
    %v1108 = vld [vmem:[%s1 + $0x2160] sm:$0xff]
    %v1109 = vld [vmem:[%s1 + $0x2168] sm:$0xff]
    %v1110 = vld [vmem:[%s1 + $0x2170] sm:$0xff]
    %v1111 = vld [vmem:[%s1 + $0x2178] sm:$0xff]
    %v1112 = vld [vmem:[%s1 + $0x2180] sm:$0xff]
    %v1113 = vld [vmem:[%s1 + $0x2188] sm:$0xff]
    %v1114 = vld [vmem:[%s1 + $0x2190] sm:$0xff]
    %v1115 = vld [vmem:[%s1 + $0x2198] sm:$0xff]
    %v1116 = vld [vmem:[%s1 + $0x21a0] sm:$0xff]
    %v1117 = vld [vmem:[%s1 + $0x21a8] sm:$0xff]
    %v1118 = vld [vmem:[%s1 + $0x21b0] sm:$0xff]
    %v1119 = vld [vmem:[%s1 + $0x21b8] sm:$0xff]
    %v1120 = vld [vmem:[%s1 + $0x21c0] sm:$0xff]
    %v1121 = vld [vmem:[%s1 + $0x21c8] sm:$0xff]
    %v1122 = vld [vmem:[%s1 + $0x21d0] sm:$0xff]
    %v1123 = vld [vmem:[%s1 + $0x21d8] sm:$0xff]
    %v1124 = vld [vmem:[%s1 + $0x21e0] sm:$0xff]
    %v1125 = vld [vmem:[%s1 + $0x21e8] sm:$0xff]
    %v1126 = vld [vmem:[%s1 + $0x21f0] sm:$0xff]
    %v1127 = vld [vmem:[%s1 + $0x21f8] sm:$0xff]
    %v1128 = vld [vmem:[%s1 + $0x2200] sm:$0xff]
    %v1129 = vld [vmem:[%s1 + $0x2208] sm:$0xff]
    %v1130 = vld [vmem:[%s1 + $0x2210] sm:$0xff]
    %v1131 = vld [vmem:[%s1 + $0x2218] sm:$0xff]
    %v1132 = vld [vmem:[%s1 + $0x2220] sm:$0xff]
    %v1133 = vld [vmem:[%s1 + $0x2228] sm:$0xff]
    %v1134 = vld [vmem:[%s1 + $0x2230] sm:$0xff]
    %v1135 = vld [vmem:[%s1 + $0x2238] sm:$0xff]
    %v1136 = vld [vmem:[%s1 + $0x2240] sm:$0xff]
    %v1137 = vld [vmem:[%s1 + $0x2248] sm:$0xff]
    %v1138 = vld [vmem:[%s1 + $0x2250] sm:$0xff]
    %v1139 = vld [vmem:[%s1 + $0x2258] sm:$0xff]
    %v1140 = vld [vmem:[%s1 + $0x2260] sm:$0xff]
    %v1141 = vld [vmem:[%s1 + $0x2268] sm:$0xff]
    %v1142 = vld [vmem:[%s1 + $0x2270] sm:$0xff]
    %v1143 = vld [vmem:[%s1 + $0x2278] sm:$0xff]
    %v1144 = vld [vmem:[%s1 + $0x2280] sm:$0xff]
    %v1145 = vld [vmem:[%s1 + $0x2288] sm:$0xff]
    %v1146 = vld [vmem:[%s1 + $0x2290] sm:$0xff]
    %v1147 = vld [vmem:[%s1 + $0x2298] sm:$0xff]
    %v1148 = vld [vmem:[%s1 + $0x22a0] sm:$0xff]
    %v1149 = vld [vmem:[%s1 + $0x22a8] sm:$0xff]
    %v1150 = vld [vmem:[%s1 + $0x22b0] sm:$0xff]
    %v1151 = vld [vmem:[%s1 + $0x22b8] sm:$0xff]
    %v1152 = vld [vmem:[%s1 + $0x22c0] sm:$0xff]
    %v1153 = vld [vmem:[%s1 + $0x22c8] sm:$0xff]
    %v1154 = vld [vmem:[%s1 + $0x22d0] sm:$0xff]
    %v1155 = vld [vmem:[%s1 + $0x22d8] sm:$0xff]
    %v1156 = vld [vmem:[%s1 + $0x22e0] sm:$0xff]
    %v1157 = vld [vmem:[%s1 + $0x22e8] sm:$0xff]
    %v1158 = vld [vmem:[%s1 + $0x22f0] sm:$0xff]
    %v1159 = vld [vmem:[%s1 + $0x22f8] sm:$0xff]
    %v1160 = vld [vmem:[%s1 + $0x2300] sm:$0xff]
    %v1161 = vld [vmem:[%s1 + $0x2308] sm:$0xff]
    %v1162 = vld [vmem:[%s1 + $0x2310] sm:$0xff]
    %v1163 = vld [vmem:[%s1 + $0x2318] sm:$0xff]
    %v1164 = vld [vmem:[%s1 + $0x2320] sm:$0xff]
    %v1165 = vld [vmem:[%s1 + $0x2328] sm:$0xff]
    %v1166 = vld [vmem:[%s1 + $0x2330] sm:$0xff]
    %v1167 = vld [vmem:[%s1 + $0x2338] sm:$0xff]
    %v1168 = vld [vmem:[%s1 + $0x2340] sm:$0xff]
    %v1169 = vld [vmem:[%s1 + $0x2348] sm:$0xff]
    %v1170 = vld [vmem:[%s1 + $0x2350] sm:$0xff]
    %v1171 = vld [vmem:[%s1 + $0x2358] sm:$0xff]
    %v1172 = vld [vmem:[%s1 + $0x2360] sm:$0xff]
    %v1173 = vld [vmem:[%s1 + $0x2368] sm:$0xff]
    %v1174 = vld [vmem:[%s1 + $0x2370] sm:$0xff]
    %v1175 = vld [vmem:[%s1 + $0x2378] sm:$0xff]
    %v1176 = vld [vmem:[%s1 + $0x2380] sm:$0xff]
    %v1177 = vld [vmem:[%s1 + $0x2388] sm:$0xff]
    %v1178 = vld [vmem:[%s1 + $0x2390] sm:$0xff]
    %v1179 = vld [vmem:[%s1 + $0x2398] sm:$0xff]
    %v1180 = vld [vmem:[%s1 + $0x23a0] sm:$0xff]
    %v1181 = vld [vmem:[%s1 + $0x23a8] sm:$0xff]
    %v1182 = vld [vmem:[%s1 + $0x23b0] sm:$0xff]
    %v1183 = vld [vmem:[%s1 + $0x23b8] sm:$0xff]
    %v1184 = vld [vmem:[%s1 + $0x23c0] sm:$0xff]
    %v1185 = vld [vmem:[%s1 + $0x23c8] sm:$0xff]
    %v1186 = vld [vmem:[%s1 + $0x23d0] sm:$0xff]
    %v1187 = vld [vmem:[%s1 + $0x23d8] sm:$0xff]
    %v1188 = vld [vmem:[%s1 + $0x23e0] sm:$0xff]
    %v1189 = vld [vmem:[%s1 + $0x23e8] sm:$0xff]
    %v1190 = vld [vmem:[%s1 + $0x23f0] sm:$0xff]
    %v1191 = vld [vmem:[%s1 + $0x23f8] sm:$0xff]
    %v1192 = vld [vmem:[%s1 + $0x2400] sm:$0xff]
    %v1193 = vld [vmem:[%s1 + $0x2408] sm:$0xff]
    %v1194 = vld [vmem:[%s1 + $0x2410] sm:$0xff]
    %v1195 = vld [vmem:[%s1 + $0x2418] sm:$0xff]
    %v1196 = vld [vmem:[%s1 + $0x2420] sm:$0xff]
    %v1197 = vld [vmem:[%s1 + $0x2428] sm:$0xff]
    %v1198 = vld [vmem:[%s1 + $0x2430] sm:$0xff]
    %v1199 = vld [vmem:[%s1 + $0x2438] sm:$0xff]
    %v1200 = vld [vmem:[%s1 + $0x2440] sm:$0xff]
    %v1201 = vld [vmem:[%s1 + $0x2448] sm:$0xff]
    %v1202 = vld [vmem:[%s1 + $0x2450] sm:$0xff]
    %v1203 = vld [vmem:[%s1 + $0x2458] sm:$0xff]
    %v1204 = vld [vmem:[%s1 + $0x2460] sm:$0xff]
    %v1205 = vld [vmem:[%s1 + $0x2468] sm:$0xff]
    %v1206 = vld [vmem:[%s1 + $0x2470] sm:$0xff]
    %v1207 = vld [vmem:[%s1 + $0x2478] sm:$0xff]
    %v1208 = vld [vmem:[%s1 + $0x2480] sm:$0xff]
    %v1209 = vld [vmem:[%s1 + $0x2488] sm:$0xff]
    %v1210 = vld [vmem:[%s1 + $0x2490] sm:$0xff]
    %v1211 = vld [vmem:[%s1 + $0x2498] sm:$0xff]
    %v1212 = vld [vmem:[%s1 + $0x24a0] sm:$0xff]
    %v1213 = vld [vmem:[%s1 + $0x24a8] sm:$0xff]
    %v1214 = vld [vmem:[%s1 + $0x24b0] sm:$0xff]
    %v1215 = vld [vmem:[%s1 + $0x24b8] sm:$0xff]
    %v1216 = vld [vmem:[%s1 + $0x24c0] sm:$0xff]
    %v1217 = vld [vmem:[%s1 + $0x24c8] sm:$0xff]
    %v1218 = vld [vmem:[%s1 + $0x24d0] sm:$0xff]
    %v1219 = vld [vmem:[%s1 + $0x24d8] sm:$0xff]
    %v1220 = vld [vmem:[%s1 + $0x24e0] sm:$0xff]
    %v1221 = vld [vmem:[%s1 + $0x24e8] sm:$0xff]
    %v1222 = vld [vmem:[%s1 + $0x24f0] sm:$0xff]
    %v1223 = vld [vmem:[%s1 + $0x24f8] sm:$0xff]
    %v1224 = vld [vmem:[%s1 + $0x2500] sm:$0xff]
    %v1225 = vld [vmem:[%s1 + $0x2508] sm:$0xff]
    %v1226 = vld [vmem:[%s1 + $0x2510] sm:$0xff]
    %v1227 = vld [vmem:[%s1 + $0x2518] sm:$0xff]
    %v1228 = vld [vmem:[%s1 + $0x2520] sm:$0xff]
    %v1229 = vld [vmem:[%s1 + $0x2528] sm:$0xff]
    %v1230 = vld [vmem:[%s1 + $0x2530] sm:$0xff]
    %v1231 = vld [vmem:[%s1 + $0x2538] sm:$0xff]
    %v1232 = vld [vmem:[%s1 + $0x2540] sm:$0xff]
    %v1233 = vld [vmem:[%s1 + $0x2548] sm:$0xff]
    %v1234 = vld [vmem:[%s1 + $0x2550] sm:$0xff]
    %v1235 = vld [vmem:[%s1 + $0x2558] sm:$0xff]
    %v1236 = vld [vmem:[%s1 + $0x2560] sm:$0xff]
    %v1237 = vld [vmem:[%s1 + $0x2568] sm:$0xff]
    %v1238 = vld [vmem:[%s1 + $0x2570] sm:$0xff]
    %v1239 = vld [vmem:[%s1 + $0x2578] sm:$0xff]
    %v1240 = vld [vmem:[%s1 + $0x2580] sm:$0xff]
    %v1241 = vld [vmem:[%s1 + $0x2588] sm:$0xff]
    %v1242 = vld [vmem:[%s1 + $0x2590] sm:$0xff]
    %v1243 = vld [vmem:[%s1 + $0x2598] sm:$0xff]
    %v1244 = vld [vmem:[%s1 + $0x25a0] sm:$0xff]
    %v1245 = vld [vmem:[%s1 + $0x25a8] sm:$0xff]
    %v1246 = vld [vmem:[%s1 + $0x25b0] sm:$0xff]
    %v1247 = vld [vmem:[%s1 + $0x25b8] sm:$0xff]
    %v1248 = vld [vmem:[%s1 + $0x25c0] sm:$0xff]
    %v1249 = vld [vmem:[%s1 + $0x25c8] sm:$0xff]
    %v1250 = vld [vmem:[%s1 + $0x25d0] sm:$0xff]
    %v1251 = vld [vmem:[%s1 + $0x25d8] sm:$0xff]
    %v1252 = vld [vmem:[%s1 + $0x25e0] sm:$0xff]
    %v1253 = vld [vmem:[%s1 + $0x25e8] sm:$0xff]
    %v1254 = vld [vmem:[%s1 + $0x25f0] sm:$0xff]
    %v1255 = vld [vmem:[%s1 + $0x25f8] sm:$0xff]
    %v1256 = vld [vmem:[%s1 + $0x2600] sm:$0xff]
    %v1257 = vld [vmem:[%s1 + $0x2608] sm:$0xff]
    %v1258 = vld [vmem:[%s1 + $0x2610] sm:$0xff]
    %v1259 = vld [vmem:[%s1 + $0x2618] sm:$0xff]
    %v1260 = vld [vmem:[%s1 + $0x2620] sm:$0xff]
    %v1261 = vld [vmem:[%s1 + $0x2628] sm:$0xff]
    %v1262 = vld [vmem:[%s1 + $0x2630] sm:$0xff]
    %v1263 = vld [vmem:[%s1 + $0x2638] sm:$0xff]
    %v1264 = vld [vmem:[%s1 + $0x2640] sm:$0xff]
    %v1265 = vld [vmem:[%s1 + $0x2648] sm:$0xff]
    %v1266 = vld [vmem:[%s1 + $0x2650] sm:$0xff]
    %v1267 = vld [vmem:[%s1 + $0x2658] sm:$0xff]
    %v1268 = vld [vmem:[%s1 + $0x2660] sm:$0xff]
    %v1269 = vld [vmem:[%s1 + $0x2668] sm:$0xff]
    %v1270 = vld [vmem:[%s1 + $0x2670] sm:$0xff]
    %v1271 = vld [vmem:[%s1 + $0x2678] sm:$0xff]
    %v1272 = vld [vmem:[%s1 + $0x2680] sm:$0xff]
    %v1273 = vld [vmem:[%s1 + $0x2688] sm:$0xff]
    %v1274 = vld [vmem:[%s1 + $0x2690] sm:$0xff]
    %v1275 = vld [vmem:[%s1 + $0x2698] sm:$0xff]
    %v1276 = vld [vmem:[%s1 + $0x26a0] sm:$0xff]
    %v1277 = vld [vmem:[%s1 + $0x26a8] sm:$0xff]
    %v1278 = vld [vmem:[%s1 + $0x26b0] sm:$0xff]
    %v1279 = vld [vmem:[%s1 + $0x26b8] sm:$0xff]
    %v1280 = vld [vmem:[%s1 + $0x26c0] sm:$0xff]
    %v1281 = vld [vmem:[%s1 + $0x26c8] sm:$0xff]
    %v1282 = vld [vmem:[%s1 + $0x26d0] sm:$0xff]
    %v1283 = vld [vmem:[%s1 + $0x26d8] sm:$0xff]
    %v1284 = vld [vmem:[%s1 + $0x26e0] sm:$0xff]
    %v1285 = vld [vmem:[%s1 + $0x26e8] sm:$0xff]
    %v1286 = vld [vmem:[%s1 + $0x26f0] sm:$0xff]
    %v1287 = vld [vmem:[%s1 + $0x26f8] sm:$0xff]
    %v1288 = vld [vmem:[%s1 + $0x2700] sm:$0xff]
    %v1289 = vld [vmem:[%s1 + $0x2708] sm:$0xff]
    %v1290 = vld [vmem:[%s1 + $0x2710] sm:$0xff]
    %v1291 = vld [vmem:[%s1 + $0x2718] sm:$0xff]
    %v1292 = vld [vmem:[%s1 + $0x2720] sm:$0xff]
    %v1293 = vld [vmem:[%s1 + $0x2728] sm:$0xff]
    %v1294 = vld [vmem:[%s1 + $0x2730] sm:$0xff]
    %v1295 = vld [vmem:[%s1 + $0x2738] sm:$0xff]
    %v1296 = vld [vmem:[%s1 + $0x2740] sm:$0xff]
    %v1297 = vld [vmem:[%s1 + $0x2748] sm:$0xff]
    %v1298 = vld [vmem:[%s1 + $0x2750] sm:$0xff]
    %v1299 = vld [vmem:[%s1 + $0x2758] sm:$0xff]
    %v1300 = vld [vmem:[%s1 + $0x2760] sm:$0xff]
    %v1301 = vld [vmem:[%s1 + $0x2768] sm:$0xff]
    %v1302 = vld [vmem:[%s1 + $0x2770] sm:$0xff]
    %v1303 = vld [vmem:[%s1 + $0x2778] sm:$0xff]
    %v1304 = vld [vmem:[%s1 + $0x2780] sm:$0xff]
    %v1305 = vld [vmem:[%s1 + $0x2788] sm:$0xff]
    %v1306 = vld [vmem:[%s1 + $0x2790] sm:$0xff]
    %v1307 = vld [vmem:[%s1 + $0x2798] sm:$0xff]
    %v1308 = vld [vmem:[%s1 + $0x27a0] sm:$0xff]
    %v1309 = vld [vmem:[%s1 + $0x27a8] sm:$0xff]
    %v1310 = vld [vmem:[%s1 + $0x27b0] sm:$0xff]
    %v1311 = vld [vmem:[%s1 + $0x27b8] sm:$0xff]
    %v1312 = vld [vmem:[%s1 + $0x27c0] sm:$0xff]
    %v1313 = vld [vmem:[%s1 + $0x27c8] sm:$0xff]
    %v1314 = vld [vmem:[%s1 + $0x27d0] sm:$0xff]
    %v1315 = vld [vmem:[%s1 + $0x27d8] sm:$0xff]
    %v1316 = vld [vmem:[%s1 + $0x27e0] sm:$0xff]
    %v1317 = vld [vmem:[%s1 + $0x27e8] sm:$0xff]
    %v1318 = vld [vmem:[%s1 + $0x27f0] sm:$0xff]
    %v1319 = vld [vmem:[%s1 + $0x27f8] sm:$0xff]
    %v1320 = vld [vmem:[%s1 + $0x2800] sm:$0xff]
    %v1321 = vld [vmem:[%s1 + $0x2808] sm:$0xff]
    %v1322 = vld [vmem:[%s1 + $0x2810] sm:$0xff]
    %v1323 = vld [vmem:[%s1 + $0x2818] sm:$0xff]
    %v1324 = vld [vmem:[%s1 + $0x2820] sm:$0xff]
    %v1325 = vld [vmem:[%s1 + $0x2828] sm:$0xff]
    %v1326 = vld [vmem:[%s1 + $0x2830] sm:$0xff]
    %v1327 = vld [vmem:[%s1 + $0x2838] sm:$0xff]
    %v1328 = vld [vmem:[%s1 + $0x2840] sm:$0xff]
    %v1329 = vld [vmem:[%s1 + $0x2848] sm:$0xff]
    %v1330 = vld [vmem:[%s1 + $0x2850] sm:$0xff]
    %v1331 = vld [vmem:[%s1 + $0x2858] sm:$0xff]
    %v1332 = vld [vmem:[%s1 + $0x2860] sm:$0xff]
    %v1333 = vld [vmem:[%s1 + $0x2868] sm:$0xff]
    %v1334 = vld [vmem:[%s1 + $0x2870] sm:$0xff]
    %v1335 = vld [vmem:[%s1 + $0x2878] sm:$0xff]
    %v1336 = vld [vmem:[%s1 + $0x2880] sm:$0xff]
    %v1337 = vld [vmem:[%s1 + $0x2888] sm:$0xff]
    %v1338 = vld [vmem:[%s1 + $0x2890] sm:$0xff]
    %v1339 = vld [vmem:[%s1 + $0x2898] sm:$0xff]
    %v1340 = vld [vmem:[%s1 + $0x28a0] sm:$0xff]
    %v1341 = vld [vmem:[%s1 + $0x28a8] sm:$0xff]
    %v1342 = vld [vmem:[%s1 + $0x28b0] sm:$0xff]
    %v1343 = vld [vmem:[%s1 + $0x28b8] sm:$0xff]
    %v1344 = vld [vmem:[%s1 + $0x28c0] sm:$0xff]
    %v1345 = vld [vmem:[%s1 + $0x28c8] sm:$0xff]
    %v1346 = vld [vmem:[%s1 + $0x28d0] sm:$0xff]
    %v1347 = vld [vmem:[%s1 + $0x28d8] sm:$0xff]
    %v1348 = vld [vmem:[%s1 + $0x28e0] sm:$0xff]
    %v1349 = vld [vmem:[%s1 + $0x28e8] sm:$0xff]
    %v1350 = vld [vmem:[%s1 + $0x28f0] sm:$0xff]
    %v1351 = vld [vmem:[%s1 + $0x28f8] sm:$0xff]
    %v1352 = vld [vmem:[%s1 + $0x2900] sm:$0xff]
    %v1353 = vld [vmem:[%s1 + $0x2908] sm:$0xff]
    %v1354 = vld [vmem:[%s1 + $0x2910] sm:$0xff]
    %v1355 = vld [vmem:[%s1 + $0x2918] sm:$0xff]
    %v1356 = vld [vmem:[%s1 + $0x2920] sm:$0xff]
    %v1357 = vld [vmem:[%s1 + $0x2928] sm:$0xff]
    %v1358 = vld [vmem:[%s1 + $0x2930] sm:$0xff]
    %v1359 = vld [vmem:[%s1 + $0x2938] sm:$0xff]
    %v1360 = vld [vmem:[%s1 + $0x2940] sm:$0xff]
    %v1361 = vld [vmem:[%s1 + $0x2948] sm:$0xff]
    %v1362 = vld [vmem:[%s1 + $0x2950] sm:$0xff]
    %v1363 = vld [vmem:[%s1 + $0x2958] sm:$0xff]
    %v1364 = vld [vmem:[%s1 + $0x2960] sm:$0xff]
    %v1365 = vld [vmem:[%s1 + $0x2968] sm:$0xff]
    %v1366 = vld [vmem:[%s1 + $0x2970] sm:$0xff]
    %v1367 = vld [vmem:[%s1 + $0x2978] sm:$0xff]
    %v1368 = vld [vmem:[%s1 + $0x2980] sm:$0xff]
    %v1369 = vld [vmem:[%s1 + $0x2988] sm:$0xff]
    %v1370 = vld [vmem:[%s1 + $0x2990] sm:$0xff]
    %v1371 = vld [vmem:[%s1 + $0x2998] sm:$0xff]
    %v1372 = vld [vmem:[%s1 + $0x29a0] sm:$0xff]
    %v1373 = vld [vmem:[%s1 + $0x29a8] sm:$0xff]
    %v1374 = vld [vmem:[%s1 + $0x29b0] sm:$0xff]
    %v1375 = vld [vmem:[%s1 + $0x29b8] sm:$0xff]
    %v1376 = vld [vmem:[%s1 + $0x29c0] sm:$0xff]
    %v1377 = vld [vmem:[%s1 + $0x29c8] sm:$0xff]
    %v1378 = vld [vmem:[%s1 + $0x29d0] sm:$0xff]
    %v1379 = vld [vmem:[%s1 + $0x29d8] sm:$0xff]
    %v1380 = vld [vmem:[%s1 + $0x29e0] sm:$0xff]
    %v1381 = vld [vmem:[%s1 + $0x29e8] sm:$0xff]
    %v1382 = vld [vmem:[%s1 + $0x29f0] sm:$0xff]
    %v1383 = vld [vmem:[%s1 + $0x29f8] sm:$0xff]
    %v1384 = vld [vmem:[%s1 + $0x2a00] sm:$0xff]
    %v1385 = vld [vmem:[%s1 + $0x2a08] sm:$0xff]
    %v1386 = vld [vmem:[%s1 + $0x2a10] sm:$0xff]
    %v1387 = vld [vmem:[%s1 + $0x2a18] sm:$0xff]
    %v1388 = vld [vmem:[%s1 + $0x2a20] sm:$0xff]
    %v1389 = vld [vmem:[%s1 + $0x2a28] sm:$0xff]
    %v1390 = vld [vmem:[%s1 + $0x2a30] sm:$0xff]
    %v1391 = vld [vmem:[%s1 + $0x2a38] sm:$0xff]
    %v1392 = vld [vmem:[%s1 + $0x2a40] sm:$0xff]
    %v1393 = vld [vmem:[%s1 + $0x2a48] sm:$0xff]
    %v1394 = vld [vmem:[%s1 + $0x2a50] sm:$0xff]
    %v1395 = vld [vmem:[%s1 + $0x2a58] sm:$0xff]
    %v1396 = vld [vmem:[%s1 + $0x2a60] sm:$0xff]
    %v1397 = vld [vmem:[%s1 + $0x2a68] sm:$0xff]
    %v1398 = vld [vmem:[%s1 + $0x2a70] sm:$0xff]
    %v1399 = vld [vmem:[%s1 + $0x2a78] sm:$0xff]
    %v1400 = vld [vmem:[%s1 + $0x2a80] sm:$0xff]
    %v1401 = vld [vmem:[%s1 + $0x2a88] sm:$0xff]
    %v1402 = vld [vmem:[%s1 + $0x2a90] sm:$0xff]
    %v1403 = vld [vmem:[%s1 + $0x2a98] sm:$0xff]
    %v1404 = vld [vmem:[%s1 + $0x2aa0] sm:$0xff]
    %v1405 = vld [vmem:[%s1 + $0x2aa8] sm:$0xff]
    %v1406 = vld [vmem:[%s1 + $0x2ab0] sm:$0xff]
    %v1407 = vld [vmem:[%s1 + $0x2ab8] sm:$0xff]
    %v1408 = vld [vmem:[%s1 + $0x2ac0] sm:$0xff]
    %v1409 = vld [vmem:[%s1 + $0x2ac8] sm:$0xff]
    %v1410 = vld [vmem:[%s1 + $0x2ad0] sm:$0xff]
    %v1411 = vld [vmem:[%s1 + $0x2ad8] sm:$0xff]
    %v1412 = vld [vmem:[%s1 + $0x2ae0] sm:$0xff]
    %v1413 = vld [vmem:[%s1 + $0x2ae8] sm:$0xff]
    %v1414 = vld [vmem:[%s1 + $0x2af0] sm:$0xff]
    %v1415 = vld [vmem:[%s1 + $0x2af8] sm:$0xff]
    %v1416 = vld [vmem:[%s1 + $0x2b00] sm:$0xff]
    %v1417 = vld [vmem:[%s1 + $0x2b08] sm:$0xff]
    %v1418 = vld [vmem:[%s1 + $0x2b10] sm:$0xff]
    %v1419 = vld [vmem:[%s1 + $0x2b18] sm:$0xff]
    %v1420 = vld [vmem:[%s1 + $0x2b20] sm:$0xff]
    %v1421 = vld [vmem:[%s1 + $0x2b28] sm:$0xff]
    %v1422 = vld [vmem:[%s1 + $0x2b30] sm:$0xff]
    %v1423 = vld [vmem:[%s1 + $0x2b38] sm:$0xff]
    %v1424 = vld [vmem:[%s1 + $0x2b40] sm:$0xff]
    %v1425 = vld [vmem:[%s1 + $0x2b48] sm:$0xff]
    %v1426 = vld [vmem:[%s1 + $0x2b50] sm:$0xff]
    %v1427 = vld [vmem:[%s1 + $0x2b58] sm:$0xff]
    %v1428 = vld [vmem:[%s1 + $0x2b60] sm:$0xff]
    %v1429 = vld [vmem:[%s1 + $0x2b68] sm:$0xff]
    %v1430 = vld [vmem:[%s1 + $0x2b70] sm:$0xff]
    %v1431 = vld [vmem:[%s1 + $0x2b78] sm:$0xff]
    %v1432 = vld [vmem:[%s1 + $0x2b80] sm:$0xff]
    %v1433 = vld [vmem:[%s1 + $0x2b88] sm:$0xff]
    %v1434 = vld [vmem:[%s1 + $0x2b90] sm:$0xff]
    %v1435 = vld [vmem:[%s1 + $0x2b98] sm:$0xff]
    %v1436 = vld [vmem:[%s1 + $0x2ba0] sm:$0xff]
    %v1437 = vld [vmem:[%s1 + $0x2ba8] sm:$0xff]
    %v1438 = vld [vmem:[%s1 + $0x2bb0] sm:$0xff]
    %v1439 = vld [vmem:[%s1 + $0x2bb8] sm:$0xff]
    %v1440 = vld [vmem:[%s1 + $0x2bc0] sm:$0xff]
    %v1441 = vld [vmem:[%s1 + $0x2bc8] sm:$0xff]
    %v1442 = vld [vmem:[%s1 + $0x2bd0] sm:$0xff]
    %v1443 = vld [vmem:[%s1 + $0x2bd8] sm:$0xff]
    %v1444 = vld [vmem:[%s1 + $0x2be0] sm:$0xff]
    %v1445 = vld [vmem:[%s1 + $0x2be8] sm:$0xff]
    %v1446 = vld [vmem:[%s1 + $0x2bf0] sm:$0xff]
    %v1447 = vld [vmem:[%s1 + $0x2bf8] sm:$0xff]
    %v1448 = vld [vmem:[%s1 + $0x2c00] sm:$0xff]
    %v1449 = vld [vmem:[%s1 + $0x2c08] sm:$0xff]
    %v1450 = vld [vmem:[%s1 + $0x2c10] sm:$0xff]
    %v1451 = vld [vmem:[%s1 + $0x2c18] sm:$0xff]
    %v1452 = vld [vmem:[%s1 + $0x2c20] sm:$0xff]
    %v1453 = vld [vmem:[%s1 + $0x2c28] sm:$0xff]
    %v1454 = vld [vmem:[%s1 + $0x2c30] sm:$0xff]
    %v1455 = vld [vmem:[%s1 + $0x2c38] sm:$0xff]
    %v1456 = vld [vmem:[%s1 + $0x2c40] sm:$0xff]
    %v1457 = vld [vmem:[%s1 + $0x2c48] sm:$0xff]
    %v1458 = vld [vmem:[%s1 + $0x2c50] sm:$0xff]
    %v1459 = vld [vmem:[%s1 + $0x2c58] sm:$0xff]
    %v1460 = vld [vmem:[%s1 + $0x2c60] sm:$0xff]
    %v1461 = vld [vmem:[%s1 + $0x2c68] sm:$0xff]
    %v1462 = vld [vmem:[%s1 + $0x2c70] sm:$0xff]
    %v1463 = vld [vmem:[%s1 + $0x2c78] sm:$0xff]
    %v1464 = vld [vmem:[%s1 + $0x2c80] sm:$0xff]
    %v1465 = vld [vmem:[%s1 + $0x2c88] sm:$0xff]
    %v1466 = vld [vmem:[%s1 + $0x2c90] sm:$0xff]
    %v1467 = vld [vmem:[%s1 + $0x2c98] sm:$0xff]
    %v1468 = vld [vmem:[%s1 + $0x2ca0] sm:$0xff]
    %v1469 = vld [vmem:[%s1 + $0x2ca8] sm:$0xff]
    %v1470 = vld [vmem:[%s1 + $0x2cb0] sm:$0xff]
    %v1471 = vld [vmem:[%s1 + $0x2cb8] sm:$0xff]
    %v1472 = vld [vmem:[%s1 + $0x2cc0] sm:$0xff]
    %v1473 = vld [vmem:[%s1 + $0x2cc8] sm:$0xff]
    %v1474 = vld [vmem:[%s1 + $0x2cd0] sm:$0xff]
    %v1475 = vld [vmem:[%s1 + $0x2cd8] sm:$0xff]
    %v1476 = vld [vmem:[%s1 + $0x2ce0] sm:$0xff]
    %v1477 = vld [vmem:[%s1 + $0x2ce8] sm:$0xff]
    %v1478 = vld [vmem:[%s1 + $0x2cf0] sm:$0xff]
    %v1479 = vld [vmem:[%s1 + $0x2cf8] sm:$0xff]
    %v1480 = vld [vmem:[%s1 + $0x2d00] sm:$0xff]
    %v1481 = vld [vmem:[%s1 + $0x2d08] sm:$0xff]
    %v1482 = vld [vmem:[%s1 + $0x2d10] sm:$0xff]
    %v1483 = vld [vmem:[%s1 + $0x2d18] sm:$0xff]
    %v1484 = vld [vmem:[%s1 + $0x2d20] sm:$0xff]
    %v1485 = vld [vmem:[%s1 + $0x2d28] sm:$0xff]
    %v1486 = vld [vmem:[%s1 + $0x2d30] sm:$0xff]
    %v1487 = vld [vmem:[%s1 + $0x2d38] sm:$0xff]
    %v1488 = vld [vmem:[%s1 + $0x2d40] sm:$0xff]
    %v1489 = vld [vmem:[%s1 + $0x2d48] sm:$0xff]
    %v1490 = vld [vmem:[%s1 + $0x2d50] sm:$0xff]
    %v1491 = vld [vmem:[%s1 + $0x2d58] sm:$0xff]
    %v1492 = vld [vmem:[%s1 + $0x2d60] sm:$0xff]
    %v1493 = vld [vmem:[%s1 + $0x2d68] sm:$0xff]
    %v1494 = vld [vmem:[%s1 + $0x2d70] sm:$0xff]
    %v1495 = vld [vmem:[%s1 + $0x2d78] sm:$0xff]
    %v1496 = vld [vmem:[%s1 + $0x2d80] sm:$0xff]
    %v1497 = vld [vmem:[%s1 + $0x2d88] sm:$0xff]
    %v1498 = vld [vmem:[%s1 + $0x2d90] sm:$0xff]
    %v1499 = vld [vmem:[%s1 + $0x2d98] sm:$0xff]
    %v1500 = vld [vmem:[%s1 + $0x2da0] sm:$0xff]
    %v1501 = vld [vmem:[%s1 + $0x2da8] sm:$0xff]
    %v1502 = vld [vmem:[%s1 + $0x2db0] sm:$0xff]
    %v1503 = vld [vmem:[%s1 + $0x2db8] sm:$0xff]
    %v1504 = vld [vmem:[%s1 + $0x2dc0] sm:$0xff]
    %v1505 = vld [vmem:[%s1 + $0x2dc8] sm:$0xff]
    %v1506 = vld [vmem:[%s1 + $0x2dd0] sm:$0xff]
    %v1507 = vld [vmem:[%s1 + $0x2dd8] sm:$0xff]
    %v1508 = vld [vmem:[%s1 + $0x2de0] sm:$0xff]
    %v1509 = vld [vmem:[%s1 + $0x2de8] sm:$0xff]
    %v1510 = vld [vmem:[%s1 + $0x2df0] sm:$0xff]
    %v1511 = vld [vmem:[%s1 + $0x2df8] sm:$0xff]
    %v1512 = vld [vmem:[%s1 + $0x2e00] sm:$0xff]
    %v1513 = vld [vmem:[%s1 + $0x2e08] sm:$0xff]
    %v1514 = vld [vmem:[%s1 + $0x2e10] sm:$0xff]
    %v1515 = vld [vmem:[%s1 + $0x2e18] sm:$0xff]
    %v1516 = vld [vmem:[%s1 + $0x2e20] sm:$0xff]
    %v1517 = vld [vmem:[%s1 + $0x2e28] sm:$0xff]
    %v1518 = vld [vmem:[%s1 + $0x2e30] sm:$0xff]
    %v1519 = vld [vmem:[%s1 + $0x2e38] sm:$0xff]
    %v1520 = vld [vmem:[%s1 + $0x2e40] sm:$0xff]
    %v1521 = vld [vmem:[%s1 + $0x2e48] sm:$0xff]
    %v1522 = vld [vmem:[%s1 + $0x2e50] sm:$0xff]
    %v1523 = vld [vmem:[%s1 + $0x2e58] sm:$0xff]
    %v1524 = vld [vmem:[%s1 + $0x2e60] sm:$0xff]
    %v1525 = vld [vmem:[%s1 + $0x2e68] sm:$0xff]
    %v1526 = vld [vmem:[%s1 + $0x2e70] sm:$0xff]
    %v1527 = vld [vmem:[%s1 + $0x2e78] sm:$0xff]
    %v1528 = vld [vmem:[%s1 + $0x2e80] sm:$0xff]
    %v1529 = vld [vmem:[%s1 + $0x2e88] sm:$0xff]
    %v1530 = vld [vmem:[%s1 + $0x2e90] sm:$0xff]
    %v1531 = vld [vmem:[%s1 + $0x2e98] sm:$0xff]
    %v1532 = vld [vmem:[%s1 + $0x2ea0] sm:$0xff]
    %v1533 = vld [vmem:[%s1 + $0x2ea8] sm:$0xff]
    %v1534 = vld [vmem:[%s1 + $0x2eb0] sm:$0xff]
    %v1535 = vld [vmem:[%s1 + $0x2eb8] sm:$0xff]
    %v1536 = vld [vmem:[%s1 + $0x2ec0] sm:$0xff]
    %v1537 = vld [vmem:[%s1 + $0x2ec8] sm:$0xff]
    %v1538 = vld [vmem:[%s1 + $0x2ed0] sm:$0xff]
    %v1539 = vld [vmem:[%s1 + $0x2ed8] sm:$0xff]
    %v1540 = vld [vmem:[%s1 + $0x2ee0] sm:$0xff]
    %v1541 = vld [vmem:[%s1 + $0x2ee8] sm:$0xff]
    %v1542 = vld [vmem:[%s1 + $0x2ef0] sm:$0xff]
    %v1543 = vld [vmem:[%s1 + $0x2ef8] sm:$0xff]
    %v1544 = vld [vmem:[%s1 + $0x2f00] sm:$0xff]
    %v1545 = vld [vmem:[%s1 + $0x2f08] sm:$0xff]
    %v1546 = vld [vmem:[%s1 + $0x2f10] sm:$0xff]
    %v1547 = vld [vmem:[%s1 + $0x2f18] sm:$0xff]
    %v1548 = vld [vmem:[%s1 + $0x2f20] sm:$0xff]
    %v1549 = vld [vmem:[%s1 + $0x2f28] sm:$0xff]
    %v1550 = vld [vmem:[%s1 + $0x2f30] sm:$0xff]
    %v1551 = vld [vmem:[%s1 + $0x2f38] sm:$0xff]
    %v1552 = vld [vmem:[%s1 + $0x2f40] sm:$0xff]
    %v1553 = vld [vmem:[%s1 + $0x2f48] sm:$0xff]
    %v1554 = vld [vmem:[%s1 + $0x2f50] sm:$0xff]
    %v1555 = vld [vmem:[%s1 + $0x2f58] sm:$0xff]
    %v1556 = vld [vmem:[%s1 + $0x2f60] sm:$0xff]
    %v1557 = vld [vmem:[%s1 + $0x2f68] sm:$0xff]
    %v1558 = vld [vmem:[%s1 + $0x2f70] sm:$0xff]
    %v1559 = vld [vmem:[%s1 + $0x2f78] sm:$0xff]
    %v1560 = vld [vmem:[%s1 + $0x2f80] sm:$0xff]
    %v1561 = vld [vmem:[%s1 + $0x2f88] sm:$0xff]
    %v1562 = vld [vmem:[%s1 + $0x2f90] sm:$0xff]
    %v1563 = vld [vmem:[%s1 + $0x2f98] sm:$0xff]
    %v1564 = vld [vmem:[%s1 + $0x2fa0] sm:$0xff]
    %v1565 = vld [vmem:[%s1 + $0x2fa8] sm:$0xff]
    %v1566 = vld [vmem:[%s1 + $0x2fb0] sm:$0xff]
    %v1567 = vld [vmem:[%s1 + $0x2fb8] sm:$0xff]
    %v1568 = vld [vmem:[%s1 + $0x2fc0] sm:$0xff]
    %v1569 = vld [vmem:[%s1 + $0x2fc8] sm:$0xff]
    %v1570 = vld [vmem:[%s1 + $0x2fd0] sm:$0xff]
    %v1571 = vld [vmem:[%s1 + $0x2fd8] sm:$0xff]
    %v1572 = vld [vmem:[%s1 + $0x2fe0] sm:$0xff]
    %v1573 = vld [vmem:[%s1 + $0x2fe8] sm:$0xff]
    %v1574 = vld [vmem:[%s1 + $0x2ff0] sm:$0xff]
    %v1575 = vld [vmem:[%s1 + $0x2ff8] sm:$0xff]
    %v1576 = vld [vmem:[%s1 + $0x3000] sm:$0xff]
    %v1577 = vld [vmem:[%s1 + $0x3008] sm:$0xff]
    %v1578 = vld [vmem:[%s1 + $0x3010] sm:$0xff]
    %v1579 = vld [vmem:[%s1 + $0x3018] sm:$0xff]
    %v1580 = vld [vmem:[%s1 + $0x3020] sm:$0xff]
    %v1581 = vld [vmem:[%s1 + $0x3028] sm:$0xff]
    %v1582 = vld [vmem:[%s1 + $0x3030] sm:$0xff]
    %v1583 = vld [vmem:[%s1 + $0x3038] sm:$0xff]
    %v1584 = vld [vmem:[%s1 + $0x3040] sm:$0xff]
    %v1585 = vld [vmem:[%s1 + $0x3048] sm:$0xff]
    %v1586 = vld [vmem:[%s1 + $0x3050] sm:$0xff]
    %v1587 = vld [vmem:[%s1 + $0x3058] sm:$0xff]
    %v1588 = vld [vmem:[%s1 + $0x3060] sm:$0xff]
    %v1589 = vld [vmem:[%s1 + $0x3068] sm:$0xff]
    %v1590 = vld [vmem:[%s1 + $0x3070] sm:$0xff]
    %v1591 = vld [vmem:[%s1 + $0x3078] sm:$0xff]
    %v1592 = vld [vmem:[%s1 + $0x3080] sm:$0xff]
    %v1593 = vld [vmem:[%s1 + $0x3088] sm:$0xff]
    %v1594 = vld [vmem:[%s1 + $0x3090] sm:$0xff]
    %v1595 = vld [vmem:[%s1 + $0x3098] sm:$0xff]
    %v1596 = vld [vmem:[%s1 + $0x30a0] sm:$0xff]
    %v1597 = vld [vmem:[%s1 + $0x30a8] sm:$0xff]
    %v1598 = vld [vmem:[%s1 + $0x30b0] sm:$0xff]
    %v1599 = vld [vmem:[%s1 + $0x30b8] sm:$0xff]
    %v1600 = vld [vmem:[%s1 + $0x30c0] sm:$0xff]
    %v1601 = vld [vmem:[%s1 + $0x30c8] sm:$0xff]
    %v1602 = vld [vmem:[%s1 + $0x30d0] sm:$0xff]
    %v1603 = vld [vmem:[%s1 + $0x30d8] sm:$0xff]
    %v1604 = vld [vmem:[%s1 + $0x30e0] sm:$0xff]
    %v1605 = vld [vmem:[%s1 + $0x30e8] sm:$0xff]
    %v1606 = vld [vmem:[%s1 + $0x30f0] sm:$0xff]
    %v1607 = vld [vmem:[%s1 + $0x30f8] sm:$0xff]
    %v1608 = vld [vmem:[%s1 + $0x3100] sm:$0xff]
    %v1609 = vld [vmem:[%s1 + $0x3108] sm:$0xff]
    %v1610 = vld [vmem:[%s1 + $0x3110] sm:$0xff]
    %v1611 = vld [vmem:[%s1 + $0x3118] sm:$0xff]
    %v1612 = vld [vmem:[%s1 + $0x3120] sm:$0xff]
    %v1613 = vld [vmem:[%s1 + $0x3128] sm:$0xff]
    %v1614 = vld [vmem:[%s1 + $0x3130] sm:$0xff]
    %v1615 = vld [vmem:[%s1 + $0x3138] sm:$0xff]
    %v1616 = vld [vmem:[%s1 + $0x3140] sm:$0xff]
    %v1617 = vld [vmem:[%s1 + $0x3148] sm:$0xff]
    %v1618 = vld [vmem:[%s1 + $0x3150] sm:$0xff]
    %v1619 = vld [vmem:[%s1 + $0x3158] sm:$0xff]
    %v1620 = vld [vmem:[%s1 + $0x3160] sm:$0xff]
    %v1621 = vld [vmem:[%s1 + $0x3168] sm:$0xff]
    %v1622 = vld [vmem:[%s1 + $0x3170] sm:$0xff]
    %v1623 = vld [vmem:[%s1 + $0x3178] sm:$0xff]
    %v1624 = vld [vmem:[%s1 + $0x3180] sm:$0xff]
    %v1625 = vld [vmem:[%s1 + $0x3188] sm:$0xff]
    %v1626 = vld [vmem:[%s1 + $0x3190] sm:$0xff]
    %v1627 = vld [vmem:[%s1 + $0x3198] sm:$0xff]
    %v1628 = vld [vmem:[%s1 + $0x31a0] sm:$0xff]
    %v1629 = vld [vmem:[%s1 + $0x31a8] sm:$0xff]
    %v1630 = vld [vmem:[%s1 + $0x31b0] sm:$0xff]
    %v1631 = vld [vmem:[%s1 + $0x31b8] sm:$0xff]
    %v1632 = vld [vmem:[%s1 + $0x31c0] sm:$0xff]
    %v1633 = vld [vmem:[%s1 + $0x31c8] sm:$0xff]
    %v1634 = vld [vmem:[%s1 + $0x31d0] sm:$0xff]
    %v1635 = vld [vmem:[%s1 + $0x31d8] sm:$0xff]
    %v1636 = vld [vmem:[%s1 + $0x31e0] sm:$0xff]
    %v1637 = vld [vmem:[%s1 + $0x31e8] sm:$0xff]
    %v1638 = vld [vmem:[%s1 + $0x31f0] sm:$0xff]
    %v1639 = vld [vmem:[%s1 + $0x31f8] sm:$0xff]
    %v1640 = vld [vmem:[%s2] sm:$0x1]
    %v1642 = vlaneseq
    %v1643 = vshrl.u32 %v1642, 7
    %v1644 = vsub.s32 0, %v1643
    %v1645 = vrot.slane %v1640, %v1644
    %v1672 = vcombine.high %v15, %v15
    %v1674 = vunpack.c.l.s4 1983009808
    %v1675 = vunpack.c.0.s8 %v1674
    %v1676 = vlaneseq
    %v1677 = vshrl.u32 %v1676, 7
    %v1678 = vsub.s32 %v1675, %v1677
    %v1679 = vrot.slane %v15, %v1678
    %v1681 = vunpack.c.l.s4 1983009808
    %v1682 = vunpack.c.0.s8 %v1681
    %v1683 = vlaneseq
    %v1684 = vshrl.u32 %v1683, 7
    %v1685 = vsub.s32 %v1682, %v1684
    %v1686 = vrot.slane %v1672, %v1685
    %v1687 = vcombine.high %v1679, %v1679
    %v1688 = vcombine.high %v1686, %v1686
    %v1689 = vcombine.high %v16, %v16
    %v1691 = vunpack.c.l.s4 1983009808
    %v1692 = vunpack.c.0.s8 %v1691
    %v1693 = vlaneseq
    %v1694 = vshrl.u32 %v1693, 7
    %v1695 = vsub.s32 %v1692, %v1694
    %v1696 = vrot.slane %v16, %v1695
    %v1698 = vunpack.c.l.s4 1983009808
    %v1699 = vunpack.c.0.s8 %v1698
    %v1700 = vlaneseq
    %v1701 = vshrl.u32 %v1700, 7
    %v1702 = vsub.s32 %v1699, %v1701
    %v1703 = vrot.slane %v1689, %v1702
    %v1704 = vcombine.high %v1696, %v1696
    %v1705 = vcombine.high %v1703, %v1703
    %v1706 = vcombine.high %v17, %v17
    %v1708 = vunpack.c.l.s4 1983009808
    %v1709 = vunpack.c.0.s8 %v1708
    %v1710 = vlaneseq
    %v1711 = vshrl.u32 %v1710, 7
    %v1712 = vsub.s32 %v1709, %v1711
    %v1713 = vrot.slane %v17, %v1712
    %v1715 = vunpack.c.l.s4 1983009808
    %v1716 = vunpack.c.0.s8 %v1715
    %v1717 = vlaneseq
    %v1718 = vshrl.u32 %v1717, 7
    %v1719 = vsub.s32 %v1716, %v1718
    %v1720 = vrot.slane %v1706, %v1719
    %v1721 = vcombine.high %v1713, %v1713
    %v1722 = vcombine.high %v1720, %v1720
    %v1723 = vcombine.high %v18, %v18
    %v1725 = vunpack.c.l.s4 1983009808
    %v1726 = vunpack.c.0.s8 %v1725
    %v1727 = vlaneseq
    %v1728 = vshrl.u32 %v1727, 7
    %v1729 = vsub.s32 %v1726, %v1728
    %v1730 = vrot.slane %v18, %v1729
    %v1732 = vunpack.c.l.s4 1983009808
    %v1733 = vunpack.c.0.s8 %v1732
    %v1734 = vlaneseq
    %v1735 = vshrl.u32 %v1734, 7
    %v1736 = vsub.s32 %v1733, %v1735
    %v1737 = vrot.slane %v1723, %v1736
    %v1738 = vcombine.high %v1730, %v1730
    %v1739 = vcombine.high %v1737, %v1737
    %v1740 = vcombine.high %v19, %v19
    %v1742 = vunpack.c.l.s4 1983009808
    %v1743 = vunpack.c.0.s8 %v1742
    %v1744 = vlaneseq
    %v1745 = vshrl.u32 %v1744, 7
    %v1746 = vsub.s32 %v1743, %v1745
    %v1747 = vrot.slane %v19, %v1746
    %v1749 = vunpack.c.l.s4 1983009808
    %v1750 = vunpack.c.0.s8 %v1749
    %v1751 = vlaneseq
    %v1752 = vshrl.u32 %v1751, 7
    %v1753 = vsub.s32 %v1750, %v1752
    %v1754 = vrot.slane %v1740, %v1753
    %v1755 = vcombine.high %v1747, %v1747
    %v1756 = vcombine.high %v1754, %v1754
    %v1757 = vcombine.high %v20, %v20
    %v1759 = vunpack.c.l.s4 1983009808
    %v1760 = vunpack.c.0.s8 %v1759
    %v1761 = vlaneseq
    %v1762 = vshrl.u32 %v1761, 7
    %v1763 = vsub.s32 %v1760, %v1762
    %v1764 = vrot.slane %v20, %v1763
    %v1766 = vunpack.c.l.s4 1983009808
    %v1767 = vunpack.c.0.s8 %v1766
    %v1768 = vlaneseq
    %v1769 = vshrl.u32 %v1768, 7
    %v1770 = vsub.s32 %v1767, %v1769
    %v1771 = vrot.slane %v1757, %v1770
    %v1772 = vcombine.high %v1764, %v1764
    %v1773 = vcombine.high %v1771, %v1771
    %v1774 = vcombine.high %v21, %v21
    %v1776 = vunpack.c.l.s4 1983009808
    %v1777 = vunpack.c.0.s8 %v1776
    %v1778 = vlaneseq
    %v1779 = vshrl.u32 %v1778, 7
    %v1780 = vsub.s32 %v1777, %v1779
    %v1781 = vrot.slane %v21, %v1780
    %v1783 = vunpack.c.l.s4 1983009808
    %v1784 = vunpack.c.0.s8 %v1783
    %v1785 = vlaneseq
    %v1786 = vshrl.u32 %v1785, 7
    %v1787 = vsub.s32 %v1784, %v1786
    %v1788 = vrot.slane %v1774, %v1787
    %v1789 = vcombine.high %v1781, %v1781
    %v1790 = vcombine.high %v1788, %v1788
    %v1791 = vcombine.high %v22, %v22
    %v1793 = vunpack.c.l.s4 1983009808
    %v1794 = vunpack.c.0.s8 %v1793
    %v1795 = vlaneseq
    %v1796 = vshrl.u32 %v1795, 7
    %v1797 = vsub.s32 %v1794, %v1796
    %v1798 = vrot.slane %v22, %v1797
    %v1800 = vunpack.c.l.s4 1983009808
    %v1801 = vunpack.c.0.s8 %v1800
    %v1802 = vlaneseq
    %v1803 = vshrl.u32 %v1802, 7
    %v1804 = vsub.s32 %v1801, %v1803
    %v1805 = vrot.slane %v1791, %v1804
    %v1806 = vcombine.high %v1798, %v1798
    %v1807 = vcombine.high %v1805, %v1805
    %v1808 = vcombine.high %v23, %v23
    %v1810 = vunpack.c.l.s4 1983009808
    %v1811 = vunpack.c.0.s8 %v1810
    %v1812 = vlaneseq
    %v1813 = vshrl.u32 %v1812, 7
    %v1814 = vsub.s32 %v1811, %v1813
    %v1815 = vrot.slane %v23, %v1814
    %v1817 = vunpack.c.l.s4 1983009808
    %v1818 = vunpack.c.0.s8 %v1817
    %v1819 = vlaneseq
    %v1820 = vshrl.u32 %v1819, 7
    %v1821 = vsub.s32 %v1818, %v1820
    %v1822 = vrot.slane %v1808, %v1821
    %v1823 = vcombine.high %v1815, %v1815
    %v1824 = vcombine.high %v1822, %v1822
    %v1825 = vcombine.high %v24, %v24
    %v1827 = vunpack.c.l.s4 1983009808
    %v1828 = vunpack.c.0.s8 %v1827
    %v1829 = vlaneseq
    %v1830 = vshrl.u32 %v1829, 7
    %v1831 = vsub.s32 %v1828, %v1830
    %v1832 = vrot.slane %v24, %v1831
    %v1834 = vunpack.c.l.s4 1983009808
    %v1835 = vunpack.c.0.s8 %v1834
    %v1836 = vlaneseq
    %v1837 = vshrl.u32 %v1836, 7
    %v1838 = vsub.s32 %v1835, %v1837
    %v1839 = vrot.slane %v1825, %v1838
    %v1840 = vcombine.high %v1832, %v1832
    %v1841 = vcombine.high %v1839, %v1839
    %v1842 = vcombine.high %v25, %v25
    %v1844 = vunpack.c.l.s4 1983009808
    %v1845 = vunpack.c.0.s8 %v1844
    %v1846 = vlaneseq
    %v1847 = vshrl.u32 %v1846, 7
    %v1848 = vsub.s32 %v1845, %v1847
    %v1849 = vrot.slane %v25, %v1848
    %v1851 = vunpack.c.l.s4 1983009808
    %v1852 = vunpack.c.0.s8 %v1851
    %v1853 = vlaneseq
    %v1854 = vshrl.u32 %v1853, 7
    %v1855 = vsub.s32 %v1852, %v1854
    %v1856 = vrot.slane %v1842, %v1855
    %v1857 = vcombine.high %v1849, %v1849
    %v1858 = vcombine.high %v1856, %v1856
    %v1859 = vcombine.high %v26, %v26
    %v1861 = vunpack.c.l.s4 1983009808
    %v1862 = vunpack.c.0.s8 %v1861
    %v1863 = vlaneseq
    %v1864 = vshrl.u32 %v1863, 7
    %v1865 = vsub.s32 %v1862, %v1864
    %v1866 = vrot.slane %v26, %v1865
    %v1868 = vunpack.c.l.s4 1983009808
    %v1869 = vunpack.c.0.s8 %v1868
    %v1870 = vlaneseq
    %v1871 = vshrl.u32 %v1870, 7
    %v1872 = vsub.s32 %v1869, %v1871
    %v1873 = vrot.slane %v1859, %v1872
    %v1874 = vcombine.high %v1866, %v1866
    %v1875 = vcombine.high %v1873, %v1873
    %v1876 = vcombine.high %v27, %v27
    %v1878 = vunpack.c.l.s4 1983009808
    %v1879 = vunpack.c.0.s8 %v1878
    %v1880 = vlaneseq
    %v1881 = vshrl.u32 %v1880, 7
    %v1882 = vsub.s32 %v1879, %v1881
    %v1883 = vrot.slane %v27, %v1882
    %v1885 = vunpack.c.l.s4 1983009808
    %v1886 = vunpack.c.0.s8 %v1885
    %v1887 = vlaneseq
    %v1888 = vshrl.u32 %v1887, 7
    %v1889 = vsub.s32 %v1886, %v1888
    %v1890 = vrot.slane %v1876, %v1889
    %v1891 = vcombine.high %v1883, %v1883
    %v1892 = vcombine.high %v1890, %v1890
    %v1893 = vcombine.high %v28, %v28
    %v1895 = vunpack.c.l.s4 1983009808
    %v1896 = vunpack.c.0.s8 %v1895
    %v1897 = vlaneseq
    %v1898 = vshrl.u32 %v1897, 7
    %v1899 = vsub.s32 %v1896, %v1898
    %v1900 = vrot.slane %v28, %v1899
    %v1902 = vunpack.c.l.s4 1983009808
    %v1903 = vunpack.c.0.s8 %v1902
    %v1904 = vlaneseq
    %v1905 = vshrl.u32 %v1904, 7
    %v1906 = vsub.s32 %v1903, %v1905
    %v1907 = vrot.slane %v1893, %v1906
    %v1908 = vcombine.high %v1900, %v1900
    %v1909 = vcombine.high %v1907, %v1907
    %v1910 = vcombine.high %v29, %v29
    %v1912 = vunpack.c.l.s4 1983009808
    %v1913 = vunpack.c.0.s8 %v1912
    %v1914 = vlaneseq
    %v1915 = vshrl.u32 %v1914, 7
    %v1916 = vsub.s32 %v1913, %v1915
    %v1917 = vrot.slane %v29, %v1916
    %v1919 = vunpack.c.l.s4 1983009808
    %v1920 = vunpack.c.0.s8 %v1919
    %v1921 = vlaneseq
    %v1922 = vshrl.u32 %v1921, 7
    %v1923 = vsub.s32 %v1920, %v1922
    %v1924 = vrot.slane %v1910, %v1923
    %v1925 = vcombine.high %v1917, %v1917
    %v1926 = vcombine.high %v1924, %v1924
    %v1927 = vcombine.high %v30, %v30
    %v1929 = vunpack.c.l.s4 1983009808
    %v1930 = vunpack.c.0.s8 %v1929
    %v1931 = vlaneseq
    %v1932 = vshrl.u32 %v1931, 7
    %v1933 = vsub.s32 %v1930, %v1932
    %v1934 = vrot.slane %v30, %v1933
    %v1936 = vunpack.c.l.s4 1983009808
    %v1937 = vunpack.c.0.s8 %v1936
    %v1938 = vlaneseq
    %v1939 = vshrl.u32 %v1938, 7
    %v1940 = vsub.s32 %v1937, %v1939
    %v1941 = vrot.slane %v1927, %v1940
    %v1942 = vcombine.high %v1934, %v1934
    %v1943 = vcombine.high %v1941, %v1941
    %v1944 = vcombine.high %v31, %v31
    %v1946 = vunpack.c.l.s4 1983009808
    %v1947 = vunpack.c.0.s8 %v1946
    %v1948 = vlaneseq
    %v1949 = vshrl.u32 %v1948, 7
    %v1950 = vsub.s32 %v1947, %v1949
    %v1951 = vrot.slane %v31, %v1950
    %v1953 = vunpack.c.l.s4 1983009808
    %v1954 = vunpack.c.0.s8 %v1953
    %v1955 = vlaneseq
    %v1956 = vshrl.u32 %v1955, 7
    %v1957 = vsub.s32 %v1954, %v1956
    %v1958 = vrot.slane %v1944, %v1957
    %v1959 = vcombine.high %v1951, %v1951
    %v1960 = vcombine.high %v1958, %v1958
    %v1961 = vcombine.high %v32, %v32
    %v1963 = vunpack.c.l.s4 1983009808
    %v1964 = vunpack.c.0.s8 %v1963
    %v1965 = vlaneseq
    %v1966 = vshrl.u32 %v1965, 7
    %v1967 = vsub.s32 %v1964, %v1966
    %v1968 = vrot.slane %v32, %v1967
    %v1970 = vunpack.c.l.s4 1983009808
    %v1971 = vunpack.c.0.s8 %v1970
    %v1972 = vlaneseq
    %v1973 = vshrl.u32 %v1972, 7
    %v1974 = vsub.s32 %v1971, %v1973
    %v1975 = vrot.slane %v1961, %v1974
    %v1976 = vcombine.high %v1968, %v1968
    %v1977 = vcombine.high %v1975, %v1975
    %v1978 = vcombine.high %v33, %v33
    %v1980 = vunpack.c.l.s4 1983009808
    %v1981 = vunpack.c.0.s8 %v1980
    %v1982 = vlaneseq
    %v1983 = vshrl.u32 %v1982, 7
    %v1984 = vsub.s32 %v1981, %v1983
    %v1985 = vrot.slane %v33, %v1984
    %v1987 = vunpack.c.l.s4 1983009808
    %v1988 = vunpack.c.0.s8 %v1987
    %v1989 = vlaneseq
    %v1990 = vshrl.u32 %v1989, 7
    %v1991 = vsub.s32 %v1988, %v1990
    %v1992 = vrot.slane %v1978, %v1991
    %v1993 = vcombine.high %v1985, %v1985
    %v1994 = vcombine.high %v1992, %v1992
    %v1995 = vcombine.high %v34, %v34
    %v1997 = vunpack.c.l.s4 1983009808
    %v1998 = vunpack.c.0.s8 %v1997
    %v1999 = vlaneseq
    %v2000 = vshrl.u32 %v1999, 7
    %v2001 = vsub.s32 %v1998, %v2000
    %v2002 = vrot.slane %v34, %v2001
    %v2004 = vunpack.c.l.s4 1983009808
    %v2005 = vunpack.c.0.s8 %v2004
    %v2006 = vlaneseq
    %v2007 = vshrl.u32 %v2006, 7
    %v2008 = vsub.s32 %v2005, %v2007
    %v2009 = vrot.slane %v1995, %v2008
    %v2010 = vcombine.high %v2002, %v2002
    %v2011 = vcombine.high %v2009, %v2009
    %v2012 = vcombine.high %v35, %v35
    %v2014 = vunpack.c.l.s4 1983009808
    %v2015 = vunpack.c.0.s8 %v2014
    %v2016 = vlaneseq
    %v2017 = vshrl.u32 %v2016, 7
    %v2018 = vsub.s32 %v2015, %v2017
    %v2019 = vrot.slane %v35, %v2018
    %v2021 = vunpack.c.l.s4 1983009808
    %v2022 = vunpack.c.0.s8 %v2021
    %v2023 = vlaneseq
    %v2024 = vshrl.u32 %v2023, 7
    %v2025 = vsub.s32 %v2022, %v2024
    %v2026 = vrot.slane %v2012, %v2025
    %v2027 = vcombine.high %v2019, %v2019
    %v2028 = vcombine.high %v2026, %v2026
    %v2029 = vcombine.high %v36, %v36
    %v2031 = vunpack.c.l.s4 1983009808
    %v2032 = vunpack.c.0.s8 %v2031
    %v2033 = vlaneseq
    %v2034 = vshrl.u32 %v2033, 7
    %v2035 = vsub.s32 %v2032, %v2034
    %v2036 = vrot.slane %v36, %v2035
    %v2038 = vunpack.c.l.s4 1983009808
    %v2039 = vunpack.c.0.s8 %v2038
    %v2040 = vlaneseq
    %v2041 = vshrl.u32 %v2040, 7
    %v2042 = vsub.s32 %v2039, %v2041
    %v2043 = vrot.slane %v2029, %v2042
    %v2044 = vcombine.high %v2036, %v2036
    %v2045 = vcombine.high %v2043, %v2043
    %v2046 = vcombine.high %v37, %v37
    %v2048 = vunpack.c.l.s4 1983009808
    %v2049 = vunpack.c.0.s8 %v2048
    %v2050 = vlaneseq
    %v2051 = vshrl.u32 %v2050, 7
    %v2052 = vsub.s32 %v2049, %v2051
    %v2053 = vrot.slane %v37, %v2052
    %v2055 = vunpack.c.l.s4 1983009808
    %v2056 = vunpack.c.0.s8 %v2055
    %v2057 = vlaneseq
    %v2058 = vshrl.u32 %v2057, 7
    %v2059 = vsub.s32 %v2056, %v2058
    %v2060 = vrot.slane %v2046, %v2059
    %v2061 = vcombine.high %v2053, %v2053
    %v2062 = vcombine.high %v2060, %v2060
    %v2063 = vcombine.high %v38, %v38
    %v2065 = vunpack.c.l.s4 1983009808
    %v2066 = vunpack.c.0.s8 %v2065
    %v2067 = vlaneseq
    %v2068 = vshrl.u32 %v2067, 7
    %v2069 = vsub.s32 %v2066, %v2068
    %v2070 = vrot.slane %v38, %v2069
    %v2072 = vunpack.c.l.s4 1983009808
    %v2073 = vunpack.c.0.s8 %v2072
    %v2074 = vlaneseq
    %v2075 = vshrl.u32 %v2074, 7
    %v2076 = vsub.s32 %v2073, %v2075
    %v2077 = vrot.slane %v2063, %v2076
    %v2078 = vcombine.high %v2070, %v2070
    %v2079 = vcombine.high %v2077, %v2077
    %v2080 = vcombine.high %v39, %v39
    %v2082 = vunpack.c.l.s4 1983009808
    %v2083 = vunpack.c.0.s8 %v2082
    %v2084 = vlaneseq
    %v2085 = vshrl.u32 %v2084, 7
    %v2086 = vsub.s32 %v2083, %v2085
    %v2087 = vrot.slane %v39, %v2086
    %v2089 = vunpack.c.l.s4 1983009808
    %v2090 = vunpack.c.0.s8 %v2089
    %v2091 = vlaneseq
    %v2092 = vshrl.u32 %v2091, 7
    %v2093 = vsub.s32 %v2090, %v2092
    %v2094 = vrot.slane %v2080, %v2093
    %v2095 = vcombine.high %v2087, %v2087
    %v2096 = vcombine.high %v2094, %v2094
    %2197 = vmatprep.subr.mxu0 0.0
    %2198 = vmatpush1.msra.mxu0 %v40
    %2199 = vmatprep.subr.mxu0 0.0
    %2200 = vmatpush1.msra.mxu0 %v41
    %2201 = vmatprep.subr.mxu0 0.0
    %2202 = vmatpush1.msra.mxu0 %v42
    %2203 = vmatprep.subr.mxu0 0.0
    %2204 = vmatpush1.msra.mxu0 %v43
    %2205 = vmatprep.subr.mxu0 0.0
    %2206 = vmatpush1.msra.mxu0 %v44
    %2207 = vmatprep.subr.mxu0 0.0
    %2208 = vmatpush1.msra.mxu0 %v45
    %2209 = vmatprep.subr.mxu0 0.0
    %2210 = vmatpush1.msra.mxu0 %v46
    %2211 = vmatprep.subr.mxu0 0.0
    %2212 = vmatpush1.msra.mxu0 %v47
    %2213 = vmatprep.subr.mxu0 0.0
    %2214 = vmatpush1.msra.mxu0 %v48
    %2215 = vmatprep.subr.mxu0 0.0
    %2216 = vmatpush1.msra.mxu0 %v49
    %2217 = vmatprep.subr.mxu0 0.0
    %2218 = vmatpush1.msra.mxu0 %v50
    %2219 = vmatprep.subr.mxu0 0.0
    %2220 = vmatpush1.msra.mxu0 %v51
    %2221 = vmatprep.subr.mxu0 0.0
    %2222 = vmatpush1.msra.mxu0 %v52
    %2223 = vmatprep.subr.mxu0 0.0
    %2224 = vmatpush1.msra.mxu0 %v53
    %2225 = vmatprep.subr.mxu0 0.0
    %2226 = vmatpush1.msra.mxu0 %v54
    %2227 = vmatprep.subr.mxu0 0.0
    %2228 = vmatpush1.msra.mxu0 %v55
    %2229 = vmatprep.subr.mxu0 0.0
    %2230 = vmatpush1.msra.mxu0 %v56
    %2231 = vmatprep.subr.mxu0 0.0
    %2232 = vmatpush1.msra.mxu0 %v57
    %2233 = vmatprep.subr.mxu0 0.0
    %2234 = vmatpush1.msra.mxu0 %v58
    %2235 = vmatprep.subr.mxu0 0.0
    %2236 = vmatpush1.msra.mxu0 %v59
    %2237 = vmatprep.subr.mxu0 0.0
    %2238 = vmatpush1.msra.mxu0 %v60
    %2239 = vmatprep.subr.mxu0 0.0
    %2240 = vmatpush1.msra.mxu0 %v61
    %2241 = vmatprep.subr.mxu0 0.0
    %2242 = vmatpush1.msra.mxu0 %v62
    %2243 = vmatprep.subr.mxu0 0.0
    %2244 = vmatpush1.msra.mxu0 %v63
    %2245 = vmatprep.subr.mxu0 0.0
    %2246 = vmatpush1.msra.mxu0 %v64
    %2247 = vmatprep.subr.mxu0 0.0
    %2248 = vmatpush1.msra.mxu0 %v65
    %2249 = vmatprep.subr.mxu0 0.0
    %2250 = vmatpush1.msra.mxu0 %v66
    %2251 = vmatprep.subr.mxu0 0.0
    %2252 = vmatpush1.msra.mxu0 %v67
    %2253 = vmatprep.subr.mxu0 0.0
    %2254 = vmatpush1.msra.mxu0 %v68
    %2255 = vmatprep.subr.mxu0 0.0
    %2256 = vmatpush1.msra.mxu0 %v69
    %2257 = vmatprep.subr.mxu0 0.0
    %2258 = vmatpush1.msra.mxu0 %v70
    %2259 = vmatprep.subr.mxu0 0.0
    %2260 = vmatpush1.msra.mxu0 %v71
    %2261 = vmatprep.mubr.f32.mxu0 %v1687
    %2262 = vmatmul.mubr.f32.gmra.mrb[0].mxu0 %v1679
    %v2263 = vpop.f32.mrb[0].mxu0
    %v2264 = vadd.f32 %v1645, %v2263
    %v2265 = vpop.f32.mrb[0].mxu0
    %2266 = vdwg.mxu0
    %2267 = vmatprep.subr.mxu0 0.0
    %2268 = vmatpush1.msra.mxu0 %v72
    %2269 = vmatprep.subr.mxu0 0.0
    %2270 = vmatpush1.msra.mxu0 %v73
    %2271 = vmatprep.subr.mxu0 0.0
    %2272 = vmatpush1.msra.mxu0 %v74
    %2273 = vmatprep.subr.mxu0 0.0
    %2274 = vmatpush1.msra.mxu0 %v75
    %2275 = vmatprep.subr.mxu0 0.0
    %2276 = vmatpush1.msra.mxu0 %v76
    %2277 = vmatprep.subr.mxu0 0.0
    %2278 = vmatpush1.msra.mxu0 %v77
    %2279 = vmatprep.subr.mxu0 0.0
    %2280 = vmatpush1.msra.mxu0 %v78
    %2281 = vmatprep.subr.mxu0 0.0
    %2282 = vmatpush1.msra.mxu0 %v79
    %2283 = vmatprep.subr.mxu0 0.0
    %2284 = vmatpush1.msra.mxu0 %v80
    %2285 = vmatprep.subr.mxu0 0.0
    %2286 = vmatpush1.msra.mxu0 %v81
    %2287 = vmatprep.subr.mxu0 0.0
    %2288 = vmatpush1.msra.mxu0 %v82
    %2289 = vmatprep.subr.mxu0 0.0
    %2290 = vmatpush1.msra.mxu0 %v83
    %2291 = vmatprep.subr.mxu0 0.0
    %2292 = vmatpush1.msra.mxu0 %v84
    %2293 = vmatprep.subr.mxu0 0.0
    %2294 = vmatpush1.msra.mxu0 %v85
    %2295 = vmatprep.subr.mxu0 0.0
    %2296 = vmatpush1.msra.mxu0 %v86
    %2297 = vmatprep.subr.mxu0 0.0
    %2298 = vmatpush1.msra.mxu0 %v87
    %2299 = vmatprep.subr.mxu0 0.0
    %2300 = vmatpush1.msra.mxu0 %v88
    %2301 = vmatprep.subr.mxu0 0.0
    %2302 = vmatpush1.msra.mxu0 %v89
    %2303 = vmatprep.subr.mxu0 0.0
    %2304 = vmatpush1.msra.mxu0 %v90
    %2305 = vmatprep.subr.mxu0 0.0
    %2306 = vmatpush1.msra.mxu0 %v91
    %2307 = vmatprep.subr.mxu0 0.0
    %2308 = vmatpush1.msra.mxu0 %v92
    %2309 = vmatprep.subr.mxu0 0.0
    %2310 = vmatpush1.msra.mxu0 %v93
    %2311 = vmatprep.subr.mxu0 0.0
    %2312 = vmatpush1.msra.mxu0 %v94
    %2313 = vmatprep.subr.mxu0 0.0
    %2314 = vmatpush1.msra.mxu0 %v95
    %2315 = vmatprep.subr.mxu0 0.0
    %2316 = vmatpush1.msra.mxu0 %v96
    %2317 = vmatprep.subr.mxu0 0.0
    %2318 = vmatpush1.msra.mxu0 %v97
    %2319 = vmatprep.subr.mxu0 0.0
    %2320 = vmatpush1.msra.mxu0 %v98
    %2321 = vmatprep.subr.mxu0 0.0
    %2322 = vmatpush1.msra.mxu0 %v99
    %2323 = vmatprep.subr.mxu0 0.0
    %2324 = vmatpush1.msra.mxu0 %v100
    %2325 = vmatprep.subr.mxu0 0.0
    %2326 = vmatpush1.msra.mxu0 %v101
    %2327 = vmatprep.subr.mxu0 0.0
    %2328 = vmatpush1.msra.mxu0 %v102
    %2329 = vmatprep.subr.mxu0 0.0
    %2330 = vmatpush1.msra.mxu0 %v103
    %2331 = vmatprep.mubr.f32.mxu0 %v1688
    %2332 = vmatmul.mubr.f32.gmra.mrb[0].mxu0 %v1686
    %v2333 = vpop.f32.mrb[0].mxu0
    %v2334 = vadd.f32 %v2264, %v2333
    %v2335 = vpop.f32.mrb[0].mxu0
    %2336 = vdwg.mxu0
    %2337 = vmatprep.subr.mxu0 0.0
    %2338 = vmatpush1.msra.mxu0 %v104
    %2339 = vmatprep.subr.mxu0 0.0
    %2340 = vmatpush1.msra.mxu0 %v105
    %2341 = vmatprep.subr.mxu0 0.0
    %2342 = vmatpush1.msra.mxu0 %v106
    %2343 = vmatprep.subr.mxu0 0.0
    %2344 = vmatpush1.msra.mxu0 %v107
    %2345 = vmatprep.subr.mxu0 0.0
    %2346 = vmatpush1.msra.mxu0 %v108
    %2347 = vmatprep.subr.mxu0 0.0
    %2348 = vmatpush1.msra.mxu0 %v109
    %2349 = vmatprep.subr.mxu0 0.0
    %2350 = vmatpush1.msra.mxu0 %v110
    %2351 = vmatprep.subr.mxu0 0.0
    %2352 = vmatpush1.msra.mxu0 %v111
    %2353 = vmatprep.subr.mxu0 0.0
    %2354 = vmatpush1.msra.mxu0 %v112
    %2355 = vmatprep.subr.mxu0 0.0
    %2356 = vmatpush1.msra.mxu0 %v113
    %2357 = vmatprep.subr.mxu0 0.0
    %2358 = vmatpush1.msra.mxu0 %v114
    %2359 = vmatprep.subr.mxu0 0.0
    %2360 = vmatpush1.msra.mxu0 %v115
    %2361 = vmatprep.subr.mxu0 0.0
    %2362 = vmatpush1.msra.mxu0 %v116
    %2363 = vmatprep.subr.mxu0 0.0
    %2364 = vmatpush1.msra.mxu0 %v117
    %2365 = vmatprep.subr.mxu0 0.0
    %2366 = vmatpush1.msra.mxu0 %v118
    %2367 = vmatprep.subr.mxu0 0.0
    %2368 = vmatpush1.msra.mxu0 %v119
    %2369 = vmatprep.subr.mxu0 0.0
    %2370 = vmatpush1.msra.mxu0 %v120
    %2371 = vmatprep.subr.mxu0 0.0
    %2372 = vmatpush1.msra.mxu0 %v121
    %2373 = vmatprep.subr.mxu0 0.0
    %2374 = vmatpush1.msra.mxu0 %v122
    %2375 = vmatprep.subr.mxu0 0.0
    %2376 = vmatpush1.msra.mxu0 %v123
    %2377 = vmatprep.subr.mxu0 0.0
    %2378 = vmatpush1.msra.mxu0 %v124
    %2379 = vmatprep.subr.mxu0 0.0
    %2380 = vmatpush1.msra.mxu0 %v125
    %2381 = vmatprep.subr.mxu0 0.0
    %2382 = vmatpush1.msra.mxu0 %v126
    %2383 = vmatprep.subr.mxu0 0.0
    %2384 = vmatpush1.msra.mxu0 %v127
    %2385 = vmatprep.subr.mxu0 0.0
    %2386 = vmatpush1.msra.mxu0 %v128
    %2387 = vmatprep.subr.mxu0 0.0
    %2388 = vmatpush1.msra.mxu0 %v129
    %2389 = vmatprep.subr.mxu0 0.0
    %2390 = vmatpush1.msra.mxu0 %v130
    %2391 = vmatprep.subr.mxu0 0.0
    %2392 = vmatpush1.msra.mxu0 %v131
    %2393 = vmatprep.subr.mxu0 0.0
    %2394 = vmatpush1.msra.mxu0 %v132
    %2395 = vmatprep.subr.mxu0 0.0
    %2396 = vmatpush1.msra.mxu0 %v133
    %2397 = vmatprep.subr.mxu0 0.0
    %2398 = vmatpush1.msra.mxu0 %v134
    %2399 = vmatprep.subr.mxu0 0.0
    %2400 = vmatpush1.msra.mxu0 %v135
    %2401 = vmatprep.mubr.f32.mxu0 %v1704
    %2402 = vmatmul.mubr.f32.gmra.mrb[0].mxu0 %v1696
    %v2403 = vpop.f32.mrb[0].mxu0
    %v2404 = vadd.f32 %v2334, %v2403
    %v2405 = vpop.f32.mrb[0].mxu0
    %2406 = vdwg.mxu0
    %2407 = vmatprep.subr.mxu0 0.0
    %2408 = vmatpush1.msra.mxu0 %v136
    %2409 = vmatprep.subr.mxu0 0.0
    %2410 = vmatpush1.msra.mxu0 %v137
    %2411 = vmatprep.subr.mxu0 0.0
    %2412 = vmatpush1.msra.mxu0 %v138
    %2413 = vmatprep.subr.mxu0 0.0
    %2414 = vmatpush1.msra.mxu0 %v139
    %2415 = vmatprep.subr.mxu0 0.0
    %2416 = vmatpush1.msra.mxu0 %v140
    %2417 = vmatprep.subr.mxu0 0.0
    %2418 = vmatpush1.msra.mxu0 %v141
    %2419 = vmatprep.subr.mxu0 0.0
    %2420 = vmatpush1.msra.mxu0 %v142
    %2421 = vmatprep.subr.mxu0 0.0
    %2422 = vmatpush1.msra.mxu0 %v143
    %2423 = vmatprep.subr.mxu0 0.0
    %2424 = vmatpush1.msra.mxu0 %v144
    %2425 = vmatprep.subr.mxu0 0.0
    %2426 = vmatpush1.msra.mxu0 %v145
    %2427 = vmatprep.subr.mxu0 0.0
    %2428 = vmatpush1.msra.mxu0 %v146
    %2429 = vmatprep.subr.mxu0 0.0
    %2430 = vmatpush1.msra.mxu0 %v147
    %2431 = vmatprep.subr.mxu0 0.0
    %2432 = vmatpush1.msra.mxu0 %v148
    %2433 = vmatprep.subr.mxu0 0.0
    %2434 = vmatpush1.msra.mxu0 %v149
    %2435 = vmatprep.subr.mxu0 0.0
    %2436 = vmatpush1.msra.mxu0 %v150
    %2437 = vmatprep.subr.mxu0 0.0
    %2438 = vmatpush1.msra.mxu0 %v151
    %2439 = vmatprep.subr.mxu0 0.0
    %2440 = vmatpush1.msra.mxu0 %v152
    %2441 = vmatprep.subr.mxu0 0.0
    %2442 = vmatpush1.msra.mxu0 %v153
    %2443 = vmatprep.subr.mxu0 0.0
    %2444 = vmatpush1.msra.mxu0 %v154
    %2445 = vmatprep.subr.mxu0 0.0
    %2446 = vmatpush1.msra.mxu0 %v155
    %2447 = vmatprep.subr.mxu0 0.0
    %2448 = vmatpush1.msra.mxu0 %v156
    %2449 = vmatprep.subr.mxu0 0.0
    %2450 = vmatpush1.msra.mxu0 %v157
    %2451 = vmatprep.subr.mxu0 0.0
    %2452 = vmatpush1.msra.mxu0 %v158
    %2453 = vmatprep.subr.mxu0 0.0
    %2454 = vmatpush1.msra.mxu0 %v159
    %2455 = vmatprep.subr.mxu0 0.0
    %2456 = vmatpush1.msra.mxu0 %v160
    %2457 = vmatprep.subr.mxu0 0.0
    %2458 = vmatpush1.msra.mxu0 %v161
    %2459 = vmatprep.subr.mxu0 0.0
    %2460 = vmatpush1.msra.mxu0 %v162
    %2461 = vmatprep.subr.mxu0 0.0
    %2462 = vmatpush1.msra.mxu0 %v163
    %2463 = vmatprep.subr.mxu0 0.0
    %2464 = vmatpush1.msra.mxu0 %v164
    %2465 = vmatprep.subr.mxu0 0.0
    %2466 = vmatpush1.msra.mxu0 %v165
    %2467 = vmatprep.subr.mxu0 0.0
    %2468 = vmatpush1.msra.mxu0 %v166
    %2469 = vmatprep.subr.mxu0 0.0
    %2470 = vmatpush1.msra.mxu0 %v167
    %2471 = vmatprep.mubr.f32.mxu0 %v1705
    %2472 = vmatmul.mubr.f32.gmra.mrb[0].mxu0 %v1703
    %v2473 = vpop.f32.mrb[0].mxu0
    %v2474 = vadd.f32 %v2404, %v2473
    %v2475 = vpop.f32.mrb[0].mxu0
    %2476 = vdwg.mxu0
    %2477 = vmatprep.subr.mxu0 0.0
    %2478 = vmatpush1.msra.mxu0 %v168
    %2479 = vmatprep.subr.mxu0 0.0
    %2480 = vmatpush1.msra.mxu0 %v169
    %2481 = vmatprep.subr.mxu0 0.0
    %2482 = vmatpush1.msra.mxu0 %v170
    %2483 = vmatprep.subr.mxu0 0.0
    %2484 = vmatpush1.msra.mxu0 %v171
    %2485 = vmatprep.subr.mxu0 0.0
    %2486 = vmatpush1.msra.mxu0 %v172
    %2487 = vmatprep.subr.mxu0 0.0
    %2488 = vmatpush1.msra.mxu0 %v173
    %2489 = vmatprep.subr.mxu0 0.0
    %2490 = vmatpush1.msra.mxu0 %v174
    %2491 = vmatprep.subr.mxu0 0.0
    %2492 = vmatpush1.msra.mxu0 %v175
    %2493 = vmatprep.subr.mxu0 0.0
    %2494 = vmatpush1.msra.mxu0 %v176
    %2495 = vmatprep.subr.mxu0 0.0
    %2496 = vmatpush1.msra.mxu0 %v177
    %2497 = vmatprep.subr.mxu0 0.0
    %2498 = vmatpush1.msra.mxu0 %v178
    %2499 = vmatprep.subr.mxu0 0.0
    %2500 = vmatpush1.msra.mxu0 %v179
    %2501 = vmatprep.subr.mxu0 0.0
    %2502 = vmatpush1.msra.mxu0 %v180
    %2503 = vmatprep.subr.mxu0 0.0
    %2504 = vmatpush1.msra.mxu0 %v181
    %2505 = vmatprep.subr.mxu0 0.0
    %2506 = vmatpush1.msra.mxu0 %v182
    %2507 = vmatprep.subr.mxu0 0.0
    %2508 = vmatpush1.msra.mxu0 %v183
    %2509 = vmatprep.subr.mxu0 0.0
    %2510 = vmatpush1.msra.mxu0 %v184
    %2511 = vmatprep.subr.mxu0 0.0
    %2512 = vmatpush1.msra.mxu0 %v185
    %2513 = vmatprep.subr.mxu0 0.0
    %2514 = vmatpush1.msra.mxu0 %v186
    %2515 = vmatprep.subr.mxu0 0.0
    %2516 = vmatpush1.msra.mxu0 %v187
    %2517 = vmatprep.subr.mxu0 0.0
    %2518 = vmatpush1.msra.mxu0 %v188
    %2519 = vmatprep.subr.mxu0 0.0
    %2520 = vmatpush1.msra.mxu0 %v189
    %2521 = vmatprep.subr.mxu0 0.0
    %2522 = vmatpush1.msra.mxu0 %v190
    %2523 = vmatprep.subr.mxu0 0.0
    %2524 = vmatpush1.msra.mxu0 %v191
    %2525 = vmatprep.subr.mxu0 0.0
    %2526 = vmatpush1.msra.mxu0 %v192
    %2527 = vmatprep.subr.mxu0 0.0
    %2528 = vmatpush1.msra.mxu0 %v193
    %2529 = vmatprep.subr.mxu0 0.0
    %2530 = vmatpush1.msra.mxu0 %v194
    %2531 = vmatprep.subr.mxu0 0.0
    %2532 = vmatpush1.msra.mxu0 %v195
    %2533 = vmatprep.subr.mxu0 0.0
    %2534 = vmatpush1.msra.mxu0 %v196
    %2535 = vmatprep.subr.mxu0 0.0
    %2536 = vmatpush1.msra.mxu0 %v197
    %2537 = vmatprep.subr.mxu0 0.0
    %2538 = vmatpush1.msra.mxu0 %v198
    %2539 = vmatprep.subr.mxu0 0.0
    %2540 = vmatpush1.msra.mxu0 %v199
    %2541 = vmatprep.mubr.f32.mxu0 %v1721
    %2542 = vmatmul.mubr.f32.gmra.mrb[0].mxu0 %v1713
    %v2543 = vpop.f32.mrb[0].mxu0
    %v2544 = vadd.f32 %v2474, %v2543
    %v2545 = vpop.f32.mrb[0].mxu0
    %2546 = vdwg.mxu0
    %2547 = vmatprep.subr.mxu0 0.0
    %2548 = vmatpush1.msra.mxu0 %v200
    %2549 = vmatprep.subr.mxu0 0.0
    %2550 = vmatpush1.msra.mxu0 %v201
    %2551 = vmatprep.subr.mxu0 0.0
    %2552 = vmatpush1.msra.mxu0 %v202
    %2553 = vmatprep.subr.mxu0 0.0
    %2554 = vmatpush1.msra.mxu0 %v203
    %2555 = vmatprep.subr.mxu0 0.0
    %2556 = vmatpush1.msra.mxu0 %v204
    %2557 = vmatprep.subr.mxu0 0.0
    %2558 = vmatpush1.msra.mxu0 %v205
    %2559 = vmatprep.subr.mxu0 0.0
    %2560 = vmatpush1.msra.mxu0 %v206
    %2561 = vmatprep.subr.mxu0 0.0
    %2562 = vmatpush1.msra.mxu0 %v207
    %2563 = vmatprep.subr.mxu0 0.0
    %2564 = vmatpush1.msra.mxu0 %v208
    %2565 = vmatprep.subr.mxu0 0.0
    %2566 = vmatpush1.msra.mxu0 %v209
    %2567 = vmatprep.subr.mxu0 0.0
    %2568 = vmatpush1.msra.mxu0 %v210
    %2569 = vmatprep.subr.mxu0 0.0
    %2570 = vmatpush1.msra.mxu0 %v211
    %2571 = vmatprep.subr.mxu0 0.0
    %2572 = vmatpush1.msra.mxu0 %v212
    %2573 = vmatprep.subr.mxu0 0.0
    %2574 = vmatpush1.msra.mxu0 %v213
    %2575 = vmatprep.subr.mxu0 0.0
    %2576 = vmatpush1.msra.mxu0 %v214
    %2577 = vmatprep.subr.mxu0 0.0
    %2578 = vmatpush1.msra.mxu0 %v215
    %2579 = vmatprep.subr.mxu0 0.0
    %2580 = vmatpush1.msra.mxu0 %v216
    %2581 = vmatprep.subr.mxu0 0.0
    %2582 = vmatpush1.msra.mxu0 %v217
    %2583 = vmatprep.subr.mxu0 0.0
    %2584 = vmatpush1.msra.mxu0 %v218
    %2585 = vmatprep.subr.mxu0 0.0
    %2586 = vmatpush1.msra.mxu0 %v219
    %2587 = vmatprep.subr.mxu0 0.0
    %2588 = vmatpush1.msra.mxu0 %v220
    %2589 = vmatprep.subr.mxu0 0.0
    %2590 = vmatpush1.msra.mxu0 %v221
    %2591 = vmatprep.subr.mxu0 0.0
    %2592 = vmatpush1.msra.mxu0 %v222
    %2593 = vmatprep.subr.mxu0 0.0
    %2594 = vmatpush1.msra.mxu0 %v223
    %2595 = vmatprep.subr.mxu0 0.0
    %2596 = vmatpush1.msra.mxu0 %v224
    %2597 = vmatprep.subr.mxu0 0.0
    %2598 = vmatpush1.msra.mxu0 %v225
    %2599 = vmatprep.subr.mxu0 0.0
    %2600 = vmatpush1.msra.mxu0 %v226
    %2601 = vmatprep.subr.mxu0 0.0
    %2602 = vmatpush1.msra.mxu0 %v227
    %2603 = vmatprep.subr.mxu0 0.0
    %2604 = vmatpush1.msra.mxu0 %v228
    %2605 = vmatprep.subr.mxu0 0.0
    %2606 = vmatpush1.msra.mxu0 %v229
    %2607 = vmatprep.subr.mxu0 0.0
    %2608 = vmatpush1.msra.mxu0 %v230
    %2609 = vmatprep.subr.mxu0 0.0
    %2610 = vmatpush1.msra.mxu0 %v231
    %2611 = vmatprep.mubr.f32.mxu0 %v1722
    %2612 = vmatmul.mubr.f32.gmra.mrb[0].mxu0 %v1720
    %v2613 = vpop.f32.mrb[0].mxu0
    %v2614 = vadd.f32 %v2544, %v2613
    %v2615 = vpop.f32.mrb[0].mxu0
    %2616 = vdwg.mxu0
    %2617 = vmatprep.subr.mxu0 0.0
    %2618 = vmatpush1.msra.mxu0 %v232
    %2619 = vmatprep.subr.mxu0 0.0
    %2620 = vmatpush1.msra.mxu0 %v233
    %2621 = vmatprep.subr.mxu0 0.0
    %2622 = vmatpush1.msra.mxu0 %v234
    %2623 = vmatprep.subr.mxu0 0.0
    %2624 = vmatpush1.msra.mxu0 %v235
    %2625 = vmatprep.subr.mxu0 0.0
    %2626 = vmatpush1.msra.mxu0 %v236
    %2627 = vmatprep.subr.mxu0 0.0
    %2628 = vmatpush1.msra.mxu0 %v237
    %2629 = vmatprep.subr.mxu0 0.0
    %2630 = vmatpush1.msra.mxu0 %v238
    %2631 = vmatprep.subr.mxu0 0.0
    %2632 = vmatpush1.msra.mxu0 %v239
    %2633 = vmatprep.subr.mxu0 0.0
    %2634 = vmatpush1.msra.mxu0 %v240
    %2635 = vmatprep.subr.mxu0 0.0
    %2636 = vmatpush1.msra.mxu0 %v241
    %2637 = vmatprep.subr.mxu0 0.0
    %2638 = vmatpush1.msra.mxu0 %v242
    %2639 = vmatprep.subr.mxu0 0.0
    %2640 = vmatpush1.msra.mxu0 %v243
    %2641 = vmatprep.subr.mxu0 0.0
    %2642 = vmatpush1.msra.mxu0 %v244
    %2643 = vmatprep.subr.mxu0 0.0
    %2644 = vmatpush1.msra.mxu0 %v245
    %2645 = vmatprep.subr.mxu0 0.0
    %2646 = vmatpush1.msra.mxu0 %v246
    %2647 = vmatprep.subr.mxu0 0.0
    %2648 = vmatpush1.msra.mxu0 %v247
    %2649 = vmatprep.subr.mxu0 0.0
    %2650 = vmatpush1.msra.mxu0 %v248
    %2651 = vmatprep.subr.mxu0 0.0
    %2652 = vmatpush1.msra.mxu0 %v249
    %2653 = vmatprep.subr.mxu0 0.0
    %2654 = vmatpush1.msra.mxu0 %v250
    %2655 = vmatprep.subr.mxu0 0.0
    %2656 = vmatpush1.msra.mxu0 %v251
    %2657 = vmatprep.subr.mxu0 0.0
    %2658 = vmatpush1.msra.mxu0 %v252
    %2659 = vmatprep.subr.mxu0 0.0
    %2660 = vmatpush1.msra.mxu0 %v253
    %2661 = vmatprep.subr.mxu0 0.0
    %2662 = vmatpush1.msra.mxu0 %v254
    %2663 = vmatprep.subr.mxu0 0.0
    %2664 = vmatpush1.msra.mxu0 %v255
    %2665 = vmatprep.subr.mxu0 0.0
    %2666 = vmatpush1.msra.mxu0 %v256
    %2667 = vmatprep.subr.mxu0 0.0
    %2668 = vmatpush1.msra.mxu0 %v257
    %2669 = vmatprep.subr.mxu0 0.0
    %2670 = vmatpush1.msra.mxu0 %v258
    %2671 = vmatprep.subr.mxu0 0.0
    %2672 = vmatpush1.msra.mxu0 %v259
    %2673 = vmatprep.subr.mxu0 0.0
    %2674 = vmatpush1.msra.mxu0 %v260
    %2675 = vmatprep.subr.mxu0 0.0
    %2676 = vmatpush1.msra.mxu0 %v261
    %2677 = vmatprep.subr.mxu0 0.0
    %2678 = vmatpush1.msra.mxu0 %v262
    %2679 = vmatprep.subr.mxu0 0.0
    %2680 = vmatpush1.msra.mxu0 %v263
    %2681 = vmatprep.mubr.f32.mxu0 %v1738
    %2682 = vmatmul.mubr.f32.gmra.mrb[0].mxu0 %v1730
    %v2683 = vpop.f32.mrb[0].mxu0
    %v2684 = vadd.f32 %v2614, %v2683
    %v2685 = vpop.f32.mrb[0].mxu0
    %2686 = vdwg.mxu0
    %2687 = vmatprep.subr.mxu0 0.0
    %2688 = vmatpush1.msra.mxu0 %v264
    %2689 = vmatprep.subr.mxu0 0.0
    %2690 = vmatpush1.msra.mxu0 %v265
    %2691 = vmatprep.subr.mxu0 0.0
    %2692 = vmatpush1.msra.mxu0 %v266
    %2693 = vmatprep.subr.mxu0 0.0
    %2694 = vmatpush1.msra.mxu0 %v267
    %2695 = vmatprep.subr.mxu0 0.0
    %2696 = vmatpush1.msra.mxu0 %v268
    %2697 = vmatprep.subr.mxu0 0.0
    %2698 = vmatpush1.msra.mxu0 %v269
    %2699 = vmatprep.subr.mxu0 0.0
    %2700 = vmatpush1.msra.mxu0 %v270
    %2701 = vmatprep.subr.mxu0 0.0
    %2702 = vmatpush1.msra.mxu0 %v271
    %2703 = vmatprep.subr.mxu0 0.0
    %2704 = vmatpush1.msra.mxu0 %v272
    %2705 = vmatprep.subr.mxu0 0.0
    %2706 = vmatpush1.msra.mxu0 %v273
    %2707 = vmatprep.subr.mxu0 0.0
    %2708 = vmatpush1.msra.mxu0 %v274
    %2709 = vmatprep.subr.mxu0 0.0
    %2710 = vmatpush1.msra.mxu0 %v275
    %2711 = vmatprep.subr.mxu0 0.0
    %2712 = vmatpush1.msra.mxu0 %v276
    %2713 = vmatprep.subr.mxu0 0.0
    %2714 = vmatpush1.msra.mxu0 %v277
    %2715 = vmatprep.subr.mxu0 0.0
    %2716 = vmatpush1.msra.mxu0 %v278
    %2717 = vmatprep.subr.mxu0 0.0
    %2718 = vmatpush1.msra.mxu0 %v279
    %2719 = vmatprep.subr.mxu0 0.0
    %2720 = vmatpush1.msra.mxu0 %v280
    %2721 = vmatprep.subr.mxu0 0.0
    %2722 = vmatpush1.msra.mxu0 %v281
    %2723 = vmatprep.subr.mxu0 0.0
    %2724 = vmatpush1.msra.mxu0 %v282
    %2725 = vmatprep.subr.mxu0 0.0
    %2726 = vmatpush1.msra.mxu0 %v283
    %2727 = vmatprep.subr.mxu0 0.0
    %2728 = vmatpush1.msra.mxu0 %v284
    %2729 = vmatprep.subr.mxu0 0.0
    %2730 = vmatpush1.msra.mxu0 %v285
    %2731 = vmatprep.subr.mxu0 0.0
    %2732 = vmatpush1.msra.mxu0 %v286
    %2733 = vmatprep.subr.mxu0 0.0
    %2734 = vmatpush1.msra.mxu0 %v287
    %2735 = vmatprep.subr.mxu0 0.0
    %2736 = vmatpush1.msra.mxu0 %v288
    %2737 = vmatprep.subr.mxu0 0.0
    %2738 = vmatpush1.msra.mxu0 %v289
    %2739 = vmatprep.subr.mxu0 0.0
    %2740 = vmatpush1.msra.mxu0 %v290
    %2741 = vmatprep.subr.mxu0 0.0
    %2742 = vmatpush1.msra.mxu0 %v291
    %2743 = vmatprep.subr.mxu0 0.0
    %2744 = vmatpush1.msra.mxu0 %v292
    %2745 = vmatprep.subr.mxu0 0.0
    %2746 = vmatpush1.msra.mxu0 %v293
    %2747 = vmatprep.subr.mxu0 0.0
    %2748 = vmatpush1.msra.mxu0 %v294
    %2749 = vmatprep.subr.mxu0 0.0
    %2750 = vmatpush1.msra.mxu0 %v295
    %2751 = vmatprep.mubr.f32.mxu0 %v1739
    %2752 = vmatmul.mubr.f32.gmra.mrb[0].mxu0 %v1737
    %v2753 = vpop.f32.mrb[0].mxu0
    %v2754 = vadd.f32 %v2684, %v2753
    %v2755 = vpop.f32.mrb[0].mxu0
    %2756 = vdwg.mxu0
    %2757 = vmatprep.subr.mxu0 0.0
    %2758 = vmatpush1.msra.mxu0 %v296
    %2759 = vmatprep.subr.mxu0 0.0
    %2760 = vmatpush1.msra.mxu0 %v297
    %2761 = vmatprep.subr.mxu0 0.0
    %2762 = vmatpush1.msra.mxu0 %v298
    %2763 = vmatprep.subr.mxu0 0.0
    %2764 = vmatpush1.msra.mxu0 %v299
    %2765 = vmatprep.subr.mxu0 0.0
    %2766 = vmatpush1.msra.mxu0 %v300
    %2767 = vmatprep.subr.mxu0 0.0
    %2768 = vmatpush1.msra.mxu0 %v301
    %2769 = vmatprep.subr.mxu0 0.0
    %2770 = vmatpush1.msra.mxu0 %v302
    %2771 = vmatprep.subr.mxu0 0.0
    %2772 = vmatpush1.msra.mxu0 %v303
    %2773 = vmatprep.subr.mxu0 0.0
    %2774 = vmatpush1.msra.mxu0 %v304
    %2775 = vmatprep.subr.mxu0 0.0
    %2776 = vmatpush1.msra.mxu0 %v305
    %2777 = vmatprep.subr.mxu0 0.0
    %2778 = vmatpush1.msra.mxu0 %v306
    %2779 = vmatprep.subr.mxu0 0.0
    %2780 = vmatpush1.msra.mxu0 %v307
    %2781 = vmatprep.subr.mxu0 0.0
    %2782 = vmatpush1.msra.mxu0 %v308
    %2783 = vmatprep.subr.mxu0 0.0
    %2784 = vmatpush1.msra.mxu0 %v309
    %2785 = vmatprep.subr.mxu0 0.0
    %2786 = vmatpush1.msra.mxu0 %v310
    %2787 = vmatprep.subr.mxu0 0.0
    %2788 = vmatpush1.msra.mxu0 %v311
    %2789 = vmatprep.subr.mxu0 0.0
    %2790 = vmatpush1.msra.mxu0 %v312
    %2791 = vmatprep.subr.mxu0 0.0
    %2792 = vmatpush1.msra.mxu0 %v313
    %2793 = vmatprep.subr.mxu0 0.0
    %2794 = vmatpush1.msra.mxu0 %v314
    %2795 = vmatprep.subr.mxu0 0.0
    %2796 = vmatpush1.msra.mxu0 %v315
    %2797 = vmatprep.subr.mxu0 0.0
    %2798 = vmatpush1.msra.mxu0 %v316
    %2799 = vmatprep.subr.mxu0 0.0
    %2800 = vmatpush1.msra.mxu0 %v317
    %2801 = vmatprep.subr.mxu0 0.0
    %2802 = vmatpush1.msra.mxu0 %v318
    %2803 = vmatprep.subr.mxu0 0.0
    %2804 = vmatpush1.msra.mxu0 %v319
    %2805 = vmatprep.subr.mxu0 0.0
    %2806 = vmatpush1.msra.mxu0 %v320
    %2807 = vmatprep.subr.mxu0 0.0
    %2808 = vmatpush1.msra.mxu0 %v321
    %2809 = vmatprep.subr.mxu0 0.0
    %2810 = vmatpush1.msra.mxu0 %v322
    %2811 = vmatprep.subr.mxu0 0.0
    %2812 = vmatpush1.msra.mxu0 %v323
    %2813 = vmatprep.subr.mxu0 0.0
    %2814 = vmatpush1.msra.mxu0 %v324
    %2815 = vmatprep.subr.mxu0 0.0
    %2816 = vmatpush1.msra.mxu0 %v325
    %2817 = vmatprep.subr.mxu0 0.0
    %2818 = vmatpush1.msra.mxu0 %v326
    %2819 = vmatprep.subr.mxu0 0.0
    %2820 = vmatpush1.msra.mxu0 %v327
    %2821 = vmatprep.mubr.f32.mxu0 %v1755
    %2822 = vmatmul.mubr.f32.gmra.mrb[0].mxu0 %v1747
    %v2823 = vpop.f32.mrb[0].mxu0
    %v2824 = vadd.f32 %v2754, %v2823
    %v2825 = vpop.f32.mrb[0].mxu0
    %2826 = vdwg.mxu0
    %2827 = vmatprep.subr.mxu0 0.0
    %2828 = vmatpush1.msra.mxu0 %v328
    %2829 = vmatprep.subr.mxu0 0.0
    %2830 = vmatpush1.msra.mxu0 %v329
    %2831 = vmatprep.subr.mxu0 0.0
    %2832 = vmatpush1.msra.mxu0 %v330
    %2833 = vmatprep.subr.mxu0 0.0
    %2834 = vmatpush1.msra.mxu0 %v331
    %2835 = vmatprep.subr.mxu0 0.0
    %2836 = vmatpush1.msra.mxu0 %v332
    %2837 = vmatprep.subr.mxu0 0.0
    %2838 = vmatpush1.msra.mxu0 %v333
    %2839 = vmatprep.subr.mxu0 0.0
    %2840 = vmatpush1.msra.mxu0 %v334
    %2841 = vmatprep.subr.mxu0 0.0
    %2842 = vmatpush1.msra.mxu0 %v335
    %2843 = vmatprep.subr.mxu0 0.0
    %2844 = vmatpush1.msra.mxu0 %v336
    %2845 = vmatprep.subr.mxu0 0.0
    %2846 = vmatpush1.msra.mxu0 %v337
    %2847 = vmatprep.subr.mxu0 0.0
    %2848 = vmatpush1.msra.mxu0 %v338
    %2849 = vmatprep.subr.mxu0 0.0
    %2850 = vmatpush1.msra.mxu0 %v339
    %2851 = vmatprep.subr.mxu0 0.0
    %2852 = vmatpush1.msra.mxu0 %v340
    %2853 = vmatprep.subr.mxu0 0.0
    %2854 = vmatpush1.msra.mxu0 %v341
    %2855 = vmatprep.subr.mxu0 0.0
    %2856 = vmatpush1.msra.mxu0 %v342
    %2857 = vmatprep.subr.mxu0 0.0
    %2858 = vmatpush1.msra.mxu0 %v343
    %2859 = vmatprep.subr.mxu0 0.0
    %2860 = vmatpush1.msra.mxu0 %v344
    %2861 = vmatprep.subr.mxu0 0.0
    %2862 = vmatpush1.msra.mxu0 %v345
    %2863 = vmatprep.subr.mxu0 0.0
    %2864 = vmatpush1.msra.mxu0 %v346
    %2865 = vmatprep.subr.mxu0 0.0
    %2866 = vmatpush1.msra.mxu0 %v347
    %2867 = vmatprep.subr.mxu0 0.0
    %2868 = vmatpush1.msra.mxu0 %v348
    %2869 = vmatprep.subr.mxu0 0.0
    %2870 = vmatpush1.msra.mxu0 %v349
    %2871 = vmatprep.subr.mxu0 0.0
    %2872 = vmatpush1.msra.mxu0 %v350
    %2873 = vmatprep.subr.mxu0 0.0
    %2874 = vmatpush1.msra.mxu0 %v351
    %2875 = vmatprep.subr.mxu0 0.0
    %2876 = vmatpush1.msra.mxu0 %v352
    %2877 = vmatprep.subr.mxu0 0.0
    %2878 = vmatpush1.msra.mxu0 %v353
    %2879 = vmatprep.subr.mxu0 0.0
    %2880 = vmatpush1.msra.mxu0 %v354
    %2881 = vmatprep.subr.mxu0 0.0
    %2882 = vmatpush1.msra.mxu0 %v355
    %2883 = vmatprep.subr.mxu0 0.0
    %2884 = vmatpush1.msra.mxu0 %v356
    %2885 = vmatprep.subr.mxu0 0.0
    %2886 = vmatpush1.msra.mxu0 %v357
    %2887 = vmatprep.subr.mxu0 0.0
    %2888 = vmatpush1.msra.mxu0 %v358
    %2889 = vmatprep.subr.mxu0 0.0
    %2890 = vmatpush1.msra.mxu0 %v359
    %2891 = vmatprep.mubr.f32.mxu0 %v1756
    %2892 = vmatmul.mubr.f32.gmra.mrb[0].mxu0 %v1754
    %v2893 = vpop.f32.mrb[0].mxu0
    %v2894 = vadd.f32 %v2824, %v2893
    %v2895 = vpop.f32.mrb[0].mxu0
    %2896 = vdwg.mxu0
    %2897 = vmatprep.subr.mxu0 0.0
    %2898 = vmatpush1.msra.mxu0 %v360
    %2899 = vmatprep.subr.mxu0 0.0
    %2900 = vmatpush1.msra.mxu0 %v361
    %2901 = vmatprep.subr.mxu0 0.0
    %2902 = vmatpush1.msra.mxu0 %v362
    %2903 = vmatprep.subr.mxu0 0.0
    %2904 = vmatpush1.msra.mxu0 %v363
    %2905 = vmatprep.subr.mxu0 0.0
    %2906 = vmatpush1.msra.mxu0 %v364
    %2907 = vmatprep.subr.mxu0 0.0
    %2908 = vmatpush1.msra.mxu0 %v365
    %2909 = vmatprep.subr.mxu0 0.0
    %2910 = vmatpush1.msra.mxu0 %v366
    %2911 = vmatprep.subr.mxu0 0.0
    %2912 = vmatpush1.msra.mxu0 %v367
    %2913 = vmatprep.subr.mxu0 0.0
    %2914 = vmatpush1.msra.mxu0 %v368
    %2915 = vmatprep.subr.mxu0 0.0
    %2916 = vmatpush1.msra.mxu0 %v369
    %2917 = vmatprep.subr.mxu0 0.0
    %2918 = vmatpush1.msra.mxu0 %v370
    %2919 = vmatprep.subr.mxu0 0.0
    %2920 = vmatpush1.msra.mxu0 %v371
    %2921 = vmatprep.subr.mxu0 0.0
    %2922 = vmatpush1.msra.mxu0 %v372
    %2923 = vmatprep.subr.mxu0 0.0
    %2924 = vmatpush1.msra.mxu0 %v373
    %2925 = vmatprep.subr.mxu0 0.0
    %2926 = vmatpush1.msra.mxu0 %v374
    %2927 = vmatprep.subr.mxu0 0.0
    %2928 = vmatpush1.msra.mxu0 %v375
    %2929 = vmatprep.subr.mxu0 0.0
    %2930 = vmatpush1.msra.mxu0 %v376
    %2931 = vmatprep.subr.mxu0 0.0
    %2932 = vmatpush1.msra.mxu0 %v377
    %2933 = vmatprep.subr.mxu0 0.0
    %2934 = vmatpush1.msra.mxu0 %v378
    %2935 = vmatprep.subr.mxu0 0.0
    %2936 = vmatpush1.msra.mxu0 %v379
    %2937 = vmatprep.subr.mxu0 0.0
    %2938 = vmatpush1.msra.mxu0 %v380
    %2939 = vmatprep.subr.mxu0 0.0
    %2940 = vmatpush1.msra.mxu0 %v381
    %2941 = vmatprep.subr.mxu0 0.0
    %2942 = vmatpush1.msra.mxu0 %v382
    %2943 = vmatprep.subr.mxu0 0.0
    %2944 = vmatpush1.msra.mxu0 %v383
    %2945 = vmatprep.subr.mxu0 0.0
    %2946 = vmatpush1.msra.mxu0 %v384
    %2947 = vmatprep.subr.mxu0 0.0
    %2948 = vmatpush1.msra.mxu0 %v385
    %2949 = vmatprep.subr.mxu0 0.0
    %2950 = vmatpush1.msra.mxu0 %v386
    %2951 = vmatprep.subr.mxu0 0.0
    %2952 = vmatpush1.msra.mxu0 %v387
    %2953 = vmatprep.subr.mxu0 0.0
    %2954 = vmatpush1.msra.mxu0 %v388
    %2955 = vmatprep.subr.mxu0 0.0
    %2956 = vmatpush1.msra.mxu0 %v389
    %2957 = vmatprep.subr.mxu0 0.0
    %2958 = vmatpush1.msra.mxu0 %v390
    %2959 = vmatprep.subr.mxu0 0.0
    %2960 = vmatpush1.msra.mxu0 %v391
    %2961 = vmatprep.mubr.f32.mxu0 %v1772
    %2962 = vmatmul.mubr.f32.gmra.mrb[0].mxu0 %v1764
    %v2963 = vpop.f32.mrb[0].mxu0
    %v2964 = vadd.f32 %v2894, %v2963
    %v2965 = vpop.f32.mrb[0].mxu0
    %2966 = vdwg.mxu0
    %2967 = vmatprep.subr.mxu0 0.0
    %2968 = vmatpush1.msra.mxu0 %v392
    %2969 = vmatprep.subr.mxu0 0.0
    %2970 = vmatpush1.msra.mxu0 %v393
    %2971 = vmatprep.subr.mxu0 0.0
    %2972 = vmatpush1.msra.mxu0 %v394
    %2973 = vmatprep.subr.mxu0 0.0
    %2974 = vmatpush1.msra.mxu0 %v395
    %2975 = vmatprep.subr.mxu0 0.0
    %2976 = vmatpush1.msra.mxu0 %v396
    %2977 = vmatprep.subr.mxu0 0.0
    %2978 = vmatpush1.msra.mxu0 %v397
    %2979 = vmatprep.subr.mxu0 0.0
    %2980 = vmatpush1.msra.mxu0 %v398
    %2981 = vmatprep.subr.mxu0 0.0
    %2982 = vmatpush1.msra.mxu0 %v399
    %2983 = vmatprep.subr.mxu0 0.0
    %2984 = vmatpush1.msra.mxu0 %v400
    %2985 = vmatprep.subr.mxu0 0.0
    %2986 = vmatpush1.msra.mxu0 %v401
    %2987 = vmatprep.subr.mxu0 0.0
    %2988 = vmatpush1.msra.mxu0 %v402
    %2989 = vmatprep.subr.mxu0 0.0
    %2990 = vmatpush1.msra.mxu0 %v403
    %2991 = vmatprep.subr.mxu0 0.0
    %2992 = vmatpush1.msra.mxu0 %v404
    %2993 = vmatprep.subr.mxu0 0.0
    %2994 = vmatpush1.msra.mxu0 %v405
    %2995 = vmatprep.subr.mxu0 0.0
    %2996 = vmatpush1.msra.mxu0 %v406
    %2997 = vmatprep.subr.mxu0 0.0
    %2998 = vmatpush1.msra.mxu0 %v407
    %2999 = vmatprep.subr.mxu0 0.0
    %3000 = vmatpush1.msra.mxu0 %v408
    %3001 = vmatprep.subr.mxu0 0.0
    %3002 = vmatpush1.msra.mxu0 %v409
    %3003 = vmatprep.subr.mxu0 0.0
    %3004 = vmatpush1.msra.mxu0 %v410
    %3005 = vmatprep.subr.mxu0 0.0
    %3006 = vmatpush1.msra.mxu0 %v411
    %3007 = vmatprep.subr.mxu0 0.0
    %3008 = vmatpush1.msra.mxu0 %v412
    %3009 = vmatprep.subr.mxu0 0.0
    %3010 = vmatpush1.msra.mxu0 %v413
    %3011 = vmatprep.subr.mxu0 0.0
    %3012 = vmatpush1.msra.mxu0 %v414
    %3013 = vmatprep.subr.mxu0 0.0
    %3014 = vmatpush1.msra.mxu0 %v415
    %3015 = vmatprep.subr.mxu0 0.0
    %3016 = vmatpush1.msra.mxu0 %v416
    %3017 = vmatprep.subr.mxu0 0.0
    %3018 = vmatpush1.msra.mxu0 %v417
    %3019 = vmatprep.subr.mxu0 0.0
    %3020 = vmatpush1.msra.mxu0 %v418
    %3021 = vmatprep.subr.mxu0 0.0
    %3022 = vmatpush1.msra.mxu0 %v419
    %3023 = vmatprep.subr.mxu0 0.0
    %3024 = vmatpush1.msra.mxu0 %v420
    %3025 = vmatprep.subr.mxu0 0.0
    %3026 = vmatpush1.msra.mxu0 %v421
    %3027 = vmatprep.subr.mxu0 0.0
    %3028 = vmatpush1.msra.mxu0 %v422
    %3029 = vmatprep.subr.mxu0 0.0
    %3030 = vmatpush1.msra.mxu0 %v423
    %3031 = vmatprep.mubr.f32.mxu0 %v1773
    %3032 = vmatmul.mubr.f32.gmra.mrb[0].mxu0 %v1771
    %v3033 = vpop.f32.mrb[0].mxu0
    %v3034 = vadd.f32 %v2964, %v3033
    %v3035 = vpop.f32.mrb[0].mxu0
    %3036 = vdwg.mxu0
    %3037 = vmatprep.subr.mxu0 0.0
    %3038 = vmatpush1.msra.mxu0 %v424
    %3039 = vmatprep.subr.mxu0 0.0
    %3040 = vmatpush1.msra.mxu0 %v425
    %3041 = vmatprep.subr.mxu0 0.0
    %3042 = vmatpush1.msra.mxu0 %v426
    %3043 = vmatprep.subr.mxu0 0.0
    %3044 = vmatpush1.msra.mxu0 %v427
    %3045 = vmatprep.subr.mxu0 0.0
    %3046 = vmatpush1.msra.mxu0 %v428
    %3047 = vmatprep.subr.mxu0 0.0
    %3048 = vmatpush1.msra.mxu0 %v429
    %3049 = vmatprep.subr.mxu0 0.0
    %3050 = vmatpush1.msra.mxu0 %v430
    %3051 = vmatprep.subr.mxu0 0.0
    %3052 = vmatpush1.msra.mxu0 %v431
    %3053 = vmatprep.subr.mxu0 0.0
    %3054 = vmatpush1.msra.mxu0 %v432
    %3055 = vmatprep.subr.mxu0 0.0
    %3056 = vmatpush1.msra.mxu0 %v433
    %3057 = vmatprep.subr.mxu0 0.0
    %3058 = vmatpush1.msra.mxu0 %v434
    %3059 = vmatprep.subr.mxu0 0.0
    %3060 = vmatpush1.msra.mxu0 %v435
    %3061 = vmatprep.subr.mxu0 0.0
    %3062 = vmatpush1.msra.mxu0 %v436
    %3063 = vmatprep.subr.mxu0 0.0
    %3064 = vmatpush1.msra.mxu0 %v437
    %3065 = vmatprep.subr.mxu0 0.0
    %3066 = vmatpush1.msra.mxu0 %v438
    %3067 = vmatprep.subr.mxu0 0.0
    %3068 = vmatpush1.msra.mxu0 %v439
    %3069 = vmatprep.subr.mxu0 0.0
    %3070 = vmatpush1.msra.mxu0 %v440
    %3071 = vmatprep.subr.mxu0 0.0
    %3072 = vmatpush1.msra.mxu0 %v441
    %3073 = vmatprep.subr.mxu0 0.0
    %3074 = vmatpush1.msra.mxu0 %v442
    %3075 = vmatprep.subr.mxu0 0.0
    %3076 = vmatpush1.msra.mxu0 %v443
    %3077 = vmatprep.subr.mxu0 0.0
    %3078 = vmatpush1.msra.mxu0 %v444
    %3079 = vmatprep.subr.mxu0 0.0
    %3080 = vmatpush1.msra.mxu0 %v445
    %3081 = vmatprep.subr.mxu0 0.0
    %3082 = vmatpush1.msra.mxu0 %v446
    %3083 = vmatprep.subr.mxu0 0.0
    %3084 = vmatpush1.msra.mxu0 %v447
    %3085 = vmatprep.subr.mxu0 0.0
    %3086 = vmatpush1.msra.mxu0 %v448
    %3087 = vmatprep.subr.mxu0 0.0
    %3088 = vmatpush1.msra.mxu0 %v449
    %3089 = vmatprep.subr.mxu0 0.0
    %3090 = vmatpush1.msra.mxu0 %v450
    %3091 = vmatprep.subr.mxu0 0.0
    %3092 = vmatpush1.msra.mxu0 %v451
    %3093 = vmatprep.subr.mxu0 0.0
    %3094 = vmatpush1.msra.mxu0 %v452
    %3095 = vmatprep.subr.mxu0 0.0
    %3096 = vmatpush1.msra.mxu0 %v453
    %3097 = vmatprep.subr.mxu0 0.0
    %3098 = vmatpush1.msra.mxu0 %v454
    %3099 = vmatprep.subr.mxu0 0.0
    %3100 = vmatpush1.msra.mxu0 %v455
    %3101 = vmatprep.mubr.f32.mxu0 %v1789
    %3102 = vmatmul.mubr.f32.gmra.mrb[0].mxu0 %v1781
    %v3103 = vpop.f32.mrb[0].mxu0
    %v3104 = vadd.f32 %v3034, %v3103
    %v3105 = vpop.f32.mrb[0].mxu0
    %3106 = vdwg.mxu0
    %3107 = vmatprep.subr.mxu0 0.0
    %3108 = vmatpush1.msra.mxu0 %v456
    %3109 = vmatprep.subr.mxu0 0.0
    %3110 = vmatpush1.msra.mxu0 %v457
    %3111 = vmatprep.subr.mxu0 0.0
    %3112 = vmatpush1.msra.mxu0 %v458
    %3113 = vmatprep.subr.mxu0 0.0
    %3114 = vmatpush1.msra.mxu0 %v459
    %3115 = vmatprep.subr.mxu0 0.0
    %3116 = vmatpush1.msra.mxu0 %v460
    %3117 = vmatprep.subr.mxu0 0.0
    %3118 = vmatpush1.msra.mxu0 %v461
    %3119 = vmatprep.subr.mxu0 0.0
    %3120 = vmatpush1.msra.mxu0 %v462
    %3121 = vmatprep.subr.mxu0 0.0
    %3122 = vmatpush1.msra.mxu0 %v463
    %3123 = vmatprep.subr.mxu0 0.0
    %3124 = vmatpush1.msra.mxu0 %v464
    %3125 = vmatprep.subr.mxu0 0.0
    %3126 = vmatpush1.msra.mxu0 %v465
    %3127 = vmatprep.subr.mxu0 0.0
    %3128 = vmatpush1.msra.mxu0 %v466
    %3129 = vmatprep.subr.mxu0 0.0
    %3130 = vmatpush1.msra.mxu0 %v467
    %3131 = vmatprep.subr.mxu0 0.0
    %3132 = vmatpush1.msra.mxu0 %v468
    %3133 = vmatprep.subr.mxu0 0.0
    %3134 = vmatpush1.msra.mxu0 %v469
    %3135 = vmatprep.subr.mxu0 0.0
    %3136 = vmatpush1.msra.mxu0 %v470
    %3137 = vmatprep.subr.mxu0 0.0
    %3138 = vmatpush1.msra.mxu0 %v471
    %3139 = vmatprep.subr.mxu0 0.0
    %3140 = vmatpush1.msra.mxu0 %v472
    %3141 = vmatprep.subr.mxu0 0.0
    %3142 = vmatpush1.msra.mxu0 %v473
    %3143 = vmatprep.subr.mxu0 0.0
    %3144 = vmatpush1.msra.mxu0 %v474
    %3145 = vmatprep.subr.mxu0 0.0
    %3146 = vmatpush1.msra.mxu0 %v475
    %3147 = vmatprep.subr.mxu0 0.0
    %3148 = vmatpush1.msra.mxu0 %v476
    %3149 = vmatprep.subr.mxu0 0.0
    %3150 = vmatpush1.msra.mxu0 %v477
    %3151 = vmatprep.subr.mxu0 0.0
    %3152 = vmatpush1.msra.mxu0 %v478
    %3153 = vmatprep.subr.mxu0 0.0
    %3154 = vmatpush1.msra.mxu0 %v479
    %3155 = vmatprep.subr.mxu0 0.0
    %3156 = vmatpush1.msra.mxu0 %v480
    %3157 = vmatprep.subr.mxu0 0.0
    %3158 = vmatpush1.msra.mxu0 %v481
    %3159 = vmatprep.subr.mxu0 0.0
    %3160 = vmatpush1.msra.mxu0 %v482
    %3161 = vmatprep.subr.mxu0 0.0
    %3162 = vmatpush1.msra.mxu0 %v483
    %3163 = vmatprep.subr.mxu0 0.0
    %3164 = vmatpush1.msra.mxu0 %v484
    %3165 = vmatprep.subr.mxu0 0.0
    %3166 = vmatpush1.msra.mxu0 %v485
    %3167 = vmatprep.subr.mxu0 0.0
    %3168 = vmatpush1.msra.mxu0 %v486
    %3169 = vmatprep.subr.mxu0 0.0
    %3170 = vmatpush1.msra.mxu0 %v487
    %3171 = vmatprep.mubr.f32.mxu0 %v1790
    %3172 = vmatmul.mubr.f32.gmra.mrb[0].mxu0 %v1788
    %v3173 = vpop.f32.mrb[0].mxu0
    %v3174 = vadd.f32 %v3104, %v3173
    %v3175 = vpop.f32.mrb[0].mxu0
    %3176 = vdwg.mxu0
    %3177 = vmatprep.subr.mxu0 0.0
    %3178 = vmatpush1.msra.mxu0 %v488
    %3179 = vmatprep.subr.mxu0 0.0
    %3180 = vmatpush1.msra.mxu0 %v489
    %3181 = vmatprep.subr.mxu0 0.0
    %3182 = vmatpush1.msra.mxu0 %v490
    %3183 = vmatprep.subr.mxu0 0.0
    %3184 = vmatpush1.msra.mxu0 %v491
    %3185 = vmatprep.subr.mxu0 0.0
    %3186 = vmatpush1.msra.mxu0 %v492
    %3187 = vmatprep.subr.mxu0 0.0
    %3188 = vmatpush1.msra.mxu0 %v493
    %3189 = vmatprep.subr.mxu0 0.0
    %3190 = vmatpush1.msra.mxu0 %v494
    %3191 = vmatprep.subr.mxu0 0.0
    %3192 = vmatpush1.msra.mxu0 %v495
    %3193 = vmatprep.subr.mxu0 0.0
    %3194 = vmatpush1.msra.mxu0 %v496
    %3195 = vmatprep.subr.mxu0 0.0
    %3196 = vmatpush1.msra.mxu0 %v497
    %3197 = vmatprep.subr.mxu0 0.0
    %3198 = vmatpush1.msra.mxu0 %v498
    %3199 = vmatprep.subr.mxu0 0.0
    %3200 = vmatpush1.msra.mxu0 %v499
    %3201 = vmatprep.subr.mxu0 0.0
    %3202 = vmatpush1.msra.mxu0 %v500
    %3203 = vmatprep.subr.mxu0 0.0
    %3204 = vmatpush1.msra.mxu0 %v501
    %3205 = vmatprep.subr.mxu0 0.0
    %3206 = vmatpush1.msra.mxu0 %v502
    %3207 = vmatprep.subr.mxu0 0.0
    %3208 = vmatpush1.msra.mxu0 %v503
    %3209 = vmatprep.subr.mxu0 0.0
    %3210 = vmatpush1.msra.mxu0 %v504
    %3211 = vmatprep.subr.mxu0 0.0
    %3212 = vmatpush1.msra.mxu0 %v505
    %3213 = vmatprep.subr.mxu0 0.0
    %3214 = vmatpush1.msra.mxu0 %v506
    %3215 = vmatprep.subr.mxu0 0.0
    %3216 = vmatpush1.msra.mxu0 %v507
    %3217 = vmatprep.subr.mxu0 0.0
    %3218 = vmatpush1.msra.mxu0 %v508
    %3219 = vmatprep.subr.mxu0 0.0
    %3220 = vmatpush1.msra.mxu0 %v509
    %3221 = vmatprep.subr.mxu0 0.0
    %3222 = vmatpush1.msra.mxu0 %v510
    %3223 = vmatprep.subr.mxu0 0.0
    %3224 = vmatpush1.msra.mxu0 %v511
    %3225 = vmatprep.subr.mxu0 0.0
    %3226 = vmatpush1.msra.mxu0 %v512
    %3227 = vmatprep.subr.mxu0 0.0
    %3228 = vmatpush1.msra.mxu0 %v513
    %3229 = vmatprep.subr.mxu0 0.0
    %3230 = vmatpush1.msra.mxu0 %v514
    %3231 = vmatprep.subr.mxu0 0.0
    %3232 = vmatpush1.msra.mxu0 %v515
    %3233 = vmatprep.subr.mxu0 0.0
    %3234 = vmatpush1.msra.mxu0 %v516
    %3235 = vmatprep.subr.mxu0 0.0
    %3236 = vmatpush1.msra.mxu0 %v517
    %3237 = vmatprep.subr.mxu0 0.0
    %3238 = vmatpush1.msra.mxu0 %v518
    %3239 = vmatprep.subr.mxu0 0.0
    %3240 = vmatpush1.msra.mxu0 %v519
    %3241 = vmatprep.mubr.f32.mxu0 %v1806
    %3242 = vmatmul.mubr.f32.gmra.mrb[0].mxu0 %v1798
    %v3243 = vpop.f32.mrb[0].mxu0
    %v3244 = vadd.f32 %v3174, %v3243
    %v3245 = vpop.f32.mrb[0].mxu0
    %3246 = vdwg.mxu0
    %3247 = vmatprep.subr.mxu0 0.0
    %3248 = vmatpush1.msra.mxu0 %v520
    %3249 = vmatprep.subr.mxu0 0.0
    %3250 = vmatpush1.msra.mxu0 %v521
    %3251 = vmatprep.subr.mxu0 0.0
    %3252 = vmatpush1.msra.mxu0 %v522
    %3253 = vmatprep.subr.mxu0 0.0
    %3254 = vmatpush1.msra.mxu0 %v523
    %3255 = vmatprep.subr.mxu0 0.0
    %3256 = vmatpush1.msra.mxu0 %v524
    %3257 = vmatprep.subr.mxu0 0.0
    %3258 = vmatpush1.msra.mxu0 %v525
    %3259 = vmatprep.subr.mxu0 0.0
    %3260 = vmatpush1.msra.mxu0 %v526
    %3261 = vmatprep.subr.mxu0 0.0
    %3262 = vmatpush1.msra.mxu0 %v527
    %3263 = vmatprep.subr.mxu0 0.0
    %3264 = vmatpush1.msra.mxu0 %v528
    %3265 = vmatprep.subr.mxu0 0.0
    %3266 = vmatpush1.msra.mxu0 %v529
    %3267 = vmatprep.subr.mxu0 0.0
    %3268 = vmatpush1.msra.mxu0 %v530
    %3269 = vmatprep.subr.mxu0 0.0
    %3270 = vmatpush1.msra.mxu0 %v531
    %3271 = vmatprep.subr.mxu0 0.0
    %3272 = vmatpush1.msra.mxu0 %v532
    %3273 = vmatprep.subr.mxu0 0.0
    %3274 = vmatpush1.msra.mxu0 %v533
    %3275 = vmatprep.subr.mxu0 0.0
    %3276 = vmatpush1.msra.mxu0 %v534
    %3277 = vmatprep.subr.mxu0 0.0
    %3278 = vmatpush1.msra.mxu0 %v535
    %3279 = vmatprep.subr.mxu0 0.0
    %3280 = vmatpush1.msra.mxu0 %v536
    %3281 = vmatprep.subr.mxu0 0.0
    %3282 = vmatpush1.msra.mxu0 %v537
    %3283 = vmatprep.subr.mxu0 0.0
    %3284 = vmatpush1.msra.mxu0 %v538
    %3285 = vmatprep.subr.mxu0 0.0
    %3286 = vmatpush1.msra.mxu0 %v539
    %3287 = vmatprep.subr.mxu0 0.0
    %3288 = vmatpush1.msra.mxu0 %v540
    %3289 = vmatprep.subr.mxu0 0.0
    %3290 = vmatpush1.msra.mxu0 %v541
    %3291 = vmatprep.subr.mxu0 0.0
    %3292 = vmatpush1.msra.mxu0 %v542
    %3293 = vmatprep.subr.mxu0 0.0
    %3294 = vmatpush1.msra.mxu0 %v543
    %3295 = vmatprep.subr.mxu0 0.0
    %3296 = vmatpush1.msra.mxu0 %v544
    %3297 = vmatprep.subr.mxu0 0.0
    %3298 = vmatpush1.msra.mxu0 %v545
    %3299 = vmatprep.subr.mxu0 0.0
    %3300 = vmatpush1.msra.mxu0 %v546
    %3301 = vmatprep.subr.mxu0 0.0
    %3302 = vmatpush1.msra.mxu0 %v547
    %3303 = vmatprep.subr.mxu0 0.0
    %3304 = vmatpush1.msra.mxu0 %v548
    %3305 = vmatprep.subr.mxu0 0.0
    %3306 = vmatpush1.msra.mxu0 %v549
    %3307 = vmatprep.subr.mxu0 0.0
    %3308 = vmatpush1.msra.mxu0 %v550
    %3309 = vmatprep.subr.mxu0 0.0
    %3310 = vmatpush1.msra.mxu0 %v551
    %3311 = vmatprep.mubr.f32.mxu0 %v1807
    %3312 = vmatmul.mubr.f32.gmra.mrb[0].mxu0 %v1805
    %v3313 = vpop.f32.mrb[0].mxu0
    %v3314 = vadd.f32 %v3244, %v3313
    %v3315 = vpop.f32.mrb[0].mxu0
    %3316 = vdwg.mxu0
    %3317 = vmatprep.subr.mxu0 0.0
    %3318 = vmatpush1.msra.mxu0 %v552
    %3319 = vmatprep.subr.mxu0 0.0
    %3320 = vmatpush1.msra.mxu0 %v553
    %3321 = vmatprep.subr.mxu0 0.0
    %3322 = vmatpush1.msra.mxu0 %v554
    %3323 = vmatprep.subr.mxu0 0.0
    %3324 = vmatpush1.msra.mxu0 %v555
    %3325 = vmatprep.subr.mxu0 0.0
    %3326 = vmatpush1.msra.mxu0 %v556
    %3327 = vmatprep.subr.mxu0 0.0
    %3328 = vmatpush1.msra.mxu0 %v557
    %3329 = vmatprep.subr.mxu0 0.0
    %3330 = vmatpush1.msra.mxu0 %v558
    %3331 = vmatprep.subr.mxu0 0.0
    %3332 = vmatpush1.msra.mxu0 %v559
    %3333 = vmatprep.subr.mxu0 0.0
    %3334 = vmatpush1.msra.mxu0 %v560
    %3335 = vmatprep.subr.mxu0 0.0
    %3336 = vmatpush1.msra.mxu0 %v561
    %3337 = vmatprep.subr.mxu0 0.0
    %3338 = vmatpush1.msra.mxu0 %v562
    %3339 = vmatprep.subr.mxu0 0.0
    %3340 = vmatpush1.msra.mxu0 %v563
    %3341 = vmatprep.subr.mxu0 0.0
    %3342 = vmatpush1.msra.mxu0 %v564
    %3343 = vmatprep.subr.mxu0 0.0
    %3344 = vmatpush1.msra.mxu0 %v565
    %3345 = vmatprep.subr.mxu0 0.0
    %3346 = vmatpush1.msra.mxu0 %v566
    %3347 = vmatprep.subr.mxu0 0.0
    %3348 = vmatpush1.msra.mxu0 %v567
    %3349 = vmatprep.subr.mxu0 0.0
    %3350 = vmatpush1.msra.mxu0 %v568
    %3351 = vmatprep.subr.mxu0 0.0
    %3352 = vmatpush1.msra.mxu0 %v569
    %3353 = vmatprep.subr.mxu0 0.0
    %3354 = vmatpush1.msra.mxu0 %v570
    %3355 = vmatprep.subr.mxu0 0.0
    %3356 = vmatpush1.msra.mxu0 %v571
    %3357 = vmatprep.subr.mxu0 0.0
    %3358 = vmatpush1.msra.mxu0 %v572
    %3359 = vmatprep.subr.mxu0 0.0
    %3360 = vmatpush1.msra.mxu0 %v573
    %3361 = vmatprep.subr.mxu0 0.0
    %3362 = vmatpush1.msra.mxu0 %v574
    %3363 = vmatprep.subr.mxu0 0.0
    %3364 = vmatpush1.msra.mxu0 %v575
    %3365 = vmatprep.subr.mxu0 0.0
    %3366 = vmatpush1.msra.mxu0 %v576
    %3367 = vmatprep.subr.mxu0 0.0
    %3368 = vmatpush1.msra.mxu0 %v577
    %3369 = vmatprep.subr.mxu0 0.0
    %3370 = vmatpush1.msra.mxu0 %v578
    %3371 = vmatprep.subr.mxu0 0.0
    %3372 = vmatpush1.msra.mxu0 %v579
    %3373 = vmatprep.subr.mxu0 0.0
    %3374 = vmatpush1.msra.mxu0 %v580
    %3375 = vmatprep.subr.mxu0 0.0
    %3376 = vmatpush1.msra.mxu0 %v581
    %3377 = vmatprep.subr.mxu0 0.0
    %3378 = vmatpush1.msra.mxu0 %v582
    %3379 = vmatprep.subr.mxu0 0.0
    %3380 = vmatpush1.msra.mxu0 %v583
    %3381 = vmatprep.mubr.f32.mxu0 %v1823
    %3382 = vmatmul.mubr.f32.gmra.mrb[0].mxu0 %v1815
    %v3383 = vpop.f32.mrb[0].mxu0
    %v3384 = vadd.f32 %v3314, %v3383
    %v3385 = vpop.f32.mrb[0].mxu0
    %3386 = vdwg.mxu0
    %3387 = vmatprep.subr.mxu0 0.0
    %3388 = vmatpush1.msra.mxu0 %v584
    %3389 = vmatprep.subr.mxu0 0.0
    %3390 = vmatpush1.msra.mxu0 %v585
    %3391 = vmatprep.subr.mxu0 0.0
    %3392 = vmatpush1.msra.mxu0 %v586
    %3393 = vmatprep.subr.mxu0 0.0
    %3394 = vmatpush1.msra.mxu0 %v587
    %3395 = vmatprep.subr.mxu0 0.0
    %3396 = vmatpush1.msra.mxu0 %v588
    %3397 = vmatprep.subr.mxu0 0.0
    %3398 = vmatpush1.msra.mxu0 %v589
    %3399 = vmatprep.subr.mxu0 0.0
    %3400 = vmatpush1.msra.mxu0 %v590
    %3401 = vmatprep.subr.mxu0 0.0
    %3402 = vmatpush1.msra.mxu0 %v591
    %3403 = vmatprep.subr.mxu0 0.0
    %3404 = vmatpush1.msra.mxu0 %v592
    %3405 = vmatprep.subr.mxu0 0.0
    %3406 = vmatpush1.msra.mxu0 %v593
    %3407 = vmatprep.subr.mxu0 0.0
    %3408 = vmatpush1.msra.mxu0 %v594
    %3409 = vmatprep.subr.mxu0 0.0
    %3410 = vmatpush1.msra.mxu0 %v595
    %3411 = vmatprep.subr.mxu0 0.0
    %3412 = vmatpush1.msra.mxu0 %v596
    %3413 = vmatprep.subr.mxu0 0.0
    %3414 = vmatpush1.msra.mxu0 %v597
    %3415 = vmatprep.subr.mxu0 0.0
    %3416 = vmatpush1.msra.mxu0 %v598
    %3417 = vmatprep.subr.mxu0 0.0
    %3418 = vmatpush1.msra.mxu0 %v599
    %3419 = vmatprep.subr.mxu0 0.0
    %3420 = vmatpush1.msra.mxu0 %v600
    %3421 = vmatprep.subr.mxu0 0.0
    %3422 = vmatpush1.msra.mxu0 %v601
    %3423 = vmatprep.subr.mxu0 0.0
    %3424 = vmatpush1.msra.mxu0 %v602
    %3425 = vmatprep.subr.mxu0 0.0
    %3426 = vmatpush1.msra.mxu0 %v603
    %3427 = vmatprep.subr.mxu0 0.0
    %3428 = vmatpush1.msra.mxu0 %v604
    %3429 = vmatprep.subr.mxu0 0.0
    %3430 = vmatpush1.msra.mxu0 %v605
    %3431 = vmatprep.subr.mxu0 0.0
    %3432 = vmatpush1.msra.mxu0 %v606
    %3433 = vmatprep.subr.mxu0 0.0
    %3434 = vmatpush1.msra.mxu0 %v607
    %3435 = vmatprep.subr.mxu0 0.0
    %3436 = vmatpush1.msra.mxu0 %v608
    %3437 = vmatprep.subr.mxu0 0.0
    %3438 = vmatpush1.msra.mxu0 %v609
    %3439 = vmatprep.subr.mxu0 0.0
    %3440 = vmatpush1.msra.mxu0 %v610
    %3441 = vmatprep.subr.mxu0 0.0
    %3442 = vmatpush1.msra.mxu0 %v611
    %3443 = vmatprep.subr.mxu0 0.0
    %3444 = vmatpush1.msra.mxu0 %v612
    %3445 = vmatprep.subr.mxu0 0.0
    %3446 = vmatpush1.msra.mxu0 %v613
    %3447 = vmatprep.subr.mxu0 0.0
    %3448 = vmatpush1.msra.mxu0 %v614
    %3449 = vmatprep.subr.mxu0 0.0
    %3450 = vmatpush1.msra.mxu0 %v615
    %3451 = vmatprep.mubr.f32.mxu0 %v1824
    %3452 = vmatmul.mubr.f32.gmra.mrb[0].mxu0 %v1822
    %v3453 = vpop.f32.mrb[0].mxu0
    %v3454 = vadd.f32 %v3384, %v3453
    %v3455 = vpop.f32.mrb[0].mxu0
    %3456 = vdwg.mxu0
    %3457 = vmatprep.subr.mxu0 0.0
    %3458 = vmatpush1.msra.mxu0 %v616
    %3459 = vmatprep.subr.mxu0 0.0
    %3460 = vmatpush1.msra.mxu0 %v617
    %3461 = vmatprep.subr.mxu0 0.0
    %3462 = vmatpush1.msra.mxu0 %v618
    %3463 = vmatprep.subr.mxu0 0.0
    %3464 = vmatpush1.msra.mxu0 %v619
    %3465 = vmatprep.subr.mxu0 0.0
    %3466 = vmatpush1.msra.mxu0 %v620
    %3467 = vmatprep.subr.mxu0 0.0
    %3468 = vmatpush1.msra.mxu0 %v621
    %3469 = vmatprep.subr.mxu0 0.0
    %3470 = vmatpush1.msra.mxu0 %v622
    %3471 = vmatprep.subr.mxu0 0.0
    %3472 = vmatpush1.msra.mxu0 %v623
    %3473 = vmatprep.subr.mxu0 0.0
    %3474 = vmatpush1.msra.mxu0 %v624
    %3475 = vmatprep.subr.mxu0 0.0
    %3476 = vmatpush1.msra.mxu0 %v625
    %3477 = vmatprep.subr.mxu0 0.0
    %3478 = vmatpush1.msra.mxu0 %v626
    %3479 = vmatprep.subr.mxu0 0.0
    %3480 = vmatpush1.msra.mxu0 %v627
    %3481 = vmatprep.subr.mxu0 0.0
    %3482 = vmatpush1.msra.mxu0 %v628
    %3483 = vmatprep.subr.mxu0 0.0
    %3484 = vmatpush1.msra.mxu0 %v629
    %3485 = vmatprep.subr.mxu0 0.0
    %3486 = vmatpush1.msra.mxu0 %v630
    %3487 = vmatprep.subr.mxu0 0.0
    %3488 = vmatpush1.msra.mxu0 %v631
    %3489 = vmatprep.subr.mxu0 0.0
    %3490 = vmatpush1.msra.mxu0 %v632
    %3491 = vmatprep.subr.mxu0 0.0
    %3492 = vmatpush1.msra.mxu0 %v633
    %3493 = vmatprep.subr.mxu0 0.0
    %3494 = vmatpush1.msra.mxu0 %v634
    %3495 = vmatprep.subr.mxu0 0.0
    %3496 = vmatpush1.msra.mxu0 %v635
    %3497 = vmatprep.subr.mxu0 0.0
    %3498 = vmatpush1.msra.mxu0 %v636
    %3499 = vmatprep.subr.mxu0 0.0
    %3500 = vmatpush1.msra.mxu0 %v637
    %3501 = vmatprep.subr.mxu0 0.0
    %3502 = vmatpush1.msra.mxu0 %v638
    %3503 = vmatprep.subr.mxu0 0.0
    %3504 = vmatpush1.msra.mxu0 %v639
    %3505 = vmatprep.subr.mxu0 0.0
    %3506 = vmatpush1.msra.mxu0 %v640
    %3507 = vmatprep.subr.mxu0 0.0
    %3508 = vmatpush1.msra.mxu0 %v641
    %3509 = vmatprep.subr.mxu0 0.0
    %3510 = vmatpush1.msra.mxu0 %v642
    %3511 = vmatprep.subr.mxu0 0.0
    %3512 = vmatpush1.msra.mxu0 %v643
    %3513 = vmatprep.subr.mxu0 0.0
    %3514 = vmatpush1.msra.mxu0 %v644
    %3515 = vmatprep.subr.mxu0 0.0
    %3516 = vmatpush1.msra.mxu0 %v645
    %3517 = vmatprep.subr.mxu0 0.0
    %3518 = vmatpush1.msra.mxu0 %v646
    %3519 = vmatprep.subr.mxu0 0.0
    %3520 = vmatpush1.msra.mxu0 %v647
    %3521 = vmatprep.mubr.f32.mxu0 %v1840
    %3522 = vmatmul.mubr.f32.gmra.mrb[0].mxu0 %v1832
    %v3523 = vpop.f32.mrb[0].mxu0
    %v3524 = vadd.f32 %v3454, %v3523
    %v3525 = vpop.f32.mrb[0].mxu0
    %3526 = vdwg.mxu0
    %3527 = vmatprep.subr.mxu0 0.0
    %3528 = vmatpush1.msra.mxu0 %v648
    %3529 = vmatprep.subr.mxu0 0.0
    %3530 = vmatpush1.msra.mxu0 %v649
    %3531 = vmatprep.subr.mxu0 0.0
    %3532 = vmatpush1.msra.mxu0 %v650
    %3533 = vmatprep.subr.mxu0 0.0
    %3534 = vmatpush1.msra.mxu0 %v651
    %3535 = vmatprep.subr.mxu0 0.0
    %3536 = vmatpush1.msra.mxu0 %v652
    %3537 = vmatprep.subr.mxu0 0.0
    %3538 = vmatpush1.msra.mxu0 %v653
    %3539 = vmatprep.subr.mxu0 0.0
    %3540 = vmatpush1.msra.mxu0 %v654
    %3541 = vmatprep.subr.mxu0 0.0
    %3542 = vmatpush1.msra.mxu0 %v655
    %3543 = vmatprep.subr.mxu0 0.0
    %3544 = vmatpush1.msra.mxu0 %v656
    %3545 = vmatprep.subr.mxu0 0.0
    %3546 = vmatpush1.msra.mxu0 %v657
    %3547 = vmatprep.subr.mxu0 0.0
    %3548 = vmatpush1.msra.mxu0 %v658
    %3549 = vmatprep.subr.mxu0 0.0
    %3550 = vmatpush1.msra.mxu0 %v659
    %3551 = vmatprep.subr.mxu0 0.0
    %3552 = vmatpush1.msra.mxu0 %v660
    %3553 = vmatprep.subr.mxu0 0.0
    %3554 = vmatpush1.msra.mxu0 %v661
    %3555 = vmatprep.subr.mxu0 0.0
    %3556 = vmatpush1.msra.mxu0 %v662
    %3557 = vmatprep.subr.mxu0 0.0
    %3558 = vmatpush1.msra.mxu0 %v663
    %3559 = vmatprep.subr.mxu0 0.0
    %3560 = vmatpush1.msra.mxu0 %v664
    %3561 = vmatprep.subr.mxu0 0.0
    %3562 = vmatpush1.msra.mxu0 %v665
    %3563 = vmatprep.subr.mxu0 0.0
    %3564 = vmatpush1.msra.mxu0 %v666
    %3565 = vmatprep.subr.mxu0 0.0
    %3566 = vmatpush1.msra.mxu0 %v667
    %3567 = vmatprep.subr.mxu0 0.0
    %3568 = vmatpush1.msra.mxu0 %v668
    %3569 = vmatprep.subr.mxu0 0.0
    %3570 = vmatpush1.msra.mxu0 %v669
    %3571 = vmatprep.subr.mxu0 0.0
    %3572 = vmatpush1.msra.mxu0 %v670
    %3573 = vmatprep.subr.mxu0 0.0
    %3574 = vmatpush1.msra.mxu0 %v671
    %3575 = vmatprep.subr.mxu0 0.0
    %3576 = vmatpush1.msra.mxu0 %v672
    %3577 = vmatprep.subr.mxu0 0.0
    %3578 = vmatpush1.msra.mxu0 %v673
    %3579 = vmatprep.subr.mxu0 0.0
    %3580 = vmatpush1.msra.mxu0 %v674
    %3581 = vmatprep.subr.mxu0 0.0
    %3582 = vmatpush1.msra.mxu0 %v675
    %3583 = vmatprep.subr.mxu0 0.0
    %3584 = vmatpush1.msra.mxu0 %v676
    %3585 = vmatprep.subr.mxu0 0.0
    %3586 = vmatpush1.msra.mxu0 %v677
    %3587 = vmatprep.subr.mxu0 0.0
    %3588 = vmatpush1.msra.mxu0 %v678
    %3589 = vmatprep.subr.mxu0 0.0
    %3590 = vmatpush1.msra.mxu0 %v679
    %3591 = vmatprep.mubr.f32.mxu0 %v1841
    %3592 = vmatmul.mubr.f32.gmra.mrb[0].mxu0 %v1839
    %v3593 = vpop.f32.mrb[0].mxu0
    %v3594 = vadd.f32 %v3524, %v3593
    %v3595 = vpop.f32.mrb[0].mxu0
    %3596 = vdwg.mxu0
    %3597 = vmatprep.subr.mxu0 0.0
    %3598 = vmatpush1.msra.mxu0 %v680
    %3599 = vmatprep.subr.mxu0 0.0
    %3600 = vmatpush1.msra.mxu0 %v681
    %3601 = vmatprep.subr.mxu0 0.0
    %3602 = vmatpush1.msra.mxu0 %v682
    %3603 = vmatprep.subr.mxu0 0.0
    %3604 = vmatpush1.msra.mxu0 %v683
    %3605 = vmatprep.subr.mxu0 0.0
    %3606 = vmatpush1.msra.mxu0 %v684
    %3607 = vmatprep.subr.mxu0 0.0
    %3608 = vmatpush1.msra.mxu0 %v685
    %3609 = vmatprep.subr.mxu0 0.0
    %3610 = vmatpush1.msra.mxu0 %v686
    %3611 = vmatprep.subr.mxu0 0.0
    %3612 = vmatpush1.msra.mxu0 %v687
    %3613 = vmatprep.subr.mxu0 0.0
    %3614 = vmatpush1.msra.mxu0 %v688
    %3615 = vmatprep.subr.mxu0 0.0
    %3616 = vmatpush1.msra.mxu0 %v689
    %3617 = vmatprep.subr.mxu0 0.0
    %3618 = vmatpush1.msra.mxu0 %v690
    %3619 = vmatprep.subr.mxu0 0.0
    %3620 = vmatpush1.msra.mxu0 %v691
    %3621 = vmatprep.subr.mxu0 0.0
    %3622 = vmatpush1.msra.mxu0 %v692
    %3623 = vmatprep.subr.mxu0 0.0
    %3624 = vmatpush1.msra.mxu0 %v693
    %3625 = vmatprep.subr.mxu0 0.0
    %3626 = vmatpush1.msra.mxu0 %v694
    %3627 = vmatprep.subr.mxu0 0.0
    %3628 = vmatpush1.msra.mxu0 %v695
    %3629 = vmatprep.subr.mxu0 0.0
    %3630 = vmatpush1.msra.mxu0 %v696
    %3631 = vmatprep.subr.mxu0 0.0
    %3632 = vmatpush1.msra.mxu0 %v697
    %3633 = vmatprep.subr.mxu0 0.0
    %3634 = vmatpush1.msra.mxu0 %v698
    %3635 = vmatprep.subr.mxu0 0.0
    %3636 = vmatpush1.msra.mxu0 %v699
    %3637 = vmatprep.subr.mxu0 0.0
    %3638 = vmatpush1.msra.mxu0 %v700
    %3639 = vmatprep.subr.mxu0 0.0
    %3640 = vmatpush1.msra.mxu0 %v701
    %3641 = vmatprep.subr.mxu0 0.0
    %3642 = vmatpush1.msra.mxu0 %v702
    %3643 = vmatprep.subr.mxu0 0.0
    %3644 = vmatpush1.msra.mxu0 %v703
    %3645 = vmatprep.subr.mxu0 0.0
    %3646 = vmatpush1.msra.mxu0 %v704
    %3647 = vmatprep.subr.mxu0 0.0
    %3648 = vmatpush1.msra.mxu0 %v705
    %3649 = vmatprep.subr.mxu0 0.0
    %3650 = vmatpush1.msra.mxu0 %v706
    %3651 = vmatprep.subr.mxu0 0.0
    %3652 = vmatpush1.msra.mxu0 %v707
    %3653 = vmatprep.subr.mxu0 0.0
    %3654 = vmatpush1.msra.mxu0 %v708
    %3655 = vmatprep.subr.mxu0 0.0
    %3656 = vmatpush1.msra.mxu0 %v709
    %3657 = vmatprep.subr.mxu0 0.0
    %3658 = vmatpush1.msra.mxu0 %v710
    %3659 = vmatprep.subr.mxu0 0.0
    %3660 = vmatpush1.msra.mxu0 %v711
    %3661 = vmatprep.mubr.f32.mxu0 %v1857
    %3662 = vmatmul.mubr.f32.gmra.mrb[0].mxu0 %v1849
    %v3663 = vpop.f32.mrb[0].mxu0
    %v3664 = vadd.f32 %v3594, %v3663
    %v3665 = vpop.f32.mrb[0].mxu0
    %3666 = vdwg.mxu0
    %3667 = vmatprep.subr.mxu0 0.0
    %3668 = vmatpush1.msra.mxu0 %v712
    %3669 = vmatprep.subr.mxu0 0.0
    %3670 = vmatpush1.msra.mxu0 %v713
    %3671 = vmatprep.subr.mxu0 0.0
    %3672 = vmatpush1.msra.mxu0 %v714
    %3673 = vmatprep.subr.mxu0 0.0
    %3674 = vmatpush1.msra.mxu0 %v715
    %3675 = vmatprep.subr.mxu0 0.0
    %3676 = vmatpush1.msra.mxu0 %v716
    %3677 = vmatprep.subr.mxu0 0.0
    %3678 = vmatpush1.msra.mxu0 %v717
    %3679 = vmatprep.subr.mxu0 0.0
    %3680 = vmatpush1.msra.mxu0 %v718
    %3681 = vmatprep.subr.mxu0 0.0
    %3682 = vmatpush1.msra.mxu0 %v719
    %3683 = vmatprep.subr.mxu0 0.0
    %3684 = vmatpush1.msra.mxu0 %v720
    %3685 = vmatprep.subr.mxu0 0.0
    %3686 = vmatpush1.msra.mxu0 %v721
    %3687 = vmatprep.subr.mxu0 0.0
    %3688 = vmatpush1.msra.mxu0 %v722
    %3689 = vmatprep.subr.mxu0 0.0
    %3690 = vmatpush1.msra.mxu0 %v723
    %3691 = vmatprep.subr.mxu0 0.0
    %3692 = vmatpush1.msra.mxu0 %v724
    %3693 = vmatprep.subr.mxu0 0.0
    %3694 = vmatpush1.msra.mxu0 %v725
    %3695 = vmatprep.subr.mxu0 0.0
    %3696 = vmatpush1.msra.mxu0 %v726
    %3697 = vmatprep.subr.mxu0 0.0
    %3698 = vmatpush1.msra.mxu0 %v727
    %3699 = vmatprep.subr.mxu0 0.0
    %3700 = vmatpush1.msra.mxu0 %v728
    %3701 = vmatprep.subr.mxu0 0.0
    %3702 = vmatpush1.msra.mxu0 %v729
    %3703 = vmatprep.subr.mxu0 0.0
    %3704 = vmatpush1.msra.mxu0 %v730
    %3705 = vmatprep.subr.mxu0 0.0
    %3706 = vmatpush1.msra.mxu0 %v731
    %3707 = vmatprep.subr.mxu0 0.0
    %3708 = vmatpush1.msra.mxu0 %v732
    %3709 = vmatprep.subr.mxu0 0.0
    %3710 = vmatpush1.msra.mxu0 %v733
    %3711 = vmatprep.subr.mxu0 0.0
    %3712 = vmatpush1.msra.mxu0 %v734
    %3713 = vmatprep.subr.mxu0 0.0
    %3714 = vmatpush1.msra.mxu0 %v735
    %3715 = vmatprep.subr.mxu0 0.0
    %3716 = vmatpush1.msra.mxu0 %v736
    %3717 = vmatprep.subr.mxu0 0.0
    %3718 = vmatpush1.msra.mxu0 %v737
    %3719 = vmatprep.subr.mxu0 0.0
    %3720 = vmatpush1.msra.mxu0 %v738
    %3721 = vmatprep.subr.mxu0 0.0
    %3722 = vmatpush1.msra.mxu0 %v739
    %3723 = vmatprep.subr.mxu0 0.0
    %3724 = vmatpush1.msra.mxu0 %v740
    %3725 = vmatprep.subr.mxu0 0.0
    %3726 = vmatpush1.msra.mxu0 %v741
    %3727 = vmatprep.subr.mxu0 0.0
    %3728 = vmatpush1.msra.mxu0 %v742
    %3729 = vmatprep.subr.mxu0 0.0
    %3730 = vmatpush1.msra.mxu0 %v743
    %3731 = vmatprep.mubr.f32.mxu0 %v1858
    %3732 = vmatmul.mubr.f32.gmra.mrb[0].mxu0 %v1856
    %v3733 = vpop.f32.mrb[0].mxu0
    %v3734 = vadd.f32 %v3664, %v3733
    %v3735 = vpop.f32.mrb[0].mxu0
    %3736 = vdwg.mxu0
    %3737 = vmatprep.subr.mxu0 0.0
    %3738 = vmatpush1.msra.mxu0 %v744
    %3739 = vmatprep.subr.mxu0 0.0
    %3740 = vmatpush1.msra.mxu0 %v745
    %3741 = vmatprep.subr.mxu0 0.0
    %3742 = vmatpush1.msra.mxu0 %v746
    %3743 = vmatprep.subr.mxu0 0.0
    %3744 = vmatpush1.msra.mxu0 %v747
    %3745 = vmatprep.subr.mxu0 0.0
    %3746 = vmatpush1.msra.mxu0 %v748
    %3747 = vmatprep.subr.mxu0 0.0
    %3748 = vmatpush1.msra.mxu0 %v749
    %3749 = vmatprep.subr.mxu0 0.0
    %3750 = vmatpush1.msra.mxu0 %v750
    %3751 = vmatprep.subr.mxu0 0.0
    %3752 = vmatpush1.msra.mxu0 %v751
    %3753 = vmatprep.subr.mxu0 0.0
    %3754 = vmatpush1.msra.mxu0 %v752
    %3755 = vmatprep.subr.mxu0 0.0
    %3756 = vmatpush1.msra.mxu0 %v753
    %3757 = vmatprep.subr.mxu0 0.0
    %3758 = vmatpush1.msra.mxu0 %v754
    %3759 = vmatprep.subr.mxu0 0.0
    %3760 = vmatpush1.msra.mxu0 %v755
    %3761 = vmatprep.subr.mxu0 0.0
    %3762 = vmatpush1.msra.mxu0 %v756
    %3763 = vmatprep.subr.mxu0 0.0
    %3764 = vmatpush1.msra.mxu0 %v757
    %3765 = vmatprep.subr.mxu0 0.0
    %3766 = vmatpush1.msra.mxu0 %v758
    %3767 = vmatprep.subr.mxu0 0.0
    %3768 = vmatpush1.msra.mxu0 %v759
    %3769 = vmatprep.subr.mxu0 0.0
    %3770 = vmatpush1.msra.mxu0 %v760
    %3771 = vmatprep.subr.mxu0 0.0
    %3772 = vmatpush1.msra.mxu0 %v761
    %3773 = vmatprep.subr.mxu0 0.0
    %3774 = vmatpush1.msra.mxu0 %v762
    %3775 = vmatprep.subr.mxu0 0.0
    %3776 = vmatpush1.msra.mxu0 %v763
    %3777 = vmatprep.subr.mxu0 0.0
    %3778 = vmatpush1.msra.mxu0 %v764
    %3779 = vmatprep.subr.mxu0 0.0
    %3780 = vmatpush1.msra.mxu0 %v765
    %3781 = vmatprep.subr.mxu0 0.0
    %3782 = vmatpush1.msra.mxu0 %v766
    %3783 = vmatprep.subr.mxu0 0.0
    %3784 = vmatpush1.msra.mxu0 %v767
    %3785 = vmatprep.subr.mxu0 0.0
    %3786 = vmatpush1.msra.mxu0 %v768
    %3787 = vmatprep.subr.mxu0 0.0
    %3788 = vmatpush1.msra.mxu0 %v769
    %3789 = vmatprep.subr.mxu0 0.0
    %3790 = vmatpush1.msra.mxu0 %v770
    %3791 = vmatprep.subr.mxu0 0.0
    %3792 = vmatpush1.msra.mxu0 %v771
    %3793 = vmatprep.subr.mxu0 0.0
    %3794 = vmatpush1.msra.mxu0 %v772
    %3795 = vmatprep.subr.mxu0 0.0
    %3796 = vmatpush1.msra.mxu0 %v773
    %3797 = vmatprep.subr.mxu0 0.0
    %3798 = vmatpush1.msra.mxu0 %v774
    %3799 = vmatprep.subr.mxu0 0.0
    %3800 = vmatpush1.msra.mxu0 %v775
    %3801 = vmatprep.mubr.f32.mxu0 %v1874
    %3802 = vmatmul.mubr.f32.gmra.mrb[0].mxu0 %v1866
    %v3803 = vpop.f32.mrb[0].mxu0
    %v3804 = vadd.f32 %v3734, %v3803
    %v3805 = vpop.f32.mrb[0].mxu0
    %3806 = vdwg.mxu0
    %3807 = vmatprep.subr.mxu0 0.0
    %3808 = vmatpush1.msra.mxu0 %v776
    %3809 = vmatprep.subr.mxu0 0.0
    %3810 = vmatpush1.msra.mxu0 %v777
    %3811 = vmatprep.subr.mxu0 0.0
    %3812 = vmatpush1.msra.mxu0 %v778
    %3813 = vmatprep.subr.mxu0 0.0
    %3814 = vmatpush1.msra.mxu0 %v779
    %3815 = vmatprep.subr.mxu0 0.0
    %3816 = vmatpush1.msra.mxu0 %v780
    %3817 = vmatprep.subr.mxu0 0.0
    %3818 = vmatpush1.msra.mxu0 %v781
    %3819 = vmatprep.subr.mxu0 0.0
    %3820 = vmatpush1.msra.mxu0 %v782
    %3821 = vmatprep.subr.mxu0 0.0
    %3822 = vmatpush1.msra.mxu0 %v783
    %3823 = vmatprep.subr.mxu0 0.0
    %3824 = vmatpush1.msra.mxu0 %v784
    %3825 = vmatprep.subr.mxu0 0.0
    %3826 = vmatpush1.msra.mxu0 %v785
    %3827 = vmatprep.subr.mxu0 0.0
    %3828 = vmatpush1.msra.mxu0 %v786
    %3829 = vmatprep.subr.mxu0 0.0
    %3830 = vmatpush1.msra.mxu0 %v787
    %3831 = vmatprep.subr.mxu0 0.0
    %3832 = vmatpush1.msra.mxu0 %v788
    %3833 = vmatprep.subr.mxu0 0.0
    %3834 = vmatpush1.msra.mxu0 %v789
    %3835 = vmatprep.subr.mxu0 0.0
    %3836 = vmatpush1.msra.mxu0 %v790
    %3837 = vmatprep.subr.mxu0 0.0
    %3838 = vmatpush1.msra.mxu0 %v791
    %3839 = vmatprep.subr.mxu0 0.0
    %3840 = vmatpush1.msra.mxu0 %v792
    %3841 = vmatprep.subr.mxu0 0.0
    %3842 = vmatpush1.msra.mxu0 %v793
    %3843 = vmatprep.subr.mxu0 0.0
    %3844 = vmatpush1.msra.mxu0 %v794
    %3845 = vmatprep.subr.mxu0 0.0
    %3846 = vmatpush1.msra.mxu0 %v795
    %3847 = vmatprep.subr.mxu0 0.0
    %3848 = vmatpush1.msra.mxu0 %v796
    %3849 = vmatprep.subr.mxu0 0.0
    %3850 = vmatpush1.msra.mxu0 %v797
    %3851 = vmatprep.subr.mxu0 0.0
    %3852 = vmatpush1.msra.mxu0 %v798
    %3853 = vmatprep.subr.mxu0 0.0
    %3854 = vmatpush1.msra.mxu0 %v799
    %3855 = vmatprep.subr.mxu0 0.0
    %3856 = vmatpush1.msra.mxu0 %v800
    %3857 = vmatprep.subr.mxu0 0.0
    %3858 = vmatpush1.msra.mxu0 %v801
    %3859 = vmatprep.subr.mxu0 0.0
    %3860 = vmatpush1.msra.mxu0 %v802
    %3861 = vmatprep.subr.mxu0 0.0
    %3862 = vmatpush1.msra.mxu0 %v803
    %3863 = vmatprep.subr.mxu0 0.0
    %3864 = vmatpush1.msra.mxu0 %v804
    %3865 = vmatprep.subr.mxu0 0.0
    %3866 = vmatpush1.msra.mxu0 %v805
    %3867 = vmatprep.subr.mxu0 0.0
    %3868 = vmatpush1.msra.mxu0 %v806
    %3869 = vmatprep.subr.mxu0 0.0
    %3870 = vmatpush1.msra.mxu0 %v807
    %3871 = vmatprep.mubr.f32.mxu0 %v1875
    %3872 = vmatmul.mubr.f32.gmra.mrb[0].mxu0 %v1873
    %v3873 = vpop.f32.mrb[0].mxu0
    %v3874 = vadd.f32 %v3804, %v3873
    %v3875 = vpop.f32.mrb[0].mxu0
    %3876 = vdwg.mxu0
    %3877 = vmatprep.subr.mxu0 0.0
    %3878 = vmatpush1.msra.mxu0 %v808
    %3879 = vmatprep.subr.mxu0 0.0
    %3880 = vmatpush1.msra.mxu0 %v809
    %3881 = vmatprep.subr.mxu0 0.0
    %3882 = vmatpush1.msra.mxu0 %v810
    %3883 = vmatprep.subr.mxu0 0.0
    %3884 = vmatpush1.msra.mxu0 %v811
    %3885 = vmatprep.subr.mxu0 0.0
    %3886 = vmatpush1.msra.mxu0 %v812
    %3887 = vmatprep.subr.mxu0 0.0
    %3888 = vmatpush1.msra.mxu0 %v813
    %3889 = vmatprep.subr.mxu0 0.0
    %3890 = vmatpush1.msra.mxu0 %v814
    %3891 = vmatprep.subr.mxu0 0.0
    %3892 = vmatpush1.msra.mxu0 %v815
    %3893 = vmatprep.subr.mxu0 0.0
    %3894 = vmatpush1.msra.mxu0 %v816
    %3895 = vmatprep.subr.mxu0 0.0
    %3896 = vmatpush1.msra.mxu0 %v817
    %3897 = vmatprep.subr.mxu0 0.0
    %3898 = vmatpush1.msra.mxu0 %v818
    %3899 = vmatprep.subr.mxu0 0.0
    %3900 = vmatpush1.msra.mxu0 %v819
    %3901 = vmatprep.subr.mxu0 0.0
    %3902 = vmatpush1.msra.mxu0 %v820
    %3903 = vmatprep.subr.mxu0 0.0
    %3904 = vmatpush1.msra.mxu0 %v821
    %3905 = vmatprep.subr.mxu0 0.0
    %3906 = vmatpush1.msra.mxu0 %v822
    %3907 = vmatprep.subr.mxu0 0.0
    %3908 = vmatpush1.msra.mxu0 %v823
    %3909 = vmatprep.subr.mxu0 0.0
    %3910 = vmatpush1.msra.mxu0 %v824
    %3911 = vmatprep.subr.mxu0 0.0
    %3912 = vmatpush1.msra.mxu0 %v825
    %3913 = vmatprep.subr.mxu0 0.0
    %3914 = vmatpush1.msra.mxu0 %v826
    %3915 = vmatprep.subr.mxu0 0.0
    %3916 = vmatpush1.msra.mxu0 %v827
    %3917 = vmatprep.subr.mxu0 0.0
    %3918 = vmatpush1.msra.mxu0 %v828
    %3919 = vmatprep.subr.mxu0 0.0
    %3920 = vmatpush1.msra.mxu0 %v829
    %3921 = vmatprep.subr.mxu0 0.0
    %3922 = vmatpush1.msra.mxu0 %v830
    %3923 = vmatprep.subr.mxu0 0.0
    %3924 = vmatpush1.msra.mxu0 %v831
    %3925 = vmatprep.subr.mxu0 0.0
    %3926 = vmatpush1.msra.mxu0 %v832
    %3927 = vmatprep.subr.mxu0 0.0
    %3928 = vmatpush1.msra.mxu0 %v833
    %3929 = vmatprep.subr.mxu0 0.0
    %3930 = vmatpush1.msra.mxu0 %v834
    %3931 = vmatprep.subr.mxu0 0.0
    %3932 = vmatpush1.msra.mxu0 %v835
    %3933 = vmatprep.subr.mxu0 0.0
    %3934 = vmatpush1.msra.mxu0 %v836
    %3935 = vmatprep.subr.mxu0 0.0
    %3936 = vmatpush1.msra.mxu0 %v837
    %3937 = vmatprep.subr.mxu0 0.0
    %3938 = vmatpush1.msra.mxu0 %v838
    %3939 = vmatprep.subr.mxu0 0.0
    %3940 = vmatpush1.msra.mxu0 %v839
    %3941 = vmatprep.mubr.f32.mxu0 %v1891
    %3942 = vmatmul.mubr.f32.gmra.mrb[0].mxu0 %v1883
    %v3943 = vpop.f32.mrb[0].mxu0
    %v3944 = vadd.f32 %v3874, %v3943
    %v3945 = vpop.f32.mrb[0].mxu0
    %3946 = vdwg.mxu0
    %3947 = vmatprep.subr.mxu0 0.0
    %3948 = vmatpush1.msra.mxu0 %v840
    %3949 = vmatprep.subr.mxu0 0.0
    %3950 = vmatpush1.msra.mxu0 %v841
    %3951 = vmatprep.subr.mxu0 0.0
    %3952 = vmatpush1.msra.mxu0 %v842
    %3953 = vmatprep.subr.mxu0 0.0
    %3954 = vmatpush1.msra.mxu0 %v843
    %3955 = vmatprep.subr.mxu0 0.0
    %3956 = vmatpush1.msra.mxu0 %v844
    %3957 = vmatprep.subr.mxu0 0.0
    %3958 = vmatpush1.msra.mxu0 %v845
    %3959 = vmatprep.subr.mxu0 0.0
    %3960 = vmatpush1.msra.mxu0 %v846
    %3961 = vmatprep.subr.mxu0 0.0
    %3962 = vmatpush1.msra.mxu0 %v847
    %3963 = vmatprep.subr.mxu0 0.0
    %3964 = vmatpush1.msra.mxu0 %v848
    %3965 = vmatprep.subr.mxu0 0.0
    %3966 = vmatpush1.msra.mxu0 %v849
    %3967 = vmatprep.subr.mxu0 0.0
    %3968 = vmatpush1.msra.mxu0 %v850
    %3969 = vmatprep.subr.mxu0 0.0
    %3970 = vmatpush1.msra.mxu0 %v851
    %3971 = vmatprep.subr.mxu0 0.0
    %3972 = vmatpush1.msra.mxu0 %v852
    %3973 = vmatprep.subr.mxu0 0.0
    %3974 = vmatpush1.msra.mxu0 %v853
    %3975 = vmatprep.subr.mxu0 0.0
    %3976 = vmatpush1.msra.mxu0 %v854
    %3977 = vmatprep.subr.mxu0 0.0
    %3978 = vmatpush1.msra.mxu0 %v855
    %3979 = vmatprep.subr.mxu0 0.0
    %3980 = vmatpush1.msra.mxu0 %v856
    %3981 = vmatprep.subr.mxu0 0.0
    %3982 = vmatpush1.msra.mxu0 %v857
    %3983 = vmatprep.subr.mxu0 0.0
    %3984 = vmatpush1.msra.mxu0 %v858
    %3985 = vmatprep.subr.mxu0 0.0
    %3986 = vmatpush1.msra.mxu0 %v859
    %3987 = vmatprep.subr.mxu0 0.0
    %3988 = vmatpush1.msra.mxu0 %v860
    %3989 = vmatprep.subr.mxu0 0.0
    %3990 = vmatpush1.msra.mxu0 %v861
    %3991 = vmatprep.subr.mxu0 0.0
    %3992 = vmatpush1.msra.mxu0 %v862
    %3993 = vmatprep.subr.mxu0 0.0
    %3994 = vmatpush1.msra.mxu0 %v863
    %3995 = vmatprep.subr.mxu0 0.0
    %3996 = vmatpush1.msra.mxu0 %v864
    %3997 = vmatprep.subr.mxu0 0.0
    %3998 = vmatpush1.msra.mxu0 %v865
    %3999 = vmatprep.subr.mxu0 0.0
    %4000 = vmatpush1.msra.mxu0 %v866
    %4001 = vmatprep.subr.mxu0 0.0
    %4002 = vmatpush1.msra.mxu0 %v867
    %4003 = vmatprep.subr.mxu0 0.0
    %4004 = vmatpush1.msra.mxu0 %v868
    %4005 = vmatprep.subr.mxu0 0.0
    %4006 = vmatpush1.msra.mxu0 %v869
    %4007 = vmatprep.subr.mxu0 0.0
    %4008 = vmatpush1.msra.mxu0 %v870
    %4009 = vmatprep.subr.mxu0 0.0
    %4010 = vmatpush1.msra.mxu0 %v871
    %4011 = vmatprep.mubr.f32.mxu0 %v1892
    %4012 = vmatmul.mubr.f32.gmra.mrb[0].mxu0 %v1890
    %v4013 = vpop.f32.mrb[0].mxu0
    %v4014 = vadd.f32 %v3944, %v4013
    %v4015 = vpop.f32.mrb[0].mxu0
    %4016 = vdwg.mxu0
    %4017 = vmatprep.subr.mxu0 0.0
    %4018 = vmatpush1.msra.mxu0 %v872
    %4019 = vmatprep.subr.mxu0 0.0
    %4020 = vmatpush1.msra.mxu0 %v873
    %4021 = vmatprep.subr.mxu0 0.0
    %4022 = vmatpush1.msra.mxu0 %v874
    %4023 = vmatprep.subr.mxu0 0.0
    %4024 = vmatpush1.msra.mxu0 %v875
    %4025 = vmatprep.subr.mxu0 0.0
    %4026 = vmatpush1.msra.mxu0 %v876
    %4027 = vmatprep.subr.mxu0 0.0
    %4028 = vmatpush1.msra.mxu0 %v877
    %4029 = vmatprep.subr.mxu0 0.0
    %4030 = vmatpush1.msra.mxu0 %v878
    %4031 = vmatprep.subr.mxu0 0.0
    %4032 = vmatpush1.msra.mxu0 %v879
    %4033 = vmatprep.subr.mxu0 0.0
    %4034 = vmatpush1.msra.mxu0 %v880
    %4035 = vmatprep.subr.mxu0 0.0
    %4036 = vmatpush1.msra.mxu0 %v881
    %4037 = vmatprep.subr.mxu0 0.0
    %4038 = vmatpush1.msra.mxu0 %v882
    %4039 = vmatprep.subr.mxu0 0.0
    %4040 = vmatpush1.msra.mxu0 %v883
    %4041 = vmatprep.subr.mxu0 0.0
    %4042 = vmatpush1.msra.mxu0 %v884
    %4043 = vmatprep.subr.mxu0 0.0
    %4044 = vmatpush1.msra.mxu0 %v885
    %4045 = vmatprep.subr.mxu0 0.0
    %4046 = vmatpush1.msra.mxu0 %v886
    %4047 = vmatprep.subr.mxu0 0.0
    %4048 = vmatpush1.msra.mxu0 %v887
    %4049 = vmatprep.subr.mxu0 0.0
    %4050 = vmatpush1.msra.mxu0 %v888
    %4051 = vmatprep.subr.mxu0 0.0
    %4052 = vmatpush1.msra.mxu0 %v889
    %4053 = vmatprep.subr.mxu0 0.0
    %4054 = vmatpush1.msra.mxu0 %v890
    %4055 = vmatprep.subr.mxu0 0.0
    %4056 = vmatpush1.msra.mxu0 %v891
    %4057 = vmatprep.subr.mxu0 0.0
    %4058 = vmatpush1.msra.mxu0 %v892
    %4059 = vmatprep.subr.mxu0 0.0
    %4060 = vmatpush1.msra.mxu0 %v893
    %4061 = vmatprep.subr.mxu0 0.0
    %4062 = vmatpush1.msra.mxu0 %v894
    %4063 = vmatprep.subr.mxu0 0.0
    %4064 = vmatpush1.msra.mxu0 %v895
    %4065 = vmatprep.subr.mxu0 0.0
    %4066 = vmatpush1.msra.mxu0 %v896
    %4067 = vmatprep.subr.mxu0 0.0
    %4068 = vmatpush1.msra.mxu0 %v897
    %4069 = vmatprep.subr.mxu0 0.0
    %4070 = vmatpush1.msra.mxu0 %v898
    %4071 = vmatprep.subr.mxu0 0.0
    %4072 = vmatpush1.msra.mxu0 %v899
    %4073 = vmatprep.subr.mxu0 0.0
    %4074 = vmatpush1.msra.mxu0 %v900
    %4075 = vmatprep.subr.mxu0 0.0
    %4076 = vmatpush1.msra.mxu0 %v901
    %4077 = vmatprep.subr.mxu0 0.0
    %4078 = vmatpush1.msra.mxu0 %v902
    %4079 = vmatprep.subr.mxu0 0.0
    %4080 = vmatpush1.msra.mxu0 %v903
    %4081 = vmatprep.mubr.f32.mxu0 %v1908
    %4082 = vmatmul.mubr.f32.gmra.mrb[0].mxu0 %v1900
    %v4083 = vpop.f32.mrb[0].mxu0
    %v4084 = vadd.f32 %v4014, %v4083
    %v4085 = vpop.f32.mrb[0].mxu0
    %4086 = vdwg.mxu0
    %4087 = vmatprep.subr.mxu0 0.0
    %4088 = vmatpush1.msra.mxu0 %v904
    %4089 = vmatprep.subr.mxu0 0.0
    %4090 = vmatpush1.msra.mxu0 %v905
    %4091 = vmatprep.subr.mxu0 0.0
    %4092 = vmatpush1.msra.mxu0 %v906
    %4093 = vmatprep.subr.mxu0 0.0
    %4094 = vmatpush1.msra.mxu0 %v907
    %4095 = vmatprep.subr.mxu0 0.0
    %4096 = vmatpush1.msra.mxu0 %v908
    %4097 = vmatprep.subr.mxu0 0.0
    %4098 = vmatpush1.msra.mxu0 %v909
    %4099 = vmatprep.subr.mxu0 0.0
    %4100 = vmatpush1.msra.mxu0 %v910
    %4101 = vmatprep.subr.mxu0 0.0
    %4102 = vmatpush1.msra.mxu0 %v911
    %4103 = vmatprep.subr.mxu0 0.0
    %4104 = vmatpush1.msra.mxu0 %v912
    %4105 = vmatprep.subr.mxu0 0.0
    %4106 = vmatpush1.msra.mxu0 %v913
    %4107 = vmatprep.subr.mxu0 0.0
    %4108 = vmatpush1.msra.mxu0 %v914
    %4109 = vmatprep.subr.mxu0 0.0
    %4110 = vmatpush1.msra.mxu0 %v915
    %4111 = vmatprep.subr.mxu0 0.0
    %4112 = vmatpush1.msra.mxu0 %v916
    %4113 = vmatprep.subr.mxu0 0.0
    %4114 = vmatpush1.msra.mxu0 %v917
    %4115 = vmatprep.subr.mxu0 0.0
    %4116 = vmatpush1.msra.mxu0 %v918
    %4117 = vmatprep.subr.mxu0 0.0
    %4118 = vmatpush1.msra.mxu0 %v919
    %4119 = vmatprep.subr.mxu0 0.0
    %4120 = vmatpush1.msra.mxu0 %v920
    %4121 = vmatprep.subr.mxu0 0.0
    %4122 = vmatpush1.msra.mxu0 %v921
    %4123 = vmatprep.subr.mxu0 0.0
    %4124 = vmatpush1.msra.mxu0 %v922
    %4125 = vmatprep.subr.mxu0 0.0
    %4126 = vmatpush1.msra.mxu0 %v923
    %4127 = vmatprep.subr.mxu0 0.0
    %4128 = vmatpush1.msra.mxu0 %v924
    %4129 = vmatprep.subr.mxu0 0.0
    %4130 = vmatpush1.msra.mxu0 %v925
    %4131 = vmatprep.subr.mxu0 0.0
    %4132 = vmatpush1.msra.mxu0 %v926
    %4133 = vmatprep.subr.mxu0 0.0
    %4134 = vmatpush1.msra.mxu0 %v927
    %4135 = vmatprep.subr.mxu0 0.0
    %4136 = vmatpush1.msra.mxu0 %v928
    %4137 = vmatprep.subr.mxu0 0.0
    %4138 = vmatpush1.msra.mxu0 %v929
    %4139 = vmatprep.subr.mxu0 0.0
    %4140 = vmatpush1.msra.mxu0 %v930
    %4141 = vmatprep.subr.mxu0 0.0
    %4142 = vmatpush1.msra.mxu0 %v931
    %4143 = vmatprep.subr.mxu0 0.0
    %4144 = vmatpush1.msra.mxu0 %v932
    %4145 = vmatprep.subr.mxu0 0.0
    %4146 = vmatpush1.msra.mxu0 %v933
    %4147 = vmatprep.subr.mxu0 0.0
    %4148 = vmatpush1.msra.mxu0 %v934
    %4149 = vmatprep.subr.mxu0 0.0
    %4150 = vmatpush1.msra.mxu0 %v935
    %4151 = vmatprep.mubr.f32.mxu0 %v1909
    %4152 = vmatmul.mubr.f32.gmra.mrb[0].mxu0 %v1907
    %v4153 = vpop.f32.mrb[0].mxu0
    %v4154 = vadd.f32 %v4084, %v4153
    %v4155 = vpop.f32.mrb[0].mxu0
    %4156 = vdwg.mxu0
    %4157 = vmatprep.subr.mxu0 0.0
    %4158 = vmatpush1.msra.mxu0 %v936
    %4159 = vmatprep.subr.mxu0 0.0
    %4160 = vmatpush1.msra.mxu0 %v937
    %4161 = vmatprep.subr.mxu0 0.0
    %4162 = vmatpush1.msra.mxu0 %v938
    %4163 = vmatprep.subr.mxu0 0.0
    %4164 = vmatpush1.msra.mxu0 %v939
    %4165 = vmatprep.subr.mxu0 0.0
    %4166 = vmatpush1.msra.mxu0 %v940
    %4167 = vmatprep.subr.mxu0 0.0
    %4168 = vmatpush1.msra.mxu0 %v941
    %4169 = vmatprep.subr.mxu0 0.0
    %4170 = vmatpush1.msra.mxu0 %v942
    %4171 = vmatprep.subr.mxu0 0.0
    %4172 = vmatpush1.msra.mxu0 %v943
    %4173 = vmatprep.subr.mxu0 0.0
    %4174 = vmatpush1.msra.mxu0 %v944
    %4175 = vmatprep.subr.mxu0 0.0
    %4176 = vmatpush1.msra.mxu0 %v945
    %4177 = vmatprep.subr.mxu0 0.0
    %4178 = vmatpush1.msra.mxu0 %v946
    %4179 = vmatprep.subr.mxu0 0.0
    %4180 = vmatpush1.msra.mxu0 %v947
    %4181 = vmatprep.subr.mxu0 0.0
    %4182 = vmatpush1.msra.mxu0 %v948
    %4183 = vmatprep.subr.mxu0 0.0
    %4184 = vmatpush1.msra.mxu0 %v949
    %4185 = vmatprep.subr.mxu0 0.0
    %4186 = vmatpush1.msra.mxu0 %v950
    %4187 = vmatprep.subr.mxu0 0.0
    %4188 = vmatpush1.msra.mxu0 %v951
    %4189 = vmatprep.subr.mxu0 0.0
    %4190 = vmatpush1.msra.mxu0 %v952
    %4191 = vmatprep.subr.mxu0 0.0
    %4192 = vmatpush1.msra.mxu0 %v953
    %4193 = vmatprep.subr.mxu0 0.0
    %4194 = vmatpush1.msra.mxu0 %v954
    %4195 = vmatprep.subr.mxu0 0.0
    %4196 = vmatpush1.msra.mxu0 %v955
    %4197 = vmatprep.subr.mxu0 0.0
    %4198 = vmatpush1.msra.mxu0 %v956
    %4199 = vmatprep.subr.mxu0 0.0
    %4200 = vmatpush1.msra.mxu0 %v957
    %4201 = vmatprep.subr.mxu0 0.0
    %4202 = vmatpush1.msra.mxu0 %v958
    %4203 = vmatprep.subr.mxu0 0.0
    %4204 = vmatpush1.msra.mxu0 %v959
    %4205 = vmatprep.subr.mxu0 0.0
    %4206 = vmatpush1.msra.mxu0 %v960
    %4207 = vmatprep.subr.mxu0 0.0
    %4208 = vmatpush1.msra.mxu0 %v961
    %4209 = vmatprep.subr.mxu0 0.0
    %4210 = vmatpush1.msra.mxu0 %v962
    %4211 = vmatprep.subr.mxu0 0.0
    %4212 = vmatpush1.msra.mxu0 %v963
    %4213 = vmatprep.subr.mxu0 0.0
    %4214 = vmatpush1.msra.mxu0 %v964
    %4215 = vmatprep.subr.mxu0 0.0
    %4216 = vmatpush1.msra.mxu0 %v965
    %4217 = vmatprep.subr.mxu0 0.0
    %4218 = vmatpush1.msra.mxu0 %v966
    %4219 = vmatprep.subr.mxu0 0.0
    %4220 = vmatpush1.msra.mxu0 %v967
    %4221 = vmatprep.mubr.f32.mxu0 %v1925
    %4222 = vmatmul.mubr.f32.gmra.mrb[0].mxu0 %v1917
    %v4223 = vpop.f32.mrb[0].mxu0
    %v4224 = vadd.f32 %v4154, %v4223
    %v4225 = vpop.f32.mrb[0].mxu0
    %4226 = vdwg.mxu0
    %4227 = vmatprep.subr.mxu0 0.0
    %4228 = vmatpush1.msra.mxu0 %v968
    %4229 = vmatprep.subr.mxu0 0.0
    %4230 = vmatpush1.msra.mxu0 %v969
    %4231 = vmatprep.subr.mxu0 0.0
    %4232 = vmatpush1.msra.mxu0 %v970
    %4233 = vmatprep.subr.mxu0 0.0
    %4234 = vmatpush1.msra.mxu0 %v971
    %4235 = vmatprep.subr.mxu0 0.0
    %4236 = vmatpush1.msra.mxu0 %v972
    %4237 = vmatprep.subr.mxu0 0.0
    %4238 = vmatpush1.msra.mxu0 %v973
    %4239 = vmatprep.subr.mxu0 0.0
    %4240 = vmatpush1.msra.mxu0 %v974
    %4241 = vmatprep.subr.mxu0 0.0
    %4242 = vmatpush1.msra.mxu0 %v975
    %4243 = vmatprep.subr.mxu0 0.0
    %4244 = vmatpush1.msra.mxu0 %v976
    %4245 = vmatprep.subr.mxu0 0.0
    %4246 = vmatpush1.msra.mxu0 %v977
    %4247 = vmatprep.subr.mxu0 0.0
    %4248 = vmatpush1.msra.mxu0 %v978
    %4249 = vmatprep.subr.mxu0 0.0
    %4250 = vmatpush1.msra.mxu0 %v979
    %4251 = vmatprep.subr.mxu0 0.0
    %4252 = vmatpush1.msra.mxu0 %v980
    %4253 = vmatprep.subr.mxu0 0.0
    %4254 = vmatpush1.msra.mxu0 %v981
    %4255 = vmatprep.subr.mxu0 0.0
    %4256 = vmatpush1.msra.mxu0 %v982
    %4257 = vmatprep.subr.mxu0 0.0
    %4258 = vmatpush1.msra.mxu0 %v983
    %4259 = vmatprep.subr.mxu0 0.0
    %4260 = vmatpush1.msra.mxu0 %v984
    %4261 = vmatprep.subr.mxu0 0.0
    %4262 = vmatpush1.msra.mxu0 %v985
    %4263 = vmatprep.subr.mxu0 0.0
    %4264 = vmatpush1.msra.mxu0 %v986
    %4265 = vmatprep.subr.mxu0 0.0
    %4266 = vmatpush1.msra.mxu0 %v987
    %4267 = vmatprep.subr.mxu0 0.0
    %4268 = vmatpush1.msra.mxu0 %v988
    %4269 = vmatprep.subr.mxu0 0.0
    %4270 = vmatpush1.msra.mxu0 %v989
    %4271 = vmatprep.subr.mxu0 0.0
    %4272 = vmatpush1.msra.mxu0 %v990
    %4273 = vmatprep.subr.mxu0 0.0
    %4274 = vmatpush1.msra.mxu0 %v991
    %4275 = vmatprep.subr.mxu0 0.0
    %4276 = vmatpush1.msra.mxu0 %v992
    %4277 = vmatprep.subr.mxu0 0.0
    %4278 = vmatpush1.msra.mxu0 %v993
    %4279 = vmatprep.subr.mxu0 0.0
    %4280 = vmatpush1.msra.mxu0 %v994
    %4281 = vmatprep.subr.mxu0 0.0
    %4282 = vmatpush1.msra.mxu0 %v995
    %4283 = vmatprep.subr.mxu0 0.0
    %4284 = vmatpush1.msra.mxu0 %v996
    %4285 = vmatprep.subr.mxu0 0.0
    %4286 = vmatpush1.msra.mxu0 %v997
    %4287 = vmatprep.subr.mxu0 0.0
    %4288 = vmatpush1.msra.mxu0 %v998
    %4289 = vmatprep.subr.mxu0 0.0
    %4290 = vmatpush1.msra.mxu0 %v999
    %4291 = vmatprep.mubr.f32.mxu0 %v1926
    %4292 = vmatmul.mubr.f32.gmra.mrb[0].mxu0 %v1924
    %v4293 = vpop.f32.mrb[0].mxu0
    %v4294 = vadd.f32 %v4224, %v4293
    %v4295 = vpop.f32.mrb[0].mxu0
    %4296 = vdwg.mxu0
    %4297 = vmatprep.subr.mxu0 0.0
    %4298 = vmatpush1.msra.mxu0 %v1000
    %4299 = vmatprep.subr.mxu0 0.0
    %4300 = vmatpush1.msra.mxu0 %v1001
    %4301 = vmatprep.subr.mxu0 0.0
    %4302 = vmatpush1.msra.mxu0 %v1002
    %4303 = vmatprep.subr.mxu0 0.0
    %4304 = vmatpush1.msra.mxu0 %v1003
    %4305 = vmatprep.subr.mxu0 0.0
    %4306 = vmatpush1.msra.mxu0 %v1004
    %4307 = vmatprep.subr.mxu0 0.0
    %4308 = vmatpush1.msra.mxu0 %v1005
    %4309 = vmatprep.subr.mxu0 0.0
    %4310 = vmatpush1.msra.mxu0 %v1006
    %4311 = vmatprep.subr.mxu0 0.0
    %4312 = vmatpush1.msra.mxu0 %v1007
    %4313 = vmatprep.subr.mxu0 0.0
    %4314 = vmatpush1.msra.mxu0 %v1008
    %4315 = vmatprep.subr.mxu0 0.0
    %4316 = vmatpush1.msra.mxu0 %v1009
    %4317 = vmatprep.subr.mxu0 0.0
    %4318 = vmatpush1.msra.mxu0 %v1010
    %4319 = vmatprep.subr.mxu0 0.0
    %4320 = vmatpush1.msra.mxu0 %v1011
    %4321 = vmatprep.subr.mxu0 0.0
    %4322 = vmatpush1.msra.mxu0 %v1012
    %4323 = vmatprep.subr.mxu0 0.0
    %4324 = vmatpush1.msra.mxu0 %v1013
    %4325 = vmatprep.subr.mxu0 0.0
    %4326 = vmatpush1.msra.mxu0 %v1014
    %4327 = vmatprep.subr.mxu0 0.0
    %4328 = vmatpush1.msra.mxu0 %v1015
    %4329 = vmatprep.subr.mxu0 0.0
    %4330 = vmatpush1.msra.mxu0 %v1016
    %4331 = vmatprep.subr.mxu0 0.0
    %4332 = vmatpush1.msra.mxu0 %v1017
    %4333 = vmatprep.subr.mxu0 0.0
    %4334 = vmatpush1.msra.mxu0 %v1018
    %4335 = vmatprep.subr.mxu0 0.0
    %4336 = vmatpush1.msra.mxu0 %v1019
    %4337 = vmatprep.subr.mxu0 0.0
    %4338 = vmatpush1.msra.mxu0 %v1020
    %4339 = vmatprep.subr.mxu0 0.0
    %4340 = vmatpush1.msra.mxu0 %v1021
    %4341 = vmatprep.subr.mxu0 0.0
    %4342 = vmatpush1.msra.mxu0 %v1022
    %4343 = vmatprep.subr.mxu0 0.0
    %4344 = vmatpush1.msra.mxu0 %v1023
    %4345 = vmatprep.subr.mxu0 0.0
    %4346 = vmatpush1.msra.mxu0 %v1024
    %4347 = vmatprep.subr.mxu0 0.0
    %4348 = vmatpush1.msra.mxu0 %v1025
    %4349 = vmatprep.subr.mxu0 0.0
    %4350 = vmatpush1.msra.mxu0 %v1026
    %4351 = vmatprep.subr.mxu0 0.0
    %4352 = vmatpush1.msra.mxu0 %v1027
    %4353 = vmatprep.subr.mxu0 0.0
    %4354 = vmatpush1.msra.mxu0 %v1028
    %4355 = vmatprep.subr.mxu0 0.0
    %4356 = vmatpush1.msra.mxu0 %v1029
    %4357 = vmatprep.subr.mxu0 0.0
    %4358 = vmatpush1.msra.mxu0 %v1030
    %4359 = vmatprep.subr.mxu0 0.0
    %4360 = vmatpush1.msra.mxu0 %v1031
    %4361 = vmatprep.mubr.f32.mxu0 %v1942
    %4362 = vmatmul.mubr.f32.gmra.mrb[0].mxu0 %v1934
    %v4363 = vpop.f32.mrb[0].mxu0
    %v4364 = vadd.f32 %v4294, %v4363
    %v4365 = vpop.f32.mrb[0].mxu0
    %4366 = vdwg.mxu0
    %4367 = vmatprep.subr.mxu0 0.0
    %4368 = vmatpush1.msra.mxu0 %v1032
    %4369 = vmatprep.subr.mxu0 0.0
    %4370 = vmatpush1.msra.mxu0 %v1033
    %4371 = vmatprep.subr.mxu0 0.0
    %4372 = vmatpush1.msra.mxu0 %v1034
    %4373 = vmatprep.subr.mxu0 0.0
    %4374 = vmatpush1.msra.mxu0 %v1035
    %4375 = vmatprep.subr.mxu0 0.0
    %4376 = vmatpush1.msra.mxu0 %v1036
    %4377 = vmatprep.subr.mxu0 0.0
    %4378 = vmatpush1.msra.mxu0 %v1037
    %4379 = vmatprep.subr.mxu0 0.0
    %4380 = vmatpush1.msra.mxu0 %v1038
    %4381 = vmatprep.subr.mxu0 0.0
    %4382 = vmatpush1.msra.mxu0 %v1039
    %4383 = vmatprep.subr.mxu0 0.0
    %4384 = vmatpush1.msra.mxu0 %v1040
    %4385 = vmatprep.subr.mxu0 0.0
    %4386 = vmatpush1.msra.mxu0 %v1041
    %4387 = vmatprep.subr.mxu0 0.0
    %4388 = vmatpush1.msra.mxu0 %v1042
    %4389 = vmatprep.subr.mxu0 0.0
    %4390 = vmatpush1.msra.mxu0 %v1043
    %4391 = vmatprep.subr.mxu0 0.0
    %4392 = vmatpush1.msra.mxu0 %v1044
    %4393 = vmatprep.subr.mxu0 0.0
    %4394 = vmatpush1.msra.mxu0 %v1045
    %4395 = vmatprep.subr.mxu0 0.0
    %4396 = vmatpush1.msra.mxu0 %v1046
    %4397 = vmatprep.subr.mxu0 0.0
    %4398 = vmatpush1.msra.mxu0 %v1047
    %4399 = vmatprep.subr.mxu0 0.0
    %4400 = vmatpush1.msra.mxu0 %v1048
    %4401 = vmatprep.subr.mxu0 0.0
    %4402 = vmatpush1.msra.mxu0 %v1049
    %4403 = vmatprep.subr.mxu0 0.0
    %4404 = vmatpush1.msra.mxu0 %v1050
    %4405 = vmatprep.subr.mxu0 0.0
    %4406 = vmatpush1.msra.mxu0 %v1051
    %4407 = vmatprep.subr.mxu0 0.0
    %4408 = vmatpush1.msra.mxu0 %v1052
    %4409 = vmatprep.subr.mxu0 0.0
    %4410 = vmatpush1.msra.mxu0 %v1053
    %4411 = vmatprep.subr.mxu0 0.0
    %4412 = vmatpush1.msra.mxu0 %v1054
    %4413 = vmatprep.subr.mxu0 0.0
    %4414 = vmatpush1.msra.mxu0 %v1055
    %4415 = vmatprep.subr.mxu0 0.0
    %4416 = vmatpush1.msra.mxu0 %v1056
    %4417 = vmatprep.subr.mxu0 0.0
    %4418 = vmatpush1.msra.mxu0 %v1057
    %4419 = vmatprep.subr.mxu0 0.0
    %4420 = vmatpush1.msra.mxu0 %v1058
    %4421 = vmatprep.subr.mxu0 0.0
    %4422 = vmatpush1.msra.mxu0 %v1059
    %4423 = vmatprep.subr.mxu0 0.0
    %4424 = vmatpush1.msra.mxu0 %v1060
    %4425 = vmatprep.subr.mxu0 0.0
    %4426 = vmatpush1.msra.mxu0 %v1061
    %4427 = vmatprep.subr.mxu0 0.0
    %4428 = vmatpush1.msra.mxu0 %v1062
    %4429 = vmatprep.subr.mxu0 0.0
    %4430 = vmatpush1.msra.mxu0 %v1063
    %4431 = vmatprep.mubr.f32.mxu0 %v1943
    %4432 = vmatmul.mubr.f32.gmra.mrb[0].mxu0 %v1941
    %v4433 = vpop.f32.mrb[0].mxu0
    %v4434 = vadd.f32 %v4364, %v4433
    %v4435 = vpop.f32.mrb[0].mxu0
    %4436 = vdwg.mxu0
    %4437 = vmatprep.subr.mxu0 0.0
    %4438 = vmatpush1.msra.mxu0 %v1064
    %4439 = vmatprep.subr.mxu0 0.0
    %4440 = vmatpush1.msra.mxu0 %v1065
    %4441 = vmatprep.subr.mxu0 0.0
    %4442 = vmatpush1.msra.mxu0 %v1066
    %4443 = vmatprep.subr.mxu0 0.0
    %4444 = vmatpush1.msra.mxu0 %v1067
    %4445 = vmatprep.subr.mxu0 0.0
    %4446 = vmatpush1.msra.mxu0 %v1068
    %4447 = vmatprep.subr.mxu0 0.0
    %4448 = vmatpush1.msra.mxu0 %v1069
    %4449 = vmatprep.subr.mxu0 0.0
    %4450 = vmatpush1.msra.mxu0 %v1070
    %4451 = vmatprep.subr.mxu0 0.0
    %4452 = vmatpush1.msra.mxu0 %v1071
    %4453 = vmatprep.subr.mxu0 0.0
    %4454 = vmatpush1.msra.mxu0 %v1072
    %4455 = vmatprep.subr.mxu0 0.0
    %4456 = vmatpush1.msra.mxu0 %v1073
    %4457 = vmatprep.subr.mxu0 0.0
    %4458 = vmatpush1.msra.mxu0 %v1074
    %4459 = vmatprep.subr.mxu0 0.0
    %4460 = vmatpush1.msra.mxu0 %v1075
    %4461 = vmatprep.subr.mxu0 0.0
    %4462 = vmatpush1.msra.mxu0 %v1076
    %4463 = vmatprep.subr.mxu0 0.0
    %4464 = vmatpush1.msra.mxu0 %v1077
    %4465 = vmatprep.subr.mxu0 0.0
    %4466 = vmatpush1.msra.mxu0 %v1078
    %4467 = vmatprep.subr.mxu0 0.0
    %4468 = vmatpush1.msra.mxu0 %v1079
    %4469 = vmatprep.subr.mxu0 0.0
    %4470 = vmatpush1.msra.mxu0 %v1080
    %4471 = vmatprep.subr.mxu0 0.0
    %4472 = vmatpush1.msra.mxu0 %v1081
    %4473 = vmatprep.subr.mxu0 0.0
    %4474 = vmatpush1.msra.mxu0 %v1082
    %4475 = vmatprep.subr.mxu0 0.0
    %4476 = vmatpush1.msra.mxu0 %v1083
    %4477 = vmatprep.subr.mxu0 0.0
    %4478 = vmatpush1.msra.mxu0 %v1084
    %4479 = vmatprep.subr.mxu0 0.0
    %4480 = vmatpush1.msra.mxu0 %v1085
    %4481 = vmatprep.subr.mxu0 0.0
    %4482 = vmatpush1.msra.mxu0 %v1086
    %4483 = vmatprep.subr.mxu0 0.0
    %4484 = vmatpush1.msra.mxu0 %v1087
    %4485 = vmatprep.subr.mxu0 0.0
    %4486 = vmatpush1.msra.mxu0 %v1088
    %4487 = vmatprep.subr.mxu0 0.0
    %4488 = vmatpush1.msra.mxu0 %v1089
    %4489 = vmatprep.subr.mxu0 0.0
    %4490 = vmatpush1.msra.mxu0 %v1090
    %4491 = vmatprep.subr.mxu0 0.0
    %4492 = vmatpush1.msra.mxu0 %v1091
    %4493 = vmatprep.subr.mxu0 0.0
    %4494 = vmatpush1.msra.mxu0 %v1092
    %4495 = vmatprep.subr.mxu0 0.0
    %4496 = vmatpush1.msra.mxu0 %v1093
    %4497 = vmatprep.subr.mxu0 0.0
    %4498 = vmatpush1.msra.mxu0 %v1094
    %4499 = vmatprep.subr.mxu0 0.0
    %4500 = vmatpush1.msra.mxu0 %v1095
    %4501 = vmatprep.mubr.f32.mxu0 %v1959
    %4502 = vmatmul.mubr.f32.gmra.mrb[0].mxu0 %v1951
    %v4503 = vpop.f32.mrb[0].mxu0
    %v4504 = vadd.f32 %v4434, %v4503
    %v4505 = vpop.f32.mrb[0].mxu0
    %4506 = vdwg.mxu0
    %4507 = vmatprep.subr.mxu0 0.0
    %4508 = vmatpush1.msra.mxu0 %v1096
    %4509 = vmatprep.subr.mxu0 0.0
    %4510 = vmatpush1.msra.mxu0 %v1097
    %4511 = vmatprep.subr.mxu0 0.0
    %4512 = vmatpush1.msra.mxu0 %v1098
    %4513 = vmatprep.subr.mxu0 0.0
    %4514 = vmatpush1.msra.mxu0 %v1099
    %4515 = vmatprep.subr.mxu0 0.0
    %4516 = vmatpush1.msra.mxu0 %v1100
    %4517 = vmatprep.subr.mxu0 0.0
    %4518 = vmatpush1.msra.mxu0 %v1101
    %4519 = vmatprep.subr.mxu0 0.0
    %4520 = vmatpush1.msra.mxu0 %v1102
    %4521 = vmatprep.subr.mxu0 0.0
    %4522 = vmatpush1.msra.mxu0 %v1103
    %4523 = vmatprep.subr.mxu0 0.0
    %4524 = vmatpush1.msra.mxu0 %v1104
    %4525 = vmatprep.subr.mxu0 0.0
    %4526 = vmatpush1.msra.mxu0 %v1105
    %4527 = vmatprep.subr.mxu0 0.0
    %4528 = vmatpush1.msra.mxu0 %v1106
    %4529 = vmatprep.subr.mxu0 0.0
    %4530 = vmatpush1.msra.mxu0 %v1107
    %4531 = vmatprep.subr.mxu0 0.0
    %4532 = vmatpush1.msra.mxu0 %v1108
    %4533 = vmatprep.subr.mxu0 0.0
    %4534 = vmatpush1.msra.mxu0 %v1109
    %4535 = vmatprep.subr.mxu0 0.0
    %4536 = vmatpush1.msra.mxu0 %v1110
    %4537 = vmatprep.subr.mxu0 0.0
    %4538 = vmatpush1.msra.mxu0 %v1111
    %4539 = vmatprep.subr.mxu0 0.0
    %4540 = vmatpush1.msra.mxu0 %v1112
    %4541 = vmatprep.subr.mxu0 0.0
    %4542 = vmatpush1.msra.mxu0 %v1113
    %4543 = vmatprep.subr.mxu0 0.0
    %4544 = vmatpush1.msra.mxu0 %v1114
    %4545 = vmatprep.subr.mxu0 0.0
    %4546 = vmatpush1.msra.mxu0 %v1115
    %4547 = vmatprep.subr.mxu0 0.0
    %4548 = vmatpush1.msra.mxu0 %v1116
    %4549 = vmatprep.subr.mxu0 0.0
    %4550 = vmatpush1.msra.mxu0 %v1117
    %4551 = vmatprep.subr.mxu0 0.0
    %4552 = vmatpush1.msra.mxu0 %v1118
    %4553 = vmatprep.subr.mxu0 0.0
    %4554 = vmatpush1.msra.mxu0 %v1119
    %4555 = vmatprep.subr.mxu0 0.0
    %4556 = vmatpush1.msra.mxu0 %v1120
    %4557 = vmatprep.subr.mxu0 0.0
    %4558 = vmatpush1.msra.mxu0 %v1121
    %4559 = vmatprep.subr.mxu0 0.0
    %4560 = vmatpush1.msra.mxu0 %v1122
    %4561 = vmatprep.subr.mxu0 0.0
    %4562 = vmatpush1.msra.mxu0 %v1123
    %4563 = vmatprep.subr.mxu0 0.0
    %4564 = vmatpush1.msra.mxu0 %v1124
    %4565 = vmatprep.subr.mxu0 0.0
    %4566 = vmatpush1.msra.mxu0 %v1125
    %4567 = vmatprep.subr.mxu0 0.0
    %4568 = vmatpush1.msra.mxu0 %v1126
    %4569 = vmatprep.subr.mxu0 0.0
    %4570 = vmatpush1.msra.mxu0 %v1127
    %4571 = vmatprep.mubr.f32.mxu0 %v1960
    %4572 = vmatmul.mubr.f32.gmra.mrb[0].mxu0 %v1958
    %v4573 = vpop.f32.mrb[0].mxu0
    %v4574 = vadd.f32 %v4504, %v4573
    %v4575 = vpop.f32.mrb[0].mxu0
    %4576 = vdwg.mxu0
    %4577 = vmatprep.subr.mxu0 0.0
    %4578 = vmatpush1.msra.mxu0 %v1128
    %4579 = vmatprep.subr.mxu0 0.0
    %4580 = vmatpush1.msra.mxu0 %v1129
    %4581 = vmatprep.subr.mxu0 0.0
    %4582 = vmatpush1.msra.mxu0 %v1130
    %4583 = vmatprep.subr.mxu0 0.0
    %4584 = vmatpush1.msra.mxu0 %v1131
    %4585 = vmatprep.subr.mxu0 0.0
    %4586 = vmatpush1.msra.mxu0 %v1132
    %4587 = vmatprep.subr.mxu0 0.0
    %4588 = vmatpush1.msra.mxu0 %v1133
    %4589 = vmatprep.subr.mxu0 0.0
    %4590 = vmatpush1.msra.mxu0 %v1134
    %4591 = vmatprep.subr.mxu0 0.0
    %4592 = vmatpush1.msra.mxu0 %v1135
    %4593 = vmatprep.subr.mxu0 0.0
    %4594 = vmatpush1.msra.mxu0 %v1136
    %4595 = vmatprep.subr.mxu0 0.0
    %4596 = vmatpush1.msra.mxu0 %v1137
    %4597 = vmatprep.subr.mxu0 0.0
    %4598 = vmatpush1.msra.mxu0 %v1138
    %4599 = vmatprep.subr.mxu0 0.0
    %4600 = vmatpush1.msra.mxu0 %v1139
    %4601 = vmatprep.subr.mxu0 0.0
    %4602 = vmatpush1.msra.mxu0 %v1140
    %4603 = vmatprep.subr.mxu0 0.0
    %4604 = vmatpush1.msra.mxu0 %v1141
    %4605 = vmatprep.subr.mxu0 0.0
    %4606 = vmatpush1.msra.mxu0 %v1142
    %4607 = vmatprep.subr.mxu0 0.0
    %4608 = vmatpush1.msra.mxu0 %v1143
    %4609 = vmatprep.subr.mxu0 0.0
    %4610 = vmatpush1.msra.mxu0 %v1144
    %4611 = vmatprep.subr.mxu0 0.0
    %4612 = vmatpush1.msra.mxu0 %v1145
    %4613 = vmatprep.subr.mxu0 0.0
    %4614 = vmatpush1.msra.mxu0 %v1146
    %4615 = vmatprep.subr.mxu0 0.0
    %4616 = vmatpush1.msra.mxu0 %v1147
    %4617 = vmatprep.subr.mxu0 0.0
    %4618 = vmatpush1.msra.mxu0 %v1148
    %4619 = vmatprep.subr.mxu0 0.0
    %4620 = vmatpush1.msra.mxu0 %v1149
    %4621 = vmatprep.subr.mxu0 0.0
    %4622 = vmatpush1.msra.mxu0 %v1150
    %4623 = vmatprep.subr.mxu0 0.0
    %4624 = vmatpush1.msra.mxu0 %v1151
    %4625 = vmatprep.subr.mxu0 0.0
    %4626 = vmatpush1.msra.mxu0 %v1152
    %4627 = vmatprep.subr.mxu0 0.0
    %4628 = vmatpush1.msra.mxu0 %v1153
    %4629 = vmatprep.subr.mxu0 0.0
    %4630 = vmatpush1.msra.mxu0 %v1154
    %4631 = vmatprep.subr.mxu0 0.0
    %4632 = vmatpush1.msra.mxu0 %v1155
    %4633 = vmatprep.subr.mxu0 0.0
    %4634 = vmatpush1.msra.mxu0 %v1156
    %4635 = vmatprep.subr.mxu0 0.0
    %4636 = vmatpush1.msra.mxu0 %v1157
    %4637 = vmatprep.subr.mxu0 0.0
    %4638 = vmatpush1.msra.mxu0 %v1158
    %4639 = vmatprep.subr.mxu0 0.0
    %4640 = vmatpush1.msra.mxu0 %v1159
    %4641 = vmatprep.mubr.f32.mxu0 %v1976
    %4642 = vmatmul.mubr.f32.gmra.mrb[0].mxu0 %v1968
    %v4643 = vpop.f32.mrb[0].mxu0
    %v4644 = vadd.f32 %v4574, %v4643
    %v4645 = vpop.f32.mrb[0].mxu0
    %4646 = vdwg.mxu0
    %4647 = vmatprep.subr.mxu0 0.0
    %4648 = vmatpush1.msra.mxu0 %v1160
    %4649 = vmatprep.subr.mxu0 0.0
    %4650 = vmatpush1.msra.mxu0 %v1161
    %4651 = vmatprep.subr.mxu0 0.0
    %4652 = vmatpush1.msra.mxu0 %v1162
    %4653 = vmatprep.subr.mxu0 0.0
    %4654 = vmatpush1.msra.mxu0 %v1163
    %4655 = vmatprep.subr.mxu0 0.0
    %4656 = vmatpush1.msra.mxu0 %v1164
    %4657 = vmatprep.subr.mxu0 0.0
    %4658 = vmatpush1.msra.mxu0 %v1165
    %4659 = vmatprep.subr.mxu0 0.0
    %4660 = vmatpush1.msra.mxu0 %v1166
    %4661 = vmatprep.subr.mxu0 0.0
    %4662 = vmatpush1.msra.mxu0 %v1167
    %4663 = vmatprep.subr.mxu0 0.0
    %4664 = vmatpush1.msra.mxu0 %v1168
    %4665 = vmatprep.subr.mxu0 0.0
    %4666 = vmatpush1.msra.mxu0 %v1169
    %4667 = vmatprep.subr.mxu0 0.0
    %4668 = vmatpush1.msra.mxu0 %v1170
    %4669 = vmatprep.subr.mxu0 0.0
    %4670 = vmatpush1.msra.mxu0 %v1171
    %4671 = vmatprep.subr.mxu0 0.0
    %4672 = vmatpush1.msra.mxu0 %v1172
    %4673 = vmatprep.subr.mxu0 0.0
    %4674 = vmatpush1.msra.mxu0 %v1173
    %4675 = vmatprep.subr.mxu0 0.0
    %4676 = vmatpush1.msra.mxu0 %v1174
    %4677 = vmatprep.subr.mxu0 0.0
    %4678 = vmatpush1.msra.mxu0 %v1175
    %4679 = vmatprep.subr.mxu0 0.0
    %4680 = vmatpush1.msra.mxu0 %v1176
    %4681 = vmatprep.subr.mxu0 0.0
    %4682 = vmatpush1.msra.mxu0 %v1177
    %4683 = vmatprep.subr.mxu0 0.0
    %4684 = vmatpush1.msra.mxu0 %v1178
    %4685 = vmatprep.subr.mxu0 0.0
    %4686 = vmatpush1.msra.mxu0 %v1179
    %4687 = vmatprep.subr.mxu0 0.0
    %4688 = vmatpush1.msra.mxu0 %v1180
    %4689 = vmatprep.subr.mxu0 0.0
    %4690 = vmatpush1.msra.mxu0 %v1181
    %4691 = vmatprep.subr.mxu0 0.0
    %4692 = vmatpush1.msra.mxu0 %v1182
    %4693 = vmatprep.subr.mxu0 0.0
    %4694 = vmatpush1.msra.mxu0 %v1183
    %4695 = vmatprep.subr.mxu0 0.0
    %4696 = vmatpush1.msra.mxu0 %v1184
    %4697 = vmatprep.subr.mxu0 0.0
    %4698 = vmatpush1.msra.mxu0 %v1185
    %4699 = vmatprep.subr.mxu0 0.0
    %4700 = vmatpush1.msra.mxu0 %v1186
    %4701 = vmatprep.subr.mxu0 0.0
    %4702 = vmatpush1.msra.mxu0 %v1187
    %4703 = vmatprep.subr.mxu0 0.0
    %4704 = vmatpush1.msra.mxu0 %v1188
    %4705 = vmatprep.subr.mxu0 0.0
    %4706 = vmatpush1.msra.mxu0 %v1189
    %4707 = vmatprep.subr.mxu0 0.0
    %4708 = vmatpush1.msra.mxu0 %v1190
    %4709 = vmatprep.subr.mxu0 0.0
    %4710 = vmatpush1.msra.mxu0 %v1191
    %4711 = vmatprep.mubr.f32.mxu0 %v1977
    %4712 = vmatmul.mubr.f32.gmra.mrb[0].mxu0 %v1975
    %v4713 = vpop.f32.mrb[0].mxu0
    %v4714 = vadd.f32 %v4644, %v4713
    %v4715 = vpop.f32.mrb[0].mxu0
    %4716 = vdwg.mxu0
    %4717 = vmatprep.subr.mxu0 0.0
    %4718 = vmatpush1.msra.mxu0 %v1192
    %4719 = vmatprep.subr.mxu0 0.0
    %4720 = vmatpush1.msra.mxu0 %v1193
    %4721 = vmatprep.subr.mxu0 0.0
    %4722 = vmatpush1.msra.mxu0 %v1194
    %4723 = vmatprep.subr.mxu0 0.0
    %4724 = vmatpush1.msra.mxu0 %v1195
    %4725 = vmatprep.subr.mxu0 0.0
    %4726 = vmatpush1.msra.mxu0 %v1196
    %4727 = vmatprep.subr.mxu0 0.0
    %4728 = vmatpush1.msra.mxu0 %v1197
    %4729 = vmatprep.subr.mxu0 0.0
    %4730 = vmatpush1.msra.mxu0 %v1198
    %4731 = vmatprep.subr.mxu0 0.0
    %4732 = vmatpush1.msra.mxu0 %v1199
    %4733 = vmatprep.subr.mxu0 0.0
    %4734 = vmatpush1.msra.mxu0 %v1200
    %4735 = vmatprep.subr.mxu0 0.0
    %4736 = vmatpush1.msra.mxu0 %v1201
    %4737 = vmatprep.subr.mxu0 0.0
    %4738 = vmatpush1.msra.mxu0 %v1202
    %4739 = vmatprep.subr.mxu0 0.0
    %4740 = vmatpush1.msra.mxu0 %v1203
    %4741 = vmatprep.subr.mxu0 0.0
    %4742 = vmatpush1.msra.mxu0 %v1204
    %4743 = vmatprep.subr.mxu0 0.0
    %4744 = vmatpush1.msra.mxu0 %v1205
    %4745 = vmatprep.subr.mxu0 0.0
    %4746 = vmatpush1.msra.mxu0 %v1206
    %4747 = vmatprep.subr.mxu0 0.0
    %4748 = vmatpush1.msra.mxu0 %v1207
    %4749 = vmatprep.subr.mxu0 0.0
    %4750 = vmatpush1.msra.mxu0 %v1208
    %4751 = vmatprep.subr.mxu0 0.0
    %4752 = vmatpush1.msra.mxu0 %v1209
    %4753 = vmatprep.subr.mxu0 0.0
    %4754 = vmatpush1.msra.mxu0 %v1210
    %4755 = vmatprep.subr.mxu0 0.0
    %4756 = vmatpush1.msra.mxu0 %v1211
    %4757 = vmatprep.subr.mxu0 0.0
    %4758 = vmatpush1.msra.mxu0 %v1212
    %4759 = vmatprep.subr.mxu0 0.0
    %4760 = vmatpush1.msra.mxu0 %v1213
    %4761 = vmatprep.subr.mxu0 0.0
    %4762 = vmatpush1.msra.mxu0 %v1214
    %4763 = vmatprep.subr.mxu0 0.0
    %4764 = vmatpush1.msra.mxu0 %v1215
    %4765 = vmatprep.subr.mxu0 0.0
    %4766 = vmatpush1.msra.mxu0 %v1216
    %4767 = vmatprep.subr.mxu0 0.0
    %4768 = vmatpush1.msra.mxu0 %v1217
    %4769 = vmatprep.subr.mxu0 0.0
    %4770 = vmatpush1.msra.mxu0 %v1218
    %4771 = vmatprep.subr.mxu0 0.0
    %4772 = vmatpush1.msra.mxu0 %v1219
    %4773 = vmatprep.subr.mxu0 0.0
    %4774 = vmatpush1.msra.mxu0 %v1220
    %4775 = vmatprep.subr.mxu0 0.0
    %4776 = vmatpush1.msra.mxu0 %v1221
    %4777 = vmatprep.subr.mxu0 0.0
    %4778 = vmatpush1.msra.mxu0 %v1222
    %4779 = vmatprep.subr.mxu0 0.0
    %4780 = vmatpush1.msra.mxu0 %v1223
    %4781 = vmatprep.mubr.f32.mxu0 %v1993
    %4782 = vmatmul.mubr.f32.gmra.mrb[0].mxu0 %v1985
    %v4783 = vpop.f32.mrb[0].mxu0
    %v4784 = vadd.f32 %v4714, %v4783
    %v4785 = vpop.f32.mrb[0].mxu0
    %4786 = vdwg.mxu0
    %4787 = vmatprep.subr.mxu0 0.0
    %4788 = vmatpush1.msra.mxu0 %v1224
    %4789 = vmatprep.subr.mxu0 0.0
    %4790 = vmatpush1.msra.mxu0 %v1225
    %4791 = vmatprep.subr.mxu0 0.0
    %4792 = vmatpush1.msra.mxu0 %v1226
    %4793 = vmatprep.subr.mxu0 0.0
    %4794 = vmatpush1.msra.mxu0 %v1227
    %4795 = vmatprep.subr.mxu0 0.0
    %4796 = vmatpush1.msra.mxu0 %v1228
    %4797 = vmatprep.subr.mxu0 0.0
    %4798 = vmatpush1.msra.mxu0 %v1229
    %4799 = vmatprep.subr.mxu0 0.0
    %4800 = vmatpush1.msra.mxu0 %v1230
    %4801 = vmatprep.subr.mxu0 0.0
    %4802 = vmatpush1.msra.mxu0 %v1231
    %4803 = vmatprep.subr.mxu0 0.0
    %4804 = vmatpush1.msra.mxu0 %v1232
    %4805 = vmatprep.subr.mxu0 0.0
    %4806 = vmatpush1.msra.mxu0 %v1233
    %4807 = vmatprep.subr.mxu0 0.0
    %4808 = vmatpush1.msra.mxu0 %v1234
    %4809 = vmatprep.subr.mxu0 0.0
    %4810 = vmatpush1.msra.mxu0 %v1235
    %4811 = vmatprep.subr.mxu0 0.0
    %4812 = vmatpush1.msra.mxu0 %v1236
    %4813 = vmatprep.subr.mxu0 0.0
    %4814 = vmatpush1.msra.mxu0 %v1237
    %4815 = vmatprep.subr.mxu0 0.0
    %4816 = vmatpush1.msra.mxu0 %v1238
    %4817 = vmatprep.subr.mxu0 0.0
    %4818 = vmatpush1.msra.mxu0 %v1239
    %4819 = vmatprep.subr.mxu0 0.0
    %4820 = vmatpush1.msra.mxu0 %v1240
    %4821 = vmatprep.subr.mxu0 0.0
    %4822 = vmatpush1.msra.mxu0 %v1241
    %4823 = vmatprep.subr.mxu0 0.0
    %4824 = vmatpush1.msra.mxu0 %v1242
    %4825 = vmatprep.subr.mxu0 0.0
    %4826 = vmatpush1.msra.mxu0 %v1243
    %4827 = vmatprep.subr.mxu0 0.0
    %4828 = vmatpush1.msra.mxu0 %v1244
    %4829 = vmatprep.subr.mxu0 0.0
    %4830 = vmatpush1.msra.mxu0 %v1245
    %4831 = vmatprep.subr.mxu0 0.0
    %4832 = vmatpush1.msra.mxu0 %v1246
    %4833 = vmatprep.subr.mxu0 0.0
    %4834 = vmatpush1.msra.mxu0 %v1247
    %4835 = vmatprep.subr.mxu0 0.0
    %4836 = vmatpush1.msra.mxu0 %v1248
    %4837 = vmatprep.subr.mxu0 0.0
    %4838 = vmatpush1.msra.mxu0 %v1249
    %4839 = vmatprep.subr.mxu0 0.0
    %4840 = vmatpush1.msra.mxu0 %v1250
    %4841 = vmatprep.subr.mxu0 0.0
    %4842 = vmatpush1.msra.mxu0 %v1251
    %4843 = vmatprep.subr.mxu0 0.0
    %4844 = vmatpush1.msra.mxu0 %v1252
    %4845 = vmatprep.subr.mxu0 0.0
    %4846 = vmatpush1.msra.mxu0 %v1253
    %4847 = vmatprep.subr.mxu0 0.0
    %4848 = vmatpush1.msra.mxu0 %v1254
    %4849 = vmatprep.subr.mxu0 0.0
    %4850 = vmatpush1.msra.mxu0 %v1255
    %4851 = vmatprep.mubr.f32.mxu0 %v1994
    %4852 = vmatmul.mubr.f32.gmra.mrb[0].mxu0 %v1992
    %v4853 = vpop.f32.mrb[0].mxu0
    %v4854 = vadd.f32 %v4784, %v4853
    %v4855 = vpop.f32.mrb[0].mxu0
    %4856 = vdwg.mxu0
    %4857 = vmatprep.subr.mxu0 0.0
    %4858 = vmatpush1.msra.mxu0 %v1256
    %4859 = vmatprep.subr.mxu0 0.0
    %4860 = vmatpush1.msra.mxu0 %v1257
    %4861 = vmatprep.subr.mxu0 0.0
    %4862 = vmatpush1.msra.mxu0 %v1258
    %4863 = vmatprep.subr.mxu0 0.0
    %4864 = vmatpush1.msra.mxu0 %v1259
    %4865 = vmatprep.subr.mxu0 0.0
    %4866 = vmatpush1.msra.mxu0 %v1260
    %4867 = vmatprep.subr.mxu0 0.0
    %4868 = vmatpush1.msra.mxu0 %v1261
    %4869 = vmatprep.subr.mxu0 0.0
    %4870 = vmatpush1.msra.mxu0 %v1262
    %4871 = vmatprep.subr.mxu0 0.0
    %4872 = vmatpush1.msra.mxu0 %v1263
    %4873 = vmatprep.subr.mxu0 0.0
    %4874 = vmatpush1.msra.mxu0 %v1264
    %4875 = vmatprep.subr.mxu0 0.0
    %4876 = vmatpush1.msra.mxu0 %v1265
    %4877 = vmatprep.subr.mxu0 0.0
    %4878 = vmatpush1.msra.mxu0 %v1266
    %4879 = vmatprep.subr.mxu0 0.0
    %4880 = vmatpush1.msra.mxu0 %v1267
    %4881 = vmatprep.subr.mxu0 0.0
    %4882 = vmatpush1.msra.mxu0 %v1268
    %4883 = vmatprep.subr.mxu0 0.0
    %4884 = vmatpush1.msra.mxu0 %v1269
    %4885 = vmatprep.subr.mxu0 0.0
    %4886 = vmatpush1.msra.mxu0 %v1270
    %4887 = vmatprep.subr.mxu0 0.0
    %4888 = vmatpush1.msra.mxu0 %v1271
    %4889 = vmatprep.subr.mxu0 0.0
    %4890 = vmatpush1.msra.mxu0 %v1272
    %4891 = vmatprep.subr.mxu0 0.0
    %4892 = vmatpush1.msra.mxu0 %v1273
    %4893 = vmatprep.subr.mxu0 0.0
    %4894 = vmatpush1.msra.mxu0 %v1274
    %4895 = vmatprep.subr.mxu0 0.0
    %4896 = vmatpush1.msra.mxu0 %v1275
    %4897 = vmatprep.subr.mxu0 0.0
    %4898 = vmatpush1.msra.mxu0 %v1276
    %4899 = vmatprep.subr.mxu0 0.0
    %4900 = vmatpush1.msra.mxu0 %v1277
    %4901 = vmatprep.subr.mxu0 0.0
    %4902 = vmatpush1.msra.mxu0 %v1278
    %4903 = vmatprep.subr.mxu0 0.0
    %4904 = vmatpush1.msra.mxu0 %v1279
    %4905 = vmatprep.subr.mxu0 0.0
    %4906 = vmatpush1.msra.mxu0 %v1280
    %4907 = vmatprep.subr.mxu0 0.0
    %4908 = vmatpush1.msra.mxu0 %v1281
    %4909 = vmatprep.subr.mxu0 0.0
    %4910 = vmatpush1.msra.mxu0 %v1282
    %4911 = vmatprep.subr.mxu0 0.0
    %4912 = vmatpush1.msra.mxu0 %v1283
    %4913 = vmatprep.subr.mxu0 0.0
    %4914 = vmatpush1.msra.mxu0 %v1284
    %4915 = vmatprep.subr.mxu0 0.0
    %4916 = vmatpush1.msra.mxu0 %v1285
    %4917 = vmatprep.subr.mxu0 0.0
    %4918 = vmatpush1.msra.mxu0 %v1286
    %4919 = vmatprep.subr.mxu0 0.0
    %4920 = vmatpush1.msra.mxu0 %v1287
    %4921 = vmatprep.mubr.f32.mxu0 %v2010
    %4922 = vmatmul.mubr.f32.gmra.mrb[0].mxu0 %v2002
    %v4923 = vpop.f32.mrb[0].mxu0
    %v4924 = vadd.f32 %v4854, %v4923
    %v4925 = vpop.f32.mrb[0].mxu0
    %4926 = vdwg.mxu0
    %4927 = vmatprep.subr.mxu0 0.0
    %4928 = vmatpush1.msra.mxu0 %v1288
    %4929 = vmatprep.subr.mxu0 0.0
    %4930 = vmatpush1.msra.mxu0 %v1289
    %4931 = vmatprep.subr.mxu0 0.0
    %4932 = vmatpush1.msra.mxu0 %v1290
    %4933 = vmatprep.subr.mxu0 0.0
    %4934 = vmatpush1.msra.mxu0 %v1291
    %4935 = vmatprep.subr.mxu0 0.0
    %4936 = vmatpush1.msra.mxu0 %v1292
    %4937 = vmatprep.subr.mxu0 0.0
    %4938 = vmatpush1.msra.mxu0 %v1293
    %4939 = vmatprep.subr.mxu0 0.0
    %4940 = vmatpush1.msra.mxu0 %v1294
    %4941 = vmatprep.subr.mxu0 0.0
    %4942 = vmatpush1.msra.mxu0 %v1295
    %4943 = vmatprep.subr.mxu0 0.0
    %4944 = vmatpush1.msra.mxu0 %v1296
    %4945 = vmatprep.subr.mxu0 0.0
    %4946 = vmatpush1.msra.mxu0 %v1297
    %4947 = vmatprep.subr.mxu0 0.0
    %4948 = vmatpush1.msra.mxu0 %v1298
    %4949 = vmatprep.subr.mxu0 0.0
    %4950 = vmatpush1.msra.mxu0 %v1299
    %4951 = vmatprep.subr.mxu0 0.0
    %4952 = vmatpush1.msra.mxu0 %v1300
    %4953 = vmatprep.subr.mxu0 0.0
    %4954 = vmatpush1.msra.mxu0 %v1301
    %4955 = vmatprep.subr.mxu0 0.0
    %4956 = vmatpush1.msra.mxu0 %v1302
    %4957 = vmatprep.subr.mxu0 0.0
    %4958 = vmatpush1.msra.mxu0 %v1303
    %4959 = vmatprep.subr.mxu0 0.0
    %4960 = vmatpush1.msra.mxu0 %v1304
    %4961 = vmatprep.subr.mxu0 0.0
    %4962 = vmatpush1.msra.mxu0 %v1305
    %4963 = vmatprep.subr.mxu0 0.0
    %4964 = vmatpush1.msra.mxu0 %v1306
    %4965 = vmatprep.subr.mxu0 0.0
    %4966 = vmatpush1.msra.mxu0 %v1307
    %4967 = vmatprep.subr.mxu0 0.0
    %4968 = vmatpush1.msra.mxu0 %v1308
    %4969 = vmatprep.subr.mxu0 0.0
    %4970 = vmatpush1.msra.mxu0 %v1309
    %4971 = vmatprep.subr.mxu0 0.0
    %4972 = vmatpush1.msra.mxu0 %v1310
    %4973 = vmatprep.subr.mxu0 0.0
    %4974 = vmatpush1.msra.mxu0 %v1311
    %4975 = vmatprep.subr.mxu0 0.0
    %4976 = vmatpush1.msra.mxu0 %v1312
    %4977 = vmatprep.subr.mxu0 0.0
    %4978 = vmatpush1.msra.mxu0 %v1313
    %4979 = vmatprep.subr.mxu0 0.0
    %4980 = vmatpush1.msra.mxu0 %v1314
    %4981 = vmatprep.subr.mxu0 0.0
    %4982 = vmatpush1.msra.mxu0 %v1315
    %4983 = vmatprep.subr.mxu0 0.0
    %4984 = vmatpush1.msra.mxu0 %v1316
    %4985 = vmatprep.subr.mxu0 0.0
    %4986 = vmatpush1.msra.mxu0 %v1317
    %4987 = vmatprep.subr.mxu0 0.0
    %4988 = vmatpush1.msra.mxu0 %v1318
    %4989 = vmatprep.subr.mxu0 0.0
    %4990 = vmatpush1.msra.mxu0 %v1319
    %4991 = vmatprep.mubr.f32.mxu0 %v2011
    %4992 = vmatmul.mubr.f32.gmra.mrb[0].mxu0 %v2009
    %v4993 = vpop.f32.mrb[0].mxu0
    %v4994 = vadd.f32 %v4924, %v4993
    %v4995 = vpop.f32.mrb[0].mxu0
    %4996 = vdwg.mxu0
    %4997 = vmatprep.subr.mxu0 0.0
    %4998 = vmatpush1.msra.mxu0 %v1320
    %4999 = vmatprep.subr.mxu0 0.0
    %5000 = vmatpush1.msra.mxu0 %v1321
    %5001 = vmatprep.subr.mxu0 0.0
    %5002 = vmatpush1.msra.mxu0 %v1322
    %5003 = vmatprep.subr.mxu0 0.0
    %5004 = vmatpush1.msra.mxu0 %v1323
    %5005 = vmatprep.subr.mxu0 0.0
    %5006 = vmatpush1.msra.mxu0 %v1324
    %5007 = vmatprep.subr.mxu0 0.0
    %5008 = vmatpush1.msra.mxu0 %v1325
    %5009 = vmatprep.subr.mxu0 0.0
    %5010 = vmatpush1.msra.mxu0 %v1326
    %5011 = vmatprep.subr.mxu0 0.0
    %5012 = vmatpush1.msra.mxu0 %v1327
    %5013 = vmatprep.subr.mxu0 0.0
    %5014 = vmatpush1.msra.mxu0 %v1328
    %5015 = vmatprep.subr.mxu0 0.0
    %5016 = vmatpush1.msra.mxu0 %v1329
    %5017 = vmatprep.subr.mxu0 0.0
    %5018 = vmatpush1.msra.mxu0 %v1330
    %5019 = vmatprep.subr.mxu0 0.0
    %5020 = vmatpush1.msra.mxu0 %v1331
    %5021 = vmatprep.subr.mxu0 0.0
    %5022 = vmatpush1.msra.mxu0 %v1332
    %5023 = vmatprep.subr.mxu0 0.0
    %5024 = vmatpush1.msra.mxu0 %v1333
    %5025 = vmatprep.subr.mxu0 0.0
    %5026 = vmatpush1.msra.mxu0 %v1334
    %5027 = vmatprep.subr.mxu0 0.0
    %5028 = vmatpush1.msra.mxu0 %v1335
    %5029 = vmatprep.subr.mxu0 0.0
    %5030 = vmatpush1.msra.mxu0 %v1336
    %5031 = vmatprep.subr.mxu0 0.0
    %5032 = vmatpush1.msra.mxu0 %v1337
    %5033 = vmatprep.subr.mxu0 0.0
    %5034 = vmatpush1.msra.mxu0 %v1338
    %5035 = vmatprep.subr.mxu0 0.0
    %5036 = vmatpush1.msra.mxu0 %v1339
    %5037 = vmatprep.subr.mxu0 0.0
    %5038 = vmatpush1.msra.mxu0 %v1340
    %5039 = vmatprep.subr.mxu0 0.0
    %5040 = vmatpush1.msra.mxu0 %v1341
    %5041 = vmatprep.subr.mxu0 0.0
    %5042 = vmatpush1.msra.mxu0 %v1342
    %5043 = vmatprep.subr.mxu0 0.0
    %5044 = vmatpush1.msra.mxu0 %v1343
    %5045 = vmatprep.subr.mxu0 0.0
    %5046 = vmatpush1.msra.mxu0 %v1344
    %5047 = vmatprep.subr.mxu0 0.0
    %5048 = vmatpush1.msra.mxu0 %v1345
    %5049 = vmatprep.subr.mxu0 0.0
    %5050 = vmatpush1.msra.mxu0 %v1346
    %5051 = vmatprep.subr.mxu0 0.0
    %5052 = vmatpush1.msra.mxu0 %v1347
    %5053 = vmatprep.subr.mxu0 0.0
    %5054 = vmatpush1.msra.mxu0 %v1348
    %5055 = vmatprep.subr.mxu0 0.0
    %5056 = vmatpush1.msra.mxu0 %v1349
    %5057 = vmatprep.subr.mxu0 0.0
    %5058 = vmatpush1.msra.mxu0 %v1350
    %5059 = vmatprep.subr.mxu0 0.0
    %5060 = vmatpush1.msra.mxu0 %v1351
    %5061 = vmatprep.mubr.f32.mxu0 %v2027
    %5062 = vmatmul.mubr.f32.gmra.mrb[0].mxu0 %v2019
    %v5063 = vpop.f32.mrb[0].mxu0
    %v5064 = vadd.f32 %v4994, %v5063
    %v5065 = vpop.f32.mrb[0].mxu0
    %5066 = vdwg.mxu0
    %5067 = vmatprep.subr.mxu0 0.0
    %5068 = vmatpush1.msra.mxu0 %v1352
    %5069 = vmatprep.subr.mxu0 0.0
    %5070 = vmatpush1.msra.mxu0 %v1353
    %5071 = vmatprep.subr.mxu0 0.0
    %5072 = vmatpush1.msra.mxu0 %v1354
    %5073 = vmatprep.subr.mxu0 0.0
    %5074 = vmatpush1.msra.mxu0 %v1355
    %5075 = vmatprep.subr.mxu0 0.0
    %5076 = vmatpush1.msra.mxu0 %v1356
    %5077 = vmatprep.subr.mxu0 0.0
    %5078 = vmatpush1.msra.mxu0 %v1357
    %5079 = vmatprep.subr.mxu0 0.0
    %5080 = vmatpush1.msra.mxu0 %v1358
    %5081 = vmatprep.subr.mxu0 0.0
    %5082 = vmatpush1.msra.mxu0 %v1359
    %5083 = vmatprep.subr.mxu0 0.0
    %5084 = vmatpush1.msra.mxu0 %v1360
    %5085 = vmatprep.subr.mxu0 0.0
    %5086 = vmatpush1.msra.mxu0 %v1361
    %5087 = vmatprep.subr.mxu0 0.0
    %5088 = vmatpush1.msra.mxu0 %v1362
    %5089 = vmatprep.subr.mxu0 0.0
    %5090 = vmatpush1.msra.mxu0 %v1363
    %5091 = vmatprep.subr.mxu0 0.0
    %5092 = vmatpush1.msra.mxu0 %v1364
    %5093 = vmatprep.subr.mxu0 0.0
    %5094 = vmatpush1.msra.mxu0 %v1365
    %5095 = vmatprep.subr.mxu0 0.0
    %5096 = vmatpush1.msra.mxu0 %v1366
    %5097 = vmatprep.subr.mxu0 0.0
    %5098 = vmatpush1.msra.mxu0 %v1367
    %5099 = vmatprep.subr.mxu0 0.0
    %5100 = vmatpush1.msra.mxu0 %v1368
    %5101 = vmatprep.subr.mxu0 0.0
    %5102 = vmatpush1.msra.mxu0 %v1369
    %5103 = vmatprep.subr.mxu0 0.0
    %5104 = vmatpush1.msra.mxu0 %v1370
    %5105 = vmatprep.subr.mxu0 0.0
    %5106 = vmatpush1.msra.mxu0 %v1371
    %5107 = vmatprep.subr.mxu0 0.0
    %5108 = vmatpush1.msra.mxu0 %v1372
    %5109 = vmatprep.subr.mxu0 0.0
    %5110 = vmatpush1.msra.mxu0 %v1373
    %5111 = vmatprep.subr.mxu0 0.0
    %5112 = vmatpush1.msra.mxu0 %v1374
    %5113 = vmatprep.subr.mxu0 0.0
    %5114 = vmatpush1.msra.mxu0 %v1375
    %5115 = vmatprep.subr.mxu0 0.0
    %5116 = vmatpush1.msra.mxu0 %v1376
    %5117 = vmatprep.subr.mxu0 0.0
    %5118 = vmatpush1.msra.mxu0 %v1377
    %5119 = vmatprep.subr.mxu0 0.0
    %5120 = vmatpush1.msra.mxu0 %v1378
    %5121 = vmatprep.subr.mxu0 0.0
    %5122 = vmatpush1.msra.mxu0 %v1379
    %5123 = vmatprep.subr.mxu0 0.0
    %5124 = vmatpush1.msra.mxu0 %v1380
    %5125 = vmatprep.subr.mxu0 0.0
    %5126 = vmatpush1.msra.mxu0 %v1381
    %5127 = vmatprep.subr.mxu0 0.0
    %5128 = vmatpush1.msra.mxu0 %v1382
    %5129 = vmatprep.subr.mxu0 0.0
    %5130 = vmatpush1.msra.mxu0 %v1383
    %5131 = vmatprep.mubr.f32.mxu0 %v2028
    %5132 = vmatmul.mubr.f32.gmra.mrb[0].mxu0 %v2026
    %v5133 = vpop.f32.mrb[0].mxu0
    %v5134 = vadd.f32 %v5064, %v5133
    %v5135 = vpop.f32.mrb[0].mxu0
    %5136 = vdwg.mxu0
    %5137 = vmatprep.subr.mxu0 0.0
    %5138 = vmatpush1.msra.mxu0 %v1384
    %5139 = vmatprep.subr.mxu0 0.0
    %5140 = vmatpush1.msra.mxu0 %v1385
    %5141 = vmatprep.subr.mxu0 0.0
    %5142 = vmatpush1.msra.mxu0 %v1386
    %5143 = vmatprep.subr.mxu0 0.0
    %5144 = vmatpush1.msra.mxu0 %v1387
    %5145 = vmatprep.subr.mxu0 0.0
    %5146 = vmatpush1.msra.mxu0 %v1388
    %5147 = vmatprep.subr.mxu0 0.0
    %5148 = vmatpush1.msra.mxu0 %v1389
    %5149 = vmatprep.subr.mxu0 0.0
    %5150 = vmatpush1.msra.mxu0 %v1390
    %5151 = vmatprep.subr.mxu0 0.0
    %5152 = vmatpush1.msra.mxu0 %v1391
    %5153 = vmatprep.subr.mxu0 0.0
    %5154 = vmatpush1.msra.mxu0 %v1392
    %5155 = vmatprep.subr.mxu0 0.0
    %5156 = vmatpush1.msra.mxu0 %v1393
    %5157 = vmatprep.subr.mxu0 0.0
    %5158 = vmatpush1.msra.mxu0 %v1394
    %5159 = vmatprep.subr.mxu0 0.0
    %5160 = vmatpush1.msra.mxu0 %v1395
    %5161 = vmatprep.subr.mxu0 0.0
    %5162 = vmatpush1.msra.mxu0 %v1396
    %5163 = vmatprep.subr.mxu0 0.0
    %5164 = vmatpush1.msra.mxu0 %v1397
    %5165 = vmatprep.subr.mxu0 0.0
    %5166 = vmatpush1.msra.mxu0 %v1398
    %5167 = vmatprep.subr.mxu0 0.0
    %5168 = vmatpush1.msra.mxu0 %v1399
    %5169 = vmatprep.subr.mxu0 0.0
    %5170 = vmatpush1.msra.mxu0 %v1400
    %5171 = vmatprep.subr.mxu0 0.0
    %5172 = vmatpush1.msra.mxu0 %v1401
    %5173 = vmatprep.subr.mxu0 0.0
    %5174 = vmatpush1.msra.mxu0 %v1402
    %5175 = vmatprep.subr.mxu0 0.0
    %5176 = vmatpush1.msra.mxu0 %v1403
    %5177 = vmatprep.subr.mxu0 0.0
    %5178 = vmatpush1.msra.mxu0 %v1404
    %5179 = vmatprep.subr.mxu0 0.0
    %5180 = vmatpush1.msra.mxu0 %v1405
    %5181 = vmatprep.subr.mxu0 0.0
    %5182 = vmatpush1.msra.mxu0 %v1406
    %5183 = vmatprep.subr.mxu0 0.0
    %5184 = vmatpush1.msra.mxu0 %v1407
    %5185 = vmatprep.subr.mxu0 0.0
    %5186 = vmatpush1.msra.mxu0 %v1408
    %5187 = vmatprep.subr.mxu0 0.0
    %5188 = vmatpush1.msra.mxu0 %v1409
    %5189 = vmatprep.subr.mxu0 0.0
    %5190 = vmatpush1.msra.mxu0 %v1410
    %5191 = vmatprep.subr.mxu0 0.0
    %5192 = vmatpush1.msra.mxu0 %v1411
    %5193 = vmatprep.subr.mxu0 0.0
    %5194 = vmatpush1.msra.mxu0 %v1412
    %5195 = vmatprep.subr.mxu0 0.0
    %5196 = vmatpush1.msra.mxu0 %v1413
    %5197 = vmatprep.subr.mxu0 0.0
    %5198 = vmatpush1.msra.mxu0 %v1414
    %5199 = vmatprep.subr.mxu0 0.0
    %5200 = vmatpush1.msra.mxu0 %v1415
    %5201 = vmatprep.mubr.f32.mxu0 %v2044
    %5202 = vmatmul.mubr.f32.gmra.mrb[0].mxu0 %v2036
    %v5203 = vpop.f32.mrb[0].mxu0
    %v5204 = vadd.f32 %v5134, %v5203
    %v5205 = vpop.f32.mrb[0].mxu0
    %5206 = vdwg.mxu0
    %5207 = vmatprep.subr.mxu0 0.0
    %5208 = vmatpush1.msra.mxu0 %v1416
    %5209 = vmatprep.subr.mxu0 0.0
    %5210 = vmatpush1.msra.mxu0 %v1417
    %5211 = vmatprep.subr.mxu0 0.0
    %5212 = vmatpush1.msra.mxu0 %v1418
    %5213 = vmatprep.subr.mxu0 0.0
    %5214 = vmatpush1.msra.mxu0 %v1419
    %5215 = vmatprep.subr.mxu0 0.0
    %5216 = vmatpush1.msra.mxu0 %v1420
    %5217 = vmatprep.subr.mxu0 0.0
    %5218 = vmatpush1.msra.mxu0 %v1421
    %5219 = vmatprep.subr.mxu0 0.0
    %5220 = vmatpush1.msra.mxu0 %v1422
    %5221 = vmatprep.subr.mxu0 0.0
    %5222 = vmatpush1.msra.mxu0 %v1423
    %5223 = vmatprep.subr.mxu0 0.0
    %5224 = vmatpush1.msra.mxu0 %v1424
    %5225 = vmatprep.subr.mxu0 0.0
    %5226 = vmatpush1.msra.mxu0 %v1425
    %5227 = vmatprep.subr.mxu0 0.0
    %5228 = vmatpush1.msra.mxu0 %v1426
    %5229 = vmatprep.subr.mxu0 0.0
    %5230 = vmatpush1.msra.mxu0 %v1427
    %5231 = vmatprep.subr.mxu0 0.0
    %5232 = vmatpush1.msra.mxu0 %v1428
    %5233 = vmatprep.subr.mxu0 0.0
    %5234 = vmatpush1.msra.mxu0 %v1429
    %5235 = vmatprep.subr.mxu0 0.0
    %5236 = vmatpush1.msra.mxu0 %v1430
    %5237 = vmatprep.subr.mxu0 0.0
    %5238 = vmatpush1.msra.mxu0 %v1431
    %5239 = vmatprep.subr.mxu0 0.0
    %5240 = vmatpush1.msra.mxu0 %v1432
    %5241 = vmatprep.subr.mxu0 0.0
    %5242 = vmatpush1.msra.mxu0 %v1433
    %5243 = vmatprep.subr.mxu0 0.0
    %5244 = vmatpush1.msra.mxu0 %v1434
    %5245 = vmatprep.subr.mxu0 0.0
    %5246 = vmatpush1.msra.mxu0 %v1435
    %5247 = vmatprep.subr.mxu0 0.0
    %5248 = vmatpush1.msra.mxu0 %v1436
    %5249 = vmatprep.subr.mxu0 0.0
    %5250 = vmatpush1.msra.mxu0 %v1437
    %5251 = vmatprep.subr.mxu0 0.0
    %5252 = vmatpush1.msra.mxu0 %v1438
    %5253 = vmatprep.subr.mxu0 0.0
    %5254 = vmatpush1.msra.mxu0 %v1439
    %5255 = vmatprep.subr.mxu0 0.0
    %5256 = vmatpush1.msra.mxu0 %v1440
    %5257 = vmatprep.subr.mxu0 0.0
    %5258 = vmatpush1.msra.mxu0 %v1441
    %5259 = vmatprep.subr.mxu0 0.0
    %5260 = vmatpush1.msra.mxu0 %v1442
    %5261 = vmatprep.subr.mxu0 0.0
    %5262 = vmatpush1.msra.mxu0 %v1443
    %5263 = vmatprep.subr.mxu0 0.0
    %5264 = vmatpush1.msra.mxu0 %v1444
    %5265 = vmatprep.subr.mxu0 0.0
    %5266 = vmatpush1.msra.mxu0 %v1445
    %5267 = vmatprep.subr.mxu0 0.0
    %5268 = vmatpush1.msra.mxu0 %v1446
    %5269 = vmatprep.subr.mxu0 0.0
    %5270 = vmatpush1.msra.mxu0 %v1447
    %5271 = vmatprep.mubr.f32.mxu0 %v2045
    %5272 = vmatmul.mubr.f32.gmra.mrb[0].mxu0 %v2043
    %v5273 = vpop.f32.mrb[0].mxu0
    %v5274 = vadd.f32 %v5204, %v5273
    %v5275 = vpop.f32.mrb[0].mxu0
    %5276 = vdwg.mxu0
    %5277 = vmatprep.subr.mxu0 0.0
    %5278 = vmatpush1.msra.mxu0 %v1448
    %5279 = vmatprep.subr.mxu0 0.0
    %5280 = vmatpush1.msra.mxu0 %v1449
    %5281 = vmatprep.subr.mxu0 0.0
    %5282 = vmatpush1.msra.mxu0 %v1450
    %5283 = vmatprep.subr.mxu0 0.0
    %5284 = vmatpush1.msra.mxu0 %v1451
    %5285 = vmatprep.subr.mxu0 0.0
    %5286 = vmatpush1.msra.mxu0 %v1452
    %5287 = vmatprep.subr.mxu0 0.0
    %5288 = vmatpush1.msra.mxu0 %v1453
    %5289 = vmatprep.subr.mxu0 0.0
    %5290 = vmatpush1.msra.mxu0 %v1454
    %5291 = vmatprep.subr.mxu0 0.0
    %5292 = vmatpush1.msra.mxu0 %v1455
    %5293 = vmatprep.subr.mxu0 0.0
    %5294 = vmatpush1.msra.mxu0 %v1456
    %5295 = vmatprep.subr.mxu0 0.0
    %5296 = vmatpush1.msra.mxu0 %v1457
    %5297 = vmatprep.subr.mxu0 0.0
    %5298 = vmatpush1.msra.mxu0 %v1458
    %5299 = vmatprep.subr.mxu0 0.0
    %5300 = vmatpush1.msra.mxu0 %v1459
    %5301 = vmatprep.subr.mxu0 0.0
    %5302 = vmatpush1.msra.mxu0 %v1460
    %5303 = vmatprep.subr.mxu0 0.0
    %5304 = vmatpush1.msra.mxu0 %v1461
    %5305 = vmatprep.subr.mxu0 0.0
    %5306 = vmatpush1.msra.mxu0 %v1462
    %5307 = vmatprep.subr.mxu0 0.0
    %5308 = vmatpush1.msra.mxu0 %v1463
    %5309 = vmatprep.subr.mxu0 0.0
    %5310 = vmatpush1.msra.mxu0 %v1464
    %5311 = vmatprep.subr.mxu0 0.0
    %5312 = vmatpush1.msra.mxu0 %v1465
    %5313 = vmatprep.subr.mxu0 0.0
    %5314 = vmatpush1.msra.mxu0 %v1466
    %5315 = vmatprep.subr.mxu0 0.0
    %5316 = vmatpush1.msra.mxu0 %v1467
    %5317 = vmatprep.subr.mxu0 0.0
    %5318 = vmatpush1.msra.mxu0 %v1468
    %5319 = vmatprep.subr.mxu0 0.0
    %5320 = vmatpush1.msra.mxu0 %v1469
    %5321 = vmatprep.subr.mxu0 0.0
    %5322 = vmatpush1.msra.mxu0 %v1470
    %5323 = vmatprep.subr.mxu0 0.0
    %5324 = vmatpush1.msra.mxu0 %v1471
    %5325 = vmatprep.subr.mxu0 0.0
    %5326 = vmatpush1.msra.mxu0 %v1472
    %5327 = vmatprep.subr.mxu0 0.0
    %5328 = vmatpush1.msra.mxu0 %v1473
    %5329 = vmatprep.subr.mxu0 0.0
    %5330 = vmatpush1.msra.mxu0 %v1474
    %5331 = vmatprep.subr.mxu0 0.0
    %5332 = vmatpush1.msra.mxu0 %v1475
    %5333 = vmatprep.subr.mxu0 0.0
    %5334 = vmatpush1.msra.mxu0 %v1476
    %5335 = vmatprep.subr.mxu0 0.0
    %5336 = vmatpush1.msra.mxu0 %v1477
    %5337 = vmatprep.subr.mxu0 0.0
    %5338 = vmatpush1.msra.mxu0 %v1478
    %5339 = vmatprep.subr.mxu0 0.0
    %5340 = vmatpush1.msra.mxu0 %v1479
    %5341 = vmatprep.mubr.f32.mxu0 %v2061
    %5342 = vmatmul.mubr.f32.gmra.mrb[0].mxu0 %v2053
    %v5343 = vpop.f32.mrb[0].mxu0
    %v5344 = vadd.f32 %v5274, %v5343
    %v5345 = vpop.f32.mrb[0].mxu0
    %5346 = vdwg.mxu0
    %5347 = vmatprep.subr.mxu0 0.0
    %5348 = vmatpush1.msra.mxu0 %v1480
    %5349 = vmatprep.subr.mxu0 0.0
    %5350 = vmatpush1.msra.mxu0 %v1481
    %5351 = vmatprep.subr.mxu0 0.0
    %5352 = vmatpush1.msra.mxu0 %v1482
    %5353 = vmatprep.subr.mxu0 0.0
    %5354 = vmatpush1.msra.mxu0 %v1483
    %5355 = vmatprep.subr.mxu0 0.0
    %5356 = vmatpush1.msra.mxu0 %v1484
    %5357 = vmatprep.subr.mxu0 0.0
    %5358 = vmatpush1.msra.mxu0 %v1485
    %5359 = vmatprep.subr.mxu0 0.0
    %5360 = vmatpush1.msra.mxu0 %v1486
    %5361 = vmatprep.subr.mxu0 0.0
    %5362 = vmatpush1.msra.mxu0 %v1487
    %5363 = vmatprep.subr.mxu0 0.0
    %5364 = vmatpush1.msra.mxu0 %v1488
    %5365 = vmatprep.subr.mxu0 0.0
    %5366 = vmatpush1.msra.mxu0 %v1489
    %5367 = vmatprep.subr.mxu0 0.0
    %5368 = vmatpush1.msra.mxu0 %v1490
    %5369 = vmatprep.subr.mxu0 0.0
    %5370 = vmatpush1.msra.mxu0 %v1491
    %5371 = vmatprep.subr.mxu0 0.0
    %5372 = vmatpush1.msra.mxu0 %v1492
    %5373 = vmatprep.subr.mxu0 0.0
    %5374 = vmatpush1.msra.mxu0 %v1493
    %5375 = vmatprep.subr.mxu0 0.0
    %5376 = vmatpush1.msra.mxu0 %v1494
    %5377 = vmatprep.subr.mxu0 0.0
    %5378 = vmatpush1.msra.mxu0 %v1495
    %5379 = vmatprep.subr.mxu0 0.0
    %5380 = vmatpush1.msra.mxu0 %v1496
    %5381 = vmatprep.subr.mxu0 0.0
    %5382 = vmatpush1.msra.mxu0 %v1497
    %5383 = vmatprep.subr.mxu0 0.0
    %5384 = vmatpush1.msra.mxu0 %v1498
    %5385 = vmatprep.subr.mxu0 0.0
    %5386 = vmatpush1.msra.mxu0 %v1499
    %5387 = vmatprep.subr.mxu0 0.0
    %5388 = vmatpush1.msra.mxu0 %v1500
    %5389 = vmatprep.subr.mxu0 0.0
    %5390 = vmatpush1.msra.mxu0 %v1501
    %5391 = vmatprep.subr.mxu0 0.0
    %5392 = vmatpush1.msra.mxu0 %v1502
    %5393 = vmatprep.subr.mxu0 0.0
    %5394 = vmatpush1.msra.mxu0 %v1503
    %5395 = vmatprep.subr.mxu0 0.0
    %5396 = vmatpush1.msra.mxu0 %v1504
    %5397 = vmatprep.subr.mxu0 0.0
    %5398 = vmatpush1.msra.mxu0 %v1505
    %5399 = vmatprep.subr.mxu0 0.0
    %5400 = vmatpush1.msra.mxu0 %v1506
    %5401 = vmatprep.subr.mxu0 0.0
    %5402 = vmatpush1.msra.mxu0 %v1507
    %5403 = vmatprep.subr.mxu0 0.0
    %5404 = vmatpush1.msra.mxu0 %v1508
    %5405 = vmatprep.subr.mxu0 0.0
    %5406 = vmatpush1.msra.mxu0 %v1509
    %5407 = vmatprep.subr.mxu0 0.0
    %5408 = vmatpush1.msra.mxu0 %v1510
    %5409 = vmatprep.subr.mxu0 0.0
    %5410 = vmatpush1.msra.mxu0 %v1511
    %5411 = vmatprep.mubr.f32.mxu0 %v2062
    %5412 = vmatmul.mubr.f32.gmra.mrb[0].mxu0 %v2060
    %v5413 = vpop.f32.mrb[0].mxu0
    %v5414 = vadd.f32 %v5344, %v5413
    %v5415 = vpop.f32.mrb[0].mxu0
    %5416 = vdwg.mxu0
    %5417 = vmatprep.subr.mxu0 0.0
    %5418 = vmatpush1.msra.mxu0 %v1512
    %5419 = vmatprep.subr.mxu0 0.0
    %5420 = vmatpush1.msra.mxu0 %v1513
    %5421 = vmatprep.subr.mxu0 0.0
    %5422 = vmatpush1.msra.mxu0 %v1514
    %5423 = vmatprep.subr.mxu0 0.0
    %5424 = vmatpush1.msra.mxu0 %v1515
    %5425 = vmatprep.subr.mxu0 0.0
    %5426 = vmatpush1.msra.mxu0 %v1516
    %5427 = vmatprep.subr.mxu0 0.0
    %5428 = vmatpush1.msra.mxu0 %v1517
    %5429 = vmatprep.subr.mxu0 0.0
    %5430 = vmatpush1.msra.mxu0 %v1518
    %5431 = vmatprep.subr.mxu0 0.0
    %5432 = vmatpush1.msra.mxu0 %v1519
    %5433 = vmatprep.subr.mxu0 0.0
    %5434 = vmatpush1.msra.mxu0 %v1520
    %5435 = vmatprep.subr.mxu0 0.0
    %5436 = vmatpush1.msra.mxu0 %v1521
    %5437 = vmatprep.subr.mxu0 0.0
    %5438 = vmatpush1.msra.mxu0 %v1522
    %5439 = vmatprep.subr.mxu0 0.0
    %5440 = vmatpush1.msra.mxu0 %v1523
    %5441 = vmatprep.subr.mxu0 0.0
    %5442 = vmatpush1.msra.mxu0 %v1524
    %5443 = vmatprep.subr.mxu0 0.0
    %5444 = vmatpush1.msra.mxu0 %v1525
    %5445 = vmatprep.subr.mxu0 0.0
    %5446 = vmatpush1.msra.mxu0 %v1526
    %5447 = vmatprep.subr.mxu0 0.0
    %5448 = vmatpush1.msra.mxu0 %v1527
    %5449 = vmatprep.subr.mxu0 0.0
    %5450 = vmatpush1.msra.mxu0 %v1528
    %5451 = vmatprep.subr.mxu0 0.0
    %5452 = vmatpush1.msra.mxu0 %v1529
    %5453 = vmatprep.subr.mxu0 0.0
    %5454 = vmatpush1.msra.mxu0 %v1530
    %5455 = vmatprep.subr.mxu0 0.0
    %5456 = vmatpush1.msra.mxu0 %v1531
    %5457 = vmatprep.subr.mxu0 0.0
    %5458 = vmatpush1.msra.mxu0 %v1532
    %5459 = vmatprep.subr.mxu0 0.0
    %5460 = vmatpush1.msra.mxu0 %v1533
    %5461 = vmatprep.subr.mxu0 0.0
    %5462 = vmatpush1.msra.mxu0 %v1534
    %5463 = vmatprep.subr.mxu0 0.0
    %5464 = vmatpush1.msra.mxu0 %v1535
    %5465 = vmatprep.subr.mxu0 0.0
    %5466 = vmatpush1.msra.mxu0 %v1536
    %5467 = vmatprep.subr.mxu0 0.0
    %5468 = vmatpush1.msra.mxu0 %v1537
    %5469 = vmatprep.subr.mxu0 0.0
    %5470 = vmatpush1.msra.mxu0 %v1538
    %5471 = vmatprep.subr.mxu0 0.0
    %5472 = vmatpush1.msra.mxu0 %v1539
    %5473 = vmatprep.subr.mxu0 0.0
    %5474 = vmatpush1.msra.mxu0 %v1540
    %5475 = vmatprep.subr.mxu0 0.0
    %5476 = vmatpush1.msra.mxu0 %v1541
    %5477 = vmatprep.subr.mxu0 0.0
    %5478 = vmatpush1.msra.mxu0 %v1542
    %5479 = vmatprep.subr.mxu0 0.0
    %5480 = vmatpush1.msra.mxu0 %v1543
    %5481 = vmatprep.mubr.f32.mxu0 %v2078
    %5482 = vmatmul.mubr.f32.gmra.mrb[0].mxu0 %v2070
    %v5483 = vpop.f32.mrb[0].mxu0
    %v5484 = vadd.f32 %v5414, %v5483
    %v5485 = vpop.f32.mrb[0].mxu0
    %5486 = vdwg.mxu0
    %5487 = vmatprep.subr.mxu0 0.0
    %5488 = vmatpush1.msra.mxu0 %v1544
    %5489 = vmatprep.subr.mxu0 0.0
    %5490 = vmatpush1.msra.mxu0 %v1545
    %5491 = vmatprep.subr.mxu0 0.0
    %5492 = vmatpush1.msra.mxu0 %v1546
    %5493 = vmatprep.subr.mxu0 0.0
    %5494 = vmatpush1.msra.mxu0 %v1547
    %5495 = vmatprep.subr.mxu0 0.0
    %5496 = vmatpush1.msra.mxu0 %v1548
    %5497 = vmatprep.subr.mxu0 0.0
    %5498 = vmatpush1.msra.mxu0 %v1549
    %5499 = vmatprep.subr.mxu0 0.0
    %5500 = vmatpush1.msra.mxu0 %v1550
    %5501 = vmatprep.subr.mxu0 0.0
    %5502 = vmatpush1.msra.mxu0 %v1551
    %5503 = vmatprep.subr.mxu0 0.0
    %5504 = vmatpush1.msra.mxu0 %v1552
    %5505 = vmatprep.subr.mxu0 0.0
    %5506 = vmatpush1.msra.mxu0 %v1553
    %5507 = vmatprep.subr.mxu0 0.0
    %5508 = vmatpush1.msra.mxu0 %v1554
    %5509 = vmatprep.subr.mxu0 0.0
    %5510 = vmatpush1.msra.mxu0 %v1555
    %5511 = vmatprep.subr.mxu0 0.0
    %5512 = vmatpush1.msra.mxu0 %v1556
    %5513 = vmatprep.subr.mxu0 0.0
    %5514 = vmatpush1.msra.mxu0 %v1557
    %5515 = vmatprep.subr.mxu0 0.0
    %5516 = vmatpush1.msra.mxu0 %v1558
    %5517 = vmatprep.subr.mxu0 0.0
    %5518 = vmatpush1.msra.mxu0 %v1559
    %5519 = vmatprep.subr.mxu0 0.0
    %5520 = vmatpush1.msra.mxu0 %v1560
    %5521 = vmatprep.subr.mxu0 0.0
    %5522 = vmatpush1.msra.mxu0 %v1561
    %5523 = vmatprep.subr.mxu0 0.0
    %5524 = vmatpush1.msra.mxu0 %v1562
    %5525 = vmatprep.subr.mxu0 0.0
    %5526 = vmatpush1.msra.mxu0 %v1563
    %5527 = vmatprep.subr.mxu0 0.0
    %5528 = vmatpush1.msra.mxu0 %v1564
    %5529 = vmatprep.subr.mxu0 0.0
    %5530 = vmatpush1.msra.mxu0 %v1565
    %5531 = vmatprep.subr.mxu0 0.0
    %5532 = vmatpush1.msra.mxu0 %v1566
    %5533 = vmatprep.subr.mxu0 0.0
    %5534 = vmatpush1.msra.mxu0 %v1567
    %5535 = vmatprep.subr.mxu0 0.0
    %5536 = vmatpush1.msra.mxu0 %v1568
    %5537 = vmatprep.subr.mxu0 0.0
    %5538 = vmatpush1.msra.mxu0 %v1569
    %5539 = vmatprep.subr.mxu0 0.0
    %5540 = vmatpush1.msra.mxu0 %v1570
    %5541 = vmatprep.subr.mxu0 0.0
    %5542 = vmatpush1.msra.mxu0 %v1571
    %5543 = vmatprep.subr.mxu0 0.0
    %5544 = vmatpush1.msra.mxu0 %v1572
    %5545 = vmatprep.subr.mxu0 0.0
    %5546 = vmatpush1.msra.mxu0 %v1573
    %5547 = vmatprep.subr.mxu0 0.0
    %5548 = vmatpush1.msra.mxu0 %v1574
    %5549 = vmatprep.subr.mxu0 0.0
    %5550 = vmatpush1.msra.mxu0 %v1575
    %5551 = vmatprep.mubr.f32.mxu0 %v2079
    %5552 = vmatmul.mubr.f32.gmra.mrb[0].mxu0 %v2077
    %v5553 = vpop.f32.mrb[0].mxu0
    %v5554 = vadd.f32 %v5484, %v5553
    %v5555 = vpop.f32.mrb[0].mxu0
    %5556 = vdwg.mxu0
    %5557 = vmatprep.subr.mxu0 0.0
    %5558 = vmatpush1.msra.mxu0 %v1576
    %5559 = vmatprep.subr.mxu0 0.0
    %5560 = vmatpush1.msra.mxu0 %v1577
    %5561 = vmatprep.subr.mxu0 0.0
    %5562 = vmatpush1.msra.mxu0 %v1578
    %5563 = vmatprep.subr.mxu0 0.0
    %5564 = vmatpush1.msra.mxu0 %v1579
    %5565 = vmatprep.subr.mxu0 0.0
    %5566 = vmatpush1.msra.mxu0 %v1580
    %5567 = vmatprep.subr.mxu0 0.0
    %5568 = vmatpush1.msra.mxu0 %v1581
    %5569 = vmatprep.subr.mxu0 0.0
    %5570 = vmatpush1.msra.mxu0 %v1582
    %5571 = vmatprep.subr.mxu0 0.0
    %5572 = vmatpush1.msra.mxu0 %v1583
    %5573 = vmatprep.subr.mxu0 0.0
    %5574 = vmatpush1.msra.mxu0 %v1584
    %5575 = vmatprep.subr.mxu0 0.0
    %5576 = vmatpush1.msra.mxu0 %v1585
    %5577 = vmatprep.subr.mxu0 0.0
    %5578 = vmatpush1.msra.mxu0 %v1586
    %5579 = vmatprep.subr.mxu0 0.0
    %5580 = vmatpush1.msra.mxu0 %v1587
    %5581 = vmatprep.subr.mxu0 0.0
    %5582 = vmatpush1.msra.mxu0 %v1588
    %5583 = vmatprep.subr.mxu0 0.0
    %5584 = vmatpush1.msra.mxu0 %v1589
    %5585 = vmatprep.subr.mxu0 0.0
    %5586 = vmatpush1.msra.mxu0 %v1590
    %5587 = vmatprep.subr.mxu0 0.0
    %5588 = vmatpush1.msra.mxu0 %v1591
    %5589 = vmatprep.subr.mxu0 0.0
    %5590 = vmatpush1.msra.mxu0 %v1592
    %5591 = vmatprep.subr.mxu0 0.0
    %5592 = vmatpush1.msra.mxu0 %v1593
    %5593 = vmatprep.subr.mxu0 0.0
    %5594 = vmatpush1.msra.mxu0 %v1594
    %5595 = vmatprep.subr.mxu0 0.0
    %5596 = vmatpush1.msra.mxu0 %v1595
    %5597 = vmatprep.subr.mxu0 0.0
    %5598 = vmatpush1.msra.mxu0 %v1596
    %5599 = vmatprep.subr.mxu0 0.0
    %5600 = vmatpush1.msra.mxu0 %v1597
    %5601 = vmatprep.subr.mxu0 0.0
    %5602 = vmatpush1.msra.mxu0 %v1598
    %5603 = vmatprep.subr.mxu0 0.0
    %5604 = vmatpush1.msra.mxu0 %v1599
    %5605 = vmatprep.subr.mxu0 0.0
    %5606 = vmatpush1.msra.mxu0 %v1600
    %5607 = vmatprep.subr.mxu0 0.0
    %5608 = vmatpush1.msra.mxu0 %v1601
    %5609 = vmatprep.subr.mxu0 0.0
    %5610 = vmatpush1.msra.mxu0 %v1602
    %5611 = vmatprep.subr.mxu0 0.0
    %5612 = vmatpush1.msra.mxu0 %v1603
    %5613 = vmatprep.subr.mxu0 0.0
    %5614 = vmatpush1.msra.mxu0 %v1604
    %5615 = vmatprep.subr.mxu0 0.0
    %5616 = vmatpush1.msra.mxu0 %v1605
    %5617 = vmatprep.subr.mxu0 0.0
    %5618 = vmatpush1.msra.mxu0 %v1606
    %5619 = vmatprep.subr.mxu0 0.0
    %5620 = vmatpush1.msra.mxu0 %v1607
    %5621 = vmatprep.mubr.f32.mxu0 %v2095
    %5622 = vmatmul.mubr.f32.gmra.mrb[0].mxu0 %v2087
    %v5623 = vpop.f32.mrb[0].mxu0
    %v5624 = vadd.f32 %v5554, %v5623
    %v5625 = vpop.f32.mrb[0].mxu0
    %5626 = vdwg.mxu0
    %5627 = vmatprep.subr.mxu0 0.0
    %5628 = vmatpush1.msra.mxu0 %v1608
    %5629 = vmatprep.subr.mxu0 0.0
    %5630 = vmatpush1.msra.mxu0 %v1609
    %5631 = vmatprep.subr.mxu0 0.0
    %5632 = vmatpush1.msra.mxu0 %v1610
    %5633 = vmatprep.subr.mxu0 0.0
    %5634 = vmatpush1.msra.mxu0 %v1611
    %5635 = vmatprep.subr.mxu0 0.0
    %5636 = vmatpush1.msra.mxu0 %v1612
    %5637 = vmatprep.subr.mxu0 0.0
    %5638 = vmatpush1.msra.mxu0 %v1613
    %5639 = vmatprep.subr.mxu0 0.0
    %5640 = vmatpush1.msra.mxu0 %v1614
    %5641 = vmatprep.subr.mxu0 0.0
    %5642 = vmatpush1.msra.mxu0 %v1615
    %5643 = vmatprep.subr.mxu0 0.0
    %5644 = vmatpush1.msra.mxu0 %v1616
    %5645 = vmatprep.subr.mxu0 0.0
    %5646 = vmatpush1.msra.mxu0 %v1617
    %5647 = vmatprep.subr.mxu0 0.0
    %5648 = vmatpush1.msra.mxu0 %v1618
    %5649 = vmatprep.subr.mxu0 0.0
    %5650 = vmatpush1.msra.mxu0 %v1619
    %5651 = vmatprep.subr.mxu0 0.0
    %5652 = vmatpush1.msra.mxu0 %v1620
    %5653 = vmatprep.subr.mxu0 0.0
    %5654 = vmatpush1.msra.mxu0 %v1621
    %5655 = vmatprep.subr.mxu0 0.0
    %5656 = vmatpush1.msra.mxu0 %v1622
    %5657 = vmatprep.subr.mxu0 0.0
    %5658 = vmatpush1.msra.mxu0 %v1623
    %5659 = vmatprep.subr.mxu0 0.0
    %5660 = vmatpush1.msra.mxu0 %v1624
    %5661 = vmatprep.subr.mxu0 0.0
    %5662 = vmatpush1.msra.mxu0 %v1625
    %5663 = vmatprep.subr.mxu0 0.0
    %5664 = vmatpush1.msra.mxu0 %v1626
    %5665 = vmatprep.subr.mxu0 0.0
    %5666 = vmatpush1.msra.mxu0 %v1627
    %5667 = vmatprep.subr.mxu0 0.0
    %5668 = vmatpush1.msra.mxu0 %v1628
    %5669 = vmatprep.subr.mxu0 0.0
    %5670 = vmatpush1.msra.mxu0 %v1629
    %5671 = vmatprep.subr.mxu0 0.0
    %5672 = vmatpush1.msra.mxu0 %v1630
    %5673 = vmatprep.subr.mxu0 0.0
    %5674 = vmatpush1.msra.mxu0 %v1631
    %5675 = vmatprep.subr.mxu0 0.0
    %5676 = vmatpush1.msra.mxu0 %v1632
    %5677 = vmatprep.subr.mxu0 0.0
    %5678 = vmatpush1.msra.mxu0 %v1633
    %5679 = vmatprep.subr.mxu0 0.0
    %5680 = vmatpush1.msra.mxu0 %v1634
    %5681 = vmatprep.subr.mxu0 0.0
    %5682 = vmatpush1.msra.mxu0 %v1635
    %5683 = vmatprep.subr.mxu0 0.0
    %5684 = vmatpush1.msra.mxu0 %v1636
    %5685 = vmatprep.subr.mxu0 0.0
    %5686 = vmatpush1.msra.mxu0 %v1637
    %5687 = vmatprep.subr.mxu0 0.0
    %5688 = vmatpush1.msra.mxu0 %v1638
    %5689 = vmatprep.subr.mxu0 0.0
    %5690 = vmatpush1.msra.mxu0 %v1639
    %5691 = vmatprep.mubr.f32.mxu0 %v2096
    %5692 = vmatmul.mubr.f32.gmra.mrb[0].mxu0 %v2094
    %v5693 = vpop.f32.mrb[0].mxu0
    %v5694 = vadd.f32 %v5624, %v5693
    %v5695 = vpop.f32.mrb[0].mxu0
    %5696 = vdwg.mxu0
    %vm5697 = vcmask 74752
    %5698 = vst.msk [vmem:[#allocation2] sm:$0x3] %vm5697, %v5694
    // Predicated region
    $region14: #{mcnn2_forward.5} parent=1 // pred_check
      _
    $region15: #{mcnn2_forward.5} parent=1 // pred_check_branch
      %5700 = sbr.rel (0) target = $region17
    $region16: #{mcnn2_forward.5} parent=1 // pred_region
      %s5702 = ssub.s32 32, 32
      %5703 = vsyncadd [#allocation3], %s5702
      %s5705 = sshll.u32 [#allocation2], 4
      %s5706 = int_to_ptr.vmem [resolvable:$true] %s5705
      %5708 = dma.vmem_to_hbm [thread:$0]  %s5706, 32, %s3, [#allocation3]
    $region17: #{mcnn2_forward.5} parent=1 // pred_fallthru
      _
    // Predicated region
    $region18: #{mcnn2_forward.5} parent=1 // pred_check
      _
    $region19: #{mcnn2_forward.5} parent=1 // pred_check_branch
      %5710 = sbr.rel (0) target = $region21
    $region20: #{mcnn2_forward.5} parent=1 // pred_region
      %5711 = dma.done [#allocation3], 32
    $region21: #{mcnn2_forward.5} parent=1 // pred_fallthru
      _
    %5712 = vsyncpa [#allocation3], 1

</llo_original>
